<compile_context>
chip_gen: v6e
topology: v6e:2x2x1
jax: 0.10.0
libtpu: 0.0.40
codegen_flags: <defaults>
</compile_context>

<pallas_src>
import functools
import math

import jax
import jax.numpy as jnp
import numpy as np
from jax import lax
from jax.experimental import pallas as pl
from jax.experimental.pallas import tpu as pltpu

CHANNEL_GAMMA = 0.25
SHIFT_PIXEL = 1

# Row indices inside the packed (16, C) per-layer vector-parameter table.
_LN0_G, _LN0_B, _LN1_G, _LN1_B, _LN2_G, _LN2_B = 0, 1, 2, 3, 4, 5
_MIX_K, _MIX_V, _MIX_R, _FMIX_K, _FMIX_R = 6, 7, 8, 9, 10
_GAMMA1, _GAMMA2, _WKV_W, _WKV_U = 11, 12, 13, 14
_NVEC = 16


# ----------------------------- in-kernel helpers ------------------------------

def _bf16(x):
    return x.astype(jnp.bfloat16)


def _ln(x, g, b):
    mu = jnp.mean(x, axis=-1, keepdims=True)
    var = jnp.mean(jnp.square(x - mu), axis=-1, keepdims=True)
    return (x - mu) * lax.rsqrt(var + 1e-5) * g + b


def _q_shift(xn, sel, *, batch, width, shift):
    # xn : (T*B, C) token-major activations, sel : (T*B, C) int32 selector
    #   0 -> take roll by +shift pixels along W (value from w-shift)
    #   1 -> take roll by -shift (value from w+shift)
    #   2 -> take roll by +shift rows along H (value from h-shift)
    #   3 -> take roll by -shift rows along H (value from h+shift)
    #   4 -> passthrough (channels >= 4*gamma*C)
    #   5 -> zero (image-border rows of the shifted quarters)
    # Rolls are XLU sublane rotations; the wrap-around / cross-image rows are
    # exactly the border rows, which the selector zeroes.
    TB = xn.shape[0]
    sh_r = pltpu.roll(xn, shift * batch, 0)
    sh_l = pltpu.roll(xn, TB - shift * batch, 0)
    sh_d = pltpu.roll(xn, shift * width * batch, 0)
    sh_u = pltpu.roll(xn, TB - shift * width * batch, 0)
    return jnp.where(sel == 0, sh_r,
           jnp.where(sel == 1, sh_l,
           jnp.where(sel == 2, sh_d,
           jnp.where(sel == 3, sh_u,
           jnp.where(sel == 4, xn, 0.0)))))


# ----------------------------- Pallas kernels ---------------------------------

def _linear_kernel(x_ref, w_ref, b_ref, o_ref):
    o_ref[...] = jnp.dot(_bf16(x_ref[...]), w_ref[...],
                         preferred_element_type=jnp.float32) + b_ref[...]


def _head_kernel(x_ref, w1_ref, b1_ref, w2_ref, b2_ref, o_ref):
    # fn1 + fn2 fused; fn2 columns pre-padded to 128 for a lane-dense store.
    hmid = jnp.dot(_bf16(x_ref[...]), w1_ref[...],
                   preferred_element_type=jnp.float32) + b1_ref[...]
    o_ref[...] = jnp.dot(_bf16(hmid), w2_ref[...],
                         preferred_element_type=jnp.float32) + b2_ref[...]


def _block_kernel(x_ref, vec_ref, sel_ref, wk_ref, wv_ref, wr_ref, wo_ref,
                  fwk_ref, fwv_ref, fwr_ref, o_ref, k_s, v_s, y_s,
                  *, batch, height, width, shift, apply_ln0, unroll):
    T = height * width
    C = x_ref.shape[-1]

    def vec(i):                                   # (1, C) row of the param table
        return vec_ref[pl.ds(i, 1), :]

    sel = sel_ref[...]
    x = x_ref[...]
    if apply_ln0:                                 # layer 0 only (static flag)
        x = _ln(x, vec(_LN0_G), vec(_LN0_B))

    # ---------------- spatial mix (attention) ----------------
    xn = _ln(x, vec(_LN1_G), vec(_LN1_B))
    xx = _q_shift(xn, sel, batch=batch, width=width, shift=shift)
    mk, mv, mr = vec(_MIX_K), vec(_MIX_V), vec(_MIX_R)
    xk = xn * mk + xx * (1.0 - mk)
    xv = xn * mv + xx * (1.0 - mv)
    xr = xn * mr + xx * (1.0 - mr)
    # M = T*B rows per matmul -> full MXU M fill.
    k_s[...] = jnp.dot(_bf16(xk), wk_ref[...], preferred_element_type=jnp.float32)
    v_s[...] = jnp.dot(_bf16(xv), wv_ref[...], preferred_element_type=jnp.float32)
    sr = jax.nn.sigmoid(
        jnp.dot(_bf16(xr), wr_ref[...], preferred_element_type=jnp.float32))

    # ---------------- WKV recurrence ----------------
    # wkv_cuda.cu kernel_forward, vectorized over the contiguous (batch, C) slab
    # of each time step.  One-exp trick: no = max(a, b) => one of the two
    # exponentials is exactly 1, so compute exp(-|a-b|) once and select.
    w = jnp.broadcast_to(vec(_WKV_W), (batch, C))   # hoisted broadcasts
    u = jnp.broadcast_to(vec(_WKV_U), (batch, C))

    def step(t, p, q, o):
        base = t * batch
        kt = k_s[pl.ds(base, batch), :]
        vt = v_s[pl.ds(base, batch), :]
        uk = u + kt
        d = o - uk                                  # no = max(o, uk)
        e = jnp.exp(-jnp.abs(d))
        pos = d >= 0.0
        a = jnp.where(pos, 1.0, e)                  # exp(o - no)
        b = jnp.where(pos, e, 1.0)                  # exp(uk - no)
        y_s[pl.ds(base, batch), :] = (
            (a * p + b * vt) * pl.reciprocal(a * q + b, approx=True))
        wo = w + o
        d2 = wo - kt                                # no2 = max(wo, kt)
        e2 = jnp.exp(-jnp.abs(d2))
        pos2 = d2 >= 0.0
        a2 = jnp.where(pos2, 1.0, e2)
        b2 = jnp.where(pos2, e2, 1.0)
        return a2 * p + b2 * vt, a2 * q + b2, jnp.maximum(wo, kt)

    def body(i, carry):
        p, q, o = carry
        for j in range(unroll):                     # static unroll for LLO visibility
            p, q, o = step(i * unroll + j, p, q, o)
        return p, q, o

    init = (jnp.zeros((batch, C), jnp.float32),
            jnp.zeros((batch, C), jnp.float32),
            jnp.full((batch, C), -1e38, jnp.float32))
    lax.fori_loop(0, T // unroll, body, init)

    att = jnp.dot(_bf16(sr * y_s[...]), wo_ref[...],
                  preferred_element_type=jnp.float32)
    x = x + vec(_GAMMA1) * att

    # ---------------- channel mix (ffn) ----------------
    xn2 = _ln(x, vec(_LN2_G), vec(_LN2_B))
    xx2 = _q_shift(xn2, sel, batch=batch, width=width, shift=shift)
    fmk, fmr = vec(_FMIX_K), vec(_FMIX_R)
    xk2 = xn2 * fmk + xx2 * (1.0 - fmk)
    xr2 = xn2 * fmr + xx2 * (1.0 - fmr)
    kk = jnp.dot(_bf16(xk2), fwk_ref[...], preferred_element_type=jnp.float32)
    kk = jnp.square(jnp.maximum(kk, 0.0))
    kv = jnp.dot(_bf16(kk), fwv_ref[...], preferred_element_type=jnp.float32)
    r = jax.nn.sigmoid(
        jnp.dot(_bf16(xr2), fwr_ref[...], preferred_element_type=jnp.float32))
    o_ref[...] = x + vec(_GAMMA2) * (r * kv)


# ----------------------------- kernel wrappers ---------------------------------

def _row_tile(n):
    for tm in (512, 256, 128, 64, 32, 16, 8):
        if n % tm == 0:
            return tm
    return n


def patch_embed(x2d, w, b):
    N, K = x2d.shape
    kp = max(8, ((K + 7) // 8) * 8)
    if kp != K:                                   # pad tiny contracting dim (cin=1)
        x2d = jnp.pad(x2d, ((0, 0), (0, kp - K)))
        w = jnp.pad(w, ((0, kp - K), (0, 0)))
    cout = w.shape[1]
    tm = _row_tile(N)
    return pl.pallas_call(
        _linear_kernel,
        grid=(N // tm,),
        in_specs=[pl.BlockSpec((tm, kp), lambda i: (i, 0)),
                  pl.BlockSpec((kp, cout), lambda i: (0, 0)),
                  pl.BlockSpec((1, cout), lambda i: (0, 0))],
        out_specs=pl.BlockSpec((tm, cout), lambda i: (i, 0)),
        out_shape=jax.ShapeDtypeStruct((N, cout), jnp.float32),
        compiler_params=pltpu.CompilerParams(dimension_semantics=("parallel",)),
    )(x2d, w, b[None, :])


def head(x2d, w1, b1, w2, b2):
    N, C = x2d.shape
    ch, co = w1.shape[1], w2.shape[1]
    cop = 128                                     # lane-dense output store
    w2p = jnp.pad(w2, ((0, 0), (0, cop - co)))
    b2p = jnp.pad(b2, ((0, cop - co),))
    tm = _row_tile(N)
    out = pl.pallas_call(
        _head_kernel,
        grid=(N // tm,),
        in_specs=[pl.BlockSpec((tm, C), lambda i: (i, 0)),
                  pl.BlockSpec((C, ch), lambda i: (0, 0)),
                  pl.BlockSpec((1, ch), lambda i: (0, 0)),
                  pl.BlockSpec((ch, cop), lambda i: (0, 0)),
                  pl.BlockSpec((1, cop), lambda i: (0, 0))],
        out_specs=pl.BlockSpec((tm, cop), lambda i: (i, 0)),
        out_shape=jax.ShapeDtypeStruct((N, cop), jnp.float32),
        compiler_params=pltpu.CompilerParams(dimension_semantics=("parallel",)),
    )(x2d, w1, b1[None, :], w2p, b2p[None, :])
    return out[:, :co]


def block_layer(x, p, sel, *, batch, height, width, apply_ln0):
    TB, C = x.shape
    T = height * width
    hid = p['ffn_wk'].shape[1]
    unroll = 8 if T % 8 == 0 else (4 if T % 4 == 0 else 1)

    vecs = jnp.stack([
        p['ln0_g'], p['ln0_b'], p['ln1_g'], p['ln1_b'], p['ln2_g'], p['ln2_b'],
        p['att_mix_k'], p['att_mix_v'], p['att_mix_r'],
        p['ffn_mix_k'], p['ffn_mix_r'],
        p['gamma1'], p['gamma2'],
        p['spatial_decay'] / T, p['spatial_first'] / T,
        jnp.zeros((C,), jnp.float32),
    ]).astype(jnp.float32)                          # (16, C) packed vector params

    # VMEM budget: activations/scratch (f32) + weights (bf16) + f32 intermediates,
    # with headroom; capped at 48 MiB so the same tile is safe on v7x (64 MiB/TC).
    est_bytes = (4 * (6 * TB * C + _NVEC * C + TB * hid)
                 + 2 * (4 * C * C + 2 * C * hid))
    vmem_limit = int(min(48 * 2**20, max(32 * 2**20, 4 * est_bytes)))

    full2 = lambda shp: pl.BlockSpec(shp, lambda i: (0, 0))
    kernel = functools.partial(
        _block_kernel, batch=batch, height=height, width=width,
        shift=SHIFT_PIXEL, apply_ln0=apply_ln0, unroll=unroll)

    return pl.pallas_call(
        kernel,
        grid=(1,),
        in_specs=[full2((TB, C)), full2((_NVEC, C)), full2((TB, C)),
                  full2((C, C)), full2((C, C)), full2((C, C)), full2((C, C)),
                  full2((C, hid)), full2((hid, C)), full2((C, C))],
        out_specs=full2((TB, C)),
        out_shape=jax.ShapeDtypeStruct((TB, C), jnp.float32),
        scratch_shapes=[pltpu.VMEM((TB, C), jnp.float32),   # k
                        pltpu.VMEM((TB, C), jnp.float32),   # v
                        pltpu.VMEM((TB, C), jnp.float32)],  # rwkv
        compiler_params=pltpu.CompilerParams(
            dimension_semantics=("arbitrary",),
            vmem_limit_bytes=vmem_limit),
    )(x, vecs, sel, p['att_wk'], p['att_wv'], p['att_wr'], p['att_wo'],
      p['ffn_wk'], p['ffn_wv'], p['ffn_wr'])


# ----------------------------- model assembly ---------------------------------

def build_shift_selector(batch, height, width, shift, channels, g):
    # int32 (T*B, C) selector for _q_shift (see its docstring for the encoding).
    T = height * width
    t = np.arange(T)
    w = t % width
    h = t // width
    valid = np.stack([w >= shift, w < width - shift,
                      h >= shift, h < height - shift], axis=1)        # (T, 4)
    per_quarter = np.where(valid, np.arange(4)[None, :], 5).astype(np.int32)
    sel = np.full((T, channels), 4, np.int32)
    for q in range(4):
        lo, hi = q * g, min((q + 1) * g, channels)
        if lo < hi:
            sel[:, lo:hi] = per_quarter[:, q][:, None]
    sel = np.repeat(sel, batch, axis=0)                               # token-major
    return jnp.asarray(sel)


def vrwkv_forward(x, params, patch_resolution, depth):
    B, T, cin = x.shape
    H, W = patch_resolution
    assert T == H * W and SHIFT_PIXEL * W * B < T * B
    C = params['pe_w'].shape[1]
    g = int(C * CHANNEL_GAMMA)
    sel = build_shift_selector(B, H, W, SHIFT_PIXEL, C, g)

    # Token-major layout (row = t*B + b): WKV batch slabs are contiguous and the
    # projection matmuls run with M = B*T rows.  Only these two tiny boundary
    # transposes exist -- no per-layer layout glue.
    xt = jnp.transpose(x, (1, 0, 2)).reshape(T * B, cin)
    h = patch_embed(xt, params['pe_w'], params['pe_b'])
    for i in range(depth):
        h = block_layer(h, params['layers'][i], sel,
                        batch=B, height=H, width=W, apply_ln0=(i == 0))
    y = head(h, params['fn1_w'], params['fn1_b'], params['fn2_w'], params['fn2_b'])
    return jnp.transpose(y.reshape(T, B, -1), (1, 0, 2))


# --------------------------- deterministic init --------------------------------

def init_params(key, in_ch, C, depth, hidden_rate=4):
    def lin(k, fan_in, fan_out):
        s = 1.0 / math.sqrt(fan_in)
        # weights stored as (in, out) so kernels compute x @ W; bf16 for MXU/DMA.
        w = jax.random.uniform(k, (fan_in, fan_out), jnp.float32, -s, s)
        return w.astype(jnp.bfloat16)

    keys = jax.random.split(key, 3 + depth)
    params = {
        'pe_w': lin(keys[0], in_ch, C),
        'pe_b': jnp.zeros((C,), jnp.float32),
        'fn1_w': lin(keys[1], C, C // 2),
        'fn1_b': jnp.zeros((C // 2,), jnp.float32),
        'fn2_w': lin(keys[2], C // 2, 2),
        'fn2_b': jnp.zeros((2,), jnp.float32),
    }

    idx = jnp.arange(C, dtype=jnp.float32)
    layers = []
    hid = hidden_rate * C
    for i in range(depth):
        lk = jax.random.split(keys[3 + i], 7)
        r01 = i / (depth - 1) if depth > 1 else 0.0
        r1a0 = 1.0 - i / depth
        decay_speed = -5.0 + 8.0 * (idx / (C - 1)) ** (0.7 + 1.3 * r01)
        zigzag = (((jnp.arange(C) + 1) % 3) - 1).astype(jnp.float32) * 0.5
        spatial_first = jnp.full((C,), math.log(0.3), jnp.float32) + zigzag
        frac = idx / C
        layer = dict(
            ln0_g=jnp.ones((C,), jnp.float32), ln0_b=jnp.zeros((C,), jnp.float32),
            ln1_g=jnp.ones((C,), jnp.float32), ln1_b=jnp.zeros((C,), jnp.float32),
            ln2_g=jnp.ones((C,), jnp.float32), ln2_b=jnp.zeros((C,), jnp.float32),
            gamma1=jnp.ones((C,), jnp.float32), gamma2=jnp.ones((C,), jnp.float32),
            spatial_decay=decay_speed.astype(jnp.float32),
            spatial_first=spatial_first,
            att_mix_k=(frac ** r1a0).astype(jnp.float32),
            att_mix_v=(frac ** r1a0 + 0.3 * r01).astype(jnp.float32),
            att_mix_r=(frac ** (0.5 * r1a0)).astype(jnp.float32),
            att_wk=lin(lk[0], C, C),
            att_wv=lin(lk[1], C, C),
            att_wr=lin(lk[2], C, C),
            att_wo=lin(lk[3], C, C),
            ffn_mix_k=(frac ** r1a0).astype(jnp.float32),
            ffn_mix_r=(frac ** r1a0).astype(jnp.float32),
            ffn_wk=lin(lk[4], C, hid),
            ffn_wv=lin(lk[5], hid, C),
            ffn_wr=lin(lk[6], C, C),
        )
        layers.append(layer)
    params['layers'] = layers
    return params


# ------------------------------------ main -------------------------------------

if __name__ == "__main__":
    B = 2
    H, W = 8, 8                 # VRWKV hard-codes patch_resolution = (8, 8)
    T = H * W                   # 64 tokens
    in_channels = 1
    embed_dims = 128            # small config, lane-aligned (multiple of 128)
    depth = 2
    hidden_rate = 4

    key = jax.random.PRNGKey(0)
    pkey, xkey = jax.random.split(key)
    params = init_params(pkey, in_channels, embed_dims, depth, hidden_rate)
    x = jax.random.normal(xkey, (B, T, in_channels), jnp.float32)

    fwd = jax.jit(lambda xx, pp: vrwkv_forward(xx, pp, (H, W), depth))
    out = jax.block_until_ready(fwd(x, params))

    assert out.shape == (B, T, 2)
    assert bool(jnp.all(jnp.isfinite(out)))
    print("KERNEL_OK")
</pallas_src>

<mosaic_0001>
module attributes {stable_mosaic.version = 11 : i64} {
  func.func @_linear_kernel(%arg0: i32, %arg1: memref<128x8xf32, #tpu.memory_space<vmem>>, %arg2: memref<8x128xbf16, #tpu.memory_space<vmem>>, %arg3: memref<1x128xf32, #tpu.memory_space<vmem>>, %arg4: memref<128x128xf32, #tpu.memory_space<vmem>>) attributes {dimension_semantics = [#tpu.dimension_semantics<parallel>], iteration_bounds = array<i64: 1>, scalar_prefetch = 0 : i64, scratch_operands = 0 : i64, tpu.core_type = #tpu.core_type<tc>, window_params = [{transform_indices = @transform_0, window_bounds = array<i64: 128, 8>}, {pipeline_mode = #tpu.pipeline_mode<synchronous>, transform_indices = @transform_1, window_bounds = array<i64: 8, 128>}, {pipeline_mode = #tpu.pipeline_mode<synchronous>, transform_indices = @transform_2, window_bounds = array<i64: 1, 128>}, {transform_indices = @transform_3, window_bounds = array<i64: 128, 128>}]} {
    %c0 = arith.constant 0 : index
    %c0_0 = arith.constant 0 : index
    %0 = vector.load %arg1[%c0, %c0_0] : memref<128x8xf32, #tpu.memory_space<vmem>>, vector<128x8xf32>
    %1 = arith.truncf %0 : vector<128x8xf32> to vector<128x8xbf16>
    %c0_1 = arith.constant 0 : index
    %c0_2 = arith.constant 0 : index
    %2 = vector.load %arg2[%c0_1, %c0_2] : memref<8x128xbf16, #tpu.memory_space<vmem>>, vector<8x128xbf16>
    %cst = arith.constant dense<0.000000e+00> : vector<128x128xf32>
    %3 = tpu.matmul %1, %2, %cst {dimension_numbers = #tpu.dot_dimension_numbers<[1], [0], [0], [1], [0, 0, 1, 1], [], []>} : vector<128x8xbf16>, vector<8x128xbf16>, vector<128x128xf32> -> vector<128x128xf32>
    %c0_3 = arith.constant 0 : index
    %c0_4 = arith.constant 0 : index
    %4 = vector.load %arg3[%c0_3, %c0_4] : memref<1x128xf32, #tpu.memory_space<vmem>>, vector<1x128xf32>
    %5 = vector.broadcast %4 : vector<1x128xf32> to vector<128x128xf32>
    %6 = arith.addf %3, %5 : vector<128x128xf32>
    %c0_5 = arith.constant 0 : index
    %c0_6 = arith.constant 0 : index
    %7 = vector.load %arg4[%c0_5, %c0_6] : memref<128x128xf32, #tpu.memory_space<vmem>>, vector<128x128xf32>
    tpu.vector_store %arg4[%c0_5, %c0_6], %6 {strides = array<i32>} : memref<128x128xf32, #tpu.memory_space<vmem>>, vector<128x128xf32>,
    return
  }
  func.func @transform_0(%arg0: i32) -> (i32, i32) {
    %c0_i32 = arith.constant 0 : i32
    %c0_i32_0 = arith.constant 0 : i32
    return %arg0, %c0_i32 : i32, i32
  }
  func.func @transform_1(%arg0: i32) -> (i32, i32) {
    %c0_i32 = arith.constant 0 : i32
    %c0_i32_0 = arith.constant 0 : i32
    %c0_i32_1 = arith.constant 0 : i32
    return %c0_i32, %c0_i32_0 : i32, i32
  }
  func.func @transform_2(%arg0: i32) -> (i32, i32) {
    %c0_i32 = arith.constant 0 : i32
    %c0_i32_0 = arith.constant 0 : i32
    %c0_i32_1 = arith.constant 0 : i32
    return %c0_i32, %c0_i32_0 : i32, i32
  }
  func.func @transform_3(%arg0: i32) -> (i32, i32) {
    %c0_i32 = arith.constant 0 : i32
    %c0_i32_0 = arith.constant 0 : i32
    return %arg0, %c0_i32 : i32, i32
  }
}

module attributes {stable_mosaic.version = 11 : i64} {
  func.func @_head_kernel(%arg0: i32, %arg1: memref<128x128xf32, #tpu.memory_space<vmem>>, %arg2: memref<128x64xbf16, #tpu.memory_space<vmem>>, %arg3: memref<1x64xf32, #tpu.memory_space<vmem>>, %arg4: memref<64x128xbf16, #tpu.memory_space<vmem>>, %arg5: memref<1x128xf32, #tpu.memory_space<vmem>>, %arg6: memref<128x128xf32, #tpu.memory_space<vmem>>) attributes {dimension_semantics = [#tpu.dimension_semantics<parallel>], iteration_bounds = array<i64: 1>, scalar_prefetch = 0 : i64, scratch_operands = 0 : i64, tpu.core_type = #tpu.core_type<tc>, window_params = [{transform_indices = @transform_0, window_bounds = array<i64: 128, 128>}, {pipeline_mode = #tpu.pipeline_mode<synchronous>, transform_indices = @transform_1, window_bounds = array<i64: 128, 64>}, {pipeline_mode = #tpu.pipeline_mode<synchronous>, transform_indices = @transform_2, window_bounds = array<i64: 1, 64>}, {pipeline_mode = #tpu.pipeline_mode<synchronous>, transform_indices = @transform_3, window_bounds = array<i64: 64, 128>}, {pipeline_mode = #tpu.pipeline_mode<synchronous>, transform_indices = @transform_4, window_bounds = array<i64: 1, 128>}, {transform_indices = @transform_5, window_bounds = array<i64: 128, 128>}]} {
    %c0 = arith.constant 0 : index
    %c0_0 = arith.constant 0 : index
    %0 = vector.load %arg1[%c0, %c0_0] : memref<128x128xf32, #tpu.memory_space<vmem>>, vector<128x128xf32>
    %1 = arith.truncf %0 : vector<128x128xf32> to vector<128x128xbf16>
    %c0_1 = arith.constant 0 : index
    %c0_2 = arith.constant 0 : index
    %2 = vector.load %arg2[%c0_1, %c0_2] : memref<128x64xbf16, #tpu.memory_space<vmem>>, vector<128x64xbf16>
    %cst = arith.constant dense<0.000000e+00> : vector<128x64xf32>
    %3 = tpu.matmul %1, %2, %cst {dimension_numbers = #tpu.dot_dimension_numbers<[1], [0], [0], [1], [0, 0, 1, 1], [], []>} : vector<128x128xbf16>, vector<128x64xbf16>, vector<128x64xf32> -> vector<128x64xf32>
    %c0_3 = arith.constant 0 : index
    %c0_4 = arith.constant 0 : index
    %4 = vector.load %arg3[%c0_3, %c0_4] : memref<1x64xf32, #tpu.memory_space<vmem>>, vector<1x64xf32>
    %5 = vector.broadcast %4 : vector<1x64xf32> to vector<128x64xf32>
    %6 = arith.addf %3, %5 : vector<128x64xf32>
    %7 = arith.truncf %6 : vector<128x64xf32> to vector<128x64xbf16>
    %c0_5 = arith.constant 0 : index
    %c0_6 = arith.constant 0 : index
    %8 = vector.load %arg4[%c0_5, %c0_6] : memref<64x128xbf16, #tpu.memory_space<vmem>>, vector<64x128xbf16>
    %cst_7 = arith.constant dense<0.000000e+00> : vector<128x128xf32>
    %9 = tpu.matmul %7, %8, %cst_7 {dimension_numbers = #tpu.dot_dimension_numbers<[1], [0], [0], [1], [0, 0, 1, 1], [], []>} : vector<128x64xbf16>, vector<64x128xbf16>, vector<128x128xf32> -> vector<128x128xf32>
    %c0_8 = arith.constant 0 : index
    %c0_9 = arith.constant 0 : index
    %10 = vector.load %arg5[%c0_8, %c0_9] : memref<1x128xf32, #tpu.memory_space<vmem>>, vector<1x128xf32>
    %11 = vector.broadcast %10 : vector<1x128xf32> to vector<128x128xf32>
    %12 = arith.addf %9, %11 : vector<128x128xf32>
    %c0_10 = arith.constant 0 : index
    %c0_11 = arith.constant 0 : index
    %13 = vector.load %arg6[%c0_10, %c0_11] : memref<128x128xf32, #tpu.memory_space<vmem>>, vector<128x128xf32>
    tpu.vector_store %arg6[%c0_10, %c0_11], %12 {strides = array<i32>} : memref<128x128xf32, #tpu.memory_space<vmem>>, vector<128x128xf32>,
    return
  }
  func.func @transform_0(%arg0: i32) -> (i32, i32) {
    %c0_i32 = arith.constant 0 : i32
    %c0_i32_0 = arith.constant 0 : i32
    return %arg0, %c0_i32 : i32, i32
  }
  func.func @transform_1(%arg0: i32) -> (i32, i32) {
    %c0_i32 = arith.constant 0 : i32
    %c0_i32_0 = arith.constant 0 : i32
    %c0_i32_1 = arith.constant 0 : i32
    return %c0_i32, %c0_i32_0 : i32, i32
  }
  func.func @transform_2(%arg0: i32) -> (i32, i32) {
    %c0_i32 = arith.constant 0 : i32
    %c0_i32_0 = arith.constant 0 : i32
    %c0_i32_1 = arith.constant 0 : i32
    return %c0_i32, %c0_i32_0 : i32, i32
  }
  func.func @transform_3(%arg0: i32) -> (i32, i32) {
    %c0_i32 = arith.constant 0 : i32
    %c0_i32_0 = arith.constant 0 : i32
    %c0_i32_1 = arith.constant 0 : i32
    return %c0_i32, %c0_i32_0 : i32, i32
  }
  func.func @transform_4(%arg0: i32) -> (i32, i32) {
    %c0_i32 = arith.constant 0 : i32
    %c0_i32_0 = arith.constant 0 : i32
    %c0_i32_1 = arith.constant 0 : i32
    return %c0_i32, %c0_i32_0 : i32, i32
  }
  func.func @transform_5(%arg0: i32) -> (i32, i32) {
    %c0_i32 = arith.constant 0 : i32
    %c0_i32_0 = arith.constant 0 : i32
    return %arg0, %c0_i32 : i32, i32
  }
}

module attributes {stable_mosaic.version = 11 : i64} {
  func.func @_block_kernel(%arg0: i32, %arg1: memref<128x128xf32, #tpu.memory_space<vmem>>, %arg2: memref<16x128xf32, #tpu.memory_space<vmem>>, %arg3: memref<128x128xi32, #tpu.memory_space<vmem>>, %arg4: memref<128x128xbf16, #tpu.memory_space<vmem>>, %arg5: memref<128x128xbf16, #tpu.memory_space<vmem>>, %arg6: memref<128x128xbf16, #tpu.memory_space<vmem>>, %arg7: memref<128x128xbf16, #tpu.memory_space<vmem>>, %arg8: memref<128x512xbf16, #tpu.memory_space<vmem>>, %arg9: memref<512x128xbf16, #tpu.memory_space<vmem>>, %arg10: memref<128x128xbf16, #tpu.memory_space<vmem>>, %arg11: memref<128x128xf32, #tpu.memory_space<vmem>>, %arg12: memref<128x128xf32, #tpu.memory_space<vmem>>, %arg13: memref<128x128xf32, #tpu.memory_space<vmem>>, %arg14: memref<128x128xf32, #tpu.memory_space<vmem>>) attributes {dimension_semantics = [#tpu.dimension_semantics<arbitrary>], iteration_bounds = array<i64: 1>, scalar_prefetch = 0 : i64, scratch_operands = 3 : i64, tpu.core_type = #tpu.core_type<tc>, window_params = [{pipeline_mode = #tpu.pipeline_mode<synchronous>, transform_indices = @transform_0, window_bounds = array<i64: 128, 128>}, {pipeline_mode = #tpu.pipeline_mode<synchronous>, transform_indices = @transform_1, window_bounds = array<i64: 16, 128>}, {pipeline_mode = #tpu.pipeline_mode<synchronous>, transform_indices = @transform_2, window_bounds = array<i64: 128, 128>}, {pipeline_mode = #tpu.pipeline_mode<synchronous>, transform_indices = @transform_3, window_bounds = array<i64: 128, 128>}, {pipeline_mode = #tpu.pipeline_mode<synchronous>, transform_indices = @transform_4, window_bounds = array<i64: 128, 128>}, {pipeline_mode = #tpu.pipeline_mode<synchronous>, transform_indices = @transform_5, window_bounds = array<i64: 128, 128>}, {pipeline_mode = #tpu.pipeline_mode<synchronous>, transform_indices = @transform_6, window_bounds = array<i64: 128, 128>}, {pipeline_mode = #tpu.pipeline_mode<synchronous>, transform_indices = @transform_7, window_bounds = array<i64: 128, 512>}, {pipeline_mode = #tpu.pipeline_mode<synchronous>, transform_indices = @transform_8, window_bounds = array<i64: 512, 128>}, {pipeline_mode = #tpu.pipeline_mode<synchronous>, transform_indices = @transform_9, window_bounds = array<i64: 128, 128>}, {pipeline_mode = #tpu.pipeline_mode<synchronous>, transform_indices = @transform_10, window_bounds = array<i64: 128, 128>}]} {
    %c0 = arith.constant 0 : index
    %c0_0 = arith.constant 0 : index
    %0 = vector.load %arg3[%c0, %c0_0] : memref<128x128xi32, #tpu.memory_space<vmem>>, vector<128x128xi32>
    %c0_1 = arith.constant 0 : index
    %c0_2 = arith.constant 0 : index
    %1 = vector.load %arg1[%c0_1, %c0_2] : memref<128x128xf32, #tpu.memory_space<vmem>>, vector<128x128xf32>
    %c0_3 = arith.constant 0 : index
    %c0_4 = arith.constant 0 : index
    %2 = vector.load %arg2[%c0_3, %c0_4] : memref<16x128xf32, #tpu.memory_space<vmem>>, vector<1x128xf32>
    %c1 = arith.constant 1 : index
    %c0_5 = arith.constant 0 : index
    %3 = vector.load %arg2[%c1, %c0_5] : memref<16x128xf32, #tpu.memory_space<vmem>>, vector<1x128xf32>
    %cst = arith.constant dense<0.000000e+00> : vector<128xf32>
    %4 = vector.multi_reduction <add>, %1, %cst [1] : vector<128x128xf32> to vector<128xf32>
    %5 = vector.shape_cast %4 : vector<128xf32> to vector<128x1xf32>
    %cst_6 = arith.constant 1.280000e+02 : f32
    %6 = vector.broadcast %cst_6 : f32 to vector<128x1xf32>
    %7 = arith.divf %5, %6 : vector<128x1xf32>
    %8 = vector.broadcast %7 : vector<128x1xf32> to vector<128x128xf32>
    %9 = arith.subf %1, %8 : vector<128x128xf32>
    %10 = arith.mulf %9, %9 : vector<128x128xf32>
    %cst_7 = arith.constant dense<0.000000e+00> : vector<128xf32>
    %11 = vector.multi_reduction <add>, %10, %cst_7 [1] : vector<128x128xf32> to vector<128xf32>
    %12 = vector.shape_cast %11 : vector<128xf32> to vector<128x1xf32>
    %cst_8 = arith.constant 1.280000e+02 : f32
    %13 = vector.broadcast %cst_8 : f32 to vector<128x1xf32>
    %14 = arith.divf %12, %13 : vector<128x1xf32>
    %15 = vector.broadcast %7 : vector<128x1xf32> to vector<128x128xf32>
    %16 = arith.subf %1, %15 : vector<128x128xf32>
    %cst_9 = arith.constant 9.99999974E-6 : f32
    %17 = vector.broadcast %cst_9 : f32 to vector<128x1xf32>
    %18 = arith.addf %14, %17 : vector<128x1xf32>
    %19 = math.rsqrt %18 : vector<128x1xf32>
    %20 = vector.broadcast %19 : vector<128x1xf32> to vector<128x128xf32>
    %21 = arith.mulf %16, %20 : vector<128x128xf32>
    %22 = vector.broadcast %2 : vector<1x128xf32> to vector<128x128xf32>
    %23 = arith.mulf %21, %22 : vector<128x128xf32>
    %24 = vector.broadcast %3 : vector<1x128xf32> to vector<128x128xf32>
    %25 = arith.addf %23, %24 : vector<128x128xf32>
    %c2 = arith.constant 2 : index
    %c0_10 = arith.constant 0 : index
    %26 = vector.load %arg2[%c2, %c0_10] : memref<16x128xf32, #tpu.memory_space<vmem>>, vector<1x128xf32>
    %c3 = arith.constant 3 : index
    %c0_11 = arith.constant 0 : index
    %27 = vector.load %arg2[%c3, %c0_11] : memref<16x128xf32, #tpu.memory_space<vmem>>, vector<1x128xf32>
    %cst_12 = arith.constant dense<0.000000e+00> : vector<128xf32>
    %28 = vector.multi_reduction <add>, %25, %cst_12 [1] : vector<128x128xf32> to vector<128xf32>
    %29 = vector.shape_cast %28 : vector<128xf32> to vector<128x1xf32>
    %cst_13 = arith.constant 1.280000e+02 : f32
    %30 = vector.broadcast %cst_13 : f32 to vector<128x1xf32>
    %31 = arith.divf %29, %30 : vector<128x1xf32>
    %32 = vector.broadcast %31 : vector<128x1xf32> to vector<128x128xf32>
    %33 = arith.subf %25, %32 : vector<128x128xf32>
    %34 = arith.mulf %33, %33 : vector<128x128xf32>
    %cst_14 = arith.constant dense<0.000000e+00> : vector<128xf32>
    %35 = vector.multi_reduction <add>, %34, %cst_14 [1] : vector<128x128xf32> to vector<128xf32>
    %36 = vector.shape_cast %35 : vector<128xf32> to vector<128x1xf32>
    %cst_15 = arith.constant 1.280000e+02 : f32
    %37 = vector.broadcast %cst_15 : f32 to vector<128x1xf32>
    %38 = arith.divf %36, %37 : vector<128x1xf32>
    %39 = vector.broadcast %31 : vector<128x1xf32> to vector<128x128xf32>
    %40 = arith.subf %25, %39 : vector<128x128xf32>
    %cst_16 = arith.constant 9.99999974E-6 : f32
    %41 = vector.broadcast %cst_16 : f32 to vector<128x1xf32>
    %42 = arith.addf %38, %41 : vector<128x1xf32>
    %43 = math.rsqrt %42 : vector<128x1xf32>
    %44 = vector.broadcast %43 : vector<128x1xf32> to vector<128x128xf32>
    %45 = arith.mulf %40, %44 : vector<128x128xf32>
    %46 = vector.broadcast %26 : vector<1x128xf32> to vector<128x128xf32>
    %47 = arith.mulf %45, %46 : vector<128x128xf32>
    %48 = vector.broadcast %27 : vector<1x128xf32> to vector<128x128xf32>
    %49 = arith.addf %47, %48 : vector<128x128xf32>
    %c2_i32 = arith.constant 2 : i32
    %50 = tpu.dynamic_rotate %49 by %c2_i32 dim 0 : vector<128x128xf32>, i32 -> vector<128x128xf32>
    %c126_i32 = arith.constant 126 : i32
    %51 = tpu.dynamic_rotate %49 by %c126_i32 dim 0 : vector<128x128xf32>, i32 -> vector<128x128xf32>
    %c16_i32 = arith.constant 16 : i32
    %52 = tpu.dynamic_rotate %49 by %c16_i32 dim 0 : vector<128x128xf32>, i32 -> vector<128x128xf32>
    %c112_i32 = arith.constant 112 : i32
    %53 = tpu.dynamic_rotate %49 by %c112_i32 dim 0 : vector<128x128xf32>, i32 -> vector<128x128xf32>
    %c0_i32 = arith.constant 0 : i32
    %54 = vector.broadcast %c0_i32 : i32 to vector<128x128xi32>
    %55 = arith.cmpi eq, %0, %54 : vector<128x128xi32>
    %c1_i32 = arith.constant 1 : i32
    %56 = vector.broadcast %c1_i32 : i32 to vector<128x128xi32>
    %57 = arith.cmpi eq, %0, %56 : vector<128x128xi32>
    %c2_i32_17 = arith.constant 2 : i32
    %58 = vector.broadcast %c2_i32_17 : i32 to vector<128x128xi32>
    %59 = arith.cmpi eq, %0, %58 : vector<128x128xi32>
    %c3_i32 = arith.constant 3 : i32
    %60 = vector.broadcast %c3_i32 : i32 to vector<128x128xi32>
    %61 = arith.cmpi eq, %0, %60 : vector<128x128xi32>
    %c4_i32 = arith.constant 4 : i32
    %62 = vector.broadcast %c4_i32 : i32 to vector<128x128xi32>
    %63 = arith.cmpi eq, %0, %62 : vector<128x128xi32>
    %cst_18 = arith.constant 0.000000e+00 : f32
    %64 = vector.broadcast %cst_18 : f32 to vector<128x128xf32>
    %65 = arith.select %63, %49, %64 : vector<128x128xi1>, vector<128x128xf32>
    %66 = arith.select %61, %53, %65 : vector<128x128xi1>, vector<128x128xf32>
    %67 = arith.select %59, %52, %66 : vector<128x128xi1>, vector<128x128xf32>
    %68 = arith.select %57, %51, %67 : vector<128x128xi1>, vector<128x128xf32>
    %69 = arith.select %55, %50, %68 : vector<128x128xi1>, vector<128x128xf32>
    %c6 = arith.constant 6 : index
    %c0_19 = arith.constant 0 : index
    %70 = vector.load %arg2[%c6, %c0_19] : memref<16x128xf32, #tpu.memory_space<vmem>>, vector<1x128xf32>
    %c7 = arith.constant 7 : index
    %c0_20 = arith.constant 0 : index
    %71 = vector.load %arg2[%c7, %c0_20] : memref<16x128xf32, #tpu.memory_space<vmem>>, vector<1x128xf32>
    %c8 = arith.constant 8 : index
    %c0_21 = arith.constant 0 : index
    %72 = vector.load %arg2[%c8, %c0_21] : memref<16x128xf32, #tpu.memory_space<vmem>>, vector<1x128xf32>
    %73 = vector.broadcast %70 : vector<1x128xf32> to vector<128x128xf32>
    %74 = arith.mulf %49, %73 : vector<128x128xf32>
    %cst_22 = arith.constant 1.000000e+00 : f32
    %75 = vector.broadcast %cst_22 : f32 to vector<1x128xf32>
    %76 = arith.subf %75, %70 : vector<1x128xf32>
    %77 = vector.broadcast %76 : vector<1x128xf32> to vector<128x128xf32>
    %78 = arith.mulf %69, %77 : vector<128x128xf32>
    %79 = arith.addf %74, %78 : vector<128x128xf32>
    %80 = vector.broadcast %71 : vector<1x128xf32> to vector<128x128xf32>
    %81 = arith.mulf %49, %80 : vector<128x128xf32>
    %cst_23 = arith.constant 1.000000e+00 : f32
    %82 = vector.broadcast %cst_23 : f32 to vector<1x128xf32>
    %83 = arith.subf %82, %71 : vector<1x128xf32>
    %84 = vector.broadcast %83 : vector<1x128xf32> to vector<128x128xf32>
    %85 = arith.mulf %69, %84 : vector<128x128xf32>
    %86 = arith.addf %81, %85 : vector<128x128xf32>
    %87 = vector.broadcast %72 : vector<1x128xf32> to vector<128x128xf32>
    %88 = arith.mulf %49, %87 : vector<128x128xf32>
    %cst_24 = arith.constant 1.000000e+00 : f32
    %89 = vector.broadcast %cst_24 : f32 to vector<1x128xf32>
    %90 = arith.subf %89, %72 : vector<1x128xf32>
    %91 = vector.broadcast %90 : vector<1x128xf32> to vector<128x128xf32>
    %92 = arith.mulf %69, %91 : vector<128x128xf32>
    %93 = arith.addf %88, %92 : vector<128x128xf32>
    %94 = arith.truncf %79 : vector<128x128xf32> to vector<128x128xbf16>
    %c0_25 = arith.constant 0 : index
    %c0_26 = arith.constant 0 : index
    %95 = vector.load %arg4[%c0_25, %c0_26] : memref<128x128xbf16, #tpu.memory_space<vmem>>, vector<128x128xbf16>
    %cst_27 = arith.constant dense<0.000000e+00> : vector<128x128xf32>
    %96 = tpu.matmul %94, %95, %cst_27 {dimension_numbers = #tpu.dot_dimension_numbers<[1], [0], [0], [1], [0, 0, 1, 1], [], []>} : vector<128x128xbf16>, vector<128x128xbf16>, vector<128x128xf32> -> vector<128x128xf32>
    %c0_28 = arith.constant 0 : index
    %c0_29 = arith.constant 0 : index
    %97 = vector.load %arg12[%c0_28, %c0_29] : memref<128x128xf32, #tpu.memory_space<vmem>>, vector<128x128xf32>
    tpu.vector_store %arg12[%c0_28, %c0_29], %96 {strides = array<i32>} : memref<128x128xf32, #tpu.memory_space<vmem>>, vector<128x128xf32>,
    %98 = arith.truncf %86 : vector<128x128xf32> to vector<128x128xbf16>
    %c0_30 = arith.constant 0 : index
    %c0_31 = arith.constant 0 : index
    %99 = vector.load %arg5[%c0_30, %c0_31] : memref<128x128xbf16, #tpu.memory_space<vmem>>, vector<128x128xbf16>
    %cst_32 = arith.constant dense<0.000000e+00> : vector<128x128xf32>
    %100 = tpu.matmul %98, %99, %cst_32 {dimension_numbers = #tpu.dot_dimension_numbers<[1], [0], [0], [1], [0, 0, 1, 1], [], []>} : vector<128x128xbf16>, vector<128x128xbf16>, vector<128x128xf32> -> vector<128x128xf32>
    %c0_33 = arith.constant 0 : index
    %c0_34 = arith.constant 0 : index
    %101 = vector.load %arg13[%c0_33, %c0_34] : memref<128x128xf32, #tpu.memory_space<vmem>>, vector<128x128xf32>
    tpu.vector_store %arg13[%c0_33, %c0_34], %100 {strides = array<i32>} : memref<128x128xf32, #tpu.memory_space<vmem>>, vector<128x128xf32>,
    %102 = arith.truncf %93 : vector<128x128xf32> to vector<128x128xbf16>
    %c0_35 = arith.constant 0 : index
    %c0_36 = arith.constant 0 : index
    %103 = vector.load %arg6[%c0_35, %c0_36] : memref<128x128xbf16, #tpu.memory_space<vmem>>, vector<128x128xbf16>
    %cst_37 = arith.constant dense<0.000000e+00> : vector<128x128xf32>
    %104 = tpu.matmul %102, %103, %cst_37 {dimension_numbers = #tpu.dot_dimension_numbers<[1], [0], [0], [1], [0, 0, 1, 1], [], []>} : vector<128x128xbf16>, vector<128x128xbf16>, vector<128x128xf32> -> vector<128x128xf32>
    %105 = arith.negf %104 : vector<128x128xf32>
    %106 = math.exp %105 : vector<128x128xf32>
    %cst_38 = arith.constant 1.000000e+00 : f32
    %107 = vector.broadcast %cst_38 : f32 to vector<128x128xf32>
    %108 = arith.addf %107, %106 : vector<128x128xf32>
    %109 = arith.divf %107, %108 : vector<128x128xf32>
    %c13 = arith.constant 13 : index
    %c0_39 = arith.constant 0 : index
    %110 = vector.load %arg2[%c13, %c0_39] : memref<16x128xf32, #tpu.memory_space<vmem>>, vector<1x128xf32>
    %111 = vector.shape_cast %110 : vector<1x128xf32> to vector<1x128xf32>
    %112 = vector.broadcast %111 : vector<1x128xf32> to vector<2x128xf32>
    %c14 = arith.constant 14 : index
    %c0_40 = arith.constant 0 : index
    %113 = vector.load %arg2[%c14, %c0_40] : memref<16x128xf32, #tpu.memory_space<vmem>>, vector<1x128xf32>
    %114 = vector.shape_cast %113 : vector<1x128xf32> to vector<1x128xf32>
    %115 = vector.broadcast %114 : vector<1x128xf32> to vector<2x128xf32>
    %cst_41 = arith.constant 0.000000e+00 : f32
    %116 = vector.broadcast %cst_41 : f32 to vector<2x128xf32>
    %cst_42 = arith.constant 0.000000e+00 : f32
    %117 = vector.broadcast %cst_42 : f32 to vector<2x128xf32>
    %cst_43 = arith.constant -9.99999968E+37 : f32
    %118 = vector.broadcast %cst_43 : f32 to vector<2x128xf32>
    %c0_i32_44 = arith.constant 0 : i32
    %c8_i32 = arith.constant 8 : i32
    %119 = arith.addi %c0_i32_44, %c8_i32 : i32
    %c1_i32_45 = arith.constant 1 : i32
    %120:3 = scf.for %arg15 = %c0_i32_44 to %119 step %c1_i32_45 iter_args(%arg16 = %116, %arg17 = %117, %arg18 = %118) -> (vector<2x128xf32>, vector<2x128xf32>, vector<2x128xf32>)  : i32 {
      %c8_i32_88 = arith.constant 8 : i32
      %213 = arith.muli %arg15, %c8_i32_88 : i32
      %c0_i32_89 = arith.constant 0 : i32
      %214 = arith.addi %213, %c0_i32_89 : i32
      %c2_i32_90 = arith.constant 2 : i32
      %215 = arith.muli %214, %c2_i32_90 : i32
      %216 = arith.index_cast %215 : i32 to index
      %c0_91 = arith.constant 0 : index
      %217 = vector.load %arg12[%216, %c0_91] : memref<128x128xf32, #tpu.memory_space<vmem>>, vector<2x128xf32>
      %218 = arith.index_cast %215 : i32 to index
      %c0_92 = arith.constant 0 : index
      %219 = vector.load %arg13[%218, %c0_92] : memref<128x128xf32, #tpu.memory_space<vmem>>, vector<2x128xf32>
      %220 = arith.addf %115, %217 : vector<2x128xf32>
      %221 = arith.subf %arg18, %220 : vector<2x128xf32>
      %222 = math.absf %221 : vector<2x128xf32>
      %cst_93 = arith.constant 0.000000e+00 : f32
      %223 = vector.broadcast %cst_93 : f32 to vector<2x128xf32>
      %224 = arith.subf %223, %222 : vector<2x128xf32>
      %225 = math.exp %224 : vector<2x128xf32>
      %cst_94 = arith.constant 0.000000e+00 : f32
      %226 = vector.broadcast %cst_94 : f32 to vector<2x128xf32>
      %227 = arith.cmpf oge, %221, %226 : vector<2x128xf32>
      %cst_95 = arith.constant 1.000000e+00 : f32
      %228 = vector.broadcast %cst_95 : f32 to vector<2x128xf32>
      %229 = arith.select %227, %228, %225 : vector<2x128xi1>, vector<2x128xf32>
      %cst_96 = arith.constant 1.000000e+00 : f32
      %230 = vector.broadcast %cst_96 : f32 to vector<2x128xf32>
      %231 = arith.select %227, %225, %230 : vector<2x128xi1>, vector<2x128xf32>
      %232 = arith.mulf %229, %arg16 : vector<2x128xf32>
      %233 = arith.mulf %231, %219 : vector<2x128xf32>
      %234 = arith.addf %232, %233 : vector<2x128xf32>
      %235 = arith.mulf %229, %arg17 : vector<2x128xf32>
      %236 = arith.addf %235, %231 : vector<2x128xf32>
      %237 = tpu.reciprocal %236 {approx = true} : vector<2x128xf32> -> vector<2x128xf32>
      %238 = arith.mulf %234, %237 : vector<2x128xf32>
      %239 = arith.index_cast %215 : i32 to index
      %c0_97 = arith.constant 0 : index
      %240 = vector.load %arg14[%239, %c0_97] : memref<128x128xf32, #tpu.memory_space<vmem>>, vector<2x128xf32>
      tpu.vector_store %arg14[%239, %c0_97], %238 {strides = array<i32>} : memref<128x128xf32, #tpu.memory_space<vmem>>, vector<2x128xf32>,
      %241 = arith.addf %112, %arg18 : vector<2x128xf32>
      %242 = arith.subf %241, %217 : vector<2x128xf32>
      %243 = math.absf %242 : vector<2x128xf32>
      %cst_98 = arith.constant 0.000000e+00 : f32
      %244 = vector.broadcast %cst_98 : f32 to vector<2x128xf32>
      %245 = arith.subf %244, %243 : vector<2x128xf32>
      %246 = math.exp %245 : vector<2x128xf32>
      %cst_99 = arith.constant 0.000000e+00 : f32
      %247 = vector.broadcast %cst_99 : f32 to vector<2x128xf32>
      %248 = arith.cmpf oge, %242, %247 : vector<2x128xf32>
      %cst_100 = arith.constant 1.000000e+00 : f32
      %249 = vector.broadcast %cst_100 : f32 to vector<2x128xf32>
      %250 = arith.select %248, %249, %246 : vector<2x128xi1>, vector<2x128xf32>
      %cst_101 = arith.constant 1.000000e+00 : f32
      %251 = vector.broadcast %cst_101 : f32 to vector<2x128xf32>
      %252 = arith.select %248, %246, %251 : vector<2x128xi1>, vector<2x128xf32>
      %253 = arith.mulf %250, %arg16 : vector<2x128xf32>
      %254 = arith.mulf %252, %219 : vector<2x128xf32>
      %255 = arith.addf %253, %254 : vector<2x128xf32>
      %256 = arith.mulf %250, %arg17 : vector<2x128xf32>
      %257 = arith.addf %256, %252 : vector<2x128xf32>
      %258 = arith.maximumf %241, %217 : vector<2x128xf32>
      %c8_i32_102 = arith.constant 8 : i32
      %259 = arith.muli %arg15, %c8_i32_102 : i32
      %c1_i32_103 = arith.constant 1 : i32
      %260 = arith.addi %259, %c1_i32_103 : i32
      %c2_i32_104 = arith.constant 2 : i32
      %261 = arith.muli %260, %c2_i32_104 : i32
      %262 = arith.index_cast %261 : i32 to index
      %c0_105 = arith.constant 0 : index
      %263 = vector.load %arg12[%262, %c0_105] : memref<128x128xf32, #tpu.memory_space<vmem>>, vector<2x128xf32>
      %264 = arith.index_cast %261 : i32 to index
      %c0_106 = arith.constant 0 : index
      %265 = vector.load %arg13[%264, %c0_106] : memref<128x128xf32, #tpu.memory_space<vmem>>, vector<2x128xf32>
      %266 = arith.addf %115, %263 : vector<2x128xf32>
      %267 = arith.subf %258, %266 : vector<2x128xf32>
      %268 = math.absf %267 : vector<2x128xf32>
      %cst_107 = arith.constant 0.000000e+00 : f32
      %269 = vector.broadcast %cst_107 : f32 to vector<2x128xf32>
      %270 = arith.subf %269, %268 : vector<2x128xf32>
      %271 = math.exp %270 : vector<2x128xf32>
      %cst_108 = arith.constant 0.000000e+00 : f32
      %272 = vector.broadcast %cst_108 : f32 to vector<2x128xf32>
      %273 = arith.cmpf oge, %267, %272 : vector<2x128xf32>
      %cst_109 = arith.constant 1.000000e+00 : f32
      %274 = vector.broadcast %cst_109 : f32 to vector<2x128xf32>
      %275 = arith.select %273, %274, %271 : vector<2x128xi1>, vector<2x128xf32>
      %cst_110 = arith.constant 1.000000e+00 : f32
      %276 = vector.broadcast %cst_110 : f32 to vector<2x128xf32>
      %277 = arith.select %273, %271, %276 : vector<2x128xi1>, vector<2x128xf32>
      %278 = arith.mulf %275, %255 : vector<2x128xf32>
      %279 = arith.mulf %277, %265 : vector<2x128xf32>
      %280 = arith.addf %278, %279 : vector<2x128xf32>
      %281 = arith.mulf %275, %257 : vector<2x128xf32>
      %282 = arith.addf %281, %277 : vector<2x128xf32>
      %283 = tpu.reciprocal %282 {approx = true} : vector<2x128xf32> -> vector<2x128xf32>
      %284 = arith.mulf %280, %283 : vector<2x128xf32>
      %285 = arith.index_cast %261 : i32 to index
      %c0_111 = arith.constant 0 : index
      %286 = vector.load %arg14[%285, %c0_111] : memref<128x128xf32, #tpu.memory_space<vmem>>, vector<2x128xf32>
      tpu.vector_store %arg14[%285, %c0_111], %284 {strides = array<i32>} : memref<128x128xf32, #tpu.memory_space<vmem>>, vector<2x128xf32>,
      %287 = arith.addf %112, %258 : vector<2x128xf32>
      %288 = arith.subf %287, %263 : vector<2x128xf32>
      %289 = math.absf %288 : vector<2x128xf32>
      %cst_112 = arith.constant 0.000000e+00 : f32
      %290 = vector.broadcast %cst_112 : f32 to vector<2x128xf32>
      %291 = arith.subf %290, %289 : vector<2x128xf32>
      %292 = math.exp %291 : vector<2x128xf32>
      %cst_113 = arith.constant 0.000000e+00 : f32
      %293 = vector.broadcast %cst_113 : f32 to vector<2x128xf32>
      %294 = arith.cmpf oge, %288, %293 : vector<2x128xf32>
      %cst_114 = arith.constant 1.000000e+00 : f32
      %295 = vector.broadcast %cst_114 : f32 to vector<2x128xf32>
      %296 = arith.select %294, %295, %292 : vector<2x128xi1>, vector<2x128xf32>
      %cst_115 = arith.constant 1.000000e+00 : f32
      %297 = vector.broadcast %cst_115 : f32 to vector<2x128xf32>
      %298 = arith.select %294, %292, %297 : vector<2x128xi1>, vector<2x128xf32>
      %299 = arith.mulf %296, %255 : vector<2x128xf32>
      %300 = arith.mulf %298, %265 : vector<2x128xf32>
      %301 = arith.addf %299, %300 : vector<2x128xf32>
      %302 = arith.mulf %296, %257 : vector<2x128xf32>
      %303 = arith.addf %302, %298 : vector<2x128xf32>
      %304 = arith.maximumf %287, %263 : vector<2x128xf32>
      %c8_i32_116 = arith.constant 8 : i32
      %305 = arith.muli %arg15, %c8_i32_116 : i32
      %c2_i32_117 = arith.constant 2 : i32
      %306 = arith.addi %305, %c2_i32_117 : i32
      %c2_i32_118 = arith.constant 2 : i32
      %307 = arith.muli %306, %c2_i32_118 : i32
      %308 = arith.index_cast %307 : i32 to index
      %c0_119 = arith.constant 0 : index
      %309 = vector.load %arg12[%308, %c0_119] : memref<128x128xf32, #tpu.memory_space<vmem>>, vector<2x128xf32>
      %310 = arith.index_cast %307 : i32 to index
      %c0_120 = arith.constant 0 : index
      %311 = vector.load %arg13[%310, %c0_120] : memref<128x128xf32, #tpu.memory_space<vmem>>, vector<2x128xf32>
      %312 = arith.addf %115, %309 : vector<2x128xf32>
      %313 = arith.subf %304, %312 : vector<2x128xf32>
      %314 = math.absf %313 : vector<2x128xf32>
      %cst_121 = arith.constant 0.000000e+00 : f32
      %315 = vector.broadcast %cst_121 : f32 to vector<2x128xf32>
      %316 = arith.subf %315, %314 : vector<2x128xf32>
      %317 = math.exp %316 : vector<2x128xf32>
      %cst_122 = arith.constant 0.000000e+00 : f32
      %318 = vector.broadcast %cst_122 : f32 to vector<2x128xf32>
      %319 = arith.cmpf oge, %313, %318 : vector<2x128xf32>
      %cst_123 = arith.constant 1.000000e+00 : f32
      %320 = vector.broadcast %cst_123 : f32 to vector<2x128xf32>
      %321 = arith.select %319, %320, %317 : vector<2x128xi1>, vector<2x128xf32>
      %cst_124 = arith.constant 1.000000e+00 : f32
      %322 = vector.broadcast %cst_124 : f32 to vector<2x128xf32>
      %323 = arith.select %319, %317, %322 : vector<2x128xi1>, vector<2x128xf32>
      %324 = arith.mulf %321, %301 : vector<2x128xf32>
      %325 = arith.mulf %323, %311 : vector<2x128xf32>
      %326 = arith.addf %324, %325 : vector<2x128xf32>
      %327 = arith.mulf %321, %303 : vector<2x128xf32>
      %328 = arith.addf %327, %323 : vector<2x128xf32>
      %329 = tpu.reciprocal %328 {approx = true} : vector<2x128xf32> -> vector<2x128xf32>
      %330 = arith.mulf %326, %329 : vector<2x128xf32>
      %331 = arith.index_cast %307 : i32 to index
      %c0_125 = arith.constant 0 : index
      %332 = vector.load %arg14[%331, %c0_125] : memref<128x128xf32, #tpu.memory_space<vmem>>, vector<2x128xf32>
      tpu.vector_store %arg14[%331, %c0_125], %330 {strides = array<i32>} : memref<128x128xf32, #tpu.memory_space<vmem>>, vector<2x128xf32>,
      %333 = arith.addf %112, %304 : vector<2x128xf32>
      %334 = arith.subf %333, %309 : vector<2x128xf32>
      %335 = math.absf %334 : vector<2x128xf32>
      %cst_126 = arith.constant 0.000000e+00 : f32
      %336 = vector.broadcast %cst_126 : f32 to vector<2x128xf32>
      %337 = arith.subf %336, %335 : vector<2x128xf32>
      %338 = math.exp %337 : vector<2x128xf32>
      %cst_127 = arith.constant 0.000000e+00 : f32
      %339 = vector.broadcast %cst_127 : f32 to vector<2x128xf32>
      %340 = arith.cmpf oge, %334, %339 : vector<2x128xf32>
      %cst_128 = arith.constant 1.000000e+00 : f32
      %341 = vector.broadcast %cst_128 : f32 to vector<2x128xf32>
      %342 = arith.select %340, %341, %338 : vector<2x128xi1>, vector<2x128xf32>
      %cst_129 = arith.constant 1.000000e+00 : f32
      %343 = vector.broadcast %cst_129 : f32 to vector<2x128xf32>
      %344 = arith.select %340, %338, %343 : vector<2x128xi1>, vector<2x128xf32>
      %345 = arith.mulf %342, %301 : vector<2x128xf32>
      %346 = arith.mulf %344, %311 : vector<2x128xf32>
      %347 = arith.addf %345, %346 : vector<2x128xf32>
      %348 = arith.mulf %342, %303 : vector<2x128xf32>
      %349 = arith.addf %348, %344 : vector<2x128xf32>
      %350 = arith.maximumf %333, %309 : vector<2x128xf32>
      %c8_i32_130 = arith.constant 8 : i32
      %351 = arith.muli %arg15, %c8_i32_130 : i32
      %c3_i32_131 = arith.constant 3 : i32
      %352 = arith.addi %351, %c3_i32_131 : i32
      %c2_i32_132 = arith.constant 2 : i32
      %353 = arith.muli %352, %c2_i32_132 : i32
      %354 = arith.index_cast %353 : i32 to index
      %c0_133 = arith.constant 0 : index
      %355 = vector.load %arg12[%354, %c0_133] : memref<128x128xf32, #tpu.memory_space<vmem>>, vector<2x128xf32>
      %356 = arith.index_cast %353 : i32 to index
      %c0_134 = arith.constant 0 : index
      %357 = vector.load %arg13[%356, %c0_134] : memref<128x128xf32, #tpu.memory_space<vmem>>, vector<2x128xf32>
      %358 = arith.addf %115, %355 : vector<2x128xf32>
      %359 = arith.subf %350, %358 : vector<2x128xf32>
      %360 = math.absf %359 : vector<2x128xf32>
      %cst_135 = arith.constant 0.000000e+00 : f32
      %361 = vector.broadcast %cst_135 : f32 to vector<2x128xf32>
      %362 = arith.subf %361, %360 : vector<2x128xf32>
      %363 = math.exp %362 : vector<2x128xf32>
      %cst_136 = arith.constant 0.000000e+00 : f32
      %364 = vector.broadcast %cst_136 : f32 to vector<2x128xf32>
      %365 = arith.cmpf oge, %359, %364 : vector<2x128xf32>
      %cst_137 = arith.constant 1.000000e+00 : f32
      %366 = vector.broadcast %cst_137 : f32 to vector<2x128xf32>
      %367 = arith.select %365, %366, %363 : vector<2x128xi1>, vector<2x128xf32>
      %cst_138 = arith.constant 1.000000e+00 : f32
      %368 = vector.broadcast %cst_138 : f32 to vector<2x128xf32>
      %369 = arith.select %365, %363, %368 : vector<2x128xi1>, vector<2x128xf32>
      %370 = arith.mulf %367, %347 : vector<2x128xf32>
      %371 = arith.mulf %369, %357 : vector<2x128xf32>
      %372 = arith.addf %370, %371 : vector<2x128xf32>
      %373 = arith.mulf %367, %349 : vector<2x128xf32>
      %374 = arith.addf %373, %369 : vector<2x128xf32>
      %375 = tpu.reciprocal %374 {approx = true} : vector<2x128xf32> -> vector<2x128xf32>
      %376 = arith.mulf %372, %375 : vector<2x128xf32>
      %377 = arith.index_cast %353 : i32 to index
      %c0_139 = arith.constant 0 : index
      %378 = vector.load %arg14[%377, %c0_139] : memref<128x128xf32, #tpu.memory_space<vmem>>, vector<2x128xf32>
      tpu.vector_store %arg14[%377, %c0_139], %376 {strides = array<i32>} : memref<128x128xf32, #tpu.memory_space<vmem>>, vector<2x128xf32>,
      %379 = arith.addf %112, %350 : vector<2x128xf32>
      %380 = arith.subf %379, %355 : vector<2x128xf32>
      %381 = math.absf %380 : vector<2x128xf32>
      %cst_140 = arith.constant 0.000000e+00 : f32
      %382 = vector.broadcast %cst_140 : f32 to vector<2x128xf32>
      %383 = arith.subf %382, %381 : vector<2x128xf32>
      %384 = math.exp %383 : vector<2x128xf32>
      %cst_141 = arith.constant 0.000000e+00 : f32
      %385 = vector.broadcast %cst_141 : f32 to vector<2x128xf32>
      %386 = arith.cmpf oge, %380, %385 : vector<2x128xf32>
      %cst_142 = arith.constant 1.000000e+00 : f32
      %387 = vector.broadcast %cst_142 : f32 to vector<2x128xf32>
      %388 = arith.select %386, %387, %384 : vector<2x128xi1>, vector<2x128xf32>
      %cst_143 = arith.constant 1.000000e+00 : f32
      %389 = vector.broadcast %cst_143 : f32 to vector<2x128xf32>
      %390 = arith.select %386, %384, %389 : vector<2x128xi1>, vector<2x128xf32>
      %391 = arith.mulf %388, %347 : vector<2x128xf32>
      %392 = arith.mulf %390, %357 : vector<2x128xf32>
      %393 = arith.addf %391, %392 : vector<2x128xf32>
      %394 = arith.mulf %388, %349 : vector<2x128xf32>
      %395 = arith.addf %394, %390 : vector<2x128xf32>
      %396 = arith.maximumf %379, %355 : vector<2x128xf32>
      %c8_i32_144 = arith.constant 8 : i32
      %397 = arith.muli %arg15, %c8_i32_144 : i32
      %c4_i32_145 = arith.constant 4 : i32
      %398 = arith.addi %397, %c4_i32_145 : i32
      %c2_i32_146 = arith.constant 2 : i32
      %399 = arith.muli %398, %c2_i32_146 : i32
      %400 = arith.index_cast %399 : i32 to index
      %c0_147 = arith.constant 0 : index
      %401 = vector.load %arg12[%400, %c0_147] : memref<128x128xf32, #tpu.memory_space<vmem>>, vector<2x128xf32>
      %402 = arith.index_cast %399 : i32 to index
      %c0_148 = arith.constant 0 : index
      %403 = vector.load %arg13[%402, %c0_148] : memref<128x128xf32, #tpu.memory_space<vmem>>, vector<2x128xf32>
      %404 = arith.addf %115, %401 : vector<2x128xf32>
      %405 = arith.subf %396, %404 : vector<2x128xf32>
      %406 = math.absf %405 : vector<2x128xf32>
      %cst_149 = arith.constant 0.000000e+00 : f32
      %407 = vector.broadcast %cst_149 : f32 to vector<2x128xf32>
      %408 = arith.subf %407, %406 : vector<2x128xf32>
      %409 = math.exp %408 : vector<2x128xf32>
      %cst_150 = arith.constant 0.000000e+00 : f32
      %410 = vector.broadcast %cst_150 : f32 to vector<2x128xf32>
      %411 = arith.cmpf oge, %405, %410 : vector<2x128xf32>
      %cst_151 = arith.constant 1.000000e+00 : f32
      %412 = vector.broadcast %cst_151 : f32 to vector<2x128xf32>
      %413 = arith.select %411, %412, %409 : vector<2x128xi1>, vector<2x128xf32>
      %cst_152 = arith.constant 1.000000e+00 : f32
      %414 = vector.broadcast %cst_152 : f32 to vector<2x128xf32>
      %415 = arith.select %411, %409, %414 : vector<2x128xi1>, vector<2x128xf32>
      %416 = arith.mulf %413, %393 : vector<2x128xf32>
      %417 = arith.mulf %415, %403 : vector<2x128xf32>
      %418 = arith.addf %416, %417 : vector<2x128xf32>
      %419 = arith.mulf %413, %395 : vector<2x128xf32>
      %420 = arith.addf %419, %415 : vector<2x128xf32>
      %421 = tpu.reciprocal %420 {approx = true} : vector<2x128xf32> -> vector<2x128xf32>
      %422 = arith.mulf %418, %421 : vector<2x128xf32>
      %423 = arith.index_cast %399 : i32 to index
      %c0_153 = arith.constant 0 : index
      %424 = vector.load %arg14[%423, %c0_153] : memref<128x128xf32, #tpu.memory_space<vmem>>, vector<2x128xf32>
      tpu.vector_store %arg14[%423, %c0_153], %422 {strides = array<i32>} : memref<128x128xf32, #tpu.memory_space<vmem>>, vector<2x128xf32>,
      %425 = arith.addf %112, %396 : vector<2x128xf32>
      %426 = arith.subf %425, %401 : vector<2x128xf32>
      %427 = math.absf %426 : vector<2x128xf32>
      %cst_154 = arith.constant 0.000000e+00 : f32
      %428 = vector.broadcast %cst_154 : f32 to vector<2x128xf32>
      %429 = arith.subf %428, %427 : vector<2x128xf32>
      %430 = math.exp %429 : vector<2x128xf32>
      %cst_155 = arith.constant 0.000000e+00 : f32
      %431 = vector.broadcast %cst_155 : f32 to vector<2x128xf32>
      %432 = arith.cmpf oge, %426, %431 : vector<2x128xf32>
      %cst_156 = arith.constant 1.000000e+00 : f32
      %433 = vector.broadcast %cst_156 : f32 to vector<2x128xf32>
      %434 = arith.select %432, %433, %430 : vector<2x128xi1>, vector<2x128xf32>
      %cst_157 = arith.constant 1.000000e+00 : f32
      %435 = vector.broadcast %cst_157 : f32 to vector<2x128xf32>
      %436 = arith.select %432, %430, %435 : vector<2x128xi1>, vector<2x128xf32>
      %437 = arith.mulf %434, %393 : vector<2x128xf32>
      %438 = arith.mulf %436, %403 : vector<2x128xf32>
      %439 = arith.addf %437, %438 : vector<2x128xf32>
      %440 = arith.mulf %434, %395 : vector<2x128xf32>
      %441 = arith.addf %440, %436 : vector<2x128xf32>
      %442 = arith.maximumf %425, %401 : vector<2x128xf32>
      %c8_i32_158 = arith.constant 8 : i32
      %443 = arith.muli %arg15, %c8_i32_158 : i32
      %c5_i32 = arith.constant 5 : i32
      %444 = arith.addi %443, %c5_i32 : i32
      %c2_i32_159 = arith.constant 2 : i32
      %445 = arith.muli %444, %c2_i32_159 : i32
      %446 = arith.index_cast %445 : i32 to index
      %c0_160 = arith.constant 0 : index
      %447 = vector.load %arg12[%446, %c0_160] : memref<128x128xf32, #tpu.memory_space<vmem>>, vector<2x128xf32>
      %448 = arith.index_cast %445 : i32 to index
      %c0_161 = arith.constant 0 : index
      %449 = vector.load %arg13[%448, %c0_161] : memref<128x128xf32, #tpu.memory_space<vmem>>, vector<2x128xf32>
      %450 = arith.addf %115, %447 : vector<2x128xf32>
      %451 = arith.subf %442, %450 : vector<2x128xf32>
      %452 = math.absf %451 : vector<2x128xf32>
      %cst_162 = arith.constant 0.000000e+00 : f32
      %453 = vector.broadcast %cst_162 : f32 to vector<2x128xf32>
      %454 = arith.subf %453, %452 : vector<2x128xf32>
      %455 = math.exp %454 : vector<2x128xf32>
      %cst_163 = arith.constant 0.000000e+00 : f32
      %456 = vector.broadcast %cst_163 : f32 to vector<2x128xf32>
      %457 = arith.cmpf oge, %451, %456 : vector<2x128xf32>
      %cst_164 = arith.constant 1.000000e+00 : f32
      %458 = vector.broadcast %cst_164 : f32 to vector<2x128xf32>
      %459 = arith.select %457, %458, %455 : vector<2x128xi1>, vector<2x128xf32>
      %cst_165 = arith.constant 1.000000e+00 : f32
      %460 = vector.broadcast %cst_165 : f32 to vector<2x128xf32>
      %461 = arith.select %457, %455, %460 : vector<2x128xi1>, vector<2x128xf32>
      %462 = arith.mulf %459, %439 : vector<2x128xf32>
      %463 = arith.mulf %461, %449 : vector<2x128xf32>
      %464 = arith.addf %462, %463 : vector<2x128xf32>
      %465 = arith.mulf %459, %441 : vector<2x128xf32>
      %466 = arith.addf %465, %461 : vector<2x128xf32>
      %467 = tpu.reciprocal %466 {approx = true} : vector<2x128xf32> -> vector<2x128xf32>
      %468 = arith.mulf %464, %467 : vector<2x128xf32>
      %469 = arith.index_cast %445 : i32 to index
      %c0_166 = arith.constant 0 : index
      %470 = vector.load %arg14[%469, %c0_166] : memref<128x128xf32, #tpu.memory_space<vmem>>, vector<2x128xf32>
      tpu.vector_store %arg14[%469, %c0_166], %468 {strides = array<i32>} : memref<128x128xf32, #tpu.memory_space<vmem>>, vector<2x128xf32>,
      %471 = arith.addf %112, %442 : vector<2x128xf32>
      %472 = arith.subf %471, %447 : vector<2x128xf32>
      %473 = math.absf %472 : vector<2x128xf32>
      %cst_167 = arith.constant 0.000000e+00 : f32
      %474 = vector.broadcast %cst_167 : f32 to vector<2x128xf32>
      %475 = arith.subf %474, %473 : vector<2x128xf32>
      %476 = math.exp %475 : vector<2x128xf32>
      %cst_168 = arith.constant 0.000000e+00 : f32
      %477 = vector.broadcast %cst_168 : f32 to vector<2x128xf32>
      %478 = arith.cmpf oge, %472, %477 : vector<2x128xf32>
      %cst_169 = arith.constant 1.000000e+00 : f32
      %479 = vector.broadcast %cst_169 : f32 to vector<2x128xf32>
      %480 = arith.select %478, %479, %476 : vector<2x128xi1>, vector<2x128xf32>
      %cst_170 = arith.constant 1.000000e+00 : f32
      %481 = vector.broadcast %cst_170 : f32 to vector<2x128xf32>
      %482 = arith.select %478, %476, %481 : vector<2x128xi1>, vector<2x128xf32>
      %483 = arith.mulf %480, %439 : vector<2x128xf32>
      %484 = arith.mulf %482, %449 : vector<2x128xf32>
      %485 = arith.addf %483, %484 : vector<2x128xf32>
      %486 = arith.mulf %480, %441 : vector<2x128xf32>
      %487 = arith.addf %486, %482 : vector<2x128xf32>
      %488 = arith.maximumf %471, %447 : vector<2x128xf32>
      %c8_i32_171 = arith.constant 8 : i32
      %489 = arith.muli %arg15, %c8_i32_171 : i32
      %c6_i32 = arith.constant 6 : i32
      %490 = arith.addi %489, %c6_i32 : i32
      %c2_i32_172 = arith.constant 2 : i32
      %491 = arith.muli %490, %c2_i32_172 : i32
      %492 = arith.index_cast %491 : i32 to index
      %c0_173 = arith.constant 0 : index
      %493 = vector.load %arg12[%492, %c0_173] : memref<128x128xf32, #tpu.memory_space<vmem>>, vector<2x128xf32>
      %494 = arith.index_cast %491 : i32 to index
      %c0_174 = arith.constant 0 : index
      %495 = vector.load %arg13[%494, %c0_174] : memref<128x128xf32, #tpu.memory_space<vmem>>, vector<2x128xf32>
      %496 = arith.addf %115, %493 : vector<2x128xf32>
      %497 = arith.subf %488, %496 : vector<2x128xf32>
      %498 = math.absf %497 : vector<2x128xf32>
      %cst_175 = arith.constant 0.000000e+00 : f32
      %499 = vector.broadcast %cst_175 : f32 to vector<2x128xf32>
      %500 = arith.subf %499, %498 : vector<2x128xf32>
      %501 = math.exp %500 : vector<2x128xf32>
      %cst_176 = arith.constant 0.000000e+00 : f32
      %502 = vector.broadcast %cst_176 : f32 to vector<2x128xf32>
      %503 = arith.cmpf oge, %497, %502 : vector<2x128xf32>
      %cst_177 = arith.constant 1.000000e+00 : f32
      %504 = vector.broadcast %cst_177 : f32 to vector<2x128xf32>
      %505 = arith.select %503, %504, %501 : vector<2x128xi1>, vector<2x128xf32>
      %cst_178 = arith.constant 1.000000e+00 : f32
      %506 = vector.broadcast %cst_178 : f32 to vector<2x128xf32>
      %507 = arith.select %503, %501, %506 : vector<2x128xi1>, vector<2x128xf32>
      %508 = arith.mulf %505, %485 : vector<2x128xf32>
      %509 = arith.mulf %507, %495 : vector<2x128xf32>
      %510 = arith.addf %508, %509 : vector<2x128xf32>
      %511 = arith.mulf %505, %487 : vector<2x128xf32>
      %512 = arith.addf %511, %507 : vector<2x128xf32>
      %513 = tpu.reciprocal %512 {approx = true} : vector<2x128xf32> -> vector<2x128xf32>
      %514 = arith.mulf %510, %513 : vector<2x128xf32>
      %515 = arith.index_cast %491 : i32 to index
      %c0_179 = arith.constant 0 : index
      %516 = vector.load %arg14[%515, %c0_179] : memref<128x128xf32, #tpu.memory_space<vmem>>, vector<2x128xf32>
      tpu.vector_store %arg14[%515, %c0_179], %514 {strides = array<i32>} : memref<128x128xf32, #tpu.memory_space<vmem>>, vector<2x128xf32>,
      %517 = arith.addf %112, %488 : vector<2x128xf32>
      %518 = arith.subf %517, %493 : vector<2x128xf32>
      %519 = math.absf %518 : vector<2x128xf32>
      %cst_180 = arith.constant 0.000000e+00 : f32
      %520 = vector.broadcast %cst_180 : f32 to vector<2x128xf32>
      %521 = arith.subf %520, %519 : vector<2x128xf32>
      %522 = math.exp %521 : vector<2x128xf32>
      %cst_181 = arith.constant 0.000000e+00 : f32
      %523 = vector.broadcast %cst_181 : f32 to vector<2x128xf32>
      %524 = arith.cmpf oge, %518, %523 : vector<2x128xf32>
      %cst_182 = arith.constant 1.000000e+00 : f32
      %525 = vector.broadcast %cst_182 : f32 to vector<2x128xf32>
      %526 = arith.select %524, %525, %522 : vector<2x128xi1>, vector<2x128xf32>
      %cst_183 = arith.constant 1.000000e+00 : f32
      %527 = vector.broadcast %cst_183 : f32 to vector<2x128xf32>
      %528 = arith.select %524, %522, %527 : vector<2x128xi1>, vector<2x128xf32>
      %529 = arith.mulf %526, %485 : vector<2x128xf32>
      %530 = arith.mulf %528, %495 : vector<2x128xf32>
      %531 = arith.addf %529, %530 : vector<2x128xf32>
      %532 = arith.mulf %526, %487 : vector<2x128xf32>
      %533 = arith.addf %532, %528 : vector<2x128xf32>
      %534 = arith.maximumf %517, %493 : vector<2x128xf32>
      %c8_i32_184 = arith.constant 8 : i32
      %535 = arith.muli %arg15, %c8_i32_184 : i32
      %c7_i32 = arith.constant 7 : i32
      %536 = arith.addi %535, %c7_i32 : i32
      %c2_i32_185 = arith.constant 2 : i32
      %537 = arith.muli %536, %c2_i32_185 : i32
      %538 = arith.index_cast %537 : i32 to index
      %c0_186 = arith.constant 0 : index
      %539 = vector.load %arg12[%538, %c0_186] : memref<128x128xf32, #tpu.memory_space<vmem>>, vector<2x128xf32>
      %540 = arith.index_cast %537 : i32 to index
      %c0_187 = arith.constant 0 : index
      %541 = vector.load %arg13[%540, %c0_187] : memref<128x128xf32, #tpu.memory_space<vmem>>, vector<2x128xf32>
      %542 = arith.addf %115, %539 : vector<2x128xf32>
      %543 = arith.subf %534, %542 : vector<2x128xf32>
      %544 = math.absf %543 : vector<2x128xf32>
      %cst_188 = arith.constant 0.000000e+00 : f32
      %545 = vector.broadcast %cst_188 : f32 to vector<2x128xf32>
      %546 = arith.subf %545, %544 : vector<2x128xf32>
      %547 = math.exp %546 : vector<2x128xf32>
      %cst_189 = arith.constant 0.000000e+00 : f32
      %548 = vector.broadcast %cst_189 : f32 to vector<2x128xf32>
      %549 = arith.cmpf oge, %543, %548 : vector<2x128xf32>
      %cst_190 = arith.constant 1.000000e+00 : f32
      %550 = vector.broadcast %cst_190 : f32 to vector<2x128xf32>
      %551 = arith.select %549, %550, %547 : vector<2x128xi1>, vector<2x128xf32>
      %cst_191 = arith.constant 1.000000e+00 : f32
      %552 = vector.broadcast %cst_191 : f32 to vector<2x128xf32>
      %553 = arith.select %549, %547, %552 : vector<2x128xi1>, vector<2x128xf32>
      %554 = arith.mulf %551, %531 : vector<2x128xf32>
      %555 = arith.mulf %553, %541 : vector<2x128xf32>
      %556 = arith.addf %554, %555 : vector<2x128xf32>
      %557 = arith.mulf %551, %533 : vector<2x128xf32>
      %558 = arith.addf %557, %553 : vector<2x128xf32>
      %559 = tpu.reciprocal %558 {approx = true} : vector<2x128xf32> -> vector<2x128xf32>
      %560 = arith.mulf %556, %559 : vector<2x128xf32>
      %561 = arith.index_cast %537 : i32 to index
      %c0_192 = arith.constant 0 : index
      %562 = vector.load %arg14[%561, %c0_192] : memref<128x128xf32, #tpu.memory_space<vmem>>, vector<2x128xf32>
      tpu.vector_store %arg14[%561, %c0_192], %560 {strides = array<i32>} : memref<128x128xf32, #tpu.memory_space<vmem>>, vector<2x128xf32>,
      %563 = arith.addf %112, %534 : vector<2x128xf32>
      %564 = arith.subf %563, %539 : vector<2x128xf32>
      %565 = math.absf %564 : vector<2x128xf32>
      %cst_193 = arith.constant 0.000000e+00 : f32
      %566 = vector.broadcast %cst_193 : f32 to vector<2x128xf32>
      %567 = arith.subf %566, %565 : vector<2x128xf32>
      %568 = math.exp %567 : vector<2x128xf32>
      %cst_194 = arith.constant 0.000000e+00 : f32
      %569 = vector.broadcast %cst_194 : f32 to vector<2x128xf32>
      %570 = arith.cmpf oge, %564, %569 : vector<2x128xf32>
      %cst_195 = arith.constant 1.000000e+00 : f32
      %571 = vector.broadcast %cst_195 : f32 to vector<2x128xf32>
      %572 = arith.select %570, %571, %568 : vector<2x128xi1>, vector<2x128xf32>
      %cst_196 = arith.constant 1.000000e+00 : f32
      %573 = vector.broadcast %cst_196 : f32 to vector<2x128xf32>
      %574 = arith.select %570, %568, %573 : vector<2x128xi1>, vector<2x128xf32>
      %575 = arith.mulf %572, %531 : vector<2x128xf32>
      %576 = arith.mulf %574, %541 : vector<2x128xf32>
      %577 = arith.addf %575, %576 : vector<2x128xf32>
      %578 = arith.mulf %572, %533 : vector<2x128xf32>
      %579 = arith.addf %578, %574 : vector<2x128xf32>
      %580 = arith.maximumf %563, %539 : vector<2x128xf32>
      scf.yield %577, %579, %580 : vector<2x128xf32>, vector<2x128xf32>, vector<2x128xf32>
    }
    %c8_i32_46 = arith.constant 8 : i32
    %c0_47 = arith.constant 0 : index
    %c0_48 = arith.constant 0 : index
    %121 = vector.load %arg14[%c0_47, %c0_48] : memref<128x128xf32, #tpu.memory_space<vmem>>, vector<128x128xf32>
    %122 = arith.mulf %109, %121 : vector<128x128xf32>
    %123 = arith.truncf %122 : vector<128x128xf32> to vector<128x128xbf16>
    %c0_49 = arith.constant 0 : index
    %c0_50 = arith.constant 0 : index
    %124 = vector.load %arg7[%c0_49, %c0_50] : memref<128x128xbf16, #tpu.memory_space<vmem>>, vector<128x128xbf16>
    %cst_51 = arith.constant dense<0.000000e+00> : vector<128x128xf32>
    %125 = tpu.matmul %123, %124, %cst_51 {dimension_numbers = #tpu.dot_dimension_numbers<[1], [0], [0], [1], [0, 0, 1, 1], [], []>} : vector<128x128xbf16>, vector<128x128xbf16>, vector<128x128xf32> -> vector<128x128xf32>
    %c11 = arith.constant 11 : index
    %c0_52 = arith.constant 0 : index
    %126 = vector.load %arg2[%c11, %c0_52] : memref<16x128xf32, #tpu.memory_space<vmem>>, vector<1x128xf32>
    %127 = vector.broadcast %126 : vector<1x128xf32> to vector<128x128xf32>
    %128 = arith.mulf %127, %125 : vector<128x128xf32>
    %129 = arith.addf %25, %128 : vector<128x128xf32>
    %c4 = arith.constant 4 : index
    %c0_53 = arith.constant 0 : index
    %130 = vector.load %arg2[%c4, %c0_53] : memref<16x128xf32, #tpu.memory_space<vmem>>, vector<1x128xf32>
    %c5 = arith.constant 5 : index
    %c0_54 = arith.constant 0 : index
    %131 = vector.load %arg2[%c5, %c0_54] : memref<16x128xf32, #tpu.memory_space<vmem>>, vector<1x128xf32>
    %cst_55 = arith.constant dense<0.000000e+00> : vector<128xf32>
    %132 = vector.multi_reduction <add>, %129, %cst_55 [1] : vector<128x128xf32> to vector<128xf32>
    %133 = vector.shape_cast %132 : vector<128xf32> to vector<128x1xf32>
    %cst_56 = arith.constant 1.280000e+02 : f32
    %134 = vector.broadcast %cst_56 : f32 to vector<128x1xf32>
    %135 = arith.divf %133, %134 : vector<128x1xf32>
    %136 = vector.broadcast %135 : vector<128x1xf32> to vector<128x128xf32>
    %137 = arith.subf %129, %136 : vector<128x128xf32>
    %138 = arith.mulf %137, %137 : vector<128x128xf32>
    %cst_57 = arith.constant dense<0.000000e+00> : vector<128xf32>
    %139 = vector.multi_reduction <add>, %138, %cst_57 [1] : vector<128x128xf32> to vector<128xf32>
    %140 = vector.shape_cast %139 : vector<128xf32> to vector<128x1xf32>
    %cst_58 = arith.constant 1.280000e+02 : f32
    %141 = vector.broadcast %cst_58 : f32 to vector<128x1xf32>
    %142 = arith.divf %140, %141 : vector<128x1xf32>
    %143 = vector.broadcast %135 : vector<128x1xf32> to vector<128x128xf32>
    %144 = arith.subf %129, %143 : vector<128x128xf32>
    %cst_59 = arith.constant 9.99999974E-6 : f32
    %145 = vector.broadcast %cst_59 : f32 to vector<128x1xf32>
    %146 = arith.addf %142, %145 : vector<128x1xf32>
    %147 = math.rsqrt %146 : vector<128x1xf32>
    %148 = vector.broadcast %147 : vector<128x1xf32> to vector<128x128xf32>
    %149 = arith.mulf %144, %148 : vector<128x128xf32>
    %150 = vector.broadcast %130 : vector<1x128xf32> to vector<128x128xf32>
    %151 = arith.mulf %149, %150 : vector<128x128xf32>
    %152 = vector.broadcast %131 : vector<1x128xf32> to vector<128x128xf32>
    %153 = arith.addf %151, %152 : vector<128x128xf32>
    %c2_i32_60 = arith.constant 2 : i32
    %154 = tpu.dynamic_rotate %153 by %c2_i32_60 dim 0 : vector<128x128xf32>, i32 -> vector<128x128xf32>
    %c126_i32_61 = arith.constant 126 : i32
    %155 = tpu.dynamic_rotate %153 by %c126_i32_61 dim 0 : vector<128x128xf32>, i32 -> vector<128x128xf32>
    %c16_i32_62 = arith.constant 16 : i32
    %156 = tpu.dynamic_rotate %153 by %c16_i32_62 dim 0 : vector<128x128xf32>, i32 -> vector<128x128xf32>
    %c112_i32_63 = arith.constant 112 : i32
    %157 = tpu.dynamic_rotate %153 by %c112_i32_63 dim 0 : vector<128x128xf32>, i32 -> vector<128x128xf32>
    %c0_i32_64 = arith.constant 0 : i32
    %158 = vector.broadcast %c0_i32_64 : i32 to vector<128x128xi32>
    %159 = arith.cmpi eq, %0, %158 : vector<128x128xi32>
    %c1_i32_65 = arith.constant 1 : i32
    %160 = vector.broadcast %c1_i32_65 : i32 to vector<128x128xi32>
    %161 = arith.cmpi eq, %0, %160 : vector<128x128xi32>
    %c2_i32_66 = arith.constant 2 : i32
    %162 = vector.broadcast %c2_i32_66 : i32 to vector<128x128xi32>
    %163 = arith.cmpi eq, %0, %162 : vector<128x128xi32>
    %c3_i32_67 = arith.constant 3 : i32
    %164 = vector.broadcast %c3_i32_67 : i32 to vector<128x128xi32>
    %165 = arith.cmpi eq, %0, %164 : vector<128x128xi32>
    %c4_i32_68 = arith.constant 4 : i32
    %166 = vector.broadcast %c4_i32_68 : i32 to vector<128x128xi32>
    %167 = arith.cmpi eq, %0, %166 : vector<128x128xi32>
    %cst_69 = arith.constant 0.000000e+00 : f32
    %168 = vector.broadcast %cst_69 : f32 to vector<128x128xf32>
    %169 = arith.select %167, %153, %168 : vector<128x128xi1>, vector<128x128xf32>
    %170 = arith.select %165, %157, %169 : vector<128x128xi1>, vector<128x128xf32>
    %171 = arith.select %163, %156, %170 : vector<128x128xi1>, vector<128x128xf32>
    %172 = arith.select %161, %155, %171 : vector<128x128xi1>, vector<128x128xf32>
    %173 = arith.select %159, %154, %172 : vector<128x128xi1>, vector<128x128xf32>
    %c9 = arith.constant 9 : index
    %c0_70 = arith.constant 0 : index
    %174 = vector.load %arg2[%c9, %c0_70] : memref<16x128xf32, #tpu.memory_space<vmem>>, vector<1x128xf32>
    %c10 = arith.constant 10 : index
    %c0_71 = arith.constant 0 : index
    %175 = vector.load %arg2[%c10, %c0_71] : memref<16x128xf32, #tpu.memory_space<vmem>>, vector<1x128xf32>
    %176 = vector.broadcast %174 : vector<1x128xf32> to vector<128x128xf32>
    %177 = arith.mulf %153, %176 : vector<128x128xf32>
    %cst_72 = arith.constant 1.000000e+00 : f32
    %178 = vector.broadcast %cst_72 : f32 to vector<1x128xf32>
    %179 = arith.subf %178, %174 : vector<1x128xf32>
    %180 = vector.broadcast %179 : vector<1x128xf32> to vector<128x128xf32>
    %181 = arith.mulf %173, %180 : vector<128x128xf32>
    %182 = arith.addf %177, %181 : vector<128x128xf32>
    %183 = vector.broadcast %175 : vector<1x128xf32> to vector<128x128xf32>
    %184 = arith.mulf %153, %183 : vector<128x128xf32>
    %cst_73 = arith.constant 1.000000e+00 : f32
    %185 = vector.broadcast %cst_73 : f32 to vector<1x128xf32>
    %186 = arith.subf %185, %175 : vector<1x128xf32>
    %187 = vector.broadcast %186 : vector<1x128xf32> to vector<128x128xf32>
    %188 = arith.mulf %173, %187 : vector<128x128xf32>
    %189 = arith.addf %184, %188 : vector<128x128xf32>
    %190 = arith.truncf %182 : vector<128x128xf32> to vector<128x128xbf16>
    %c0_74 = arith.constant 0 : index
    %c0_75 = arith.constant 0 : index
    %191 = vector.load %arg8[%c0_74, %c0_75] : memref<128x512xbf16, #tpu.memory_space<vmem>>, vector<128x512xbf16>
    %cst_76 = arith.constant dense<0.000000e+00> : vector<128x512xf32>
    %192 = tpu.matmul %190, %191, %cst_76 {dimension_numbers = #tpu.dot_dimension_numbers<[1], [0], [0], [1], [0, 0, 1, 1], [], []>} : vector<128x128xbf16>, vector<128x512xbf16>, vector<128x512xf32> -> vector<128x512xf32>
    %cst_77 = arith.constant 0.000000e+00 : f32
    %193 = vector.broadcast %cst_77 : f32 to vector<128x512xf32>
    %194 = arith.maximumf %192, %193 : vector<128x512xf32>
    %195 = arith.mulf %194, %194 : vector<128x512xf32>
    %196 = arith.truncf %195 : vector<128x512xf32> to vector<128x512xbf16>
    %c0_78 = arith.constant 0 : index
    %c0_79 = arith.constant 0 : index
    %197 = vector.load %arg9[%c0_78, %c0_79] : memref<512x128xbf16, #tpu.memory_space<vmem>>, vector<512x128xbf16>
    %cst_80 = arith.constant dense<0.000000e+00> : vector<128x128xf32>
    %198 = tpu.matmul %196, %197, %cst_80 {dimension_numbers = #tpu.dot_dimension_numbers<[1], [0], [0], [1], [0, 0, 1, 1], [], []>} : vector<128x512xbf16>, vector<512x128xbf16>, vector<128x128xf32> -> vector<128x128xf32>
    %199 = arith.truncf %189 : vector<128x128xf32> to vector<128x128xbf16>
    %c0_81 = arith.constant 0 : index
    %c0_82 = arith.constant 0 : index
    %200 = vector.load %arg10[%c0_81, %c0_82] : memref<128x128xbf16, #tpu.memory_space<vmem>>, vector<128x128xbf16>
    %cst_83 = arith.constant dense<0.000000e+00> : vector<128x128xf32>
    %201 = tpu.matmul %199, %200, %cst_83 {dimension_numbers = #tpu.dot_dimension_numbers<[1], [0], [0], [1], [0, 0, 1, 1], [], []>} : vector<128x128xbf16>, vector<128x128xbf16>, vector<128x128xf32> -> vector<128x128xf32>
    %202 = arith.negf %201 : vector<128x128xf32>
    %203 = math.exp %202 : vector<128x128xf32>
    %cst_84 = arith.constant 1.000000e+00 : f32
    %204 = vector.broadcast %cst_84 : f32 to vector<128x128xf32>
    %205 = arith.addf %204, %203 : vector<128x128xf32>
    %206 = arith.divf %204, %205 : vector<128x128xf32>
    %c12 = arith.constant 12 : index
    %c0_85 = arith.constant 0 : index
    %207 = vector.load %arg2[%c12, %c0_85] : memref<16x128xf32, #tpu.memory_space<vmem>>, vector<1x128xf32>
    %208 = arith.mulf %206, %198 : vector<128x128xf32>
    %209 = vector.broadcast %207 : vector<1x128xf32> to vector<128x128xf32>
    %210 = arith.mulf %209, %208 : vector<128x128xf32>
    %211 = arith.addf %129, %210 : vector<128x128xf32>
    %c0_86 = arith.constant 0 : index
    %c0_87 = arith.constant 0 : index
    %212 = vector.load %arg11[%c0_86, %c0_87] : memref<128x128xf32, #tpu.memory_space<vmem>>, vector<128x128xf32>
    tpu.vector_store %arg11[%c0_86, %c0_87], %211 {strides = array<i32>} : memref<128x128xf32, #tpu.memory_space<vmem>>, vector<128x128xf32>,
    return
  }
  func.func @transform_0(%arg0: i32) -> (i32, i32) {
    %c0_i32 = arith.constant 0 : i32
    %c0_i32_0 = arith.constant 0 : i32
    %c0_i32_1 = arith.constant 0 : i32
    return %c0_i32, %c0_i32_0 : i32, i32
  }
  func.func @transform_1(%arg0: i32) -> (i32, i32) {
    %c0_i32 = arith.constant 0 : i32
    %c0_i32_0 = arith.constant 0 : i32
    %c0_i32_1 = arith.constant 0 : i32
    return %c0_i32, %c0_i32_0 : i32, i32
  }
  func.func @transform_2(%arg0: i32) -> (i32, i32) {
    %c0_i32 = arith.constant 0 : i32
    %c0_i32_0 = arith.constant 0 : i32
    %c0_i32_1 = arith.constant 0 : i32
    return %c0_i32, %c0_i32_0 : i32, i32
  }
  func.func @transform_3(%arg0: i32) -> (i32, i32) {
    %c0_i32 = arith.constant 0 : i32
    %c0_i32_0 = arith.constant 0 : i32
    %c0_i32_1 = arith.constant 0 : i32
    return %c0_i32, %c0_i32_0 : i32, i32
  }
  func.func @transform_4(%arg0: i32) -> (i32, i32) {
    %c0_i32 = arith.constant 0 : i32
    %c0_i32_0 = arith.constant 0 : i32
    %c0_i32_1 = arith.constant 0 : i32
    return %c0_i32, %c0_i32_0 : i32, i32
  }
  func.func @transform_5(%arg0: i32) -> (i32, i32) {
    %c0_i32 = arith.constant 0 : i32
    %c0_i32_0 = arith.constant 0 : i32
    %c0_i32_1 = arith.constant 0 : i32
    return %c0_i32, %c0_i32_0 : i32, i32
  }
  func.func @transform_6(%arg0: i32) -> (i32, i32) {
    %c0_i32 = arith.constant 0 : i32
    %c0_i32_0 = arith.constant 0 : i32
    %c0_i32_1 = arith.constant 0 : i32
    return %c0_i32, %c0_i32_0 : i32, i32
  }
  func.func @transform_7(%arg0: i32) -> (i32, i32) {
    %c0_i32 = arith.constant 0 : i32
    %c0_i32_0 = arith.constant 0 : i32
    %c0_i32_1 = arith.constant 0 : i32
    return %c0_i32, %c0_i32_0 : i32, i32
  }
  func.func @transform_8(%arg0: i32) -> (i32, i32) {
    %c0_i32 = arith.constant 0 : i32
    %c0_i32_0 = arith.constant 0 : i32
    %c0_i32_1 = arith.constant 0 : i32
    return %c0_i32, %c0_i32_0 : i32, i32
  }
  func.func @transform_9(%arg0: i32) -> (i32, i32) {
    %c0_i32 = arith.constant 0 : i32
    %c0_i32_0 = arith.constant 0 : i32
    %c0_i32_1 = arith.constant 0 : i32
    return %c0_i32, %c0_i32_0 : i32, i32
  }
  func.func @transform_10(%arg0: i32) -> (i32, i32) {
    %c0_i32 = arith.constant 0 : i32
    %c0_i32_0 = arith.constant 0 : i32
    %c0_i32_1 = arith.constant 0 : i32
    return %c0_i32, %c0_i32_0 : i32, i32
  }
}

module attributes {stable_mosaic.version = 11 : i64} {
  func.func @_block_kernel(%arg0: i32, %arg1: memref<128x128xf32, #tpu.memory_space<vmem>>, %arg2: memref<16x128xf32, #tpu.memory_space<vmem>>, %arg3: memref<128x128xi32, #tpu.memory_space<vmem>>, %arg4: memref<128x128xbf16, #tpu.memory_space<vmem>>, %arg5: memref<128x128xbf16, #tpu.memory_space<vmem>>, %arg6: memref<128x128xbf16, #tpu.memory_space<vmem>>, %arg7: memref<128x128xbf16, #tpu.memory_space<vmem>>, %arg8: memref<128x512xbf16, #tpu.memory_space<vmem>>, %arg9: memref<512x128xbf16, #tpu.memory_space<vmem>>, %arg10: memref<128x128xbf16, #tpu.memory_space<vmem>>, %arg11: memref<128x128xf32, #tpu.memory_space<vmem>>, %arg12: memref<128x128xf32, #tpu.memory_space<vmem>>, %arg13: memref<128x128xf32, #tpu.memory_space<vmem>>, %arg14: memref<128x128xf32, #tpu.memory_space<vmem>>) attributes {dimension_semantics = [#tpu.dimension_semantics<arbitrary>], iteration_bounds = array<i64: 1>, scalar_prefetch = 0 : i64, scratch_operands = 3 : i64, tpu.core_type = #tpu.core_type<tc>, window_params = [{pipeline_mode = #tpu.pipeline_mode<synchronous>, transform_indices = @transform_0, window_bounds = array<i64: 128, 128>}, {pipeline_mode = #tpu.pipeline_mode<synchronous>, transform_indices = @transform_1, window_bounds = array<i64: 16, 128>}, {pipeline_mode = #tpu.pipeline_mode<synchronous>, transform_indices = @transform_2, window_bounds = array<i64: 128, 128>}, {pipeline_mode = #tpu.pipeline_mode<synchronous>, transform_indices = @transform_3, window_bounds = array<i64: 128, 128>}, {pipeline_mode = #tpu.pipeline_mode<synchronous>, transform_indices = @transform_4, window_bounds = array<i64: 128, 128>}, {pipeline_mode = #tpu.pipeline_mode<synchronous>, transform_indices = @transform_5, window_bounds = array<i64: 128, 128>}, {pipeline_mode = #tpu.pipeline_mode<synchronous>, transform_indices = @transform_6, window_bounds = array<i64: 128, 128>}, {pipeline_mode = #tpu.pipeline_mode<synchronous>, transform_indices = @transform_7, window_bounds = array<i64: 128, 512>}, {pipeline_mode = #tpu.pipeline_mode<synchronous>, transform_indices = @transform_8, window_bounds = array<i64: 512, 128>}, {pipeline_mode = #tpu.pipeline_mode<synchronous>, transform_indices = @transform_9, window_bounds = array<i64: 128, 128>}, {pipeline_mode = #tpu.pipeline_mode<synchronous>, transform_indices = @transform_10, window_bounds = array<i64: 128, 128>}]} {
    %c0 = arith.constant 0 : index
    %c0_0 = arith.constant 0 : index
    %0 = vector.load %arg3[%c0, %c0_0] : memref<128x128xi32, #tpu.memory_space<vmem>>, vector<128x128xi32>
    %c0_1 = arith.constant 0 : index
    %c0_2 = arith.constant 0 : index
    %1 = vector.load %arg1[%c0_1, %c0_2] : memref<128x128xf32, #tpu.memory_space<vmem>>, vector<128x128xf32>
    %c2 = arith.constant 2 : index
    %c0_3 = arith.constant 0 : index
    %2 = vector.load %arg2[%c2, %c0_3] : memref<16x128xf32, #tpu.memory_space<vmem>>, vector<1x128xf32>
    %c3 = arith.constant 3 : index
    %c0_4 = arith.constant 0 : index
    %3 = vector.load %arg2[%c3, %c0_4] : memref<16x128xf32, #tpu.memory_space<vmem>>, vector<1x128xf32>
    %cst = arith.constant dense<0.000000e+00> : vector<128xf32>
    %4 = vector.multi_reduction <add>, %1, %cst [1] : vector<128x128xf32> to vector<128xf32>
    %5 = vector.shape_cast %4 : vector<128xf32> to vector<128x1xf32>
    %cst_5 = arith.constant 1.280000e+02 : f32
    %6 = vector.broadcast %cst_5 : f32 to vector<128x1xf32>
    %7 = arith.divf %5, %6 : vector<128x1xf32>
    %8 = vector.broadcast %7 : vector<128x1xf32> to vector<128x128xf32>
    %9 = arith.subf %1, %8 : vector<128x128xf32>
    %10 = arith.mulf %9, %9 : vector<128x128xf32>
    %cst_6 = arith.constant dense<0.000000e+00> : vector<128xf32>
    %11 = vector.multi_reduction <add>, %10, %cst_6 [1] : vector<128x128xf32> to vector<128xf32>
    %12 = vector.shape_cast %11 : vector<128xf32> to vector<128x1xf32>
    %cst_7 = arith.constant 1.280000e+02 : f32
    %13 = vector.broadcast %cst_7 : f32 to vector<128x1xf32>
    %14 = arith.divf %12, %13 : vector<128x1xf32>
    %15 = vector.broadcast %7 : vector<128x1xf32> to vector<128x128xf32>
    %16 = arith.subf %1, %15 : vector<128x128xf32>
    %cst_8 = arith.constant 9.99999974E-6 : f32
    %17 = vector.broadcast %cst_8 : f32 to vector<128x1xf32>
    %18 = arith.addf %14, %17 : vector<128x1xf32>
    %19 = math.rsqrt %18 : vector<128x1xf32>
    %20 = vector.broadcast %19 : vector<128x1xf32> to vector<128x128xf32>
    %21 = arith.mulf %16, %20 : vector<128x128xf32>
    %22 = vector.broadcast %2 : vector<1x128xf32> to vector<128x128xf32>
    %23 = arith.mulf %21, %22 : vector<128x128xf32>
    %24 = vector.broadcast %3 : vector<1x128xf32> to vector<128x128xf32>
    %25 = arith.addf %23, %24 : vector<128x128xf32>
    %c2_i32 = arith.constant 2 : i32
    %26 = tpu.dynamic_rotate %25 by %c2_i32 dim 0 : vector<128x128xf32>, i32 -> vector<128x128xf32>
    %c126_i32 = arith.constant 126 : i32
    %27 = tpu.dynamic_rotate %25 by %c126_i32 dim 0 : vector<128x128xf32>, i32 -> vector<128x128xf32>
    %c16_i32 = arith.constant 16 : i32
    %28 = tpu.dynamic_rotate %25 by %c16_i32 dim 0 : vector<128x128xf32>, i32 -> vector<128x128xf32>
    %c112_i32 = arith.constant 112 : i32
    %29 = tpu.dynamic_rotate %25 by %c112_i32 dim 0 : vector<128x128xf32>, i32 -> vector<128x128xf32>
    %c0_i32 = arith.constant 0 : i32
    %30 = vector.broadcast %c0_i32 : i32 to vector<128x128xi32>
    %31 = arith.cmpi eq, %0, %30 : vector<128x128xi32>
    %c1_i32 = arith.constant 1 : i32
    %32 = vector.broadcast %c1_i32 : i32 to vector<128x128xi32>
    %33 = arith.cmpi eq, %0, %32 : vector<128x128xi32>
    %c2_i32_9 = arith.constant 2 : i32
    %34 = vector.broadcast %c2_i32_9 : i32 to vector<128x128xi32>
    %35 = arith.cmpi eq, %0, %34 : vector<128x128xi32>
    %c3_i32 = arith.constant 3 : i32
    %36 = vector.broadcast %c3_i32 : i32 to vector<128x128xi32>
    %37 = arith.cmpi eq, %0, %36 : vector<128x128xi32>
    %c4_i32 = arith.constant 4 : i32
    %38 = vector.broadcast %c4_i32 : i32 to vector<128x128xi32>
    %39 = arith.cmpi eq, %0, %38 : vector<128x128xi32>
    %cst_10 = arith.constant 0.000000e+00 : f32
    %40 = vector.broadcast %cst_10 : f32 to vector<128x128xf32>
    %41 = arith.select %39, %25, %40 : vector<128x128xi1>, vector<128x128xf32>
    %42 = arith.select %37, %29, %41 : vector<128x128xi1>, vector<128x128xf32>
    %43 = arith.select %35, %28, %42 : vector<128x128xi1>, vector<128x128xf32>
    %44 = arith.select %33, %27, %43 : vector<128x128xi1>, vector<128x128xf32>
    %45 = arith.select %31, %26, %44 : vector<128x128xi1>, vector<128x128xf32>
    %c6 = arith.constant 6 : index
    %c0_11 = arith.constant 0 : index
    %46 = vector.load %arg2[%c6, %c0_11] : memref<16x128xf32, #tpu.memory_space<vmem>>, vector<1x128xf32>
    %c7 = arith.constant 7 : index
    %c0_12 = arith.constant 0 : index
    %47 = vector.load %arg2[%c7, %c0_12] : memref<16x128xf32, #tpu.memory_space<vmem>>, vector<1x128xf32>
    %c8 = arith.constant 8 : index
    %c0_13 = arith.constant 0 : index
    %48 = vector.load %arg2[%c8, %c0_13] : memref<16x128xf32, #tpu.memory_space<vmem>>, vector<1x128xf32>
    %49 = vector.broadcast %46 : vector<1x128xf32> to vector<128x128xf32>
    %50 = arith.mulf %25, %49 : vector<128x128xf32>
    %cst_14 = arith.constant 1.000000e+00 : f32
    %51 = vector.broadcast %cst_14 : f32 to vector<1x128xf32>
    %52 = arith.subf %51, %46 : vector<1x128xf32>
    %53 = vector.broadcast %52 : vector<1x128xf32> to vector<128x128xf32>
    %54 = arith.mulf %45, %53 : vector<128x128xf32>
    %55 = arith.addf %50, %54 : vector<128x128xf32>
    %56 = vector.broadcast %47 : vector<1x128xf32> to vector<128x128xf32>
    %57 = arith.mulf %25, %56 : vector<128x128xf32>
    %cst_15 = arith.constant 1.000000e+00 : f32
    %58 = vector.broadcast %cst_15 : f32 to vector<1x128xf32>
    %59 = arith.subf %58, %47 : vector<1x128xf32>
    %60 = vector.broadcast %59 : vector<1x128xf32> to vector<128x128xf32>
    %61 = arith.mulf %45, %60 : vector<128x128xf32>
    %62 = arith.addf %57, %61 : vector<128x128xf32>
    %63 = vector.broadcast %48 : vector<1x128xf32> to vector<128x128xf32>
    %64 = arith.mulf %25, %63 : vector<128x128xf32>
    %cst_16 = arith.constant 1.000000e+00 : f32
    %65 = vector.broadcast %cst_16 : f32 to vector<1x128xf32>
    %66 = arith.subf %65, %48 : vector<1x128xf32>
    %67 = vector.broadcast %66 : vector<1x128xf32> to vector<128x128xf32>
    %68 = arith.mulf %45, %67 : vector<128x128xf32>
    %69 = arith.addf %64, %68 : vector<128x128xf32>
    %70 = arith.truncf %55 : vector<128x128xf32> to vector<128x128xbf16>
    %c0_17 = arith.constant 0 : index
    %c0_18 = arith.constant 0 : index
    %71 = vector.load %arg4[%c0_17, %c0_18] : memref<128x128xbf16, #tpu.memory_space<vmem>>, vector<128x128xbf16>
    %cst_19 = arith.constant dense<0.000000e+00> : vector<128x128xf32>
    %72 = tpu.matmul %70, %71, %cst_19 {dimension_numbers = #tpu.dot_dimension_numbers<[1], [0], [0], [1], [0, 0, 1, 1], [], []>} : vector<128x128xbf16>, vector<128x128xbf16>, vector<128x128xf32> -> vector<128x128xf32>
    %c0_20 = arith.constant 0 : index
    %c0_21 = arith.constant 0 : index
    %73 = vector.load %arg12[%c0_20, %c0_21] : memref<128x128xf32, #tpu.memory_space<vmem>>, vector<128x128xf32>
    tpu.vector_store %arg12[%c0_20, %c0_21], %72 {strides = array<i32>} : memref<128x128xf32, #tpu.memory_space<vmem>>, vector<128x128xf32>,
    %74 = arith.truncf %62 : vector<128x128xf32> to vector<128x128xbf16>
    %c0_22 = arith.constant 0 : index
    %c0_23 = arith.constant 0 : index
    %75 = vector.load %arg5[%c0_22, %c0_23] : memref<128x128xbf16, #tpu.memory_space<vmem>>, vector<128x128xbf16>
    %cst_24 = arith.constant dense<0.000000e+00> : vector<128x128xf32>
    %76 = tpu.matmul %74, %75, %cst_24 {dimension_numbers = #tpu.dot_dimension_numbers<[1], [0], [0], [1], [0, 0, 1, 1], [], []>} : vector<128x128xbf16>, vector<128x128xbf16>, vector<128x128xf32> -> vector<128x128xf32>
    %c0_25 = arith.constant 0 : index
    %c0_26 = arith.constant 0 : index
    %77 = vector.load %arg13[%c0_25, %c0_26] : memref<128x128xf32, #tpu.memory_space<vmem>>, vector<128x128xf32>
    tpu.vector_store %arg13[%c0_25, %c0_26], %76 {strides = array<i32>} : memref<128x128xf32, #tpu.memory_space<vmem>>, vector<128x128xf32>,
    %78 = arith.truncf %69 : vector<128x128xf32> to vector<128x128xbf16>
    %c0_27 = arith.constant 0 : index
    %c0_28 = arith.constant 0 : index
    %79 = vector.load %arg6[%c0_27, %c0_28] : memref<128x128xbf16, #tpu.memory_space<vmem>>, vector<128x128xbf16>
    %cst_29 = arith.constant dense<0.000000e+00> : vector<128x128xf32>
    %80 = tpu.matmul %78, %79, %cst_29 {dimension_numbers = #tpu.dot_dimension_numbers<[1], [0], [0], [1], [0, 0, 1, 1], [], []>} : vector<128x128xbf16>, vector<128x128xbf16>, vector<128x128xf32> -> vector<128x128xf32>
    %81 = arith.negf %80 : vector<128x128xf32>
    %82 = math.exp %81 : vector<128x128xf32>
    %cst_30 = arith.constant 1.000000e+00 : f32
    %83 = vector.broadcast %cst_30 : f32 to vector<128x128xf32>
    %84 = arith.addf %83, %82 : vector<128x128xf32>
    %85 = arith.divf %83, %84 : vector<128x128xf32>
    %c13 = arith.constant 13 : index
    %c0_31 = arith.constant 0 : index
    %86 = vector.load %arg2[%c13, %c0_31] : memref<16x128xf32, #tpu.memory_space<vmem>>, vector<1x128xf32>
    %87 = vector.shape_cast %86 : vector<1x128xf32> to vector<1x128xf32>
    %88 = vector.broadcast %87 : vector<1x128xf32> to vector<2x128xf32>
    %c14 = arith.constant 14 : index
    %c0_32 = arith.constant 0 : index
    %89 = vector.load %arg2[%c14, %c0_32] : memref<16x128xf32, #tpu.memory_space<vmem>>, vector<1x128xf32>
    %90 = vector.shape_cast %89 : vector<1x128xf32> to vector<1x128xf32>
    %91 = vector.broadcast %90 : vector<1x128xf32> to vector<2x128xf32>
    %cst_33 = arith.constant 0.000000e+00 : f32
    %92 = vector.broadcast %cst_33 : f32 to vector<2x128xf32>
    %cst_34 = arith.constant 0.000000e+00 : f32
    %93 = vector.broadcast %cst_34 : f32 to vector<2x128xf32>
    %cst_35 = arith.constant -9.99999968E+37 : f32
    %94 = vector.broadcast %cst_35 : f32 to vector<2x128xf32>
    %c0_i32_36 = arith.constant 0 : i32
    %c8_i32 = arith.constant 8 : i32
    %95 = arith.addi %c0_i32_36, %c8_i32 : i32
    %c1_i32_37 = arith.constant 1 : i32
    %96:3 = scf.for %arg15 = %c0_i32_36 to %95 step %c1_i32_37 iter_args(%arg16 = %92, %arg17 = %93, %arg18 = %94) -> (vector<2x128xf32>, vector<2x128xf32>, vector<2x128xf32>)  : i32 {
      %c8_i32_80 = arith.constant 8 : i32
      %189 = arith.muli %arg15, %c8_i32_80 : i32
      %c0_i32_81 = arith.constant 0 : i32
      %190 = arith.addi %189, %c0_i32_81 : i32
      %c2_i32_82 = arith.constant 2 : i32
      %191 = arith.muli %190, %c2_i32_82 : i32
      %192 = arith.index_cast %191 : i32 to index
      %c0_83 = arith.constant 0 : index
      %193 = vector.load %arg12[%192, %c0_83] : memref<128x128xf32, #tpu.memory_space<vmem>>, vector<2x128xf32>
      %194 = arith.index_cast %191 : i32 to index
      %c0_84 = arith.constant 0 : index
      %195 = vector.load %arg13[%194, %c0_84] : memref<128x128xf32, #tpu.memory_space<vmem>>, vector<2x128xf32>
      %196 = arith.addf %91, %193 : vector<2x128xf32>
      %197 = arith.subf %arg18, %196 : vector<2x128xf32>
      %198 = math.absf %197 : vector<2x128xf32>
      %cst_85 = arith.constant 0.000000e+00 : f32
      %199 = vector.broadcast %cst_85 : f32 to vector<2x128xf32>
      %200 = arith.subf %199, %198 : vector<2x128xf32>
      %201 = math.exp %200 : vector<2x128xf32>
      %cst_86 = arith.constant 0.000000e+00 : f32
      %202 = vector.broadcast %cst_86 : f32 to vector<2x128xf32>
      %203 = arith.cmpf oge, %197, %202 : vector<2x128xf32>
      %cst_87 = arith.constant 1.000000e+00 : f32
      %204 = vector.broadcast %cst_87 : f32 to vector<2x128xf32>
      %205 = arith.select %203, %204, %201 : vector<2x128xi1>, vector<2x128xf32>
      %cst_88 = arith.constant 1.000000e+00 : f32
      %206 = vector.broadcast %cst_88 : f32 to vector<2x128xf32>
      %207 = arith.select %203, %201, %206 : vector<2x128xi1>, vector<2x128xf32>
      %208 = arith.mulf %205, %arg16 : vector<2x128xf32>
      %209 = arith.mulf %207, %195 : vector<2x128xf32>
      %210 = arith.addf %208, %209 : vector<2x128xf32>
      %211 = arith.mulf %205, %arg17 : vector<2x128xf32>
      %212 = arith.addf %211, %207 : vector<2x128xf32>
      %213 = tpu.reciprocal %212 {approx = true} : vector<2x128xf32> -> vector<2x128xf32>
      %214 = arith.mulf %210, %213 : vector<2x128xf32>
      %215 = arith.index_cast %191 : i32 to index
      %c0_89 = arith.constant 0 : index
      %216 = vector.load %arg14[%215, %c0_89] : memref<128x128xf32, #tpu.memory_space<vmem>>, vector<2x128xf32>
      tpu.vector_store %arg14[%215, %c0_89], %214 {strides = array<i32>} : memref<128x128xf32, #tpu.memory_space<vmem>>, vector<2x128xf32>,
      %217 = arith.addf %88, %arg18 : vector<2x128xf32>
      %218 = arith.subf %217, %193 : vector<2x128xf32>
      %219 = math.absf %218 : vector<2x128xf32>
      %cst_90 = arith.constant 0.000000e+00 : f32
      %220 = vector.broadcast %cst_90 : f32 to vector<2x128xf32>
      %221 = arith.subf %220, %219 : vector<2x128xf32>
      %222 = math.exp %221 : vector<2x128xf32>
      %cst_91 = arith.constant 0.000000e+00 : f32
      %223 = vector.broadcast %cst_91 : f32 to vector<2x128xf32>
      %224 = arith.cmpf oge, %218, %223 : vector<2x128xf32>
      %cst_92 = arith.constant 1.000000e+00 : f32
      %225 = vector.broadcast %cst_92 : f32 to vector<2x128xf32>
      %226 = arith.select %224, %225, %222 : vector<2x128xi1>, vector<2x128xf32>
      %cst_93 = arith.constant 1.000000e+00 : f32
      %227 = vector.broadcast %cst_93 : f32 to vector<2x128xf32>
      %228 = arith.select %224, %222, %227 : vector<2x128xi1>, vector<2x128xf32>
      %229 = arith.mulf %226, %arg16 : vector<2x128xf32>
      %230 = arith.mulf %228, %195 : vector<2x128xf32>
      %231 = arith.addf %229, %230 : vector<2x128xf32>
      %232 = arith.mulf %226, %arg17 : vector<2x128xf32>
      %233 = arith.addf %232, %228 : vector<2x128xf32>
      %234 = arith.maximumf %217, %193 : vector<2x128xf32>
      %c8_i32_94 = arith.constant 8 : i32
      %235 = arith.muli %arg15, %c8_i32_94 : i32
      %c1_i32_95 = arith.constant 1 : i32
      %236 = arith.addi %235, %c1_i32_95 : i32
      %c2_i32_96 = arith.constant 2 : i32
      %237 = arith.muli %236, %c2_i32_96 : i32
      %238 = arith.index_cast %237 : i32 to index
      %c0_97 = arith.constant 0 : index
      %239 = vector.load %arg12[%238, %c0_97] : memref<128x128xf32, #tpu.memory_space<vmem>>, vector<2x128xf32>
      %240 = arith.index_cast %237 : i32 to index
      %c0_98 = arith.constant 0 : index
      %241 = vector.load %arg13[%240, %c0_98] : memref<128x128xf32, #tpu.memory_space<vmem>>, vector<2x128xf32>
      %242 = arith.addf %91, %239 : vector<2x128xf32>
      %243 = arith.subf %234, %242 : vector<2x128xf32>
      %244 = math.absf %243 : vector<2x128xf32>
      %cst_99 = arith.constant 0.000000e+00 : f32
      %245 = vector.broadcast %cst_99 : f32 to vector<2x128xf32>
      %246 = arith.subf %245, %244 : vector<2x128xf32>
      %247 = math.exp %246 : vector<2x128xf32>
      %cst_100 = arith.constant 0.000000e+00 : f32
      %248 = vector.broadcast %cst_100 : f32 to vector<2x128xf32>
      %249 = arith.cmpf oge, %243, %248 : vector<2x128xf32>
      %cst_101 = arith.constant 1.000000e+00 : f32
      %250 = vector.broadcast %cst_101 : f32 to vector<2x128xf32>
      %251 = arith.select %249, %250, %247 : vector<2x128xi1>, vector<2x128xf32>
      %cst_102 = arith.constant 1.000000e+00 : f32
      %252 = vector.broadcast %cst_102 : f32 to vector<2x128xf32>
      %253 = arith.select %249, %247, %252 : vector<2x128xi1>, vector<2x128xf32>
      %254 = arith.mulf %251, %231 : vector<2x128xf32>
      %255 = arith.mulf %253, %241 : vector<2x128xf32>
      %256 = arith.addf %254, %255 : vector<2x128xf32>
      %257 = arith.mulf %251, %233 : vector<2x128xf32>
      %258 = arith.addf %257, %253 : vector<2x128xf32>
      %259 = tpu.reciprocal %258 {approx = true} : vector<2x128xf32> -> vector<2x128xf32>
      %260 = arith.mulf %256, %259 : vector<2x128xf32>
      %261 = arith.index_cast %237 : i32 to index
      %c0_103 = arith.constant 0 : index
      %262 = vector.load %arg14[%261, %c0_103] : memref<128x128xf32, #tpu.memory_space<vmem>>, vector<2x128xf32>
      tpu.vector_store %arg14[%261, %c0_103], %260 {strides = array<i32>} : memref<128x128xf32, #tpu.memory_space<vmem>>, vector<2x128xf32>,
      %263 = arith.addf %88, %234 : vector<2x128xf32>
      %264 = arith.subf %263, %239 : vector<2x128xf32>
      %265 = math.absf %264 : vector<2x128xf32>
      %cst_104 = arith.constant 0.000000e+00 : f32
      %266 = vector.broadcast %cst_104 : f32 to vector<2x128xf32>
      %267 = arith.subf %266, %265 : vector<2x128xf32>
      %268 = math.exp %267 : vector<2x128xf32>
      %cst_105 = arith.constant 0.000000e+00 : f32
      %269 = vector.broadcast %cst_105 : f32 to vector<2x128xf32>
      %270 = arith.cmpf oge, %264, %269 : vector<2x128xf32>
      %cst_106 = arith.constant 1.000000e+00 : f32
      %271 = vector.broadcast %cst_106 : f32 to vector<2x128xf32>
      %272 = arith.select %270, %271, %268 : vector<2x128xi1>, vector<2x128xf32>
      %cst_107 = arith.constant 1.000000e+00 : f32
      %273 = vector.broadcast %cst_107 : f32 to vector<2x128xf32>
      %274 = arith.select %270, %268, %273 : vector<2x128xi1>, vector<2x128xf32>
      %275 = arith.mulf %272, %231 : vector<2x128xf32>
      %276 = arith.mulf %274, %241 : vector<2x128xf32>
      %277 = arith.addf %275, %276 : vector<2x128xf32>
      %278 = arith.mulf %272, %233 : vector<2x128xf32>
      %279 = arith.addf %278, %274 : vector<2x128xf32>
      %280 = arith.maximumf %263, %239 : vector<2x128xf32>
      %c8_i32_108 = arith.constant 8 : i32
      %281 = arith.muli %arg15, %c8_i32_108 : i32
      %c2_i32_109 = arith.constant 2 : i32
      %282 = arith.addi %281, %c2_i32_109 : i32
      %c2_i32_110 = arith.constant 2 : i32
      %283 = arith.muli %282, %c2_i32_110 : i32
      %284 = arith.index_cast %283 : i32 to index
      %c0_111 = arith.constant 0 : index
      %285 = vector.load %arg12[%284, %c0_111] : memref<128x128xf32, #tpu.memory_space<vmem>>, vector<2x128xf32>
      %286 = arith.index_cast %283 : i32 to index
      %c0_112 = arith.constant 0 : index
      %287 = vector.load %arg13[%286, %c0_112] : memref<128x128xf32, #tpu.memory_space<vmem>>, vector<2x128xf32>
      %288 = arith.addf %91, %285 : vector<2x128xf32>
      %289 = arith.subf %280, %288 : vector<2x128xf32>
      %290 = math.absf %289 : vector<2x128xf32>
      %cst_113 = arith.constant 0.000000e+00 : f32
      %291 = vector.broadcast %cst_113 : f32 to vector<2x128xf32>
      %292 = arith.subf %291, %290 : vector<2x128xf32>
      %293 = math.exp %292 : vector<2x128xf32>
      %cst_114 = arith.constant 0.000000e+00 : f32
      %294 = vector.broadcast %cst_114 : f32 to vector<2x128xf32>
      %295 = arith.cmpf oge, %289, %294 : vector<2x128xf32>
      %cst_115 = arith.constant 1.000000e+00 : f32
      %296 = vector.broadcast %cst_115 : f32 to vector<2x128xf32>
      %297 = arith.select %295, %296, %293 : vector<2x128xi1>, vector<2x128xf32>
      %cst_116 = arith.constant 1.000000e+00 : f32
      %298 = vector.broadcast %cst_116 : f32 to vector<2x128xf32>
      %299 = arith.select %295, %293, %298 : vector<2x128xi1>, vector<2x128xf32>
      %300 = arith.mulf %297, %277 : vector<2x128xf32>
      %301 = arith.mulf %299, %287 : vector<2x128xf32>
      %302 = arith.addf %300, %301 : vector<2x128xf32>
      %303 = arith.mulf %297, %279 : vector<2x128xf32>
      %304 = arith.addf %303, %299 : vector<2x128xf32>
      %305 = tpu.reciprocal %304 {approx = true} : vector<2x128xf32> -> vector<2x128xf32>
      %306 = arith.mulf %302, %305 : vector<2x128xf32>
      %307 = arith.index_cast %283 : i32 to index
      %c0_117 = arith.constant 0 : index
      %308 = vector.load %arg14[%307, %c0_117] : memref<128x128xf32, #tpu.memory_space<vmem>>, vector<2x128xf32>
      tpu.vector_store %arg14[%307, %c0_117], %306 {strides = array<i32>} : memref<128x128xf32, #tpu.memory_space<vmem>>, vector<2x128xf32>,
      %309 = arith.addf %88, %280 : vector<2x128xf32>
      %310 = arith.subf %309, %285 : vector<2x128xf32>
      %311 = math.absf %310 : vector<2x128xf32>
      %cst_118 = arith.constant 0.000000e+00 : f32
      %312 = vector.broadcast %cst_118 : f32 to vector<2x128xf32>
      %313 = arith.subf %312, %311 : vector<2x128xf32>
      %314 = math.exp %313 : vector<2x128xf32>
      %cst_119 = arith.constant 0.000000e+00 : f32
      %315 = vector.broadcast %cst_119 : f32 to vector<2x128xf32>
      %316 = arith.cmpf oge, %310, %315 : vector<2x128xf32>
      %cst_120 = arith.constant 1.000000e+00 : f32
      %317 = vector.broadcast %cst_120 : f32 to vector<2x128xf32>
      %318 = arith.select %316, %317, %314 : vector<2x128xi1>, vector<2x128xf32>
      %cst_121 = arith.constant 1.000000e+00 : f32
      %319 = vector.broadcast %cst_121 : f32 to vector<2x128xf32>
      %320 = arith.select %316, %314, %319 : vector<2x128xi1>, vector<2x128xf32>
      %321 = arith.mulf %318, %277 : vector<2x128xf32>
      %322 = arith.mulf %320, %287 : vector<2x128xf32>
      %323 = arith.addf %321, %322 : vector<2x128xf32>
      %324 = arith.mulf %318, %279 : vector<2x128xf32>
      %325 = arith.addf %324, %320 : vector<2x128xf32>
      %326 = arith.maximumf %309, %285 : vector<2x128xf32>
      %c8_i32_122 = arith.constant 8 : i32
      %327 = arith.muli %arg15, %c8_i32_122 : i32
      %c3_i32_123 = arith.constant 3 : i32
      %328 = arith.addi %327, %c3_i32_123 : i32
      %c2_i32_124 = arith.constant 2 : i32
      %329 = arith.muli %328, %c2_i32_124 : i32
      %330 = arith.index_cast %329 : i32 to index
      %c0_125 = arith.constant 0 : index
      %331 = vector.load %arg12[%330, %c0_125] : memref<128x128xf32, #tpu.memory_space<vmem>>, vector<2x128xf32>
      %332 = arith.index_cast %329 : i32 to index
      %c0_126 = arith.constant 0 : index
      %333 = vector.load %arg13[%332, %c0_126] : memref<128x128xf32, #tpu.memory_space<vmem>>, vector<2x128xf32>
      %334 = arith.addf %91, %331 : vector<2x128xf32>
      %335 = arith.subf %326, %334 : vector<2x128xf32>
      %336 = math.absf %335 : vector<2x128xf32>
      %cst_127 = arith.constant 0.000000e+00 : f32
      %337 = vector.broadcast %cst_127 : f32 to vector<2x128xf32>
      %338 = arith.subf %337, %336 : vector<2x128xf32>
      %339 = math.exp %338 : vector<2x128xf32>
      %cst_128 = arith.constant 0.000000e+00 : f32
      %340 = vector.broadcast %cst_128 : f32 to vector<2x128xf32>
      %341 = arith.cmpf oge, %335, %340 : vector<2x128xf32>
      %cst_129 = arith.constant 1.000000e+00 : f32
      %342 = vector.broadcast %cst_129 : f32 to vector<2x128xf32>
      %343 = arith.select %341, %342, %339 : vector<2x128xi1>, vector<2x128xf32>
      %cst_130 = arith.constant 1.000000e+00 : f32
      %344 = vector.broadcast %cst_130 : f32 to vector<2x128xf32>
      %345 = arith.select %341, %339, %344 : vector<2x128xi1>, vector<2x128xf32>
      %346 = arith.mulf %343, %323 : vector<2x128xf32>
      %347 = arith.mulf %345, %333 : vector<2x128xf32>
      %348 = arith.addf %346, %347 : vector<2x128xf32>
      %349 = arith.mulf %343, %325 : vector<2x128xf32>
      %350 = arith.addf %349, %345 : vector<2x128xf32>
      %351 = tpu.reciprocal %350 {approx = true} : vector<2x128xf32> -> vector<2x128xf32>
      %352 = arith.mulf %348, %351 : vector<2x128xf32>
      %353 = arith.index_cast %329 : i32 to index
      %c0_131 = arith.constant 0 : index
      %354 = vector.load %arg14[%353, %c0_131] : memref<128x128xf32, #tpu.memory_space<vmem>>, vector<2x128xf32>
      tpu.vector_store %arg14[%353, %c0_131], %352 {strides = array<i32>} : memref<128x128xf32, #tpu.memory_space<vmem>>, vector<2x128xf32>,
      %355 = arith.addf %88, %326 : vector<2x128xf32>
      %356 = arith.subf %355, %331 : vector<2x128xf32>
      %357 = math.absf %356 : vector<2x128xf32>
      %cst_132 = arith.constant 0.000000e+00 : f32
      %358 = vector.broadcast %cst_132 : f32 to vector<2x128xf32>
      %359 = arith.subf %358, %357 : vector<2x128xf32>
      %360 = math.exp %359 : vector<2x128xf32>
      %cst_133 = arith.constant 0.000000e+00 : f32
      %361 = vector.broadcast %cst_133 : f32 to vector<2x128xf32>
      %362 = arith.cmpf oge, %356, %361 : vector<2x128xf32>
      %cst_134 = arith.constant 1.000000e+00 : f32
      %363 = vector.broadcast %cst_134 : f32 to vector<2x128xf32>
      %364 = arith.select %362, %363, %360 : vector<2x128xi1>, vector<2x128xf32>
      %cst_135 = arith.constant 1.000000e+00 : f32
      %365 = vector.broadcast %cst_135 : f32 to vector<2x128xf32>
      %366 = arith.select %362, %360, %365 : vector<2x128xi1>, vector<2x128xf32>
      %367 = arith.mulf %364, %323 : vector<2x128xf32>
      %368 = arith.mulf %366, %333 : vector<2x128xf32>
      %369 = arith.addf %367, %368 : vector<2x128xf32>
      %370 = arith.mulf %364, %325 : vector<2x128xf32>
      %371 = arith.addf %370, %366 : vector<2x128xf32>
      %372 = arith.maximumf %355, %331 : vector<2x128xf32>
      %c8_i32_136 = arith.constant 8 : i32
      %373 = arith.muli %arg15, %c8_i32_136 : i32
      %c4_i32_137 = arith.constant 4 : i32
      %374 = arith.addi %373, %c4_i32_137 : i32
      %c2_i32_138 = arith.constant 2 : i32
      %375 = arith.muli %374, %c2_i32_138 : i32
      %376 = arith.index_cast %375 : i32 to index
      %c0_139 = arith.constant 0 : index
      %377 = vector.load %arg12[%376, %c0_139] : memref<128x128xf32, #tpu.memory_space<vmem>>, vector<2x128xf32>
      %378 = arith.index_cast %375 : i32 to index
      %c0_140 = arith.constant 0 : index
      %379 = vector.load %arg13[%378, %c0_140] : memref<128x128xf32, #tpu.memory_space<vmem>>, vector<2x128xf32>
      %380 = arith.addf %91, %377 : vector<2x128xf32>
      %381 = arith.subf %372, %380 : vector<2x128xf32>
      %382 = math.absf %381 : vector<2x128xf32>
      %cst_141 = arith.constant 0.000000e+00 : f32
      %383 = vector.broadcast %cst_141 : f32 to vector<2x128xf32>
      %384 = arith.subf %383, %382 : vector<2x128xf32>
      %385 = math.exp %384 : vector<2x128xf32>
      %cst_142 = arith.constant 0.000000e+00 : f32
      %386 = vector.broadcast %cst_142 : f32 to vector<2x128xf32>
      %387 = arith.cmpf oge, %381, %386 : vector<2x128xf32>
      %cst_143 = arith.constant 1.000000e+00 : f32
      %388 = vector.broadcast %cst_143 : f32 to vector<2x128xf32>
      %389 = arith.select %387, %388, %385 : vector<2x128xi1>, vector<2x128xf32>
      %cst_144 = arith.constant 1.000000e+00 : f32
      %390 = vector.broadcast %cst_144 : f32 to vector<2x128xf32>
      %391 = arith.select %387, %385, %390 : vector<2x128xi1>, vector<2x128xf32>
      %392 = arith.mulf %389, %369 : vector<2x128xf32>
      %393 = arith.mulf %391, %379 : vector<2x128xf32>
      %394 = arith.addf %392, %393 : vector<2x128xf32>
      %395 = arith.mulf %389, %371 : vector<2x128xf32>
      %396 = arith.addf %395, %391 : vector<2x128xf32>
      %397 = tpu.reciprocal %396 {approx = true} : vector<2x128xf32> -> vector<2x128xf32>
      %398 = arith.mulf %394, %397 : vector<2x128xf32>
      %399 = arith.index_cast %375 : i32 to index
      %c0_145 = arith.constant 0 : index
      %400 = vector.load %arg14[%399, %c0_145] : memref<128x128xf32, #tpu.memory_space<vmem>>, vector<2x128xf32>
      tpu.vector_store %arg14[%399, %c0_145], %398 {strides = array<i32>} : memref<128x128xf32, #tpu.memory_space<vmem>>, vector<2x128xf32>,
      %401 = arith.addf %88, %372 : vector<2x128xf32>
      %402 = arith.subf %401, %377 : vector<2x128xf32>
      %403 = math.absf %402 : vector<2x128xf32>
      %cst_146 = arith.constant 0.000000e+00 : f32
      %404 = vector.broadcast %cst_146 : f32 to vector<2x128xf32>
      %405 = arith.subf %404, %403 : vector<2x128xf32>
      %406 = math.exp %405 : vector<2x128xf32>
      %cst_147 = arith.constant 0.000000e+00 : f32
      %407 = vector.broadcast %cst_147 : f32 to vector<2x128xf32>
      %408 = arith.cmpf oge, %402, %407 : vector<2x128xf32>
      %cst_148 = arith.constant 1.000000e+00 : f32
      %409 = vector.broadcast %cst_148 : f32 to vector<2x128xf32>
      %410 = arith.select %408, %409, %406 : vector<2x128xi1>, vector<2x128xf32>
      %cst_149 = arith.constant 1.000000e+00 : f32
      %411 = vector.broadcast %cst_149 : f32 to vector<2x128xf32>
      %412 = arith.select %408, %406, %411 : vector<2x128xi1>, vector<2x128xf32>
      %413 = arith.mulf %410, %369 : vector<2x128xf32>
      %414 = arith.mulf %412, %379 : vector<2x128xf32>
      %415 = arith.addf %413, %414 : vector<2x128xf32>
      %416 = arith.mulf %410, %371 : vector<2x128xf32>
      %417 = arith.addf %416, %412 : vector<2x128xf32>
      %418 = arith.maximumf %401, %377 : vector<2x128xf32>
      %c8_i32_150 = arith.constant 8 : i32
      %419 = arith.muli %arg15, %c8_i32_150 : i32
      %c5_i32 = arith.constant 5 : i32
      %420 = arith.addi %419, %c5_i32 : i32
      %c2_i32_151 = arith.constant 2 : i32
      %421 = arith.muli %420, %c2_i32_151 : i32
      %422 = arith.index_cast %421 : i32 to index
      %c0_152 = arith.constant 0 : index
      %423 = vector.load %arg12[%422, %c0_152] : memref<128x128xf32, #tpu.memory_space<vmem>>, vector<2x128xf32>
      %424 = arith.index_cast %421 : i32 to index
      %c0_153 = arith.constant 0 : index
      %425 = vector.load %arg13[%424, %c0_153] : memref<128x128xf32, #tpu.memory_space<vmem>>, vector<2x128xf32>
      %426 = arith.addf %91, %423 : vector<2x128xf32>
      %427 = arith.subf %418, %426 : vector<2x128xf32>
      %428 = math.absf %427 : vector<2x128xf32>
      %cst_154 = arith.constant 0.000000e+00 : f32
      %429 = vector.broadcast %cst_154 : f32 to vector<2x128xf32>
      %430 = arith.subf %429, %428 : vector<2x128xf32>
      %431 = math.exp %430 : vector<2x128xf32>
      %cst_155 = arith.constant 0.000000e+00 : f32
      %432 = vector.broadcast %cst_155 : f32 to vector<2x128xf32>
      %433 = arith.cmpf oge, %427, %432 : vector<2x128xf32>
      %cst_156 = arith.constant 1.000000e+00 : f32
      %434 = vector.broadcast %cst_156 : f32 to vector<2x128xf32>
      %435 = arith.select %433, %434, %431 : vector<2x128xi1>, vector<2x128xf32>
      %cst_157 = arith.constant 1.000000e+00 : f32
      %436 = vector.broadcast %cst_157 : f32 to vector<2x128xf32>
      %437 = arith.select %433, %431, %436 : vector<2x128xi1>, vector<2x128xf32>
      %438 = arith.mulf %435, %415 : vector<2x128xf32>
      %439 = arith.mulf %437, %425 : vector<2x128xf32>
      %440 = arith.addf %438, %439 : vector<2x128xf32>
      %441 = arith.mulf %435, %417 : vector<2x128xf32>
      %442 = arith.addf %441, %437 : vector<2x128xf32>
      %443 = tpu.reciprocal %442 {approx = true} : vector<2x128xf32> -> vector<2x128xf32>
      %444 = arith.mulf %440, %443 : vector<2x128xf32>
      %445 = arith.index_cast %421 : i32 to index
      %c0_158 = arith.constant 0 : index
      %446 = vector.load %arg14[%445, %c0_158] : memref<128x128xf32, #tpu.memory_space<vmem>>, vector<2x128xf32>
      tpu.vector_store %arg14[%445, %c0_158], %444 {strides = array<i32>} : memref<128x128xf32, #tpu.memory_space<vmem>>, vector<2x128xf32>,
      %447 = arith.addf %88, %418 : vector<2x128xf32>
      %448 = arith.subf %447, %423 : vector<2x128xf32>
      %449 = math.absf %448 : vector<2x128xf32>
      %cst_159 = arith.constant 0.000000e+00 : f32
      %450 = vector.broadcast %cst_159 : f32 to vector<2x128xf32>
      %451 = arith.subf %450, %449 : vector<2x128xf32>
      %452 = math.exp %451 : vector<2x128xf32>
      %cst_160 = arith.constant 0.000000e+00 : f32
      %453 = vector.broadcast %cst_160 : f32 to vector<2x128xf32>
      %454 = arith.cmpf oge, %448, %453 : vector<2x128xf32>
      %cst_161 = arith.constant 1.000000e+00 : f32
      %455 = vector.broadcast %cst_161 : f32 to vector<2x128xf32>
      %456 = arith.select %454, %455, %452 : vector<2x128xi1>, vector<2x128xf32>
      %cst_162 = arith.constant 1.000000e+00 : f32
      %457 = vector.broadcast %cst_162 : f32 to vector<2x128xf32>
      %458 = arith.select %454, %452, %457 : vector<2x128xi1>, vector<2x128xf32>
      %459 = arith.mulf %456, %415 : vector<2x128xf32>
      %460 = arith.mulf %458, %425 : vector<2x128xf32>
      %461 = arith.addf %459, %460 : vector<2x128xf32>
      %462 = arith.mulf %456, %417 : vector<2x128xf32>
      %463 = arith.addf %462, %458 : vector<2x128xf32>
      %464 = arith.maximumf %447, %423 : vector<2x128xf32>
      %c8_i32_163 = arith.constant 8 : i32
      %465 = arith.muli %arg15, %c8_i32_163 : i32
      %c6_i32 = arith.constant 6 : i32
      %466 = arith.addi %465, %c6_i32 : i32
      %c2_i32_164 = arith.constant 2 : i32
      %467 = arith.muli %466, %c2_i32_164 : i32
      %468 = arith.index_cast %467 : i32 to index
      %c0_165 = arith.constant 0 : index
      %469 = vector.load %arg12[%468, %c0_165] : memref<128x128xf32, #tpu.memory_space<vmem>>, vector<2x128xf32>
      %470 = arith.index_cast %467 : i32 to index
      %c0_166 = arith.constant 0 : index
      %471 = vector.load %arg13[%470, %c0_166] : memref<128x128xf32, #tpu.memory_space<vmem>>, vector<2x128xf32>
      %472 = arith.addf %91, %469 : vector<2x128xf32>
      %473 = arith.subf %464, %472 : vector<2x128xf32>
      %474 = math.absf %473 : vector<2x128xf32>
      %cst_167 = arith.constant 0.000000e+00 : f32
      %475 = vector.broadcast %cst_167 : f32 to vector<2x128xf32>
      %476 = arith.subf %475, %474 : vector<2x128xf32>
      %477 = math.exp %476 : vector<2x128xf32>
      %cst_168 = arith.constant 0.000000e+00 : f32
      %478 = vector.broadcast %cst_168 : f32 to vector<2x128xf32>
      %479 = arith.cmpf oge, %473, %478 : vector<2x128xf32>
      %cst_169 = arith.constant 1.000000e+00 : f32
      %480 = vector.broadcast %cst_169 : f32 to vector<2x128xf32>
      %481 = arith.select %479, %480, %477 : vector<2x128xi1>, vector<2x128xf32>
      %cst_170 = arith.constant 1.000000e+00 : f32
      %482 = vector.broadcast %cst_170 : f32 to vector<2x128xf32>
      %483 = arith.select %479, %477, %482 : vector<2x128xi1>, vector<2x128xf32>
      %484 = arith.mulf %481, %461 : vector<2x128xf32>
      %485 = arith.mulf %483, %471 : vector<2x128xf32>
      %486 = arith.addf %484, %485 : vector<2x128xf32>
      %487 = arith.mulf %481, %463 : vector<2x128xf32>
      %488 = arith.addf %487, %483 : vector<2x128xf32>
      %489 = tpu.reciprocal %488 {approx = true} : vector<2x128xf32> -> vector<2x128xf32>
      %490 = arith.mulf %486, %489 : vector<2x128xf32>
      %491 = arith.index_cast %467 : i32 to index
      %c0_171 = arith.constant 0 : index
      %492 = vector.load %arg14[%491, %c0_171] : memref<128x128xf32, #tpu.memory_space<vmem>>, vector<2x128xf32>
      tpu.vector_store %arg14[%491, %c0_171], %490 {strides = array<i32>} : memref<128x128xf32, #tpu.memory_space<vmem>>, vector<2x128xf32>,
      %493 = arith.addf %88, %464 : vector<2x128xf32>
      %494 = arith.subf %493, %469 : vector<2x128xf32>
      %495 = math.absf %494 : vector<2x128xf32>
      %cst_172 = arith.constant 0.000000e+00 : f32
      %496 = vector.broadcast %cst_172 : f32 to vector<2x128xf32>
      %497 = arith.subf %496, %495 : vector<2x128xf32>
      %498 = math.exp %497 : vector<2x128xf32>
      %cst_173 = arith.constant 0.000000e+00 : f32
      %499 = vector.broadcast %cst_173 : f32 to vector<2x128xf32>
      %500 = arith.cmpf oge, %494, %499 : vector<2x128xf32>
      %cst_174 = arith.constant 1.000000e+00 : f32
      %501 = vector.broadcast %cst_174 : f32 to vector<2x128xf32>
      %502 = arith.select %500, %501, %498 : vector<2x128xi1>, vector<2x128xf32>
      %cst_175 = arith.constant 1.000000e+00 : f32
      %503 = vector.broadcast %cst_175 : f32 to vector<2x128xf32>
      %504 = arith.select %500, %498, %503 : vector<2x128xi1>, vector<2x128xf32>
      %505 = arith.mulf %502, %461 : vector<2x128xf32>
      %506 = arith.mulf %504, %471 : vector<2x128xf32>
      %507 = arith.addf %505, %506 : vector<2x128xf32>
      %508 = arith.mulf %502, %463 : vector<2x128xf32>
      %509 = arith.addf %508, %504 : vector<2x128xf32>
      %510 = arith.maximumf %493, %469 : vector<2x128xf32>
      %c8_i32_176 = arith.constant 8 : i32
      %511 = arith.muli %arg15, %c8_i32_176 : i32
      %c7_i32 = arith.constant 7 : i32
      %512 = arith.addi %511, %c7_i32 : i32
      %c2_i32_177 = arith.constant 2 : i32
      %513 = arith.muli %512, %c2_i32_177 : i32
      %514 = arith.index_cast %513 : i32 to index
      %c0_178 = arith.constant 0 : index
      %515 = vector.load %arg12[%514, %c0_178] : memref<128x128xf32, #tpu.memory_space<vmem>>, vector<2x128xf32>
      %516 = arith.index_cast %513 : i32 to index
      %c0_179 = arith.constant 0 : index
      %517 = vector.load %arg13[%516, %c0_179] : memref<128x128xf32, #tpu.memory_space<vmem>>, vector<2x128xf32>
      %518 = arith.addf %91, %515 : vector<2x128xf32>
      %519 = arith.subf %510, %518 : vector<2x128xf32>
      %520 = math.absf %519 : vector<2x128xf32>
      %cst_180 = arith.constant 0.000000e+00 : f32
      %521 = vector.broadcast %cst_180 : f32 to vector<2x128xf32>
      %522 = arith.subf %521, %520 : vector<2x128xf32>
      %523 = math.exp %522 : vector<2x128xf32>
      %cst_181 = arith.constant 0.000000e+00 : f32
      %524 = vector.broadcast %cst_181 : f32 to vector<2x128xf32>
      %525 = arith.cmpf oge, %519, %524 : vector<2x128xf32>
      %cst_182 = arith.constant 1.000000e+00 : f32
      %526 = vector.broadcast %cst_182 : f32 to vector<2x128xf32>
      %527 = arith.select %525, %526, %523 : vector<2x128xi1>, vector<2x128xf32>
      %cst_183 = arith.constant 1.000000e+00 : f32
      %528 = vector.broadcast %cst_183 : f32 to vector<2x128xf32>
      %529 = arith.select %525, %523, %528 : vector<2x128xi1>, vector<2x128xf32>
      %530 = arith.mulf %527, %507 : vector<2x128xf32>
      %531 = arith.mulf %529, %517 : vector<2x128xf32>
      %532 = arith.addf %530, %531 : vector<2x128xf32>
      %533 = arith.mulf %527, %509 : vector<2x128xf32>
      %534 = arith.addf %533, %529 : vector<2x128xf32>
      %535 = tpu.reciprocal %534 {approx = true} : vector<2x128xf32> -> vector<2x128xf32>
      %536 = arith.mulf %532, %535 : vector<2x128xf32>
      %537 = arith.index_cast %513 : i32 to index
      %c0_184 = arith.constant 0 : index
      %538 = vector.load %arg14[%537, %c0_184] : memref<128x128xf32, #tpu.memory_space<vmem>>, vector<2x128xf32>
      tpu.vector_store %arg14[%537, %c0_184], %536 {strides = array<i32>} : memref<128x128xf32, #tpu.memory_space<vmem>>, vector<2x128xf32>,
      %539 = arith.addf %88, %510 : vector<2x128xf32>
      %540 = arith.subf %539, %515 : vector<2x128xf32>
      %541 = math.absf %540 : vector<2x128xf32>
      %cst_185 = arith.constant 0.000000e+00 : f32
      %542 = vector.broadcast %cst_185 : f32 to vector<2x128xf32>
      %543 = arith.subf %542, %541 : vector<2x128xf32>
      %544 = math.exp %543 : vector<2x128xf32>
      %cst_186 = arith.constant 0.000000e+00 : f32
      %545 = vector.broadcast %cst_186 : f32 to vector<2x128xf32>
      %546 = arith.cmpf oge, %540, %545 : vector<2x128xf32>
      %cst_187 = arith.constant 1.000000e+00 : f32
      %547 = vector.broadcast %cst_187 : f32 to vector<2x128xf32>
      %548 = arith.select %546, %547, %544 : vector<2x128xi1>, vector<2x128xf32>
      %cst_188 = arith.constant 1.000000e+00 : f32
      %549 = vector.broadcast %cst_188 : f32 to vector<2x128xf32>
      %550 = arith.select %546, %544, %549 : vector<2x128xi1>, vector<2x128xf32>
      %551 = arith.mulf %548, %507 : vector<2x128xf32>
      %552 = arith.mulf %550, %517 : vector<2x128xf32>
      %553 = arith.addf %551, %552 : vector<2x128xf32>
      %554 = arith.mulf %548, %509 : vector<2x128xf32>
      %555 = arith.addf %554, %550 : vector<2x128xf32>
      %556 = arith.maximumf %539, %515 : vector<2x128xf32>
      scf.yield %553, %555, %556 : vector<2x128xf32>, vector<2x128xf32>, vector<2x128xf32>
    }
    %c8_i32_38 = arith.constant 8 : i32
    %c0_39 = arith.constant 0 : index
    %c0_40 = arith.constant 0 : index
    %97 = vector.load %arg14[%c0_39, %c0_40] : memref<128x128xf32, #tpu.memory_space<vmem>>, vector<128x128xf32>
    %98 = arith.mulf %85, %97 : vector<128x128xf32>
    %99 = arith.truncf %98 : vector<128x128xf32> to vector<128x128xbf16>
    %c0_41 = arith.constant 0 : index
    %c0_42 = arith.constant 0 : index
    %100 = vector.load %arg7[%c0_41, %c0_42] : memref<128x128xbf16, #tpu.memory_space<vmem>>, vector<128x128xbf16>
    %cst_43 = arith.constant dense<0.000000e+00> : vector<128x128xf32>
    %101 = tpu.matmul %99, %100, %cst_43 {dimension_numbers = #tpu.dot_dimension_numbers<[1], [0], [0], [1], [0, 0, 1, 1], [], []>} : vector<128x128xbf16>, vector<128x128xbf16>, vector<128x128xf32> -> vector<128x128xf32>
    %c11 = arith.constant 11 : index
    %c0_44 = arith.constant 0 : index
    %102 = vector.load %arg2[%c11, %c0_44] : memref<16x128xf32, #tpu.memory_space<vmem>>, vector<1x128xf32>
    %103 = vector.broadcast %102 : vector<1x128xf32> to vector<128x128xf32>
    %104 = arith.mulf %103, %101 : vector<128x128xf32>
    %105 = arith.addf %1, %104 : vector<128x128xf32>
    %c4 = arith.constant 4 : index
    %c0_45 = arith.constant 0 : index
    %106 = vector.load %arg2[%c4, %c0_45] : memref<16x128xf32, #tpu.memory_space<vmem>>, vector<1x128xf32>
    %c5 = arith.constant 5 : index
    %c0_46 = arith.constant 0 : index
    %107 = vector.load %arg2[%c5, %c0_46] : memref<16x128xf32, #tpu.memory_space<vmem>>, vector<1x128xf32>
    %cst_47 = arith.constant dense<0.000000e+00> : vector<128xf32>
    %108 = vector.multi_reduction <add>, %105, %cst_47 [1] : vector<128x128xf32> to vector<128xf32>
    %109 = vector.shape_cast %108 : vector<128xf32> to vector<128x1xf32>
    %cst_48 = arith.constant 1.280000e+02 : f32
    %110 = vector.broadcast %cst_48 : f32 to vector<128x1xf32>
    %111 = arith.divf %109, %110 : vector<128x1xf32>
    %112 = vector.broadcast %111 : vector<128x1xf32> to vector<128x128xf32>
    %113 = arith.subf %105, %112 : vector<128x128xf32>
    %114 = arith.mulf %113, %113 : vector<128x128xf32>
    %cst_49 = arith.constant dense<0.000000e+00> : vector<128xf32>
    %115 = vector.multi_reduction <add>, %114, %cst_49 [1] : vector<128x128xf32> to vector<128xf32>
    %116 = vector.shape_cast %115 : vector<128xf32> to vector<128x1xf32>
    %cst_50 = arith.constant 1.280000e+02 : f32
    %117 = vector.broadcast %cst_50 : f32 to vector<128x1xf32>
    %118 = arith.divf %116, %117 : vector<128x1xf32>
    %119 = vector.broadcast %111 : vector<128x1xf32> to vector<128x128xf32>
    %120 = arith.subf %105, %119 : vector<128x128xf32>
    %cst_51 = arith.constant 9.99999974E-6 : f32
    %121 = vector.broadcast %cst_51 : f32 to vector<128x1xf32>
    %122 = arith.addf %118, %121 : vector<128x1xf32>
    %123 = math.rsqrt %122 : vector<128x1xf32>
    %124 = vector.broadcast %123 : vector<128x1xf32> to vector<128x128xf32>
    %125 = arith.mulf %120, %124 : vector<128x128xf32>
    %126 = vector.broadcast %106 : vector<1x128xf32> to vector<128x128xf32>
    %127 = arith.mulf %125, %126 : vector<128x128xf32>
    %128 = vector.broadcast %107 : vector<1x128xf32> to vector<128x128xf32>
    %129 = arith.addf %127, %128 : vector<128x128xf32>
    %c2_i32_52 = arith.constant 2 : i32
    %130 = tpu.dynamic_rotate %129 by %c2_i32_52 dim 0 : vector<128x128xf32>, i32 -> vector<128x128xf32>
    %c126_i32_53 = arith.constant 126 : i32
    %131 = tpu.dynamic_rotate %129 by %c126_i32_53 dim 0 : vector<128x128xf32>, i32 -> vector<128x128xf32>
    %c16_i32_54 = arith.constant 16 : i32
    %132 = tpu.dynamic_rotate %129 by %c16_i32_54 dim 0 : vector<128x128xf32>, i32 -> vector<128x128xf32>
    %c112_i32_55 = arith.constant 112 : i32
    %133 = tpu.dynamic_rotate %129 by %c112_i32_55 dim 0 : vector<128x128xf32>, i32 -> vector<128x128xf32>
    %c0_i32_56 = arith.constant 0 : i32
    %134 = vector.broadcast %c0_i32_56 : i32 to vector<128x128xi32>
    %135 = arith.cmpi eq, %0, %134 : vector<128x128xi32>
    %c1_i32_57 = arith.constant 1 : i32
    %136 = vector.broadcast %c1_i32_57 : i32 to vector<128x128xi32>
    %137 = arith.cmpi eq, %0, %136 : vector<128x128xi32>
    %c2_i32_58 = arith.constant 2 : i32
    %138 = vector.broadcast %c2_i32_58 : i32 to vector<128x128xi32>
    %139 = arith.cmpi eq, %0, %138 : vector<128x128xi32>
    %c3_i32_59 = arith.constant 3 : i32
    %140 = vector.broadcast %c3_i32_59 : i32 to vector<128x128xi32>
    %141 = arith.cmpi eq, %0, %140 : vector<128x128xi32>
    %c4_i32_60 = arith.constant 4 : i32
    %142 = vector.broadcast %c4_i32_60 : i32 to vector<128x128xi32>
    %143 = arith.cmpi eq, %0, %142 : vector<128x128xi32>
    %cst_61 = arith.constant 0.000000e+00 : f32
    %144 = vector.broadcast %cst_61 : f32 to vector<128x128xf32>
    %145 = arith.select %143, %129, %144 : vector<128x128xi1>, vector<128x128xf32>
    %146 = arith.select %141, %133, %145 : vector<128x128xi1>, vector<128x128xf32>
    %147 = arith.select %139, %132, %146 : vector<128x128xi1>, vector<128x128xf32>
    %148 = arith.select %137, %131, %147 : vector<128x128xi1>, vector<128x128xf32>
    %149 = arith.select %135, %130, %148 : vector<128x128xi1>, vector<128x128xf32>
    %c9 = arith.constant 9 : index
    %c0_62 = arith.constant 0 : index
    %150 = vector.load %arg2[%c9, %c0_62] : memref<16x128xf32, #tpu.memory_space<vmem>>, vector<1x128xf32>
    %c10 = arith.constant 10 : index
    %c0_63 = arith.constant 0 : index
    %151 = vector.load %arg2[%c10, %c0_63] : memref<16x128xf32, #tpu.memory_space<vmem>>, vector<1x128xf32>
    %152 = vector.broadcast %150 : vector<1x128xf32> to vector<128x128xf32>
    %153 = arith.mulf %129, %152 : vector<128x128xf32>
    %cst_64 = arith.constant 1.000000e+00 : f32
    %154 = vector.broadcast %cst_64 : f32 to vector<1x128xf32>
    %155 = arith.subf %154, %150 : vector<1x128xf32>
    %156 = vector.broadcast %155 : vector<1x128xf32> to vector<128x128xf32>
    %157 = arith.mulf %149, %156 : vector<128x128xf32>
    %158 = arith.addf %153, %157 : vector<128x128xf32>
    %159 = vector.broadcast %151 : vector<1x128xf32> to vector<128x128xf32>
    %160 = arith.mulf %129, %159 : vector<128x128xf32>
    %cst_65 = arith.constant 1.000000e+00 : f32
    %161 = vector.broadcast %cst_65 : f32 to vector<1x128xf32>
    %162 = arith.subf %161, %151 : vector<1x128xf32>
    %163 = vector.broadcast %162 : vector<1x128xf32> to vector<128x128xf32>
    %164 = arith.mulf %149, %163 : vector<128x128xf32>
    %165 = arith.addf %160, %164 : vector<128x128xf32>
    %166 = arith.truncf %158 : vector<128x128xf32> to vector<128x128xbf16>
    %c0_66 = arith.constant 0 : index
    %c0_67 = arith.constant 0 : index
    %167 = vector.load %arg8[%c0_66, %c0_67] : memref<128x512xbf16, #tpu.memory_space<vmem>>, vector<128x512xbf16>
    %cst_68 = arith.constant dense<0.000000e+00> : vector<128x512xf32>
    %168 = tpu.matmul %166, %167, %cst_68 {dimension_numbers = #tpu.dot_dimension_numbers<[1], [0], [0], [1], [0, 0, 1, 1], [], []>} : vector<128x128xbf16>, vector<128x512xbf16>, vector<128x512xf32> -> vector<128x512xf32>
    %cst_69 = arith.constant 0.000000e+00 : f32
    %169 = vector.broadcast %cst_69 : f32 to vector<128x512xf32>
    %170 = arith.maximumf %168, %169 : vector<128x512xf32>
    %171 = arith.mulf %170, %170 : vector<128x512xf32>
    %172 = arith.truncf %171 : vector<128x512xf32> to vector<128x512xbf16>
    %c0_70 = arith.constant 0 : index
    %c0_71 = arith.constant 0 : index
    %173 = vector.load %arg9[%c0_70, %c0_71] : memref<512x128xbf16, #tpu.memory_space<vmem>>, vector<512x128xbf16>
    %cst_72 = arith.constant dense<0.000000e+00> : vector<128x128xf32>
    %174 = tpu.matmul %172, %173, %cst_72 {dimension_numbers = #tpu.dot_dimension_numbers<[1], [0], [0], [1], [0, 0, 1, 1], [], []>} : vector<128x512xbf16>, vector<512x128xbf16>, vector<128x128xf32> -> vector<128x128xf32>
    %175 = arith.truncf %165 : vector<128x128xf32> to vector<128x128xbf16>
    %c0_73 = arith.constant 0 : index
    %c0_74 = arith.constant 0 : index
    %176 = vector.load %arg10[%c0_73, %c0_74] : memref<128x128xbf16, #tpu.memory_space<vmem>>, vector<128x128xbf16>
    %cst_75 = arith.constant dense<0.000000e+00> : vector<128x128xf32>
    %177 = tpu.matmul %175, %176, %cst_75 {dimension_numbers = #tpu.dot_dimension_numbers<[1], [0], [0], [1], [0, 0, 1, 1], [], []>} : vector<128x128xbf16>, vector<128x128xbf16>, vector<128x128xf32> -> vector<128x128xf32>
    %178 = arith.negf %177 : vector<128x128xf32>
    %179 = math.exp %178 : vector<128x128xf32>
    %cst_76 = arith.constant 1.000000e+00 : f32
    %180 = vector.broadcast %cst_76 : f32 to vector<128x128xf32>
    %181 = arith.addf %180, %179 : vector<128x128xf32>
    %182 = arith.divf %180, %181 : vector<128x128xf32>
    %c12 = arith.constant 12 : index
    %c0_77 = arith.constant 0 : index
    %183 = vector.load %arg2[%c12, %c0_77] : memref<16x128xf32, #tpu.memory_space<vmem>>, vector<1x128xf32>
    %184 = arith.mulf %182, %174 : vector<128x128xf32>
    %185 = vector.broadcast %183 : vector<1x128xf32> to vector<128x128xf32>
    %186 = arith.mulf %185, %184 : vector<128x128xf32>
    %187 = arith.addf %105, %186 : vector<128x128xf32>
    %c0_78 = arith.constant 0 : index
    %c0_79 = arith.constant 0 : index
    %188 = vector.load %arg11[%c0_78, %c0_79] : memref<128x128xf32, #tpu.memory_space<vmem>>, vector<128x128xf32>
    tpu.vector_store %arg11[%c0_78, %c0_79], %187 {strides = array<i32>} : memref<128x128xf32, #tpu.memory_space<vmem>>, vector<128x128xf32>,
    return
  }
  func.func @transform_0(%arg0: i32) -> (i32, i32) {
    %c0_i32 = arith.constant 0 : i32
    %c0_i32_0 = arith.constant 0 : i32
    %c0_i32_1 = arith.constant 0 : i32
    return %c0_i32, %c0_i32_0 : i32, i32
  }
  func.func @transform_1(%arg0: i32) -> (i32, i32) {
    %c0_i32 = arith.constant 0 : i32
    %c0_i32_0 = arith.constant 0 : i32
    %c0_i32_1 = arith.constant 0 : i32
    return %c0_i32, %c0_i32_0 : i32, i32
  }
  func.func @transform_2(%arg0: i32) -> (i32, i32) {
    %c0_i32 = arith.constant 0 : i32
    %c0_i32_0 = arith.constant 0 : i32
    %c0_i32_1 = arith.constant 0 : i32
    return %c0_i32, %c0_i32_0 : i32, i32
  }
  func.func @transform_3(%arg0: i32) -> (i32, i32) {
    %c0_i32 = arith.constant 0 : i32
    %c0_i32_0 = arith.constant 0 : i32
    %c0_i32_1 = arith.constant 0 : i32
    return %c0_i32, %c0_i32_0 : i32, i32
  }
  func.func @transform_4(%arg0: i32) -> (i32, i32) {
    %c0_i32 = arith.constant 0 : i32
    %c0_i32_0 = arith.constant 0 : i32
    %c0_i32_1 = arith.constant 0 : i32
    return %c0_i32, %c0_i32_0 : i32, i32
  }
  func.func @transform_5(%arg0: i32) -> (i32, i32) {
    %c0_i32 = arith.constant 0 : i32
    %c0_i32_0 = arith.constant 0 : i32
    %c0_i32_1 = arith.constant 0 : i32
    return %c0_i32, %c0_i32_0 : i32, i32
  }
  func.func @transform_6(%arg0: i32) -> (i32, i32) {
    %c0_i32 = arith.constant 0 : i32
    %c0_i32_0 = arith.constant 0 : i32
    %c0_i32_1 = arith.constant 0 : i32
    return %c0_i32, %c0_i32_0 : i32, i32
  }
  func.func @transform_7(%arg0: i32) -> (i32, i32) {
    %c0_i32 = arith.constant 0 : i32
    %c0_i32_0 = arith.constant 0 : i32
    %c0_i32_1 = arith.constant 0 : i32
    return %c0_i32, %c0_i32_0 : i32, i32
  }
  func.func @transform_8(%arg0: i32) -> (i32, i32) {
    %c0_i32 = arith.constant 0 : i32
    %c0_i32_0 = arith.constant 0 : i32
    %c0_i32_1 = arith.constant 0 : i32
    return %c0_i32, %c0_i32_0 : i32, i32
  }
  func.func @transform_9(%arg0: i32) -> (i32, i32) {
    %c0_i32 = arith.constant 0 : i32
    %c0_i32_0 = arith.constant 0 : i32
    %c0_i32_1 = arith.constant 0 : i32
    return %c0_i32, %c0_i32_0 : i32, i32
  }
  func.func @transform_10(%arg0: i32) -> (i32, i32) {
    %c0_i32 = arith.constant 0 : i32
    %c0_i32_0 = arith.constant 0 : i32
    %c0_i32_1 = arith.constant 0 : i32
    return %c0_i32, %c0_i32_0 : i32, i32
  }
}

</mosaic_0001>

<llo_original>
// kernel: _lambda_.4
$region0: #{_lambda_.4}
  #allocation0 [shape = 'u32[]', space=smem, size = 0x4, offset = 0x4, fixed_abs, tag = 'smem constant byte address 0x4 - core index']
  #allocation1 [shape = 'u32[144,128]{1,0:T(1,128)}', space=vmem, size = 0x12000, scoped, tag = 'internal scratch']
  %s0 = inlined_call_operand.vmem [shape: f32[128,8], index: 0, kind: input, shape index: {}]
  %s1 = inlined_call_operand.vmem [shape: bf16[8,128], index: 1, kind: input, shape index: {}]
  %s2 = inlined_call_operand.vmem [shape: f32[1,128], index: 2, kind: input, shape index: {}]
  %s3 = inlined_call_operand.vmem [shape: f32[128,128], index: 3, kind: output, shape index: {}]
  %s4 = sld [smem:[#allocation0]]
  $region22: #{_lambda_.4} parent=0
    _
  %s6 = ssub.s32 1, %s4
  %s7 = scalar_select 0, %s6, %s4
  // Predicated region
  $region2: #{_lambda_.4} parent=0 // pred_check
    _
  $region3: #{_lambda_.4} parent=0 // pred_check_branch
    %9 = sbr.rel (0) target = $region5
  $region4: #{_lambda_.4} parent=0 // pred_region
    _
  $region5: #{_lambda_.4} parent=0 // pred_fallthru
    _
  // Predicated region
  $region6: #{_lambda_.4} parent=0 // pred_check
    _
  $region7: #{_lambda_.4} parent=0 // pred_check_branch
    %11 = sbr.rel (0) target = $region9
  $region8: #{_lambda_.4} parent=0 // pred_region
    _
  $region9: #{_lambda_.4} parent=0 // pred_fallthru
    _
  // Predicated region
  $region10: #{_lambda_.4} parent=0 // pred_check
    _
  $region11: #{_lambda_.4} parent=0 // pred_check_branch
    %13 = sbr.rel (0) target = $region13
  $region12: #{_lambda_.4} parent=0 // pred_region
    _
  $region13: #{_lambda_.4} parent=0 // pred_fallthru
    _
  %v15 = vld [vmem:[%s0] sm:$0xff]
  %v16 = vld [vmem:[%s0 + $0x8] sm:$0xff]
  %v17 = vld [vmem:[%s0 + $0x10] sm:$0xff]
  %v18 = vld [vmem:[%s0 + $0x18] sm:$0xff]
  %v19 = vld [vmem:[%s0 + $0x20] sm:$0xff]
  %v20 = vld [vmem:[%s0 + $0x28] sm:$0xff]
  %v21 = vld [vmem:[%s0 + $0x30] sm:$0xff]
  %v22 = vld [vmem:[%s0 + $0x38] sm:$0xff]
  %v23 = vld [vmem:[%s0 + $0x40] sm:$0xff]
  %v24 = vld [vmem:[%s0 + $0x48] sm:$0xff]
  %v25 = vld [vmem:[%s0 + $0x50] sm:$0xff]
  %v26 = vld [vmem:[%s0 + $0x58] sm:$0xff]
  %v27 = vld [vmem:[%s0 + $0x60] sm:$0xff]
  %v28 = vld [vmem:[%s0 + $0x68] sm:$0xff]
  %v29 = vld [vmem:[%s0 + $0x70] sm:$0xff]
  %v30 = vld [vmem:[%s0 + $0x78] sm:$0xff]
  %v31 = vpack.c.bf16 %v16, %v15
  %v32 = vpack.c.bf16 %v18, %v17
  %v33 = vpack.c.bf16 %v20, %v19
  %v34 = vpack.c.bf16 %v22, %v21
  %v35 = vpack.c.bf16 %v24, %v23
  %v36 = vpack.c.bf16 %v26, %v25
  %v37 = vpack.c.bf16 %v28, %v27
  %v38 = vpack.c.bf16 %v30, %v29
  %v39 = vld [vmem:[%s1] sm:$0xf]
  %v40 = vld [vmem:[%s2] sm:$0x1]
  %v42 = vlaneseq
  %v43 = vshrl.u32 %v42, 7
  %v44 = vsub.s32 0, %v43
  %v45 = vrot.slane %v40, %v44
  %vm47 = vcmask 64512
  %v49 = vsel %vm47, %v31, 0
  %v52 = vsel %vm47, %v32, 0
  %v55 = vsel %vm47, %v33, 0
  %v58 = vsel %vm47, %v34, 0
  %v61 = vsel %vm47, %v35, 0
  %v64 = vsel %vm47, %v36, 0
  %v67 = vsel %vm47, %v37, 0
  %v70 = vsel %vm47, %v38, 0
  %vm72 = vcmask 1043456
  %v74 = vsel %vm72, %v39, 0
  %76 = vmatprep.subr.bf16.mxu0 0
  %77 = vmatpush1.bf16.msra.mxu0 0
  %78 = vmatprep.subr.bf16.mxu0 0
  %79 = vmatpush1.bf16.msra.mxu0 0
  %80 = vmatprep.subr.bf16.mxu0 0
  %81 = vmatpush1.bf16.msra.mxu0 0
  %82 = vmatprep.subr.bf16.mxu0 0
  %83 = vmatpush1.bf16.msra.mxu0 0
  %84 = vmatprep.subr.bf16.mxu0 0
  %85 = vmatpush1.bf16.msra.mxu0 0
  %86 = vmatprep.subr.bf16.mxu0 0
  %87 = vmatpush1.bf16.msra.mxu0 0
  %88 = vmatprep.subr.bf16.mxu0 0
  %89 = vmatpush1.bf16.msra.mxu0 0
  %90 = vmatprep.subr.bf16.mxu0 0
  %91 = vmatpush1.bf16.msra.mxu0 %v74
  %92 = vmatprep.subr.bf16.mxu0 0
  %93 = vmatpush2.bf16.msra.mxu0 0
  %94 = vmatprep.subr.bf16.mxu0 0
  %95 = vmatpush2.bf16.msra.mxu0 0
  %96 = vmatprep.subr.bf16.mxu0 0
  %97 = vmatpush2.bf16.msra.mxu0 0
  %98 = vmatprep.subr.bf16.mxu0 0
  %99 = vmatpush2.bf16.msra.mxu0 0
  %100 = vmatprep.subr.bf16.mxu0 0
  %101 = vmatpush2.bf16.msra.mxu0 0
  %102 = vmatprep.subr.bf16.mxu0 0
  %103 = vmatpush2.bf16.msra.mxu0 0
  %104 = vmatprep.subr.bf16.mxu0 0
  %105 = vmatpush2.bf16.msra.mxu0 0
  %106 = vmatprep.subr.bf16.mxu0 0
  %107 = vmatpush2.bf16.msra.mxu0 0
  %108 = vmatprep.mubr.bf16.mxu0 0
  %109 = vmatmul.mubr.bf16.gmra.mxu0 %v49
  %v110 = vpop.f32.mrf.mxu0
  %v111 = vadd.f32 %v45, %v110
  %v112 = vpop.f32.mrf.mxu0
  %v113 = vpop.f32.mrf.mxu0
  %v114 = vadd.f32 %v45, %v113
  %v115 = vpop.f32.mrf.mxu0
  %116 = vmatprep.mubr.bf16.mxu0 0
  %117 = vmatmul.mubr.bf16.gmra.mxu0 %v52
  %v118 = vpop.f32.mrf.mxu0
  %v119 = vadd.f32 %v45, %v118
  %v120 = vpop.f32.mrf.mxu0
  %v121 = vpop.f32.mrf.mxu0
  %v122 = vadd.f32 %v45, %v121
  %v123 = vpop.f32.mrf.mxu0
  %124 = vmatprep.mubr.bf16.mxu0 0
  %125 = vmatmul.mubr.bf16.gmra.mxu0 %v55
  %v126 = vpop.f32.mrf.mxu0
  %v127 = vadd.f32 %v45, %v126
  %v128 = vpop.f32.mrf.mxu0
  %v129 = vpop.f32.mrf.mxu0
  %v130 = vadd.f32 %v45, %v129
  %v131 = vpop.f32.mrf.mxu0
  %132 = vmatprep.mubr.bf16.mxu0 0
  %133 = vmatmul.mubr.bf16.gmra.mxu0 %v58
  %v134 = vpop.f32.mrf.mxu0
  %v135 = vadd.f32 %v45, %v134
  %v136 = vpop.f32.mrf.mxu0
  %v137 = vpop.f32.mrf.mxu0
  %v138 = vadd.f32 %v45, %v137
  %v139 = vpop.f32.mrf.mxu0
  %140 = vmatprep.mubr.bf16.mxu0 0
  %141 = vmatmul.mubr.bf16.gmra.mxu0 %v61
  %v142 = vpop.f32.mrf.mxu0
  %v143 = vadd.f32 %v45, %v142
  %v144 = vpop.f32.mrf.mxu0
  %v145 = vpop.f32.mrf.mxu0
  %v146 = vadd.f32 %v45, %v145
  %v147 = vpop.f32.mrf.mxu0
  %148 = vmatprep.mubr.bf16.mxu0 0
  %149 = vmatmul.mubr.bf16.gmra.mxu0 %v64
  %v150 = vpop.f32.mrf.mxu0
  %v151 = vadd.f32 %v45, %v150
  %v152 = vpop.f32.mrf.mxu0
  %v153 = vpop.f32.mrf.mxu0
  %v154 = vadd.f32 %v45, %v153
  %v155 = vpop.f32.mrf.mxu0
  %156 = vmatprep.mubr.bf16.mxu0 0
  %157 = vmatmul.mubr.bf16.gmra.mxu0 %v67
  %v158 = vpop.f32.mrf.mxu0
  %v159 = vadd.f32 %v45, %v158
  %v160 = vpop.f32.mrf.mxu0
  %v161 = vpop.f32.mrf.mxu0
  %v162 = vadd.f32 %v45, %v161
  %v163 = vpop.f32.mrf.mxu0
  %164 = vmatprep.mubr.bf16.mxu0 0
  %165 = vmatmul.mubr.bf16.gmra.mxu0 %v70
  %v166 = vpop.f32.mrf.mxu0
  %v167 = vadd.f32 %v45, %v166
  %v168 = vpop.f32.mrf.mxu0
  %v169 = vpop.f32.mrf.mxu0
  %v170 = vadd.f32 %v45, %v169
  %v171 = vpop.f32.mrf.mxu0
  %172 = vdwg.mxu0
  %173 = vst [vmem:[%s3] sm:$0xff] %v111
  %174 = vst [vmem:[%s3 + $0x8] sm:$0xff] %v114
  %175 = vst [vmem:[%s3 + $0x10] sm:$0xff] %v119
  %176 = vst [vmem:[%s3 + $0x18] sm:$0xff] %v122
  %177 = vst [vmem:[%s3 + $0x20] sm:$0xff] %v127
  %178 = vst [vmem:[%s3 + $0x28] sm:$0xff] %v130
  %179 = vst [vmem:[%s3 + $0x30] sm:$0xff] %v135
  %180 = vst [vmem:[%s3 + $0x38] sm:$0xff] %v138
  %181 = vst [vmem:[%s3 + $0x40] sm:$0xff] %v143
  %182 = vst [vmem:[%s3 + $0x48] sm:$0xff] %v146
  %183 = vst [vmem:[%s3 + $0x50] sm:$0xff] %v151
  %184 = vst [vmem:[%s3 + $0x58] sm:$0xff] %v154
  %185 = vst [vmem:[%s3 + $0x60] sm:$0xff] %v159
  %186 = vst [vmem:[%s3 + $0x68] sm:$0xff] %v162
  %187 = vst [vmem:[%s3 + $0x70] sm:$0xff] %v167
  %188 = vst [vmem:[%s3 + $0x78] sm:$0xff] %v170
  // Predicated region
  $region14: #{_lambda_.4} parent=0 // pred_check
    _
  $region15: #{_lambda_.4} parent=0 // pred_check_branch
    %190 = sbr.rel (0) target = $region17
  $region16: #{_lambda_.4} parent=0 // pred_region
    _
  $region17: #{_lambda_.4} parent=0 // pred_fallthru
    _
  // Predicated region
  $region18: #{_lambda_.4} parent=0 // pred_check
    _
  $region19: #{_lambda_.4} parent=0 // pred_check_branch
    %192 = sbr.rel (0) target = $region21
  $region20: #{_lambda_.4} parent=0 // pred_region
    _
  $region21: #{_lambda_.4} parent=0 // pred_fallthru
    _

// kernel: _lambda_.7
$region0: #{_lambda_.7}
  #allocation0 [shape = 'u32[]', space=smem, size = 0x4, offset = 0x4, fixed_abs, tag = 'smem constant byte address 0x4 - core index']
  #allocation1 [shape = 'u32[144,128]{1,0:T(1,128)}', space=vmem, size = 0x12000, scoped, tag = 'internal scratch']
  %s0 = inlined_call_operand.vmem [shape: f32[128,128], index: 0, kind: input, shape index: {}]
  %s1 = inlined_call_operand.vmem [shape: bf16[128,64], index: 1, kind: input, shape index: {}]
  %s2 = inlined_call_operand.vmem [shape: f32[1,64], index: 2, kind: input, shape index: {}]
  %s3 = inlined_call_operand.vmem [shape: bf16[64,128], index: 3, kind: input, shape index: {}]
  %s4 = inlined_call_operand.vmem [shape: f32[1,128], index: 4, kind: input, shape index: {}]
  %s5 = inlined_call_operand.vmem [shape: f32[128,128], index: 5, kind: output, shape index: {}]
  %s6 = sld [smem:[#allocation0]]
  $region30: #{_lambda_.7} parent=0
    _
  %s8 = ssub.s32 1, %s6
  %s9 = scalar_select 0, %s8, %s6
  // Predicated region
  $region2: #{_lambda_.7} parent=0 // pred_check
    _
  $region3: #{_lambda_.7} parent=0 // pred_check_branch
    %11 = sbr.rel (0) target = $region5
  $region4: #{_lambda_.7} parent=0 // pred_region
    _
  $region5: #{_lambda_.7} parent=0 // pred_fallthru
    _
  // Predicated region
  $region6: #{_lambda_.7} parent=0 // pred_check
    _
  $region7: #{_lambda_.7} parent=0 // pred_check_branch
    %13 = sbr.rel (0) target = $region9
  $region8: #{_lambda_.7} parent=0 // pred_region
    _
  $region9: #{_lambda_.7} parent=0 // pred_fallthru
    _
  // Predicated region
  $region10: #{_lambda_.7} parent=0 // pred_check
    _
  $region11: #{_lambda_.7} parent=0 // pred_check_branch
    %15 = sbr.rel (0) target = $region13
  $region12: #{_lambda_.7} parent=0 // pred_region
    _
  $region13: #{_lambda_.7} parent=0 // pred_fallthru
    _
  // Predicated region
  $region14: #{_lambda_.7} parent=0 // pred_check
    _
  $region15: #{_lambda_.7} parent=0 // pred_check_branch
    %17 = sbr.rel (0) target = $region17
  $region16: #{_lambda_.7} parent=0 // pred_region
    _
  $region17: #{_lambda_.7} parent=0 // pred_fallthru
    _
  // Predicated region
  $region18: #{_lambda_.7} parent=0 // pred_check
    _
  $region19: #{_lambda_.7} parent=0 // pred_check_branch
    %19 = sbr.rel (0) target = $region21
  $region20: #{_lambda_.7} parent=0 // pred_region
    _
  $region21: #{_lambda_.7} parent=0 // pred_fallthru
    _
  %v21 = vld [vmem:[%s0] sm:$0xff]
  %v22 = vld [vmem:[%s0 + $0x8] sm:$0xff]
  %v23 = vld [vmem:[%s0 + $0x10] sm:$0xff]
  %v24 = vld [vmem:[%s0 + $0x18] sm:$0xff]
  %v25 = vld [vmem:[%s0 + $0x20] sm:$0xff]
  %v26 = vld [vmem:[%s0 + $0x28] sm:$0xff]
  %v27 = vld [vmem:[%s0 + $0x30] sm:$0xff]
  %v28 = vld [vmem:[%s0 + $0x38] sm:$0xff]
  %v29 = vld [vmem:[%s0 + $0x40] sm:$0xff]
  %v30 = vld [vmem:[%s0 + $0x48] sm:$0xff]
  %v31 = vld [vmem:[%s0 + $0x50] sm:$0xff]
  %v32 = vld [vmem:[%s0 + $0x58] sm:$0xff]
  %v33 = vld [vmem:[%s0 + $0x60] sm:$0xff]
  %v34 = vld [vmem:[%s0 + $0x68] sm:$0xff]
  %v35 = vld [vmem:[%s0 + $0x70] sm:$0xff]
  %v36 = vld [vmem:[%s0 + $0x78] sm:$0xff]
  %v37 = vpack.c.bf16 %v22, %v21
  %v38 = vpack.c.bf16 %v24, %v23
  %v39 = vpack.c.bf16 %v26, %v25
  %v40 = vpack.c.bf16 %v28, %v27
  %v41 = vpack.c.bf16 %v30, %v29
  %v42 = vpack.c.bf16 %v32, %v31
  %v43 = vpack.c.bf16 %v34, %v33
  %v44 = vpack.c.bf16 %v36, %v35
  %v45 = vld [vmem:[%s1] sm:$0xf]
  %v46 = vld [vmem:[%s1 + $0x4] sm:$0xf]
  %v47 = vld [vmem:[%s1 + $0x8] sm:$0xf]
  %v48 = vld [vmem:[%s1 + $0xc] sm:$0xf]
  %v49 = vld [vmem:[%s1 + $0x10] sm:$0xf]
  %v50 = vld [vmem:[%s1 + $0x14] sm:$0xf]
  %v51 = vld [vmem:[%s1 + $0x18] sm:$0xf]
  %v52 = vld [vmem:[%s1 + $0x1c] sm:$0xf]
  %v53 = vld [vmem:[%s1 + $0x20] sm:$0xf]
  %v54 = vld [vmem:[%s1 + $0x24] sm:$0xf]
  %v55 = vld [vmem:[%s1 + $0x28] sm:$0xf]
  %v56 = vld [vmem:[%s1 + $0x2c] sm:$0xf]
  %v57 = vld [vmem:[%s1 + $0x30] sm:$0xf]
  %v58 = vld [vmem:[%s1 + $0x34] sm:$0xf]
  %v59 = vld [vmem:[%s1 + $0x38] sm:$0xf]
  %v60 = vld [vmem:[%s1 + $0x3c] sm:$0xf]
  %v61 = vld [vmem:[%s2] sm:$0x1]
  %v63 = vlaneseq
  %v64 = vshrl.u32 %v63, 7
  %v65 = vsub.s32 0, %v64
  %v66 = vrot.slane %v61, %v65
  %v84 = vunpack.c.l.b16 %v45
  %v85 = vunpack.c.l.b16 %v46
  %v86 = vunpack.c.l.b16 %v47
  %v87 = vunpack.c.l.b16 %v48
  %v88 = vunpack.c.l.b16 %v49
  %v89 = vunpack.c.l.b16 %v50
  %v90 = vunpack.c.l.b16 %v51
  %v91 = vunpack.c.l.b16 %v52
  %v92 = vunpack.c.l.b16 %v53
  %v93 = vunpack.c.l.b16 %v54
  %v94 = vunpack.c.l.b16 %v55
  %v95 = vunpack.c.l.b16 %v56
  %v96 = vunpack.c.l.b16 %v57
  %v97 = vunpack.c.l.b16 %v58
  %v98 = vunpack.c.l.b16 %v59
  %v99 = vunpack.c.l.b16 %v60
  %v100 = vpack.c.b16 %v85, %v84
  %v101 = vpack.c.b16 %v87, %v86
  %v102 = vpack.c.b16 %v89, %v88
  %v103 = vpack.c.b16 %v91, %v90
  %v104 = vpack.c.b16 %v93, %v92
  %v105 = vpack.c.b16 %v95, %v94
  %v106 = vpack.c.b16 %v97, %v96
  %v107 = vpack.c.b16 %v99, %v98
  %116 = vmatprep.subr.bf16.mxu0 0
  %117 = vmatpush1.bf16.msra.mxu0 %v107
  %118 = vmatprep.subr.bf16.mxu0 0
  %119 = vmatpush1.bf16.msra.mxu0 %v106
  %120 = vmatprep.subr.bf16.mxu0 0
  %121 = vmatpush1.bf16.msra.mxu0 %v105
  %122 = vmatprep.subr.bf16.mxu0 0
  %123 = vmatpush1.bf16.msra.mxu0 %v104
  %124 = vmatprep.subr.bf16.mxu0 0
  %125 = vmatpush1.bf16.msra.mxu0 %v103
  %126 = vmatprep.subr.bf16.mxu0 0
  %127 = vmatpush1.bf16.msra.mxu0 %v102
  %128 = vmatprep.subr.bf16.mxu0 0
  %129 = vmatpush1.bf16.msra.mxu0 %v101
  %130 = vmatprep.subr.bf16.mxu0 0
  %131 = vmatpush1.bf16.msra.mxu0 %v100
  %132 = vmatprep.subr.bf16.mxu0 0
  %133 = vmatpush2.bf16.msra.mxu0 0
  %134 = vmatprep.subr.bf16.mxu0 0
  %135 = vmatpush2.bf16.msra.mxu0 0
  %136 = vmatprep.subr.bf16.mxu0 0
  %137 = vmatpush2.bf16.msra.mxu0 0
  %138 = vmatprep.subr.bf16.mxu0 0
  %139 = vmatpush2.bf16.msra.mxu0 0
  %140 = vmatprep.subr.bf16.mxu0 0
  %141 = vmatpush2.bf16.msra.mxu0 0
  %142 = vmatprep.subr.bf16.mxu0 0
  %143 = vmatpush2.bf16.msra.mxu0 0
  %144 = vmatprep.subr.bf16.mxu0 0
  %145 = vmatpush2.bf16.msra.mxu0 0
  %146 = vmatprep.subr.bf16.mxu0 0
  %147 = vmatpush2.bf16.msra.mxu0 0
  %148 = vmatprep.mubr.bf16.mxu0 0
  %149 = vmatmul.mubr.bf16.gmra.mxu0 %v37
  %v150 = vpop.f32.mrf.mxu0
  %v151 = vadd.f32 %v66, %v150
  %v152 = vpop.f32.mrf.mxu0
  %v153 = vpop.f32.mrf.mxu0
  %v154 = vadd.f32 %v66, %v153
  %v155 = vpop.f32.mrf.mxu0
  %156 = vmatprep.mubr.bf16.mxu0 0
  %157 = vmatmul.mubr.bf16.gmra.mxu0 %v38
  %v158 = vpop.f32.mrf.mxu0
  %v159 = vadd.f32 %v66, %v158
  %v160 = vpop.f32.mrf.mxu0
  %v161 = vpop.f32.mrf.mxu0
  %v162 = vadd.f32 %v66, %v161
  %v163 = vpop.f32.mrf.mxu0
  %164 = vmatprep.mubr.bf16.mxu0 0
  %165 = vmatmul.mubr.bf16.gmra.mxu0 %v39
  %v166 = vpop.f32.mrf.mxu0
  %v167 = vadd.f32 %v66, %v166
  %v168 = vpop.f32.mrf.mxu0
  %v169 = vpop.f32.mrf.mxu0
  %v170 = vadd.f32 %v66, %v169
  %v171 = vpop.f32.mrf.mxu0
  %172 = vmatprep.mubr.bf16.mxu0 0
  %173 = vmatmul.mubr.bf16.gmra.mxu0 %v40
  %v174 = vpop.f32.mrf.mxu0
  %v175 = vadd.f32 %v66, %v174
  %v176 = vpop.f32.mrf.mxu0
  %v177 = vpop.f32.mrf.mxu0
  %v178 = vadd.f32 %v66, %v177
  %v179 = vpop.f32.mrf.mxu0
  %180 = vmatprep.mubr.bf16.mxu0 0
  %181 = vmatmul.mubr.bf16.gmra.mxu0 %v41
  %v182 = vpop.f32.mrf.mxu0
  %v183 = vadd.f32 %v66, %v182
  %v184 = vpop.f32.mrf.mxu0
  %v185 = vpop.f32.mrf.mxu0
  %v186 = vadd.f32 %v66, %v185
  %v187 = vpop.f32.mrf.mxu0
  %188 = vmatprep.mubr.bf16.mxu0 0
  %189 = vmatmul.mubr.bf16.gmra.mxu0 %v42
  %v190 = vpop.f32.mrf.mxu0
  %v191 = vadd.f32 %v66, %v190
  %v192 = vpop.f32.mrf.mxu0
  %v193 = vpop.f32.mrf.mxu0
  %v194 = vadd.f32 %v66, %v193
  %v195 = vpop.f32.mrf.mxu0
  %196 = vmatprep.mubr.bf16.mxu0 0
  %197 = vmatmul.mubr.bf16.gmra.mxu0 %v43
  %v198 = vpop.f32.mrf.mxu0
  %v199 = vadd.f32 %v66, %v198
  %v200 = vpop.f32.mrf.mxu0
  %v201 = vpop.f32.mrf.mxu0
  %v202 = vadd.f32 %v66, %v201
  %v203 = vpop.f32.mrf.mxu0
  %204 = vmatprep.mubr.bf16.mxu0 0
  %205 = vmatmul.mubr.bf16.gmra.mxu0 %v44
  %v206 = vpop.f32.mrf.mxu0
  %v207 = vadd.f32 %v66, %v206
  %v208 = vpop.f32.mrf.mxu0
  %v209 = vpop.f32.mrf.mxu0
  %v210 = vadd.f32 %v66, %v209
  %v211 = vpop.f32.mrf.mxu0
  %212 = vdwg.mxu0
  %v213 = vpack.c.bf16 %v154, %v151
  %v214 = vpack.c.bf16 %v162, %v159
  %v215 = vpack.c.bf16 %v170, %v167
  %v216 = vpack.c.bf16 %v178, %v175
  %v217 = vpack.c.bf16 %v186, %v183
  %v218 = vpack.c.bf16 %v194, %v191
  %v219 = vpack.c.bf16 %v202, %v199
  %v220 = vpack.c.bf16 %v210, %v207
  %v221 = vld [vmem:[%s3] sm:$0xf]
  %v222 = vld [vmem:[%s3 + $0x4] sm:$0xf]
  %v223 = vld [vmem:[%s3 + $0x8] sm:$0xf]
  %v224 = vld [vmem:[%s3 + $0xc] sm:$0xf]
  %v225 = vld [vmem:[%s3 + $0x10] sm:$0xf]
  %v226 = vld [vmem:[%s3 + $0x14] sm:$0xf]
  %v227 = vld [vmem:[%s3 + $0x18] sm:$0xf]
  %v228 = vld [vmem:[%s3 + $0x1c] sm:$0xf]
  %v229 = vld [vmem:[%s4] sm:$0x1]
  %v231 = vlaneseq
  %v232 = vshrl.u32 %v231, 7
  %v233 = vsub.s32 0, %v232
  %v234 = vrot.slane %v229, %v233
  %v244 = vunpack.c.l.b16 %v221
  %v245 = vunpack.c.l.b16 %v222
  %v246 = vunpack.c.l.b16 %v223
  %v247 = vunpack.c.l.b16 %v224
  %v248 = vunpack.c.l.b16 %v225
  %v249 = vunpack.c.l.b16 %v226
  %v250 = vunpack.c.l.b16 %v227
  %v251 = vunpack.c.l.b16 %v228
  %v252 = vpack.c.b16 %v245, %v244
  %v253 = vpack.c.b16 %v247, %v246
  %v254 = vpack.c.b16 %v249, %v248
  %v255 = vpack.c.b16 %v251, %v250
  %vm260 = vcmask 523264
  %v262 = vsel %vm260, %v213, 0
  %v265 = vsel %vm260, %v214, 0
  %v268 = vsel %vm260, %v215, 0
  %v271 = vsel %vm260, %v216, 0
  %v274 = vsel %vm260, %v217, 0
  %v277 = vsel %vm260, %v218, 0
  %v280 = vsel %vm260, %v219, 0
  %v283 = vsel %vm260, %v220, 0
  %285 = vmatprep.subr.bf16.mxu0 0
  %286 = vmatpush1.bf16.msra.mxu0 0
  %287 = vmatprep.subr.bf16.mxu0 0
  %288 = vmatpush1.bf16.msra.mxu0 0
  %289 = vmatprep.subr.bf16.mxu0 0
  %290 = vmatpush1.bf16.msra.mxu0 0
  %291 = vmatprep.subr.bf16.mxu0 0
  %292 = vmatpush1.bf16.msra.mxu0 0
  %293 = vmatprep.subr.bf16.mxu0 0
  %294 = vmatpush1.bf16.msra.mxu0 %v255
  %295 = vmatprep.subr.bf16.mxu0 0
  %296 = vmatpush1.bf16.msra.mxu0 %v254
  %297 = vmatprep.subr.bf16.mxu0 0
  %298 = vmatpush1.bf16.msra.mxu0 %v253
  %299 = vmatprep.subr.bf16.mxu0 0
  %300 = vmatpush1.bf16.msra.mxu0 %v252
  %301 = vmatprep.subr.bf16.mxu0 0
  %302 = vmatpush2.bf16.msra.mxu0 0
  %303 = vmatprep.subr.bf16.mxu0 0
  %304 = vmatpush2.bf16.msra.mxu0 0
  %305 = vmatprep.subr.bf16.mxu0 0
  %306 = vmatpush2.bf16.msra.mxu0 0
  %307 = vmatprep.subr.bf16.mxu0 0
  %308 = vmatpush2.bf16.msra.mxu0 0
  %309 = vmatprep.subr.bf16.mxu0 0
  %310 = vmatpush2.bf16.msra.mxu0 0
  %311 = vmatprep.subr.bf16.mxu0 0
  %312 = vmatpush2.bf16.msra.mxu0 0
  %313 = vmatprep.subr.bf16.mxu0 0
  %314 = vmatpush2.bf16.msra.mxu0 0
  %315 = vmatprep.subr.bf16.mxu0 0
  %316 = vmatpush2.bf16.msra.mxu0 0
  %317 = vmatprep.mubr.bf16.mxu0 0
  %318 = vmatmul.mubr.bf16.gmra.mxu0 %v262
  %v319 = vpop.f32.mrf.mxu0
  %v320 = vadd.f32 %v234, %v319
  %v321 = vpop.f32.mrf.mxu0
  %v322 = vpop.f32.mrf.mxu0
  %v323 = vadd.f32 %v234, %v322
  %v324 = vpop.f32.mrf.mxu0
  %325 = vmatprep.mubr.bf16.mxu0 0
  %326 = vmatmul.mubr.bf16.gmra.mxu0 %v265
  %v327 = vpop.f32.mrf.mxu0
  %v328 = vadd.f32 %v234, %v327
  %v329 = vpop.f32.mrf.mxu0
  %v330 = vpop.f32.mrf.mxu0
  %v331 = vadd.f32 %v234, %v330
  %v332 = vpop.f32.mrf.mxu0
  %333 = vmatprep.mubr.bf16.mxu0 0
  %334 = vmatmul.mubr.bf16.gmra.mxu0 %v268
  %v335 = vpop.f32.mrf.mxu0
  %v336 = vadd.f32 %v234, %v335
  %v337 = vpop.f32.mrf.mxu0
  %v338 = vpop.f32.mrf.mxu0
  %v339 = vadd.f32 %v234, %v338
  %v340 = vpop.f32.mrf.mxu0
  %341 = vmatprep.mubr.bf16.mxu0 0
  %342 = vmatmul.mubr.bf16.gmra.mxu0 %v271
  %v343 = vpop.f32.mrf.mxu0
  %v344 = vadd.f32 %v234, %v343
  %v345 = vpop.f32.mrf.mxu0
  %v346 = vpop.f32.mrf.mxu0
  %v347 = vadd.f32 %v234, %v346
  %v348 = vpop.f32.mrf.mxu0
  %349 = vmatprep.mubr.bf16.mxu0 0
  %350 = vmatmul.mubr.bf16.gmra.mxu0 %v274
  %v351 = vpop.f32.mrf.mxu0
  %v352 = vadd.f32 %v234, %v351
  %v353 = vpop.f32.mrf.mxu0
  %v354 = vpop.f32.mrf.mxu0
  %v355 = vadd.f32 %v234, %v354
  %v356 = vpop.f32.mrf.mxu0
  %357 = vmatprep.mubr.bf16.mxu0 0
  %358 = vmatmul.mubr.bf16.gmra.mxu0 %v277
  %v359 = vpop.f32.mrf.mxu0
  %v360 = vadd.f32 %v234, %v359
  %v361 = vpop.f32.mrf.mxu0
  %v362 = vpop.f32.mrf.mxu0
  %v363 = vadd.f32 %v234, %v362
  %v364 = vpop.f32.mrf.mxu0
  %365 = vmatprep.mubr.bf16.mxu0 0
  %366 = vmatmul.mubr.bf16.gmra.mxu0 %v280
  %v367 = vpop.f32.mrf.mxu0
  %v368 = vadd.f32 %v234, %v367
  %v369 = vpop.f32.mrf.mxu0
  %v370 = vpop.f32.mrf.mxu0
  %v371 = vadd.f32 %v234, %v370
  %v372 = vpop.f32.mrf.mxu0
  %373 = vmatprep.mubr.bf16.mxu0 0
  %374 = vmatmul.mubr.bf16.gmra.mxu0 %v283
  %v375 = vpop.f32.mrf.mxu0
  %v376 = vadd.f32 %v234, %v375
  %v377 = vpop.f32.mrf.mxu0
  %v378 = vpop.f32.mrf.mxu0
  %v379 = vadd.f32 %v234, %v378
  %v380 = vpop.f32.mrf.mxu0
  %381 = vdwg.mxu0
  %382 = vst [vmem:[%s5] sm:$0xff] %v320
  %383 = vst [vmem:[%s5 + $0x8] sm:$0xff] %v323
  %384 = vst [vmem:[%s5 + $0x10] sm:$0xff] %v328
  %385 = vst [vmem:[%s5 + $0x18] sm:$0xff] %v331
  %386 = vst [vmem:[%s5 + $0x20] sm:$0xff] %v336
  %387 = vst [vmem:[%s5 + $0x28] sm:$0xff] %v339
  %388 = vst [vmem:[%s5 + $0x30] sm:$0xff] %v344
  %389 = vst [vmem:[%s5 + $0x38] sm:$0xff] %v347
  %390 = vst [vmem:[%s5 + $0x40] sm:$0xff] %v352
  %391 = vst [vmem:[%s5 + $0x48] sm:$0xff] %v355
  %392 = vst [vmem:[%s5 + $0x50] sm:$0xff] %v360
  %393 = vst [vmem:[%s5 + $0x58] sm:$0xff] %v363
  %394 = vst [vmem:[%s5 + $0x60] sm:$0xff] %v368
  %395 = vst [vmem:[%s5 + $0x68] sm:$0xff] %v371
  %396 = vst [vmem:[%s5 + $0x70] sm:$0xff] %v376
  %397 = vst [vmem:[%s5 + $0x78] sm:$0xff] %v379
  // Predicated region
  $region22: #{_lambda_.7} parent=0 // pred_check
    _
  $region23: #{_lambda_.7} parent=0 // pred_check_branch
    %399 = sbr.rel (0) target = $region25
  $region24: #{_lambda_.7} parent=0 // pred_region
    _
  $region25: #{_lambda_.7} parent=0 // pred_fallthru
    _
  // Predicated region
  $region26: #{_lambda_.7} parent=0 // pred_check
    _
  $region27: #{_lambda_.7} parent=0 // pred_check_branch
    %401 = sbr.rel (0) target = $region29
  $region28: #{_lambda_.7} parent=0 // pred_region
    _
  $region29: #{_lambda_.7} parent=0 // pred_fallthru
    _

// kernel: _lambda_.5
$region0: #{_lambda_.5}
  #allocation0 [shape = 'u32[]', space=smem, size = 0x4, offset = 0x4, fixed_abs, tag = 'smem constant byte address 0x4 - core index']
  #allocation1 [shape = 'u32[144,128]{1,0:T(1,128)}', space=vmem, size = 0x12000, scoped, tag = 'internal scratch']
  #allocation2 [shape = 'f32[128,128]{1,0:T(8,128)}', space=vmem, size = 0x10000, scoped, tag = 'scratch operand']
  #allocation3 [shape = 'f32[128,128]{1,0:T(8,128)}', space=vmem, size = 0x10000, scoped, tag = 'scratch operand']
  #allocation4 [shape = 'f32[128,128]{1,0:T(8,128)}', space=vmem, size = 0x10000, scoped, tag = 'scratch operand']
  %s0 = inlined_call_operand.vmem [shape: f32[128,128], index: 0, kind: input, shape index: {}]
  %s1 = inlined_call_operand.vmem [shape: f32[16,128], index: 1, kind: input, shape index: {}]
  %s2 = inlined_call_operand.vmem [shape: s32[128,128], index: 2, kind: input, shape index: {}]
  %s3 = inlined_call_operand.vmem [shape: bf16[128,128], index: 3, kind: input, shape index: {}]
  %s4 = inlined_call_operand.vmem [shape: bf16[128,128], index: 4, kind: input, shape index: {}]
  %s5 = inlined_call_operand.vmem [shape: bf16[128,128], index: 5, kind: input, shape index: {}]
  %s6 = inlined_call_operand.vmem [shape: bf16[128,128], index: 6, kind: input, shape index: {}]
  %s7 = inlined_call_operand.vmem [shape: bf16[128,512], index: 7, kind: input, shape index: {}]
  %s8 = inlined_call_operand.vmem [shape: bf16[512,128], index: 8, kind: input, shape index: {}]
  %s9 = inlined_call_operand.vmem [shape: bf16[128,128], index: 9, kind: input, shape index: {}]
  %s10 = inlined_call_operand.vmem [shape: f32[128,128], index: 10, kind: output, shape index: {}]
  %s11 = sld [smem:[#allocation0]]
  $region57: #{_lambda_.5} parent=0
    _
  %s13 = ssub.s32 1, %s11
  %s14 = scalar_select 0, %s13, %s11
  // Predicated region
  $region2: #{_lambda_.5} parent=0 // pred_check
    _
  $region3: #{_lambda_.5} parent=0 // pred_check_branch
    %16 = sbr.rel (0) target = $region5
  $region4: #{_lambda_.5} parent=0 // pred_region
    _
  $region5: #{_lambda_.5} parent=0 // pred_fallthru
    _
  // Predicated region
  $region6: #{_lambda_.5} parent=0 // pred_check
    _
  $region7: #{_lambda_.5} parent=0 // pred_check_branch
    %18 = sbr.rel (0) target = $region9
  $region8: #{_lambda_.5} parent=0 // pred_region
    _
  $region9: #{_lambda_.5} parent=0 // pred_fallthru
    _
  // Predicated region
  $region10: #{_lambda_.5} parent=0 // pred_check
    _
  $region11: #{_lambda_.5} parent=0 // pred_check_branch
    %20 = sbr.rel (0) target = $region13
  $region12: #{_lambda_.5} parent=0 // pred_region
    _
  $region13: #{_lambda_.5} parent=0 // pred_fallthru
    _
  // Predicated region
  $region14: #{_lambda_.5} parent=0 // pred_check
    _
  $region15: #{_lambda_.5} parent=0 // pred_check_branch
    %22 = sbr.rel (0) target = $region17
  $region16: #{_lambda_.5} parent=0 // pred_region
    _
  $region17: #{_lambda_.5} parent=0 // pred_fallthru
    _
  // Predicated region
  $region18: #{_lambda_.5} parent=0 // pred_check
    _
  $region19: #{_lambda_.5} parent=0 // pred_check_branch
    %24 = sbr.rel (0) target = $region21
  $region20: #{_lambda_.5} parent=0 // pred_region
    _
  $region21: #{_lambda_.5} parent=0 // pred_fallthru
    _
  // Predicated region
  $region22: #{_lambda_.5} parent=0 // pred_check
    _
  $region23: #{_lambda_.5} parent=0 // pred_check_branch
    %26 = sbr.rel (0) target = $region25
  $region24: #{_lambda_.5} parent=0 // pred_region
    _
  $region25: #{_lambda_.5} parent=0 // pred_fallthru
    _
  // Predicated region
  $region26: #{_lambda_.5} parent=0 // pred_check
    _
  $region27: #{_lambda_.5} parent=0 // pred_check_branch
    %28 = sbr.rel (0) target = $region29
  $region28: #{_lambda_.5} parent=0 // pred_region
    _
  $region29: #{_lambda_.5} parent=0 // pred_fallthru
    _
  // Predicated region
  $region30: #{_lambda_.5} parent=0 // pred_check
    _
  $region31: #{_lambda_.5} parent=0 // pred_check_branch
    %30 = sbr.rel (0) target = $region33
  $region32: #{_lambda_.5} parent=0 // pred_region
    _
  $region33: #{_lambda_.5} parent=0 // pred_fallthru
    _
  // Predicated region
  $region34: #{_lambda_.5} parent=0 // pred_check
    _
  $region35: #{_lambda_.5} parent=0 // pred_check_branch
    %32 = sbr.rel (0) target = $region37
  $region36: #{_lambda_.5} parent=0 // pred_region
    _
  $region37: #{_lambda_.5} parent=0 // pred_fallthru
    _
  // Predicated region
  $region38: #{_lambda_.5} parent=0 // pred_check
    _
  $region39: #{_lambda_.5} parent=0 // pred_check_branch
    %34 = sbr.rel (0) target = $region41
  $region40: #{_lambda_.5} parent=0 // pred_region
    _
  $region41: #{_lambda_.5} parent=0 // pred_fallthru
    _
  %v36 = vld [vmem:[%s2] sm:$0xff]
  %v37 = vld [vmem:[%s2 + $0x8] sm:$0xff]
  %v38 = vld [vmem:[%s2 + $0x10] sm:$0xff]
  %v39 = vld [vmem:[%s2 + $0x18] sm:$0xff]
  %v40 = vld [vmem:[%s2 + $0x20] sm:$0xff]
  %v41 = vld [vmem:[%s2 + $0x28] sm:$0xff]
  %v42 = vld [vmem:[%s2 + $0x30] sm:$0xff]
  %v43 = vld [vmem:[%s2 + $0x38] sm:$0xff]
  %v44 = vld [vmem:[%s2 + $0x40] sm:$0xff]
  %v45 = vld [vmem:[%s2 + $0x48] sm:$0xff]
  %v46 = vld [vmem:[%s2 + $0x50] sm:$0xff]
  %v47 = vld [vmem:[%s2 + $0x58] sm:$0xff]
  %v48 = vld [vmem:[%s2 + $0x60] sm:$0xff]
  %v49 = vld [vmem:[%s2 + $0x68] sm:$0xff]
  %v50 = vld [vmem:[%s2 + $0x70] sm:$0xff]
  %v51 = vld [vmem:[%s2 + $0x78] sm:$0xff]
  %v52 = vld [vmem:[%s0] sm:$0xff]
  %v53 = vld [vmem:[%s0 + $0x8] sm:$0xff]
  %v54 = vld [vmem:[%s0 + $0x10] sm:$0xff]
  %v55 = vld [vmem:[%s0 + $0x18] sm:$0xff]
  %v56 = vld [vmem:[%s0 + $0x20] sm:$0xff]
  %v57 = vld [vmem:[%s0 + $0x28] sm:$0xff]
  %v58 = vld [vmem:[%s0 + $0x30] sm:$0xff]
  %v59 = vld [vmem:[%s0 + $0x38] sm:$0xff]
  %v60 = vld [vmem:[%s0 + $0x40] sm:$0xff]
  %v61 = vld [vmem:[%s0 + $0x48] sm:$0xff]
  %v62 = vld [vmem:[%s0 + $0x50] sm:$0xff]
  %v63 = vld [vmem:[%s0 + $0x58] sm:$0xff]
  %v64 = vld [vmem:[%s0 + $0x60] sm:$0xff]
  %v65 = vld [vmem:[%s0 + $0x68] sm:$0xff]
  %v66 = vld [vmem:[%s0 + $0x70] sm:$0xff]
  %v67 = vld [vmem:[%s0 + $0x78] sm:$0xff]
  %v68 = vld [vmem:[%s1] sm:$0x1]
  %v69 = vld [vmem:[%s1 + $0x1] sm:$0x1]
  %70 = vadd.xlane.f32.xlu0 %v52
  %v71 = vpop.xlane.xlu0 %70
  %72 = vadd.xlane.f32.xlu0 %v53
  %v73 = vpop.xlane.xlu0 %72
  %74 = vadd.xlane.f32.xlu0 %v54
  %v75 = vpop.xlane.xlu0 %74
  %76 = vadd.xlane.f32.xlu0 %v55
  %v77 = vpop.xlane.xlu0 %76
  %78 = vadd.xlane.f32.xlu0 %v56
  %v79 = vpop.xlane.xlu0 %78
  %80 = vadd.xlane.f32.xlu0 %v57
  %v81 = vpop.xlane.xlu0 %80
  %82 = vadd.xlane.f32.xlu0 %v58
  %v83 = vpop.xlane.xlu0 %82
  %84 = vadd.xlane.f32.xlu0 %v59
  %v85 = vpop.xlane.xlu0 %84
  %86 = vadd.xlane.f32.xlu0 %v60
  %v87 = vpop.xlane.xlu0 %86
  %88 = vadd.xlane.f32.xlu0 %v61
  %v89 = vpop.xlane.xlu0 %88
  %90 = vadd.xlane.f32.xlu0 %v62
  %v91 = vpop.xlane.xlu0 %90
  %92 = vadd.xlane.f32.xlu0 %v63
  %v93 = vpop.xlane.xlu0 %92
  %94 = vadd.xlane.f32.xlu0 %v64
  %v95 = vpop.xlane.xlu0 %94
  %96 = vadd.xlane.f32.xlu0 %v65
  %v97 = vpop.xlane.xlu0 %96
  %98 = vadd.xlane.f32.xlu0 %v66
  %v99 = vpop.xlane.xlu0 %98
  %100 = vadd.xlane.f32.xlu0 %v67
  %v101 = vpop.xlane.xlu0 %100
  %v102 = vrcp.pop 128.0
  %v103 = vmul.f32 %v71, %v102
  %v104 = vmul.f32 %v73, %v102
  %v105 = vmul.f32 %v75, %v102
  %v106 = vmul.f32 %v77, %v102
  %v107 = vmul.f32 %v79, %v102
  %v108 = vmul.f32 %v81, %v102
  %v109 = vmul.f32 %v83, %v102
  %v110 = vmul.f32 %v85, %v102
  %v111 = vmul.f32 %v87, %v102
  %v112 = vmul.f32 %v89, %v102
  %v113 = vmul.f32 %v91, %v102
  %v114 = vmul.f32 %v93, %v102
  %v115 = vmul.f32 %v95, %v102
  %v116 = vmul.f32 %v97, %v102
  %v117 = vmul.f32 %v99, %v102
  %v118 = vmul.f32 %v101, %v102
  %v119 = vsub.f32 %v52, %v103
  %v120 = vsub.f32 %v53, %v104
  %v121 = vsub.f32 %v54, %v105
  %v122 = vsub.f32 %v55, %v106
  %v123 = vsub.f32 %v56, %v107
  %v124 = vsub.f32 %v57, %v108
  %v125 = vsub.f32 %v58, %v109
  %v126 = vsub.f32 %v59, %v110
  %v127 = vsub.f32 %v60, %v111
  %v128 = vsub.f32 %v61, %v112
  %v129 = vsub.f32 %v62, %v113
  %v130 = vsub.f32 %v63, %v114
  %v131 = vsub.f32 %v64, %v115
  %v132 = vsub.f32 %v65, %v116
  %v133 = vsub.f32 %v66, %v117
  %v134 = vsub.f32 %v67, %v118
  %v135 = vmul.f32 %v119, %v119
  %v136 = vmul.f32 %v120, %v120
  %v137 = vmul.f32 %v121, %v121
  %v138 = vmul.f32 %v122, %v122
  %v139 = vmul.f32 %v123, %v123
  %v140 = vmul.f32 %v124, %v124
  %v141 = vmul.f32 %v125, %v125
  %v142 = vmul.f32 %v126, %v126
  %v143 = vmul.f32 %v127, %v127
  %v144 = vmul.f32 %v128, %v128
  %v145 = vmul.f32 %v129, %v129
  %v146 = vmul.f32 %v130, %v130
  %v147 = vmul.f32 %v131, %v131
  %v148 = vmul.f32 %v132, %v132
  %v149 = vmul.f32 %v133, %v133
  %v150 = vmul.f32 %v134, %v134
  %151 = vadd.xlane.f32.xlu0 %v135
  %v152 = vpop.xlane.xlu0 %151
  %153 = vadd.xlane.f32.xlu0 %v136
  %v154 = vpop.xlane.xlu0 %153
  %155 = vadd.xlane.f32.xlu0 %v137
  %v156 = vpop.xlane.xlu0 %155
  %157 = vadd.xlane.f32.xlu0 %v138
  %v158 = vpop.xlane.xlu0 %157
  %159 = vadd.xlane.f32.xlu0 %v139
  %v160 = vpop.xlane.xlu0 %159
  %161 = vadd.xlane.f32.xlu0 %v140
  %v162 = vpop.xlane.xlu0 %161
  %163 = vadd.xlane.f32.xlu0 %v141
  %v164 = vpop.xlane.xlu0 %163
  %165 = vadd.xlane.f32.xlu0 %v142
  %v166 = vpop.xlane.xlu0 %165
  %167 = vadd.xlane.f32.xlu0 %v143
  %v168 = vpop.xlane.xlu0 %167
  %169 = vadd.xlane.f32.xlu0 %v144
  %v170 = vpop.xlane.xlu0 %169
  %171 = vadd.xlane.f32.xlu0 %v145
  %v172 = vpop.xlane.xlu0 %171
  %173 = vadd.xlane.f32.xlu0 %v146
  %v174 = vpop.xlane.xlu0 %173
  %175 = vadd.xlane.f32.xlu0 %v147
  %v176 = vpop.xlane.xlu0 %175
  %177 = vadd.xlane.f32.xlu0 %v148
  %v178 = vpop.xlane.xlu0 %177
  %179 = vadd.xlane.f32.xlu0 %v149
  %v180 = vpop.xlane.xlu0 %179
  %181 = vadd.xlane.f32.xlu0 %v150
  %v182 = vpop.xlane.xlu0 %181
  %v183 = vmul.f32 %v152, %v102
  %v184 = vmul.f32 %v154, %v102
  %v185 = vmul.f32 %v156, %v102
  %v186 = vmul.f32 %v158, %v102
  %v187 = vmul.f32 %v160, %v102
  %v188 = vmul.f32 %v162, %v102
  %v189 = vmul.f32 %v164, %v102
  %v190 = vmul.f32 %v166, %v102
  %v191 = vmul.f32 %v168, %v102
  %v192 = vmul.f32 %v170, %v102
  %v193 = vmul.f32 %v172, %v102
  %v194 = vmul.f32 %v174, %v102
  %v195 = vmul.f32 %v176, %v102
  %v196 = vmul.f32 %v178, %v102
  %v197 = vmul.f32 %v180, %v102
  %v198 = vmul.f32 %v182, %v102
  %v199 = vadd.f32 %v183, 1e-05
  %v200 = vadd.f32 %v184, 1e-05
  %v201 = vadd.f32 %v185, 1e-05
  %v202 = vadd.f32 %v186, 1e-05
  %v203 = vadd.f32 %v187, 1e-05
  %v204 = vadd.f32 %v188, 1e-05
  %v205 = vadd.f32 %v189, 1e-05
  %v206 = vadd.f32 %v190, 1e-05
  %v207 = vadd.f32 %v191, 1e-05
  %v208 = vadd.f32 %v192, 1e-05
  %v209 = vadd.f32 %v193, 1e-05
  %v210 = vadd.f32 %v194, 1e-05
  %v211 = vadd.f32 %v195, 1e-05
  %v212 = vadd.f32 %v196, 1e-05
  %v213 = vadd.f32 %v197, 1e-05
  %v214 = vadd.f32 %v198, 1e-05
  %v215 = vrsqrt.pop %v199
  %v216 = vrsqrt.pop %v200
  %v217 = vrsqrt.pop %v201
  %v218 = vrsqrt.pop %v202
  %v219 = vrsqrt.pop %v203
  %v220 = vrsqrt.pop %v204
  %v221 = vrsqrt.pop %v205
  %v222 = vrsqrt.pop %v206
  %v223 = vrsqrt.pop %v207
  %v224 = vrsqrt.pop %v208
  %v225 = vrsqrt.pop %v209
  %v226 = vrsqrt.pop %v210
  %v227 = vrsqrt.pop %v211
  %v228 = vrsqrt.pop %v212
  %v229 = vrsqrt.pop %v213
  %v230 = vrsqrt.pop %v214
  %v231 = vmul.f32 %v119, %v215
  %v232 = vmul.f32 %v120, %v216
  %v233 = vmul.f32 %v121, %v217
  %v234 = vmul.f32 %v122, %v218
  %v235 = vmul.f32 %v123, %v219
  %v236 = vmul.f32 %v124, %v220
  %v237 = vmul.f32 %v125, %v221
  %v238 = vmul.f32 %v126, %v222
  %v239 = vmul.f32 %v127, %v223
  %v240 = vmul.f32 %v128, %v224
  %v241 = vmul.f32 %v129, %v225
  %v242 = vmul.f32 %v130, %v226
  %v243 = vmul.f32 %v131, %v227
  %v244 = vmul.f32 %v132, %v228
  %v245 = vmul.f32 %v133, %v229
  %v246 = vmul.f32 %v134, %v230
  %v247 = vlaneseq
  %v248 = vshrl.u32 %v247, 7
  %v249 = vsub.s32 0, %v248
  %v250 = vrot.slane %v68, %v249
  %v251 = vmul.f32 %v231, %v250
  %v252 = vmul.f32 %v232, %v250
  %v253 = vmul.f32 %v233, %v250
  %v254 = vmul.f32 %v234, %v250
  %v255 = vmul.f32 %v235, %v250
  %v256 = vmul.f32 %v236, %v250
  %v257 = vmul.f32 %v237, %v250
  %v258 = vmul.f32 %v238, %v250
  %v259 = vmul.f32 %v239, %v250
  %v260 = vmul.f32 %v240, %v250
  %v261 = vmul.f32 %v241, %v250
  %v262 = vmul.f32 %v242, %v250
  %v263 = vmul.f32 %v243, %v250
  %v264 = vmul.f32 %v244, %v250
  %v265 = vmul.f32 %v245, %v250
  %v266 = vmul.f32 %v246, %v250
  %v267 = vlaneseq
  %v268 = vshrl.u32 %v267, 7
  %v269 = vsub.s32 0, %v268
  %v270 = vrot.slane %v69, %v269
  %v271 = vadd.f32 %v251, %v270
  %v272 = vadd.f32 %v252, %v270
  %v273 = vadd.f32 %v253, %v270
  %v274 = vadd.f32 %v254, %v270
  %v275 = vadd.f32 %v255, %v270
  %v276 = vadd.f32 %v256, %v270
  %v277 = vadd.f32 %v257, %v270
  %v278 = vadd.f32 %v258, %v270
  %v279 = vadd.f32 %v259, %v270
  %v280 = vadd.f32 %v260, %v270
  %v281 = vadd.f32 %v261, %v270
  %v282 = vadd.f32 %v262, %v270
  %v283 = vadd.f32 %v263, %v270
  %v284 = vadd.f32 %v264, %v270
  %v285 = vadd.f32 %v265, %v270
  %v286 = vadd.f32 %v266, %v270
  %v287 = vld [vmem:[%s1 + $0x2] sm:$0x1]
  %v288 = vld [vmem:[%s1 + $0x3] sm:$0x1]
  %289 = vadd.xlane.f32.xlu0 %v271
  %v290 = vpop.xlane.xlu0 %289
  %291 = vadd.xlane.f32.xlu0 %v272
  %v292 = vpop.xlane.xlu0 %291
  %293 = vadd.xlane.f32.xlu0 %v273
  %v294 = vpop.xlane.xlu0 %293
  %295 = vadd.xlane.f32.xlu0 %v274
  %v296 = vpop.xlane.xlu0 %295
  %297 = vadd.xlane.f32.xlu0 %v275
  %v298 = vpop.xlane.xlu0 %297
  %299 = vadd.xlane.f32.xlu0 %v276
  %v300 = vpop.xlane.xlu0 %299
  %301 = vadd.xlane.f32.xlu0 %v277
  %v302 = vpop.xlane.xlu0 %301
  %303 = vadd.xlane.f32.xlu0 %v278
  %v304 = vpop.xlane.xlu0 %303
  %305 = vadd.xlane.f32.xlu0 %v279
  %v306 = vpop.xlane.xlu0 %305
  %307 = vadd.xlane.f32.xlu0 %v280
  %v308 = vpop.xlane.xlu0 %307
  %309 = vadd.xlane.f32.xlu0 %v281
  %v310 = vpop.xlane.xlu0 %309
  %311 = vadd.xlane.f32.xlu0 %v282
  %v312 = vpop.xlane.xlu0 %311
  %313 = vadd.xlane.f32.xlu0 %v283
  %v314 = vpop.xlane.xlu0 %313
  %315 = vadd.xlane.f32.xlu0 %v284
  %v316 = vpop.xlane.xlu0 %315
  %317 = vadd.xlane.f32.xlu0 %v285
  %v318 = vpop.xlane.xlu0 %317
  %319 = vadd.xlane.f32.xlu0 %v286
  %v320 = vpop.xlane.xlu0 %319
  %v321 = vmul.f32 %v290, %v102
  %v322 = vmul.f32 %v292, %v102
  %v323 = vmul.f32 %v294, %v102
  %v324 = vmul.f32 %v296, %v102
  %v325 = vmul.f32 %v298, %v102
  %v326 = vmul.f32 %v300, %v102
  %v327 = vmul.f32 %v302, %v102
  %v328 = vmul.f32 %v304, %v102
  %v329 = vmul.f32 %v306, %v102
  %v330 = vmul.f32 %v308, %v102
  %v331 = vmul.f32 %v310, %v102
  %v332 = vmul.f32 %v312, %v102
  %v333 = vmul.f32 %v314, %v102
  %v334 = vmul.f32 %v316, %v102
  %v335 = vmul.f32 %v318, %v102
  %v336 = vmul.f32 %v320, %v102
  %v337 = vsub.f32 %v271, %v321
  %v338 = vsub.f32 %v272, %v322
  %v339 = vsub.f32 %v273, %v323
  %v340 = vsub.f32 %v274, %v324
  %v341 = vsub.f32 %v275, %v325
  %v342 = vsub.f32 %v276, %v326
  %v343 = vsub.f32 %v277, %v327
  %v344 = vsub.f32 %v278, %v328
  %v345 = vsub.f32 %v279, %v329
  %v346 = vsub.f32 %v280, %v330
  %v347 = vsub.f32 %v281, %v331
  %v348 = vsub.f32 %v282, %v332
  %v349 = vsub.f32 %v283, %v333
  %v350 = vsub.f32 %v284, %v334
  %v351 = vsub.f32 %v285, %v335
  %v352 = vsub.f32 %v286, %v336
  %v353 = vmul.f32 %v337, %v337
  %v354 = vmul.f32 %v338, %v338
  %v355 = vmul.f32 %v339, %v339
  %v356 = vmul.f32 %v340, %v340
  %v357 = vmul.f32 %v341, %v341
  %v358 = vmul.f32 %v342, %v342
  %v359 = vmul.f32 %v343, %v343
  %v360 = vmul.f32 %v344, %v344
  %v361 = vmul.f32 %v345, %v345
  %v362 = vmul.f32 %v346, %v346
  %v363 = vmul.f32 %v347, %v347
  %v364 = vmul.f32 %v348, %v348
  %v365 = vmul.f32 %v349, %v349
  %v366 = vmul.f32 %v350, %v350
  %v367 = vmul.f32 %v351, %v351
  %v368 = vmul.f32 %v352, %v352
  %369 = vadd.xlane.f32.xlu0 %v353
  %v370 = vpop.xlane.xlu0 %369
  %371 = vadd.xlane.f32.xlu0 %v354
  %v372 = vpop.xlane.xlu0 %371
  %373 = vadd.xlane.f32.xlu0 %v355
  %v374 = vpop.xlane.xlu0 %373
  %375 = vadd.xlane.f32.xlu0 %v356
  %v376 = vpop.xlane.xlu0 %375
  %377 = vadd.xlane.f32.xlu0 %v357
  %v378 = vpop.xlane.xlu0 %377
  %379 = vadd.xlane.f32.xlu0 %v358
  %v380 = vpop.xlane.xlu0 %379
  %381 = vadd.xlane.f32.xlu0 %v359
  %v382 = vpop.xlane.xlu0 %381
  %383 = vadd.xlane.f32.xlu0 %v360
  %v384 = vpop.xlane.xlu0 %383
  %385 = vadd.xlane.f32.xlu0 %v361
  %v386 = vpop.xlane.xlu0 %385
  %387 = vadd.xlane.f32.xlu0 %v362
  %v388 = vpop.xlane.xlu0 %387
  %389 = vadd.xlane.f32.xlu0 %v363
  %v390 = vpop.xlane.xlu0 %389
  %391 = vadd.xlane.f32.xlu0 %v364
  %v392 = vpop.xlane.xlu0 %391
  %393 = vadd.xlane.f32.xlu0 %v365
  %v394 = vpop.xlane.xlu0 %393
  %395 = vadd.xlane.f32.xlu0 %v366
  %v396 = vpop.xlane.xlu0 %395
  %397 = vadd.xlane.f32.xlu0 %v367
  %v398 = vpop.xlane.xlu0 %397
  %399 = vadd.xlane.f32.xlu0 %v368
  %v400 = vpop.xlane.xlu0 %399
  %v401 = vmul.f32 %v370, %v102
  %v402 = vmul.f32 %v372, %v102
  %v403 = vmul.f32 %v374, %v102
  %v404 = vmul.f32 %v376, %v102
  %v405 = vmul.f32 %v378, %v102
  %v406 = vmul.f32 %v380, %v102
  %v407 = vmul.f32 %v382, %v102
  %v408 = vmul.f32 %v384, %v102
  %v409 = vmul.f32 %v386, %v102
  %v410 = vmul.f32 %v388, %v102
  %v411 = vmul.f32 %v390, %v102
  %v412 = vmul.f32 %v392, %v102
  %v413 = vmul.f32 %v394, %v102
  %v414 = vmul.f32 %v396, %v102
  %v415 = vmul.f32 %v398, %v102
  %v416 = vmul.f32 %v400, %v102
  %v417 = vadd.f32 %v401, 1e-05
  %v418 = vadd.f32 %v402, 1e-05
  %v419 = vadd.f32 %v403, 1e-05
  %v420 = vadd.f32 %v404, 1e-05
  %v421 = vadd.f32 %v405, 1e-05
  %v422 = vadd.f32 %v406, 1e-05
  %v423 = vadd.f32 %v407, 1e-05
  %v424 = vadd.f32 %v408, 1e-05
  %v425 = vadd.f32 %v409, 1e-05
  %v426 = vadd.f32 %v410, 1e-05
  %v427 = vadd.f32 %v411, 1e-05
  %v428 = vadd.f32 %v412, 1e-05
  %v429 = vadd.f32 %v413, 1e-05
  %v430 = vadd.f32 %v414, 1e-05
  %v431 = vadd.f32 %v415, 1e-05
  %v432 = vadd.f32 %v416, 1e-05
  %v433 = vrsqrt.pop %v417
  %v434 = vrsqrt.pop %v418
  %v435 = vrsqrt.pop %v419
  %v436 = vrsqrt.pop %v420
  %v437 = vrsqrt.pop %v421
  %v438 = vrsqrt.pop %v422
  %v439 = vrsqrt.pop %v423
  %v440 = vrsqrt.pop %v424
  %v441 = vrsqrt.pop %v425
  %v442 = vrsqrt.pop %v426
  %v443 = vrsqrt.pop %v427
  %v444 = vrsqrt.pop %v428
  %v445 = vrsqrt.pop %v429
  %v446 = vrsqrt.pop %v430
  %v447 = vrsqrt.pop %v431
  %v448 = vrsqrt.pop %v432
  %v449 = vmul.f32 %v337, %v433
  %v450 = vmul.f32 %v338, %v434
  %v451 = vmul.f32 %v339, %v435
  %v452 = vmul.f32 %v340, %v436
  %v453 = vmul.f32 %v341, %v437
  %v454 = vmul.f32 %v342, %v438
  %v455 = vmul.f32 %v343, %v439
  %v456 = vmul.f32 %v344, %v440
  %v457 = vmul.f32 %v345, %v441
  %v458 = vmul.f32 %v346, %v442
  %v459 = vmul.f32 %v347, %v443
  %v460 = vmul.f32 %v348, %v444
  %v461 = vmul.f32 %v349, %v445
  %v462 = vmul.f32 %v350, %v446
  %v463 = vmul.f32 %v351, %v447
  %v464 = vmul.f32 %v352, %v448
  %v465 = vlaneseq
  %v466 = vshrl.u32 %v465, 7
  %v467 = vsub.s32 0, %v466
  %v468 = vrot.slane %v287, %v467
  %v469 = vmul.f32 %v449, %v468
  %v470 = vmul.f32 %v450, %v468
  %v471 = vmul.f32 %v451, %v468
  %v472 = vmul.f32 %v452, %v468
  %v473 = vmul.f32 %v453, %v468
  %v474 = vmul.f32 %v454, %v468
  %v475 = vmul.f32 %v455, %v468
  %v476 = vmul.f32 %v456, %v468
  %v477 = vmul.f32 %v457, %v468
  %v478 = vmul.f32 %v458, %v468
  %v479 = vmul.f32 %v459, %v468
  %v480 = vmul.f32 %v460, %v468
  %v481 = vmul.f32 %v461, %v468
  %v482 = vmul.f32 %v462, %v468
  %v483 = vmul.f32 %v463, %v468
  %v484 = vmul.f32 %v464, %v468
  %v485 = vlaneseq
  %v486 = vshrl.u32 %v485, 7
  %v487 = vsub.s32 0, %v486
  %v488 = vrot.slane %v288, %v487
  %v489 = vadd.f32 %v469, %v488
  %v490 = vadd.f32 %v470, %v488
  %v491 = vadd.f32 %v471, %v488
  %v492 = vadd.f32 %v472, %v488
  %v493 = vadd.f32 %v473, %v488
  %v494 = vadd.f32 %v474, %v488
  %v495 = vadd.f32 %v475, %v488
  %v496 = vadd.f32 %v476, %v488
  %v497 = vadd.f32 %v477, %v488
  %v498 = vadd.f32 %v478, %v488
  %v499 = vadd.f32 %v479, %v488
  %v500 = vadd.f32 %v480, %v488
  %v501 = vadd.f32 %v481, %v488
  %v502 = vadd.f32 %v482, %v488
  %v503 = vadd.f32 %v483, %v488
  %v504 = vadd.f32 %v484, %v488
  %v505 = vrot.slane %v489, 6
  %v506 = vrot.slane %v490, 6
  %v507 = vrot.slane %v491, 6
  %v508 = vrot.slane %v492, 6
  %v509 = vrot.slane %v493, 6
  %v510 = vrot.slane %v494, 6
  %v511 = vrot.slane %v495, 6
  %v512 = vrot.slane %v496, 6
  %v513 = vrot.slane %v497, 6
  %v514 = vrot.slane %v498, 6
  %v515 = vrot.slane %v499, 6
  %v516 = vrot.slane %v500, 6
  %v517 = vrot.slane %v501, 6
  %v518 = vrot.slane %v502, 6
  %v519 = vrot.slane %v503, 6
  %v520 = vrot.slane %v504, 6
  %v521 = vlaneseq
  %v522 = vshrl.u32 %v521, 7
  %vm523 = vcmp.lt.s32.totalorder %v522, 2
  %v524 = vsel %vm523, %v519, %v520
  %v525 = vsel %vm523, %v518, %v519
  %v526 = vsel %vm523, %v517, %v518
  %v527 = vsel %vm523, %v516, %v517
  %v528 = vsel %vm523, %v515, %v516
  %v529 = vsel %vm523, %v514, %v515
  %v530 = vsel %vm523, %v513, %v514
  %v531 = vsel %vm523, %v512, %v513
  %v532 = vsel %vm523, %v511, %v512
  %v533 = vsel %vm523, %v510, %v511
  %v534 = vsel %vm523, %v509, %v510
  %v535 = vsel %vm523, %v508, %v509
  %v536 = vsel %vm523, %v507, %v508
  %v537 = vsel %vm523, %v506, %v507
  %v538 = vsel %vm523, %v505, %v506
  %v539 = vsel %vm523, %v520, %v505
  %v540 = vrot.slane %v489, 2
  %v541 = vrot.slane %v490, 2
  %v542 = vrot.slane %v491, 2
  %v543 = vrot.slane %v492, 2
  %v544 = vrot.slane %v493, 2
  %v545 = vrot.slane %v494, 2
  %v546 = vrot.slane %v495, 2
  %v547 = vrot.slane %v496, 2
  %v548 = vrot.slane %v497, 2
  %v549 = vrot.slane %v498, 2
  %v550 = vrot.slane %v499, 2
  %v551 = vrot.slane %v500, 2
  %v552 = vrot.slane %v501, 2
  %v553 = vrot.slane %v502, 2
  %v554 = vrot.slane %v503, 2
  %v555 = vrot.slane %v504, 2
  %vm556 = vcmp.lt.s32.totalorder %v522, 6
  %v557 = vsel %vm556, %v554, %v555
  %v558 = vsel %vm556, %v553, %v554
  %v559 = vsel %vm556, %v552, %v553
  %v560 = vsel %vm556, %v551, %v552
  %v561 = vsel %vm556, %v550, %v551
  %v562 = vsel %vm556, %v549, %v550
  %v563 = vsel %vm556, %v548, %v549
  %v564 = vsel %vm556, %v547, %v548
  %v565 = vsel %vm556, %v546, %v547
  %v566 = vsel %vm556, %v545, %v546
  %v567 = vsel %vm556, %v544, %v545
  %v568 = vsel %vm556, %v543, %v544
  %v569 = vsel %vm556, %v542, %v543
  %v570 = vsel %vm556, %v541, %v542
  %v571 = vsel %vm556, %v540, %v541
  %v572 = vsel %vm556, %v555, %v540
  %vm573 = vcmp.eq.s32.totalorder %v36, 0
  %vm574 = vcmp.eq.s32.totalorder %v37, 0
  %vm575 = vcmp.eq.s32.totalorder %v38, 0
  %vm576 = vcmp.eq.s32.totalorder %v39, 0
  %vm577 = vcmp.eq.s32.totalorder %v40, 0
  %vm578 = vcmp.eq.s32.totalorder %v41, 0
  %vm579 = vcmp.eq.s32.totalorder %v42, 0
  %vm580 = vcmp.eq.s32.totalorder %v43, 0
  %vm581 = vcmp.eq.s32.totalorder %v44, 0
  %vm582 = vcmp.eq.s32.totalorder %v45, 0
  %vm583 = vcmp.eq.s32.totalorder %v46, 0
  %vm584 = vcmp.eq.s32.totalorder %v47, 0
  %vm585 = vcmp.eq.s32.totalorder %v48, 0
  %vm586 = vcmp.eq.s32.totalorder %v49, 0
  %vm587 = vcmp.eq.s32.totalorder %v50, 0
  %vm588 = vcmp.eq.s32.totalorder %v51, 0
  %vm589 = vcmp.eq.s32.totalorder %v36, 1
  %vm590 = vcmp.eq.s32.totalorder %v37, 1
  %vm591 = vcmp.eq.s32.totalorder %v38, 1
  %vm592 = vcmp.eq.s32.totalorder %v39, 1
  %vm593 = vcmp.eq.s32.totalorder %v40, 1
  %vm594 = vcmp.eq.s32.totalorder %v41, 1
  %vm595 = vcmp.eq.s32.totalorder %v42, 1
  %vm596 = vcmp.eq.s32.totalorder %v43, 1
  %vm597 = vcmp.eq.s32.totalorder %v44, 1
  %vm598 = vcmp.eq.s32.totalorder %v45, 1
  %vm599 = vcmp.eq.s32.totalorder %v46, 1
  %vm600 = vcmp.eq.s32.totalorder %v47, 1
  %vm601 = vcmp.eq.s32.totalorder %v48, 1
  %vm602 = vcmp.eq.s32.totalorder %v49, 1
  %vm603 = vcmp.eq.s32.totalorder %v50, 1
  %vm604 = vcmp.eq.s32.totalorder %v51, 1
  %vm605 = vcmp.eq.s32.totalorder %v36, 2
  %vm606 = vcmp.eq.s32.totalorder %v37, 2
  %vm607 = vcmp.eq.s32.totalorder %v38, 2
  %vm608 = vcmp.eq.s32.totalorder %v39, 2
  %vm609 = vcmp.eq.s32.totalorder %v40, 2
  %vm610 = vcmp.eq.s32.totalorder %v41, 2
  %vm611 = vcmp.eq.s32.totalorder %v42, 2
  %vm612 = vcmp.eq.s32.totalorder %v43, 2
  %vm613 = vcmp.eq.s32.totalorder %v44, 2
  %vm614 = vcmp.eq.s32.totalorder %v45, 2
  %vm615 = vcmp.eq.s32.totalorder %v46, 2
  %vm616 = vcmp.eq.s32.totalorder %v47, 2
  %vm617 = vcmp.eq.s32.totalorder %v48, 2
  %vm618 = vcmp.eq.s32.totalorder %v49, 2
  %vm619 = vcmp.eq.s32.totalorder %v50, 2
  %vm620 = vcmp.eq.s32.totalorder %v51, 2
  %vm621 = vcmp.eq.s32.totalorder %v36, 3
  %vm622 = vcmp.eq.s32.totalorder %v37, 3
  %vm623 = vcmp.eq.s32.totalorder %v38, 3
  %vm624 = vcmp.eq.s32.totalorder %v39, 3
  %vm625 = vcmp.eq.s32.totalorder %v40, 3
  %vm626 = vcmp.eq.s32.totalorder %v41, 3
  %vm627 = vcmp.eq.s32.totalorder %v42, 3
  %vm628 = vcmp.eq.s32.totalorder %v43, 3
  %vm629 = vcmp.eq.s32.totalorder %v44, 3
  %vm630 = vcmp.eq.s32.totalorder %v45, 3
  %vm631 = vcmp.eq.s32.totalorder %v46, 3
  %vm632 = vcmp.eq.s32.totalorder %v47, 3
  %vm633 = vcmp.eq.s32.totalorder %v48, 3
  %vm634 = vcmp.eq.s32.totalorder %v49, 3
  %vm635 = vcmp.eq.s32.totalorder %v50, 3
  %vm636 = vcmp.eq.s32.totalorder %v51, 3
  %vm637 = vcmp.eq.s32.totalorder %v36, 4
  %vm638 = vcmp.eq.s32.totalorder %v37, 4
  %vm639 = vcmp.eq.s32.totalorder %v38, 4
  %vm640 = vcmp.eq.s32.totalorder %v39, 4
  %vm641 = vcmp.eq.s32.totalorder %v40, 4
  %vm642 = vcmp.eq.s32.totalorder %v41, 4
  %vm643 = vcmp.eq.s32.totalorder %v42, 4
  %vm644 = vcmp.eq.s32.totalorder %v43, 4
  %vm645 = vcmp.eq.s32.totalorder %v44, 4
  %vm646 = vcmp.eq.s32.totalorder %v45, 4
  %vm647 = vcmp.eq.s32.totalorder %v46, 4
  %vm648 = vcmp.eq.s32.totalorder %v47, 4
  %vm649 = vcmp.eq.s32.totalorder %v48, 4
  %vm650 = vcmp.eq.s32.totalorder %v49, 4
  %vm651 = vcmp.eq.s32.totalorder %v50, 4
  %vm652 = vcmp.eq.s32.totalorder %v51, 4
  %v653 = vsel %vm637, %v489, 0.0
  %v654 = vsel %vm638, %v490, 0.0
  %v655 = vsel %vm639, %v491, 0.0
  %v656 = vsel %vm640, %v492, 0.0
  %v657 = vsel %vm641, %v493, 0.0
  %v658 = vsel %vm642, %v494, 0.0
  %v659 = vsel %vm643, %v495, 0.0
  %v660 = vsel %vm644, %v496, 0.0
  %v661 = vsel %vm645, %v497, 0.0
  %v662 = vsel %vm646, %v498, 0.0
  %v663 = vsel %vm647, %v499, 0.0
  %v664 = vsel %vm648, %v500, 0.0
  %v665 = vsel %vm649, %v501, 0.0
  %v666 = vsel %vm650, %v502, 0.0
  %v667 = vsel %vm651, %v503, 0.0
  %v668 = vsel %vm652, %v504, 0.0
  %v669 = vsel %vm621, %v491, %v653
  %v670 = vsel %vm622, %v492, %v654
  %v671 = vsel %vm623, %v493, %v655
  %v672 = vsel %vm624, %v494, %v656
  %v673 = vsel %vm625, %v495, %v657
  %v674 = vsel %vm626, %v496, %v658
  %v675 = vsel %vm627, %v497, %v659
  %v676 = vsel %vm628, %v498, %v660
  %v677 = vsel %vm629, %v499, %v661
  %v678 = vsel %vm630, %v500, %v662
  %v679 = vsel %vm631, %v501, %v663
  %v680 = vsel %vm632, %v502, %v664
  %v681 = vsel %vm633, %v503, %v665
  %v682 = vsel %vm634, %v504, %v666
  %v683 = vsel %vm635, %v489, %v667
  %v684 = vsel %vm636, %v490, %v668
  %v685 = vsel %vm605, %v503, %v669
  %v686 = vsel %vm606, %v504, %v670
  %v687 = vsel %vm607, %v489, %v671
  %v688 = vsel %vm608, %v490, %v672
  %v689 = vsel %vm609, %v491, %v673
  %v690 = vsel %vm610, %v492, %v674
  %v691 = vsel %vm611, %v493, %v675
  %v692 = vsel %vm612, %v494, %v676
  %v693 = vsel %vm613, %v495, %v677
  %v694 = vsel %vm614, %v496, %v678
  %v695 = vsel %vm615, %v497, %v679
  %v696 = vsel %vm616, %v498, %v680
  %v697 = vsel %vm617, %v499, %v681
  %v698 = vsel %vm618, %v500, %v682
  %v699 = vsel %vm619, %v501, %v683
  %v700 = vsel %vm620, %v502, %v684
  %v701 = vsel %vm589, %v571, %v685
  %v702 = vsel %vm590, %v570, %v686
  %v703 = vsel %vm591, %v569, %v687
  %v704 = vsel %vm592, %v568, %v688
  %v705 = vsel %vm593, %v567, %v689
  %v706 = vsel %vm594, %v566, %v690
  %v707 = vsel %vm595, %v565, %v691
  %v708 = vsel %vm596, %v564, %v692
  %v709 = vsel %vm597, %v563, %v693
  %v710 = vsel %vm598, %v562, %v694
  %v711 = vsel %vm599, %v561, %v695
  %v712 = vsel %vm600, %v560, %v696
  %v713 = vsel %vm601, %v559, %v697
  %v714 = vsel %vm602, %v558, %v698
  %v715 = vsel %vm603, %v557, %v699
  %v716 = vsel %vm604, %v572, %v700
  %v717 = vsel %vm573, %v539, %v701
  %v718 = vsel %vm574, %v538, %v702
  %v719 = vsel %vm575, %v537, %v703
  %v720 = vsel %vm576, %v536, %v704
  %v721 = vsel %vm577, %v535, %v705
  %v722 = vsel %vm578, %v534, %v706
  %v723 = vsel %vm579, %v533, %v707
  %v724 = vsel %vm580, %v532, %v708
  %v725 = vsel %vm581, %v531, %v709
  %v726 = vsel %vm582, %v530, %v710
  %v727 = vsel %vm583, %v529, %v711
  %v728 = vsel %vm584, %v528, %v712
  %v729 = vsel %vm585, %v527, %v713
  %v730 = vsel %vm586, %v526, %v714
  %v731 = vsel %vm587, %v525, %v715
  %v732 = vsel %vm588, %v524, %v716
  %v733 = vld [vmem:[%s1 + $0x6] sm:$0x1]
  %v734 = vld [vmem:[%s1 + $0x7] sm:$0x1]
  %v735 = vld [vmem:[%s1 + $0x8] sm:$0x1]
  %v736 = vlaneseq
  %v737 = vshrl.u32 %v736, 7
  %v738 = vsub.s32 0, %v737
  %v739 = vrot.slane %v733, %v738
  %v740 = vmul.f32 %v489, %v739
  %v741 = vmul.f32 %v490, %v739
  %v742 = vmul.f32 %v491, %v739
  %v743 = vmul.f32 %v492, %v739
  %v744 = vmul.f32 %v493, %v739
  %v745 = vmul.f32 %v494, %v739
  %v746 = vmul.f32 %v495, %v739
  %v747 = vmul.f32 %v496, %v739
  %v748 = vmul.f32 %v497, %v739
  %v749 = vmul.f32 %v498, %v739
  %v750 = vmul.f32 %v499, %v739
  %v751 = vmul.f32 %v500, %v739
  %v752 = vmul.f32 %v501, %v739
  %v753 = vmul.f32 %v502, %v739
  %v754 = vmul.f32 %v503, %v739
  %v755 = vmul.f32 %v504, %v739
  %v756 = vsub.f32 1.0, %v733
  %v757 = vlaneseq
  %v758 = vshrl.u32 %v757, 7
  %v759 = vsub.s32 0, %v758
  %v760 = vrot.slane %v756, %v759
  %v761 = vmul.f32 %v717, %v760
  %v762 = vmul.f32 %v718, %v760
  %v763 = vmul.f32 %v719, %v760
  %v764 = vmul.f32 %v720, %v760
  %v765 = vmul.f32 %v721, %v760
  %v766 = vmul.f32 %v722, %v760
  %v767 = vmul.f32 %v723, %v760
  %v768 = vmul.f32 %v724, %v760
  %v769 = vmul.f32 %v725, %v760
  %v770 = vmul.f32 %v726, %v760
  %v771 = vmul.f32 %v727, %v760
  %v772 = vmul.f32 %v728, %v760
  %v773 = vmul.f32 %v729, %v760
  %v774 = vmul.f32 %v730, %v760
  %v775 = vmul.f32 %v731, %v760
  %v776 = vmul.f32 %v732, %v760
  %v777 = vadd.f32 %v740, %v761
  %v778 = vadd.f32 %v741, %v762
  %v779 = vadd.f32 %v742, %v763
  %v780 = vadd.f32 %v743, %v764
  %v781 = vadd.f32 %v744, %v765
  %v782 = vadd.f32 %v745, %v766
  %v783 = vadd.f32 %v746, %v767
  %v784 = vadd.f32 %v747, %v768
  %v785 = vadd.f32 %v748, %v769
  %v786 = vadd.f32 %v749, %v770
  %v787 = vadd.f32 %v750, %v771
  %v788 = vadd.f32 %v751, %v772
  %v789 = vadd.f32 %v752, %v773
  %v790 = vadd.f32 %v753, %v774
  %v791 = vadd.f32 %v754, %v775
  %v792 = vadd.f32 %v755, %v776
  %v793 = vlaneseq
  %v794 = vshrl.u32 %v793, 7
  %v795 = vsub.s32 0, %v794
  %v796 = vrot.slane %v734, %v795
  %v797 = vmul.f32 %v489, %v796
  %v798 = vmul.f32 %v490, %v796
  %v799 = vmul.f32 %v491, %v796
  %v800 = vmul.f32 %v492, %v796
  %v801 = vmul.f32 %v493, %v796
  %v802 = vmul.f32 %v494, %v796
  %v803 = vmul.f32 %v495, %v796
  %v804 = vmul.f32 %v496, %v796
  %v805 = vmul.f32 %v497, %v796
  %v806 = vmul.f32 %v498, %v796
  %v807 = vmul.f32 %v499, %v796
  %v808 = vmul.f32 %v500, %v796
  %v809 = vmul.f32 %v501, %v796
  %v810 = vmul.f32 %v502, %v796
  %v811 = vmul.f32 %v503, %v796
  %v812 = vmul.f32 %v504, %v796
  %v813 = vsub.f32 1.0, %v734
  %v814 = vlaneseq
  %v815 = vshrl.u32 %v814, 7
  %v816 = vsub.s32 0, %v815
  %v817 = vrot.slane %v813, %v816
  %v818 = vmul.f32 %v717, %v817
  %v819 = vmul.f32 %v718, %v817
  %v820 = vmul.f32 %v719, %v817
  %v821 = vmul.f32 %v720, %v817
  %v822 = vmul.f32 %v721, %v817
  %v823 = vmul.f32 %v722, %v817
  %v824 = vmul.f32 %v723, %v817
  %v825 = vmul.f32 %v724, %v817
  %v826 = vmul.f32 %v725, %v817
  %v827 = vmul.f32 %v726, %v817
  %v828 = vmul.f32 %v727, %v817
  %v829 = vmul.f32 %v728, %v817
  %v830 = vmul.f32 %v729, %v817
  %v831 = vmul.f32 %v730, %v817
  %v832 = vmul.f32 %v731, %v817
  %v833 = vmul.f32 %v732, %v817
  %v834 = vadd.f32 %v797, %v818
  %v835 = vadd.f32 %v798, %v819
  %v836 = vadd.f32 %v799, %v820
  %v837 = vadd.f32 %v800, %v821
  %v838 = vadd.f32 %v801, %v822
  %v839 = vadd.f32 %v802, %v823
  %v840 = vadd.f32 %v803, %v824
  %v841 = vadd.f32 %v804, %v825
  %v842 = vadd.f32 %v805, %v826
  %v843 = vadd.f32 %v806, %v827
  %v844 = vadd.f32 %v807, %v828
  %v845 = vadd.f32 %v808, %v829
  %v846 = vadd.f32 %v809, %v830
  %v847 = vadd.f32 %v810, %v831
  %v848 = vadd.f32 %v811, %v832
  %v849 = vadd.f32 %v812, %v833
  %v850 = vlaneseq
  %v851 = vshrl.u32 %v850, 7
  %v852 = vsub.s32 0, %v851
  %v853 = vrot.slane %v735, %v852
  %v854 = vmul.f32 %v489, %v853
  %v855 = vmul.f32 %v490, %v853
  %v856 = vmul.f32 %v491, %v853
  %v857 = vmul.f32 %v492, %v853
  %v858 = vmul.f32 %v493, %v853
  %v859 = vmul.f32 %v494, %v853
  %v860 = vmul.f32 %v495, %v853
  %v861 = vmul.f32 %v496, %v853
  %v862 = vmul.f32 %v497, %v853
  %v863 = vmul.f32 %v498, %v853
  %v864 = vmul.f32 %v499, %v853
  %v865 = vmul.f32 %v500, %v853
  %v866 = vmul.f32 %v501, %v853
  %v867 = vmul.f32 %v502, %v853
  %v868 = vmul.f32 %v503, %v853
  %v869 = vmul.f32 %v504, %v853
  %v870 = vsub.f32 1.0, %v735
  %v871 = vlaneseq
  %v872 = vshrl.u32 %v871, 7
  %v873 = vsub.s32 0, %v872
  %v874 = vrot.slane %v870, %v873
  %v875 = vmul.f32 %v717, %v874
  %v876 = vmul.f32 %v718, %v874
  %v877 = vmul.f32 %v719, %v874
  %v878 = vmul.f32 %v720, %v874
  %v879 = vmul.f32 %v721, %v874
  %v880 = vmul.f32 %v722, %v874
  %v881 = vmul.f32 %v723, %v874
  %v882 = vmul.f32 %v724, %v874
  %v883 = vmul.f32 %v725, %v874
  %v884 = vmul.f32 %v726, %v874
  %v885 = vmul.f32 %v727, %v874
  %v886 = vmul.f32 %v728, %v874
  %v887 = vmul.f32 %v729, %v874
  %v888 = vmul.f32 %v730, %v874
  %v889 = vmul.f32 %v731, %v874
  %v890 = vmul.f32 %v732, %v874
  %v891 = vadd.f32 %v854, %v875
  %v892 = vadd.f32 %v855, %v876
  %v893 = vadd.f32 %v856, %v877
  %v894 = vadd.f32 %v857, %v878
  %v895 = vadd.f32 %v858, %v879
  %v896 = vadd.f32 %v859, %v880
  %v897 = vadd.f32 %v860, %v881
  %v898 = vadd.f32 %v861, %v882
  %v899 = vadd.f32 %v862, %v883
  %v900 = vadd.f32 %v863, %v884
  %v901 = vadd.f32 %v864, %v885
  %v902 = vadd.f32 %v865, %v886
  %v903 = vadd.f32 %v866, %v887
  %v904 = vadd.f32 %v867, %v888
  %v905 = vadd.f32 %v868, %v889
  %v906 = vadd.f32 %v869, %v890
  %v907 = vpack.c.bf16 %v778, %v777
  %v908 = vpack.c.bf16 %v780, %v779
  %v909 = vpack.c.bf16 %v782, %v781
  %v910 = vpack.c.bf16 %v784, %v783
  %v911 = vpack.c.bf16 %v786, %v785
  %v912 = vpack.c.bf16 %v788, %v787
  %v913 = vpack.c.bf16 %v790, %v789
  %v914 = vpack.c.bf16 %v792, %v791
  %v915 = vld [vmem:[%s3] sm:$0xf]
  %v916 = vld [vmem:[%s3 + $0x4] sm:$0xf]
  %v917 = vld [vmem:[%s3 + $0x8] sm:$0xf]
  %v918 = vld [vmem:[%s3 + $0xc] sm:$0xf]
  %v919 = vld [vmem:[%s3 + $0x10] sm:$0xf]
  %v920 = vld [vmem:[%s3 + $0x14] sm:$0xf]
  %v921 = vld [vmem:[%s3 + $0x18] sm:$0xf]
  %v922 = vld [vmem:[%s3 + $0x1c] sm:$0xf]
  %v923 = vld [vmem:[%s3 + $0x20] sm:$0xf]
  %v924 = vld [vmem:[%s3 + $0x24] sm:$0xf]
  %v925 = vld [vmem:[%s3 + $0x28] sm:$0xf]
  %v926 = vld [vmem:[%s3 + $0x2c] sm:$0xf]
  %v927 = vld [vmem:[%s3 + $0x30] sm:$0xf]
  %v928 = vld [vmem:[%s3 + $0x34] sm:$0xf]
  %v929 = vld [vmem:[%s3 + $0x38] sm:$0xf]
  %v930 = vld [vmem:[%s3 + $0x3c] sm:$0xf]
  %v947 = vunpack.c.l.b16 %v915
  %v948 = vunpack.c.l.b16 %v916
  %v949 = vunpack.c.l.b16 %v917
  %v950 = vunpack.c.l.b16 %v918
  %v951 = vunpack.c.l.b16 %v919
  %v952 = vunpack.c.l.b16 %v920
  %v953 = vunpack.c.l.b16 %v921
  %v954 = vunpack.c.l.b16 %v922
  %v955 = vunpack.c.l.b16 %v923
  %v956 = vunpack.c.l.b16 %v924
  %v957 = vunpack.c.l.b16 %v925
  %v958 = vunpack.c.l.b16 %v926
  %v959 = vunpack.c.l.b16 %v927
  %v960 = vunpack.c.l.b16 %v928
  %v961 = vunpack.c.l.b16 %v929
  %v962 = vunpack.c.l.b16 %v930
  %v963 = vpack.c.b16 %v948, %v947
  %v964 = vpack.c.b16 %v950, %v949
  %v965 = vpack.c.b16 %v952, %v951
  %v966 = vpack.c.b16 %v954, %v953
  %v967 = vpack.c.b16 %v956, %v955
  %v968 = vpack.c.b16 %v958, %v957
  %v969 = vpack.c.b16 %v960, %v959
  %v970 = vpack.c.b16 %v962, %v961
  %979 = vmatprep.subr.bf16.mxu0 0
  %980 = vmatpush1.bf16.msra.mxu0 %v970
  %981 = vmatprep.subr.bf16.mxu0 0
  %982 = vmatpush1.bf16.msra.mxu0 %v969
  %983 = vmatprep.subr.bf16.mxu0 0
  %984 = vmatpush1.bf16.msra.mxu0 %v968
  %985 = vmatprep.subr.bf16.mxu0 0
  %986 = vmatpush1.bf16.msra.mxu0 %v967
  %987 = vmatprep.subr.bf16.mxu0 0
  %988 = vmatpush1.bf16.msra.mxu0 %v966
  %989 = vmatprep.subr.bf16.mxu0 0
  %990 = vmatpush1.bf16.msra.mxu0 %v965
  %991 = vmatprep.subr.bf16.mxu0 0
  %992 = vmatpush1.bf16.msra.mxu0 %v964
  %993 = vmatprep.subr.bf16.mxu0 0
  %994 = vmatpush1.bf16.msra.mxu0 %v963
  %995 = vmatprep.subr.bf16.mxu0 0
  %996 = vmatpush2.bf16.msra.mxu0 0
  %997 = vmatprep.subr.bf16.mxu0 0
  %998 = vmatpush2.bf16.msra.mxu0 0
  %999 = vmatprep.subr.bf16.mxu0 0
  %1000 = vmatpush2.bf16.msra.mxu0 0
  %1001 = vmatprep.subr.bf16.mxu0 0
  %1002 = vmatpush2.bf16.msra.mxu0 0
  %1003 = vmatprep.subr.bf16.mxu0 0
  %1004 = vmatpush2.bf16.msra.mxu0 0
  %1005 = vmatprep.subr.bf16.mxu0 0
  %1006 = vmatpush2.bf16.msra.mxu0 0
  %1007 = vmatprep.subr.bf16.mxu0 0
  %1008 = vmatpush2.bf16.msra.mxu0 0
  %1009 = vmatprep.subr.bf16.mxu0 0
  %1010 = vmatpush2.bf16.msra.mxu0 0
  %1011 = vmatprep.mubr.bf16.mxu0 0
  %1012 = vmatmul.mubr.bf16.gmra.mxu0 %v907
  %v1013 = vpop.f32.mrf.mxu0
  %v1014 = vadd.f32 0.0, %v1013
  %v1015 = vpop.f32.mrf.mxu0
  %v1016 = vpop.f32.mrf.mxu0
  %v1017 = vadd.f32 0.0, %v1016
  %v1018 = vpop.f32.mrf.mxu0
  %1019 = vmatprep.mubr.bf16.mxu0 0
  %1020 = vmatmul.mubr.bf16.gmra.mxu0 %v908
  %v1021 = vpop.f32.mrf.mxu0
  %v1022 = vadd.f32 0.0, %v1021
  %v1023 = vpop.f32.mrf.mxu0
  %v1024 = vpop.f32.mrf.mxu0
  %v1025 = vadd.f32 0.0, %v1024
  %v1026 = vpop.f32.mrf.mxu0
  %1027 = vmatprep.mubr.bf16.mxu0 0
  %1028 = vmatmul.mubr.bf16.gmra.mxu0 %v909
  %v1029 = vpop.f32.mrf.mxu0
  %v1030 = vadd.f32 0.0, %v1029
  %v1031 = vpop.f32.mrf.mxu0
  %v1032 = vpop.f32.mrf.mxu0
  %v1033 = vadd.f32 0.0, %v1032
  %v1034 = vpop.f32.mrf.mxu0
  %1035 = vmatprep.mubr.bf16.mxu0 0
  %1036 = vmatmul.mubr.bf16.gmra.mxu0 %v910
  %v1037 = vpop.f32.mrf.mxu0
  %v1038 = vadd.f32 0.0, %v1037
  %v1039 = vpop.f32.mrf.mxu0
  %v1040 = vpop.f32.mrf.mxu0
  %v1041 = vadd.f32 0.0, %v1040
  %v1042 = vpop.f32.mrf.mxu0
  %1043 = vmatprep.mubr.bf16.mxu0 0
  %1044 = vmatmul.mubr.bf16.gmra.mxu0 %v911
  %v1045 = vpop.f32.mrf.mxu0
  %v1046 = vadd.f32 0.0, %v1045
  %v1047 = vpop.f32.mrf.mxu0
  %v1048 = vpop.f32.mrf.mxu0
  %v1049 = vadd.f32 0.0, %v1048
  %v1050 = vpop.f32.mrf.mxu0
  %1051 = vmatprep.mubr.bf16.mxu0 0
  %1052 = vmatmul.mubr.bf16.gmra.mxu0 %v912
  %v1053 = vpop.f32.mrf.mxu0
  %v1054 = vadd.f32 0.0, %v1053
  %v1055 = vpop.f32.mrf.mxu0
  %v1056 = vpop.f32.mrf.mxu0
  %v1057 = vadd.f32 0.0, %v1056
  %v1058 = vpop.f32.mrf.mxu0
  %1059 = vmatprep.mubr.bf16.mxu0 0
  %1060 = vmatmul.mubr.bf16.gmra.mxu0 %v913
  %v1061 = vpop.f32.mrf.mxu0
  %v1062 = vadd.f32 0.0, %v1061
  %v1063 = vpop.f32.mrf.mxu0
  %v1064 = vpop.f32.mrf.mxu0
  %v1065 = vadd.f32 0.0, %v1064
  %v1066 = vpop.f32.mrf.mxu0
  %1067 = vmatprep.mubr.bf16.mxu0 0
  %1068 = vmatmul.mubr.bf16.gmra.mxu0 %v914
  %v1069 = vpop.f32.mrf.mxu0
  %v1070 = vadd.f32 0.0, %v1069
  %v1071 = vpop.f32.mrf.mxu0
  %v1072 = vpop.f32.mrf.mxu0
  %v1073 = vadd.f32 0.0, %v1072
  %v1074 = vpop.f32.mrf.mxu0
  %1075 = vdwg.mxu0
  %1076 = vst [vmem:[#allocation2] sm:$0xff] %v1014
  %1077 = vst [vmem:[#allocation2 + $0x8] sm:$0xff] %v1017
  %1078 = vst [vmem:[#allocation2 + $0x10] sm:$0xff] %v1022
  %1079 = vst [vmem:[#allocation2 + $0x18] sm:$0xff] %v1025
  %1080 = vst [vmem:[#allocation2 + $0x20] sm:$0xff] %v1030
  %1081 = vst [vmem:[#allocation2 + $0x28] sm:$0xff] %v1033
  %1082 = vst [vmem:[#allocation2 + $0x30] sm:$0xff] %v1038
  %1083 = vst [vmem:[#allocation2 + $0x38] sm:$0xff] %v1041
  %1084 = vst [vmem:[#allocation2 + $0x40] sm:$0xff] %v1046
  %1085 = vst [vmem:[#allocation2 + $0x48] sm:$0xff] %v1049
  %1086 = vst [vmem:[#allocation2 + $0x50] sm:$0xff] %v1054
  %1087 = vst [vmem:[#allocation2 + $0x58] sm:$0xff] %v1057
  %1088 = vst [vmem:[#allocation2 + $0x60] sm:$0xff] %v1062
  %1089 = vst [vmem:[#allocation2 + $0x68] sm:$0xff] %v1065
  %1090 = vst [vmem:[#allocation2 + $0x70] sm:$0xff] %v1070
  %1091 = vst [vmem:[#allocation2 + $0x78] sm:$0xff] %v1073
  %v1092 = vpack.c.bf16 %v835, %v834
  %v1093 = vpack.c.bf16 %v837, %v836
  %v1094 = vpack.c.bf16 %v839, %v838
  %v1095 = vpack.c.bf16 %v841, %v840
  %v1096 = vpack.c.bf16 %v843, %v842
  %v1097 = vpack.c.bf16 %v845, %v844
  %v1098 = vpack.c.bf16 %v847, %v846
  %v1099 = vpack.c.bf16 %v849, %v848
  %v1100 = vld [vmem:[%s4] sm:$0xf]
  %v1101 = vld [vmem:[%s4 + $0x4] sm:$0xf]
  %v1102 = vld [vmem:[%s4 + $0x8] sm:$0xf]
  %v1103 = vld [vmem:[%s4 + $0xc] sm:$0xf]
  %v1104 = vld [vmem:[%s4 + $0x10] sm:$0xf]
  %v1105 = vld [vmem:[%s4 + $0x14] sm:$0xf]
  %v1106 = vld [vmem:[%s4 + $0x18] sm:$0xf]
  %v1107 = vld [vmem:[%s4 + $0x1c] sm:$0xf]
  %v1108 = vld [vmem:[%s4 + $0x20] sm:$0xf]
  %v1109 = vld [vmem:[%s4 + $0x24] sm:$0xf]
  %v1110 = vld [vmem:[%s4 + $0x28] sm:$0xf]
  %v1111 = vld [vmem:[%s4 + $0x2c] sm:$0xf]
  %v1112 = vld [vmem:[%s4 + $0x30] sm:$0xf]
  %v1113 = vld [vmem:[%s4 + $0x34] sm:$0xf]
  %v1114 = vld [vmem:[%s4 + $0x38] sm:$0xf]
  %v1115 = vld [vmem:[%s4 + $0x3c] sm:$0xf]
  %v1132 = vunpack.c.l.b16 %v1100
  %v1133 = vunpack.c.l.b16 %v1101
  %v1134 = vunpack.c.l.b16 %v1102
  %v1135 = vunpack.c.l.b16 %v1103
  %v1136 = vunpack.c.l.b16 %v1104
  %v1137 = vunpack.c.l.b16 %v1105
  %v1138 = vunpack.c.l.b16 %v1106
  %v1139 = vunpack.c.l.b16 %v1107
  %v1140 = vunpack.c.l.b16 %v1108
  %v1141 = vunpack.c.l.b16 %v1109
  %v1142 = vunpack.c.l.b16 %v1110
  %v1143 = vunpack.c.l.b16 %v1111
  %v1144 = vunpack.c.l.b16 %v1112
  %v1145 = vunpack.c.l.b16 %v1113
  %v1146 = vunpack.c.l.b16 %v1114
  %v1147 = vunpack.c.l.b16 %v1115
  %v1148 = vpack.c.b16 %v1133, %v1132
  %v1149 = vpack.c.b16 %v1135, %v1134
  %v1150 = vpack.c.b16 %v1137, %v1136
  %v1151 = vpack.c.b16 %v1139, %v1138
  %v1152 = vpack.c.b16 %v1141, %v1140
  %v1153 = vpack.c.b16 %v1143, %v1142
  %v1154 = vpack.c.b16 %v1145, %v1144
  %v1155 = vpack.c.b16 %v1147, %v1146
  %1164 = vmatprep.subr.bf16.mxu0 0
  %1165 = vmatpush1.bf16.msra.mxu0 %v1155
  %1166 = vmatprep.subr.bf16.mxu0 0
  %1167 = vmatpush1.bf16.msra.mxu0 %v1154
  %1168 = vmatprep.subr.bf16.mxu0 0
  %1169 = vmatpush1.bf16.msra.mxu0 %v1153
  %1170 = vmatprep.subr.bf16.mxu0 0
  %1171 = vmatpush1.bf16.msra.mxu0 %v1152
  %1172 = vmatprep.subr.bf16.mxu0 0
  %1173 = vmatpush1.bf16.msra.mxu0 %v1151
  %1174 = vmatprep.subr.bf16.mxu0 0
  %1175 = vmatpush1.bf16.msra.mxu0 %v1150
  %1176 = vmatprep.subr.bf16.mxu0 0
  %1177 = vmatpush1.bf16.msra.mxu0 %v1149
  %1178 = vmatprep.subr.bf16.mxu0 0
  %1179 = vmatpush1.bf16.msra.mxu0 %v1148
  %1180 = vmatprep.subr.bf16.mxu0 0
  %1181 = vmatpush2.bf16.msra.mxu0 0
  %1182 = vmatprep.subr.bf16.mxu0 0
  %1183 = vmatpush2.bf16.msra.mxu0 0
  %1184 = vmatprep.subr.bf16.mxu0 0
  %1185 = vmatpush2.bf16.msra.mxu0 0
  %1186 = vmatprep.subr.bf16.mxu0 0
  %1187 = vmatpush2.bf16.msra.mxu0 0
  %1188 = vmatprep.subr.bf16.mxu0 0
  %1189 = vmatpush2.bf16.msra.mxu0 0
  %1190 = vmatprep.subr.bf16.mxu0 0
  %1191 = vmatpush2.bf16.msra.mxu0 0
  %1192 = vmatprep.subr.bf16.mxu0 0
  %1193 = vmatpush2.bf16.msra.mxu0 0
  %1194 = vmatprep.subr.bf16.mxu0 0
  %1195 = vmatpush2.bf16.msra.mxu0 0
  %1196 = vmatprep.mubr.bf16.mxu0 0
  %1197 = vmatmul.mubr.bf16.gmra.mxu0 %v1092
  %v1198 = vpop.f32.mrf.mxu0
  %v1199 = vadd.f32 0.0, %v1198
  %v1200 = vpop.f32.mrf.mxu0
  %v1201 = vpop.f32.mrf.mxu0
  %v1202 = vadd.f32 0.0, %v1201
  %v1203 = vpop.f32.mrf.mxu0
  %1204 = vmatprep.mubr.bf16.mxu0 0
  %1205 = vmatmul.mubr.bf16.gmra.mxu0 %v1093
  %v1206 = vpop.f32.mrf.mxu0
  %v1207 = vadd.f32 0.0, %v1206
  %v1208 = vpop.f32.mrf.mxu0
  %v1209 = vpop.f32.mrf.mxu0
  %v1210 = vadd.f32 0.0, %v1209
  %v1211 = vpop.f32.mrf.mxu0
  %1212 = vmatprep.mubr.bf16.mxu0 0
  %1213 = vmatmul.mubr.bf16.gmra.mxu0 %v1094
  %v1214 = vpop.f32.mrf.mxu0
  %v1215 = vadd.f32 0.0, %v1214
  %v1216 = vpop.f32.mrf.mxu0
  %v1217 = vpop.f32.mrf.mxu0
  %v1218 = vadd.f32 0.0, %v1217
  %v1219 = vpop.f32.mrf.mxu0
  %1220 = vmatprep.mubr.bf16.mxu0 0
  %1221 = vmatmul.mubr.bf16.gmra.mxu0 %v1095
  %v1222 = vpop.f32.mrf.mxu0
  %v1223 = vadd.f32 0.0, %v1222
  %v1224 = vpop.f32.mrf.mxu0
  %v1225 = vpop.f32.mrf.mxu0
  %v1226 = vadd.f32 0.0, %v1225
  %v1227 = vpop.f32.mrf.mxu0
  %1228 = vmatprep.mubr.bf16.mxu0 0
  %1229 = vmatmul.mubr.bf16.gmra.mxu0 %v1096
  %v1230 = vpop.f32.mrf.mxu0
  %v1231 = vadd.f32 0.0, %v1230
  %v1232 = vpop.f32.mrf.mxu0
  %v1233 = vpop.f32.mrf.mxu0
  %v1234 = vadd.f32 0.0, %v1233
  %v1235 = vpop.f32.mrf.mxu0
  %1236 = vmatprep.mubr.bf16.mxu0 0
  %1237 = vmatmul.mubr.bf16.gmra.mxu0 %v1097
  %v1238 = vpop.f32.mrf.mxu0
  %v1239 = vadd.f32 0.0, %v1238
  %v1240 = vpop.f32.mrf.mxu0
  %v1241 = vpop.f32.mrf.mxu0
  %v1242 = vadd.f32 0.0, %v1241
  %v1243 = vpop.f32.mrf.mxu0
  %1244 = vmatprep.mubr.bf16.mxu0 0
  %1245 = vmatmul.mubr.bf16.gmra.mxu0 %v1098
  %v1246 = vpop.f32.mrf.mxu0
  %v1247 = vadd.f32 0.0, %v1246
  %v1248 = vpop.f32.mrf.mxu0
  %v1249 = vpop.f32.mrf.mxu0
  %v1250 = vadd.f32 0.0, %v1249
  %v1251 = vpop.f32.mrf.mxu0
  %1252 = vmatprep.mubr.bf16.mxu0 0
  %1253 = vmatmul.mubr.bf16.gmra.mxu0 %v1099
  %v1254 = vpop.f32.mrf.mxu0
  %v1255 = vadd.f32 0.0, %v1254
  %v1256 = vpop.f32.mrf.mxu0
  %v1257 = vpop.f32.mrf.mxu0
  %v1258 = vadd.f32 0.0, %v1257
  %v1259 = vpop.f32.mrf.mxu0
  %1260 = vdwg.mxu0
  %1261 = vst [vmem:[#allocation3] sm:$0xff] %v1199
  %1262 = vst [vmem:[#allocation3 + $0x8] sm:$0xff] %v1202
  %1263 = vst [vmem:[#allocation3 + $0x10] sm:$0xff] %v1207
  %1264 = vst [vmem:[#allocation3 + $0x18] sm:$0xff] %v1210
  %1265 = vst [vmem:[#allocation3 + $0x20] sm:$0xff] %v1215
  %1266 = vst [vmem:[#allocation3 + $0x28] sm:$0xff] %v1218
  %1267 = vst [vmem:[#allocation3 + $0x30] sm:$0xff] %v1223
  %1268 = vst [vmem:[#allocation3 + $0x38] sm:$0xff] %v1226
  %1269 = vst [vmem:[#allocation3 + $0x40] sm:$0xff] %v1231
  %1270 = vst [vmem:[#allocation3 + $0x48] sm:$0xff] %v1234
  %1271 = vst [vmem:[#allocation3 + $0x50] sm:$0xff] %v1239
  %1272 = vst [vmem:[#allocation3 + $0x58] sm:$0xff] %v1242
  %1273 = vst [vmem:[#allocation3 + $0x60] sm:$0xff] %v1247
  %1274 = vst [vmem:[#allocation3 + $0x68] sm:$0xff] %v1250
  %1275 = vst [vmem:[#allocation3 + $0x70] sm:$0xff] %v1255
  %1276 = vst [vmem:[#allocation3 + $0x78] sm:$0xff] %v1258
  %v1277 = vpack.c.bf16 %v892, %v891
  %v1278 = vpack.c.bf16 %v894, %v893
  %v1279 = vpack.c.bf16 %v896, %v895
  %v1280 = vpack.c.bf16 %v898, %v897
  %v1281 = vpack.c.bf16 %v900, %v899
  %v1282 = vpack.c.bf16 %v902, %v901
  %v1283 = vpack.c.bf16 %v904, %v903
  %v1284 = vpack.c.bf16 %v906, %v905
  %v1285 = vld [vmem:[%s5] sm:$0xf]
  %v1286 = vld [vmem:[%s5 + $0x4] sm:$0xf]
  %v1287 = vld [vmem:[%s5 + $0x8] sm:$0xf]
  %v1288 = vld [vmem:[%s5 + $0xc] sm:$0xf]
  %v1289 = vld [vmem:[%s5 + $0x10] sm:$0xf]
  %v1290 = vld [vmem:[%s5 + $0x14] sm:$0xf]
  %v1291 = vld [vmem:[%s5 + $0x18] sm:$0xf]
  %v1292 = vld [vmem:[%s5 + $0x1c] sm:$0xf]
  %v1293 = vld [vmem:[%s5 + $0x20] sm:$0xf]
  %v1294 = vld [vmem:[%s5 + $0x24] sm:$0xf]
  %v1295 = vld [vmem:[%s5 + $0x28] sm:$0xf]
  %v1296 = vld [vmem:[%s5 + $0x2c] sm:$0xf]
  %v1297 = vld [vmem:[%s5 + $0x30] sm:$0xf]
  %v1298 = vld [vmem:[%s5 + $0x34] sm:$0xf]
  %v1299 = vld [vmem:[%s5 + $0x38] sm:$0xf]
  %v1300 = vld [vmem:[%s5 + $0x3c] sm:$0xf]
  %v1317 = vunpack.c.l.b16 %v1285
  %v1318 = vunpack.c.l.b16 %v1286
  %v1319 = vunpack.c.l.b16 %v1287
  %v1320 = vunpack.c.l.b16 %v1288
  %v1321 = vunpack.c.l.b16 %v1289
  %v1322 = vunpack.c.l.b16 %v1290
  %v1323 = vunpack.c.l.b16 %v1291
  %v1324 = vunpack.c.l.b16 %v1292
  %v1325 = vunpack.c.l.b16 %v1293
  %v1326 = vunpack.c.l.b16 %v1294
  %v1327 = vunpack.c.l.b16 %v1295
  %v1328 = vunpack.c.l.b16 %v1296
  %v1329 = vunpack.c.l.b16 %v1297
  %v1330 = vunpack.c.l.b16 %v1298
  %v1331 = vunpack.c.l.b16 %v1299
  %v1332 = vunpack.c.l.b16 %v1300
  %v1333 = vpack.c.b16 %v1318, %v1317
  %v1334 = vpack.c.b16 %v1320, %v1319
  %v1335 = vpack.c.b16 %v1322, %v1321
  %v1336 = vpack.c.b16 %v1324, %v1323
  %v1337 = vpack.c.b16 %v1326, %v1325
  %v1338 = vpack.c.b16 %v1328, %v1327
  %v1339 = vpack.c.b16 %v1330, %v1329
  %v1340 = vpack.c.b16 %v1332, %v1331
  %1349 = vmatprep.subr.bf16.mxu0 0
  %1350 = vmatpush1.bf16.msra.mxu0 %v1340
  %1351 = vmatprep.subr.bf16.mxu0 0
  %1352 = vmatpush1.bf16.msra.mxu0 %v1339
  %1353 = vmatprep.subr.bf16.mxu0 0
  %1354 = vmatpush1.bf16.msra.mxu0 %v1338
  %1355 = vmatprep.subr.bf16.mxu0 0
  %1356 = vmatpush1.bf16.msra.mxu0 %v1337
  %1357 = vmatprep.subr.bf16.mxu0 0
  %1358 = vmatpush1.bf16.msra.mxu0 %v1336
  %1359 = vmatprep.subr.bf16.mxu0 0
  %1360 = vmatpush1.bf16.msra.mxu0 %v1335
  %1361 = vmatprep.subr.bf16.mxu0 0
  %1362 = vmatpush1.bf16.msra.mxu0 %v1334
  %1363 = vmatprep.subr.bf16.mxu0 0
  %1364 = vmatpush1.bf16.msra.mxu0 %v1333
  %1365 = vmatprep.subr.bf16.mxu0 0
  %1366 = vmatpush2.bf16.msra.mxu0 0
  %1367 = vmatprep.subr.bf16.mxu0 0
  %1368 = vmatpush2.bf16.msra.mxu0 0
  %1369 = vmatprep.subr.bf16.mxu0 0
  %1370 = vmatpush2.bf16.msra.mxu0 0
  %1371 = vmatprep.subr.bf16.mxu0 0
  %1372 = vmatpush2.bf16.msra.mxu0 0
  %1373 = vmatprep.subr.bf16.mxu0 0
  %1374 = vmatpush2.bf16.msra.mxu0 0
  %1375 = vmatprep.subr.bf16.mxu0 0
  %1376 = vmatpush2.bf16.msra.mxu0 0
  %1377 = vmatprep.subr.bf16.mxu0 0
  %1378 = vmatpush2.bf16.msra.mxu0 0
  %1379 = vmatprep.subr.bf16.mxu0 0
  %1380 = vmatpush2.bf16.msra.mxu0 0
  %1381 = vmatprep.mubr.bf16.mxu0 0
  %1382 = vmatmul.mubr.bf16.gmra.mxu0 %v1277
  %v1383 = vpop.f32.mrf.mxu0
  %v1384 = vadd.f32 0.0, %v1383
  %v1385 = vpop.f32.mrf.mxu0
  %v1386 = vpop.f32.mrf.mxu0
  %v1387 = vadd.f32 0.0, %v1386
  %v1388 = vpop.f32.mrf.mxu0
  %1389 = vmatprep.mubr.bf16.mxu0 0
  %1390 = vmatmul.mubr.bf16.gmra.mxu0 %v1278
  %v1391 = vpop.f32.mrf.mxu0
  %v1392 = vadd.f32 0.0, %v1391
  %v1393 = vpop.f32.mrf.mxu0
  %v1394 = vpop.f32.mrf.mxu0
  %v1395 = vadd.f32 0.0, %v1394
  %v1396 = vpop.f32.mrf.mxu0
  %1397 = vmatprep.mubr.bf16.mxu0 0
  %1398 = vmatmul.mubr.bf16.gmra.mxu0 %v1279
  %v1399 = vpop.f32.mrf.mxu0
  %v1400 = vadd.f32 0.0, %v1399
  %v1401 = vpop.f32.mrf.mxu0
  %v1402 = vpop.f32.mrf.mxu0
  %v1403 = vadd.f32 0.0, %v1402
  %v1404 = vpop.f32.mrf.mxu0
  %1405 = vmatprep.mubr.bf16.mxu0 0
  %1406 = vmatmul.mubr.bf16.gmra.mxu0 %v1280
  %v1407 = vpop.f32.mrf.mxu0
  %v1408 = vadd.f32 0.0, %v1407
  %v1409 = vpop.f32.mrf.mxu0
  %v1410 = vpop.f32.mrf.mxu0
  %v1411 = vadd.f32 0.0, %v1410
  %v1412 = vpop.f32.mrf.mxu0
  %1413 = vmatprep.mubr.bf16.mxu0 0
  %1414 = vmatmul.mubr.bf16.gmra.mxu0 %v1281
  %v1415 = vpop.f32.mrf.mxu0
  %v1416 = vadd.f32 0.0, %v1415
  %v1417 = vpop.f32.mrf.mxu0
  %v1418 = vpop.f32.mrf.mxu0
  %v1419 = vadd.f32 0.0, %v1418
  %v1420 = vpop.f32.mrf.mxu0
  %1421 = vmatprep.mubr.bf16.mxu0 0
  %1422 = vmatmul.mubr.bf16.gmra.mxu0 %v1282
  %v1423 = vpop.f32.mrf.mxu0
  %v1424 = vadd.f32 0.0, %v1423
  %v1425 = vpop.f32.mrf.mxu0
  %v1426 = vpop.f32.mrf.mxu0
  %v1427 = vadd.f32 0.0, %v1426
  %v1428 = vpop.f32.mrf.mxu0
  %1429 = vmatprep.mubr.bf16.mxu0 0
  %1430 = vmatmul.mubr.bf16.gmra.mxu0 %v1283
  %v1431 = vpop.f32.mrf.mxu0
  %v1432 = vadd.f32 0.0, %v1431
  %v1433 = vpop.f32.mrf.mxu0
  %v1434 = vpop.f32.mrf.mxu0
  %v1435 = vadd.f32 0.0, %v1434
  %v1436 = vpop.f32.mrf.mxu0
  %1437 = vmatprep.mubr.bf16.mxu0 0
  %1438 = vmatmul.mubr.bf16.gmra.mxu0 %v1284
  %v1439 = vpop.f32.mrf.mxu0
  %v1440 = vadd.f32 0.0, %v1439
  %v1441 = vpop.f32.mrf.mxu0
  %v1442 = vpop.f32.mrf.mxu0
  %v1443 = vadd.f32 0.0, %v1442
  %v1444 = vpop.f32.mrf.mxu0
  %1445 = vdwg.mxu0
  %v1446 = vxor.u32 %v1384, 2147483648
  %v1447 = vxor.u32 %v1387, 2147483648
  %v1448 = vxor.u32 %v1392, 2147483648
  %v1449 = vxor.u32 %v1395, 2147483648
  %v1450 = vxor.u32 %v1400, 2147483648
  %v1451 = vxor.u32 %v1403, 2147483648
  %v1452 = vxor.u32 %v1408, 2147483648
  %v1453 = vxor.u32 %v1411, 2147483648
  %v1454 = vxor.u32 %v1416, 2147483648
  %v1455 = vxor.u32 %v1419, 2147483648
  %v1456 = vxor.u32 %v1424, 2147483648
  %v1457 = vxor.u32 %v1427, 2147483648
  %v1458 = vxor.u32 %v1432, 2147483648
  %v1459 = vxor.u32 %v1435, 2147483648
  %v1460 = vxor.u32 %v1440, 2147483648
  %v1461 = vxor.u32 %v1443, 2147483648
  %v1462 = vmul.f32 %v1446, 1.442695
  %v1463 = vpow.pop %v1462
  %v1464 = vmul.f32 %v1447, 1.442695
  %v1465 = vpow.pop %v1464
  %v1466 = vmul.f32 %v1448, 1.442695
  %v1467 = vpow.pop %v1466
  %v1468 = vmul.f32 %v1449, 1.442695
  %v1469 = vpow.pop %v1468
  %v1470 = vmul.f32 %v1450, 1.442695
  %v1471 = vpow.pop %v1470
  %v1472 = vmul.f32 %v1451, 1.442695
  %v1473 = vpow.pop %v1472
  %v1474 = vmul.f32 %v1452, 1.442695
  %v1475 = vpow.pop %v1474
  %v1476 = vmul.f32 %v1453, 1.442695
  %v1477 = vpow.pop %v1476
  %v1478 = vmul.f32 %v1454, 1.442695
  %v1479 = vpow.pop %v1478
  %v1480 = vmul.f32 %v1455, 1.442695
  %v1481 = vpow.pop %v1480
  %v1482 = vmul.f32 %v1456, 1.442695
  %v1483 = vpow.pop %v1482
  %v1484 = vmul.f32 %v1457, 1.442695
  %v1485 = vpow.pop %v1484
  %v1486 = vmul.f32 %v1458, 1.442695
  %v1487 = vpow.pop %v1486
  %v1488 = vmul.f32 %v1459, 1.442695
  %v1489 = vpow.pop %v1488
  %v1490 = vmul.f32 %v1460, 1.442695
  %v1491 = vpow.pop %v1490
  %v1492 = vmul.f32 %v1461, 1.442695
  %v1493 = vpow.pop %v1492
  %v1494 = vadd.f32 %v1463, 1.0
  %v1495 = vadd.f32 %v1465, 1.0
  %v1496 = vadd.f32 %v1467, 1.0
  %v1497 = vadd.f32 %v1469, 1.0
  %v1498 = vadd.f32 %v1471, 1.0
  %v1499 = vadd.f32 %v1473, 1.0
  %v1500 = vadd.f32 %v1475, 1.0
  %v1501 = vadd.f32 %v1477, 1.0
  %v1502 = vadd.f32 %v1479, 1.0
  %v1503 = vadd.f32 %v1481, 1.0
  %v1504 = vadd.f32 %v1483, 1.0
  %v1505 = vadd.f32 %v1485, 1.0
  %v1506 = vadd.f32 %v1487, 1.0
  %v1507 = vadd.f32 %v1489, 1.0
  %v1508 = vadd.f32 %v1491, 1.0
  %v1509 = vadd.f32 %v1493, 1.0
  %v1510 = vrcp.pop %v1494
  %v1511 = vmul.f32 1.0, %v1510
  %v1512 = vrcp.pop %v1495
  %v1513 = vmul.f32 1.0, %v1512
  %v1514 = vrcp.pop %v1496
  %v1515 = vmul.f32 1.0, %v1514
  %v1516 = vrcp.pop %v1497
  %v1517 = vmul.f32 1.0, %v1516
  %v1518 = vrcp.pop %v1498
  %v1519 = vmul.f32 1.0, %v1518
  %v1520 = vrcp.pop %v1499
  %v1521 = vmul.f32 1.0, %v1520
  %v1522 = vrcp.pop %v1500
  %v1523 = vmul.f32 1.0, %v1522
  %v1524 = vrcp.pop %v1501
  %v1525 = vmul.f32 1.0, %v1524
  %v1526 = vrcp.pop %v1502
  %v1527 = vmul.f32 1.0, %v1526
  %v1528 = vrcp.pop %v1503
  %v1529 = vmul.f32 1.0, %v1528
  %v1530 = vrcp.pop %v1504
  %v1531 = vmul.f32 1.0, %v1530
  %v1532 = vrcp.pop %v1505
  %v1533 = vmul.f32 1.0, %v1532
  %v1534 = vrcp.pop %v1506
  %v1535 = vmul.f32 1.0, %v1534
  %v1536 = vrcp.pop %v1507
  %v1537 = vmul.f32 1.0, %v1536
  %v1538 = vrcp.pop %v1508
  %v1539 = vmul.f32 1.0, %v1538
  %v1540 = vrcp.pop %v1509
  %v1541 = vmul.f32 1.0, %v1540
  %v1542 = vld [vmem:[%s1 + $0xd] sm:$0x1]
  %v1543 = vlaneseq
  %v1544 = vshrl.u32 %v1543, 7
  %v1545 = vsub.s32 0, %v1544
  %v1546 = vrot.slane %v1542, %v1545
  %v1547 = vld [vmem:[%s1 + $0xe] sm:$0x1]
  %v1548 = vlaneseq
  %v1549 = vshrl.u32 %v1548, 7
  %v1550 = vsub.s32 0, %v1549
  %v1551 = vrot.slane %v1547, %v1550
  loop: start=0, step=1, limit=8
  $region42: #{_lambda_.5} parent=0 // loop_pre_header
    _
  $region43: #{_lambda_.5} parent=0 // loop_header
    %s1553 = sphi 0, %s1557
    %p1554 = scmp.ge.s32.totalorder %s1553, 8
    %v1558 = vphi 0.0, %v1869
    %v1559 = vphi 0.0, %v1871
    %v1560 = vphi -1e+38, %v1872
  $region44: #{_lambda_.5} parent=0 // loop_header_branch
    %1556 = sbr.rel (%p1554) target = $region48
  $region45: #{_lambda_.5} parent=0 // loop_body
    %s1561 = smul.u32 %s1553, 16
    %s1562 = scalar_lea.vmem [#allocation2], %s1561
    %v1563 = vld [vmem:[%s1562] sm:$0x3]
    %s1564 = scalar_lea.vmem [#allocation3], %s1561
    %v1565 = vld [vmem:[%s1564] sm:$0x3]
    %v1566 = vadd.f32 %v1551, %v1563
    %v1567 = vsub.f32 %v1560, %v1566
    %v1568 = vand.u32 2147483647, %v1567
    %v1569 = vsub.f32 0.0, %v1568
    %v1570 = vmul.f32 %v1569, 1.442695
    %v1571 = vpow.pop %v1570
    %vm1572 = vcmp.ge.f32.partialorder %v1567, 0.0
    %v1573 = vsel %vm1572, 1.0, %v1571
    %v1574 = vsel %vm1572, %v1571, 1.0
    %v1575 = vmul.f32 %v1573, %v1558
    %v1576 = vmul.f32 %v1574, %v1565
    %v1577 = vadd.f32 %v1575, %v1576
    %v1578 = vmul.f32 %v1573, %v1559
    %v1579 = vadd.f32 %v1578, %v1574
    %v1580 = vrcp.pop %v1579
    %v1581 = vmul.f32 %v1577, %v1580
    %s1582 = scalar_lea.vmem [#allocation4], %s1561
    %1583 = vst [vmem:[%s1582] sm:$0x3] %v1581
    %v1584 = vadd.f32 %v1546, %v1560
    %v1585 = vsub.f32 %v1584, %v1563
    %v1586 = vand.u32 2147483647, %v1585
    %v1587 = vsub.f32 0.0, %v1586
    %v1588 = vmul.f32 %v1587, 1.442695
    %v1589 = vpow.pop %v1588
    %vm1590 = vcmp.ge.f32.partialorder %v1585, 0.0
    %v1591 = vsel %vm1590, 1.0, %v1589
    %v1592 = vsel %vm1590, %v1589, 1.0
    %v1593 = vmul.f32 %v1591, %v1558
    %v1594 = vmul.f32 %v1592, %v1565
    %v1595 = vadd.f32 %v1593, %v1594
    %v1596 = vmul.f32 %v1591, %v1559
    %v1597 = vadd.f32 %v1596, %v1592
    %v1598 = vmax.f32 %v1584, %v1563
    %s1599 = smul.u32 %s1553, 8
    %s1600 = sadd.s32 %s1599, 1
    %s1601 = smul.u32 %s1600, 2
    %s1602 = scalar_lea.vmem [#allocation2], %s1601
    %v1603 = vld [vmem:[%s1602] sm:$0x3]
    %s1604 = scalar_lea.vmem [#allocation3], %s1601
    %v1605 = vld [vmem:[%s1604] sm:$0x3]
    %v1606 = vadd.f32 %v1551, %v1603
    %v1607 = vsub.f32 %v1598, %v1606
    %v1608 = vand.u32 2147483647, %v1607
    %v1609 = vsub.f32 0.0, %v1608
    %v1610 = vmul.f32 %v1609, 1.442695
    %v1611 = vpow.pop %v1610
    %vm1612 = vcmp.ge.f32.partialorder %v1607, 0.0
    %v1613 = vsel %vm1612, 1.0, %v1611
    %v1614 = vsel %vm1612, %v1611, 1.0
    %v1615 = vmul.f32 %v1613, %v1595
    %v1616 = vmul.f32 %v1614, %v1605
    %v1617 = vadd.f32 %v1615, %v1616
    %v1618 = vmul.f32 %v1613, %v1597
    %v1619 = vadd.f32 %v1618, %v1614
    %v1620 = vrcp.pop %v1619
    %v1621 = vmul.f32 %v1617, %v1620
    %s1622 = scalar_lea.vmem [#allocation4], %s1601
    %1623 = vst [vmem:[%s1622] sm:$0x3] %v1621
    %v1624 = vadd.f32 %v1546, %v1598
    %v1625 = vsub.f32 %v1624, %v1603
    %v1626 = vand.u32 2147483647, %v1625
    %v1627 = vsub.f32 0.0, %v1626
    %v1628 = vmul.f32 %v1627, 1.442695
    %v1629 = vpow.pop %v1628
    %vm1630 = vcmp.ge.f32.partialorder %v1625, 0.0
    %v1631 = vsel %vm1630, 1.0, %v1629
    %v1632 = vsel %vm1630, %v1629, 1.0
    %v1633 = vmul.f32 %v1631, %v1595
    %v1634 = vmul.f32 %v1632, %v1605
    %v1635 = vadd.f32 %v1633, %v1634
    %v1636 = vmul.f32 %v1631, %v1597
    %v1637 = vadd.f32 %v1636, %v1632
    %v1638 = vmax.f32 %v1624, %v1603
    %s1639 = sadd.s32 %s1599, 2
    %s1640 = smul.u32 %s1639, 2
    %s1641 = scalar_lea.vmem [#allocation2], %s1640
    %v1642 = vld [vmem:[%s1641] sm:$0x3]
    %s1643 = scalar_lea.vmem [#allocation3], %s1640
    %v1644 = vld [vmem:[%s1643] sm:$0x3]
    %v1645 = vadd.f32 %v1551, %v1642
    %v1646 = vsub.f32 %v1638, %v1645
    %v1647 = vand.u32 2147483647, %v1646
    %v1648 = vsub.f32 0.0, %v1647
    %v1649 = vmul.f32 %v1648, 1.442695
    %v1650 = vpow.pop %v1649
    %vm1651 = vcmp.ge.f32.partialorder %v1646, 0.0
    %v1652 = vsel %vm1651, 1.0, %v1650
    %v1653 = vsel %vm1651, %v1650, 1.0
    %v1654 = vmul.f32 %v1652, %v1635
    %v1655 = vmul.f32 %v1653, %v1644
    %v1656 = vadd.f32 %v1654, %v1655
    %v1657 = vmul.f32 %v1652, %v1637
    %v1658 = vadd.f32 %v1657, %v1653
    %v1659 = vrcp.pop %v1658
    %v1660 = vmul.f32 %v1656, %v1659
    %s1661 = scalar_lea.vmem [#allocation4], %s1640
    %1662 = vst [vmem:[%s1661] sm:$0x3] %v1660
    %v1663 = vadd.f32 %v1546, %v1638
    %v1664 = vsub.f32 %v1663, %v1642
    %v1665 = vand.u32 2147483647, %v1664
    %v1666 = vsub.f32 0.0, %v1665
    %v1667 = vmul.f32 %v1666, 1.442695
    %v1668 = vpow.pop %v1667
    %vm1669 = vcmp.ge.f32.partialorder %v1664, 0.0
    %v1670 = vsel %vm1669, 1.0, %v1668
    %v1671 = vsel %vm1669, %v1668, 1.0
    %v1672 = vmul.f32 %v1670, %v1635
    %v1673 = vmul.f32 %v1671, %v1644
    %v1674 = vadd.f32 %v1672, %v1673
    %v1675 = vmul.f32 %v1670, %v1637
    %v1676 = vadd.f32 %v1675, %v1671
    %v1677 = vmax.f32 %v1663, %v1642
    %s1678 = sadd.s32 %s1599, 3
    %s1679 = smul.u32 %s1678, 2
    %s1680 = scalar_lea.vmem [#allocation2], %s1679
    %v1681 = vld [vmem:[%s1680] sm:$0x3]
    %s1682 = scalar_lea.vmem [#allocation3], %s1679
    %v1683 = vld [vmem:[%s1682] sm:$0x3]
    %v1684 = vadd.f32 %v1551, %v1681
    %v1685 = vsub.f32 %v1677, %v1684
    %v1686 = vand.u32 2147483647, %v1685
    %v1687 = vsub.f32 0.0, %v1686
    %v1688 = vmul.f32 %v1687, 1.442695
    %v1689 = vpow.pop %v1688
    %vm1690 = vcmp.ge.f32.partialorder %v1685, 0.0
    %v1691 = vsel %vm1690, 1.0, %v1689
    %v1692 = vsel %vm1690, %v1689, 1.0
    %v1693 = vmul.f32 %v1691, %v1674
    %v1694 = vmul.f32 %v1692, %v1683
    %v1695 = vadd.f32 %v1693, %v1694
    %v1696 = vmul.f32 %v1691, %v1676
    %v1697 = vadd.f32 %v1696, %v1692
    %v1698 = vrcp.pop %v1697
    %v1699 = vmul.f32 %v1695, %v1698
    %s1700 = scalar_lea.vmem [#allocation4], %s1679
    %1701 = vst [vmem:[%s1700] sm:$0x3] %v1699
    %v1702 = vadd.f32 %v1546, %v1677
    %v1703 = vsub.f32 %v1702, %v1681
    %v1704 = vand.u32 2147483647, %v1703
    %v1705 = vsub.f32 0.0, %v1704
    %v1706 = vmul.f32 %v1705, 1.442695
    %v1707 = vpow.pop %v1706
    %vm1708 = vcmp.ge.f32.partialorder %v1703, 0.0
    %v1709 = vsel %vm1708, 1.0, %v1707
    %v1710 = vsel %vm1708, %v1707, 1.0
    %v1711 = vmul.f32 %v1709, %v1674
    %v1712 = vmul.f32 %v1710, %v1683
    %v1713 = vadd.f32 %v1711, %v1712
    %v1714 = vmul.f32 %v1709, %v1676
    %v1715 = vadd.f32 %v1714, %v1710
    %v1716 = vmax.f32 %v1702, %v1681
    %s1717 = sadd.s32 %s1599, 4
    %s1718 = smul.u32 %s1717, 2
    %s1719 = scalar_lea.vmem [#allocation2], %s1718
    %v1720 = vld [vmem:[%s1719] sm:$0x3]
    %s1721 = scalar_lea.vmem [#allocation3], %s1718
    %v1722 = vld [vmem:[%s1721] sm:$0x3]
    %v1723 = vadd.f32 %v1551, %v1720
    %v1724 = vsub.f32 %v1716, %v1723
    %v1725 = vand.u32 2147483647, %v1724
    %v1726 = vsub.f32 0.0, %v1725
    %v1727 = vmul.f32 %v1726, 1.442695
    %v1728 = vpow.pop %v1727
    %vm1729 = vcmp.ge.f32.partialorder %v1724, 0.0
    %v1730 = vsel %vm1729, 1.0, %v1728
    %v1731 = vsel %vm1729, %v1728, 1.0
    %v1732 = vmul.f32 %v1730, %v1713
    %v1733 = vmul.f32 %v1731, %v1722
    %v1734 = vadd.f32 %v1732, %v1733
    %v1735 = vmul.f32 %v1730, %v1715
    %v1736 = vadd.f32 %v1735, %v1731
    %v1737 = vrcp.pop %v1736
    %v1738 = vmul.f32 %v1734, %v1737
    %s1739 = scalar_lea.vmem [#allocation4], %s1718
    %1740 = vst [vmem:[%s1739] sm:$0x3] %v1738
    %v1741 = vadd.f32 %v1546, %v1716
    %v1742 = vsub.f32 %v1741, %v1720
    %v1743 = vand.u32 2147483647, %v1742
    %v1744 = vsub.f32 0.0, %v1743
    %v1745 = vmul.f32 %v1744, 1.442695
    %v1746 = vpow.pop %v1745
    %vm1747 = vcmp.ge.f32.partialorder %v1742, 0.0
    %v1748 = vsel %vm1747, 1.0, %v1746
    %v1749 = vsel %vm1747, %v1746, 1.0
    %v1750 = vmul.f32 %v1748, %v1713
    %v1751 = vmul.f32 %v1749, %v1722
    %v1752 = vadd.f32 %v1750, %v1751
    %v1753 = vmul.f32 %v1748, %v1715
    %v1754 = vadd.f32 %v1753, %v1749
    %v1755 = vmax.f32 %v1741, %v1720
    %s1756 = sadd.s32 %s1599, 5
    %s1757 = smul.u32 %s1756, 2
    %s1758 = scalar_lea.vmem [#allocation2], %s1757
    %v1759 = vld [vmem:[%s1758] sm:$0x3]
    %s1760 = scalar_lea.vmem [#allocation3], %s1757
    %v1761 = vld [vmem:[%s1760] sm:$0x3]
    %v1762 = vadd.f32 %v1551, %v1759
    %v1763 = vsub.f32 %v1755, %v1762
    %v1764 = vand.u32 2147483647, %v1763
    %v1765 = vsub.f32 0.0, %v1764
    %v1766 = vmul.f32 %v1765, 1.442695
    %v1767 = vpow.pop %v1766
    %vm1768 = vcmp.ge.f32.partialorder %v1763, 0.0
    %v1769 = vsel %vm1768, 1.0, %v1767
    %v1770 = vsel %vm1768, %v1767, 1.0
    %v1771 = vmul.f32 %v1769, %v1752
    %v1772 = vmul.f32 %v1770, %v1761
    %v1773 = vadd.f32 %v1771, %v1772
    %v1774 = vmul.f32 %v1769, %v1754
    %v1775 = vadd.f32 %v1774, %v1770
    %v1776 = vrcp.pop %v1775
    %v1777 = vmul.f32 %v1773, %v1776
    %s1778 = scalar_lea.vmem [#allocation4], %s1757
    %1779 = vst [vmem:[%s1778] sm:$0x3] %v1777
    %v1780 = vadd.f32 %v1546, %v1755
    %v1781 = vsub.f32 %v1780, %v1759
    %v1782 = vand.u32 2147483647, %v1781
    %v1783 = vsub.f32 0.0, %v1782
    %v1784 = vmul.f32 %v1783, 1.442695
    %v1785 = vpow.pop %v1784
    %vm1786 = vcmp.ge.f32.partialorder %v1781, 0.0
    %v1787 = vsel %vm1786, 1.0, %v1785
    %v1788 = vsel %vm1786, %v1785, 1.0
    %v1789 = vmul.f32 %v1787, %v1752
    %v1790 = vmul.f32 %v1788, %v1761
    %v1791 = vadd.f32 %v1789, %v1790
    %v1792 = vmul.f32 %v1787, %v1754
    %v1793 = vadd.f32 %v1792, %v1788
    %v1794 = vmax.f32 %v1780, %v1759
    %s1795 = sadd.s32 %s1599, 6
    %s1796 = smul.u32 %s1795, 2
    %s1797 = scalar_lea.vmem [#allocation2], %s1796
    %v1798 = vld [vmem:[%s1797] sm:$0x3]
    %s1799 = scalar_lea.vmem [#allocation3], %s1796
    %v1800 = vld [vmem:[%s1799] sm:$0x3]
    %v1801 = vadd.f32 %v1551, %v1798
    %v1802 = vsub.f32 %v1794, %v1801
    %v1803 = vand.u32 2147483647, %v1802
    %v1804 = vsub.f32 0.0, %v1803
    %v1805 = vmul.f32 %v1804, 1.442695
    %v1806 = vpow.pop %v1805
    %vm1807 = vcmp.ge.f32.partialorder %v1802, 0.0
    %v1808 = vsel %vm1807, 1.0, %v1806
    %v1809 = vsel %vm1807, %v1806, 1.0
    %v1810 = vmul.f32 %v1808, %v1791
    %v1811 = vmul.f32 %v1809, %v1800
    %v1812 = vadd.f32 %v1810, %v1811
    %v1813 = vmul.f32 %v1808, %v1793
    %v1814 = vadd.f32 %v1813, %v1809
    %v1815 = vrcp.pop %v1814
    %v1816 = vmul.f32 %v1812, %v1815
    %s1817 = scalar_lea.vmem [#allocation4], %s1796
    %1818 = vst [vmem:[%s1817] sm:$0x3] %v1816
    %v1819 = vadd.f32 %v1546, %v1794
    %v1820 = vsub.f32 %v1819, %v1798
    %v1821 = vand.u32 2147483647, %v1820
    %v1822 = vsub.f32 0.0, %v1821
    %v1823 = vmul.f32 %v1822, 1.442695
    %v1824 = vpow.pop %v1823
    %vm1825 = vcmp.ge.f32.partialorder %v1820, 0.0
    %v1826 = vsel %vm1825, 1.0, %v1824
    %v1827 = vsel %vm1825, %v1824, 1.0
    %v1828 = vmul.f32 %v1826, %v1791
    %v1829 = vmul.f32 %v1827, %v1800
    %v1830 = vadd.f32 %v1828, %v1829
    %v1831 = vmul.f32 %v1826, %v1793
    %v1832 = vadd.f32 %v1831, %v1827
    %v1833 = vmax.f32 %v1819, %v1798
    %s1834 = sadd.s32 %s1599, 7
    %s1835 = smul.u32 %s1834, 2
    %s1836 = scalar_lea.vmem [#allocation2], %s1835
    %v1837 = vld [vmem:[%s1836] sm:$0x3]
    %s1838 = scalar_lea.vmem [#allocation3], %s1835
    %v1839 = vld [vmem:[%s1838] sm:$0x3]
    %v1840 = vadd.f32 %v1551, %v1837
    %v1841 = vsub.f32 %v1833, %v1840
    %v1842 = vand.u32 2147483647, %v1841
    %v1843 = vsub.f32 0.0, %v1842
    %v1844 = vmul.f32 %v1843, 1.442695
    %v1845 = vpow.pop %v1844
    %vm1846 = vcmp.ge.f32.partialorder %v1841, 0.0
    %v1847 = vsel %vm1846, 1.0, %v1845
    %v1848 = vsel %vm1846, %v1845, 1.0
    %v1849 = vmul.f32 %v1847, %v1830
    %v1850 = vmul.f32 %v1848, %v1839
    %v1851 = vadd.f32 %v1849, %v1850
    %v1852 = vmul.f32 %v1847, %v1832
    %v1853 = vadd.f32 %v1852, %v1848
    %v1854 = vrcp.pop %v1853
    %v1855 = vmul.f32 %v1851, %v1854
    %s1856 = scalar_lea.vmem [#allocation4], %s1835
    %1857 = vst [vmem:[%s1856] sm:$0x3] %v1855
    %v1858 = vadd.f32 %v1546, %v1833
    %v1859 = vsub.f32 %v1858, %v1837
    %v1860 = vand.u32 2147483647, %v1859
    %v1861 = vsub.f32 0.0, %v1860
    %v1862 = vmul.f32 %v1861, 1.442695
    %v1863 = vpow.pop %v1862
    %vm1864 = vcmp.ge.f32.partialorder %v1859, 0.0
    %v1865 = vsel %vm1864, 1.0, %v1863
    %v1866 = vsel %vm1864, %v1863, 1.0
    %v1867 = vmul.f32 %v1865, %v1830
    %v1868 = vmul.f32 %v1866, %v1839
    %v1869 = vadd.f32 %v1867, %v1868
    %v1870 = vmul.f32 %v1865, %v1832
    %v1871 = vadd.f32 %v1870, %v1866
    %v1872 = vmax.f32 %v1858, %v1837
  $region46: #{_lambda_.5} parent=0 // loop_footer
    %s1557 = sadd.s32 1, %s1553
  $region47: #{_lambda_.5} parent=0 // loop_footer_branch
    %1552 = sbr.rel target = $region43
  $region48: #{_lambda_.5} parent=0 // loop_exit
    _
  %v1873 = vld [vmem:[#allocation4] sm:$0xff]
  %v1874 = vld [vmem:[#allocation4 + $0x8] sm:$0xff]
  %v1875 = vld [vmem:[#allocation4 + $0x10] sm:$0xff]
  %v1876 = vld [vmem:[#allocation4 + $0x18] sm:$0xff]
  %v1877 = vld [vmem:[#allocation4 + $0x20] sm:$0xff]
  %v1878 = vld [vmem:[#allocation4 + $0x28] sm:$0xff]
  %v1879 = vld [vmem:[#allocation4 + $0x30] sm:$0xff]
  %v1880 = vld [vmem:[#allocation4 + $0x38] sm:$0xff]
  %v1881 = vld [vmem:[#allocation4 + $0x40] sm:$0xff]
  %v1882 = vld [vmem:[#allocation4 + $0x48] sm:$0xff]
  %v1883 = vld [vmem:[#allocation4 + $0x50] sm:$0xff]
  %v1884 = vld [vmem:[#allocation4 + $0x58] sm:$0xff]
  %v1885 = vld [vmem:[#allocation4 + $0x60] sm:$0xff]
  %v1886 = vld [vmem:[#allocation4 + $0x68] sm:$0xff]
  %v1887 = vld [vmem:[#allocation4 + $0x70] sm:$0xff]
  %v1888 = vld [vmem:[#allocation4 + $0x78] sm:$0xff]
  %v1889 = vmul.f32 %v1511, %v1873
  %v1890 = vmul.f32 %v1513, %v1874
  %v1891 = vmul.f32 %v1515, %v1875
  %v1892 = vmul.f32 %v1517, %v1876
  %v1893 = vmul.f32 %v1519, %v1877
  %v1894 = vmul.f32 %v1521, %v1878
  %v1895 = vmul.f32 %v1523, %v1879
  %v1896 = vmul.f32 %v1525, %v1880
  %v1897 = vmul.f32 %v1527, %v1881
  %v1898 = vmul.f32 %v1529, %v1882
  %v1899 = vmul.f32 %v1531, %v1883
  %v1900 = vmul.f32 %v1533, %v1884
  %v1901 = vmul.f32 %v1535, %v1885
  %v1902 = vmul.f32 %v1537, %v1886
  %v1903 = vmul.f32 %v1539, %v1887
  %v1904 = vmul.f32 %v1541, %v1888
  %v1905 = vpack.c.bf16 %v1890, %v1889
  %v1906 = vpack.c.bf16 %v1892, %v1891
  %v1907 = vpack.c.bf16 %v1894, %v1893
  %v1908 = vpack.c.bf16 %v1896, %v1895
  %v1909 = vpack.c.bf16 %v1898, %v1897
  %v1910 = vpack.c.bf16 %v1900, %v1899
  %v1911 = vpack.c.bf16 %v1902, %v1901
  %v1912 = vpack.c.bf16 %v1904, %v1903
  %v1913 = vld [vmem:[%s6] sm:$0xf]
  %v1914 = vld [vmem:[%s6 + $0x4] sm:$0xf]
  %v1915 = vld [vmem:[%s6 + $0x8] sm:$0xf]
  %v1916 = vld [vmem:[%s6 + $0xc] sm:$0xf]
  %v1917 = vld [vmem:[%s6 + $0x10] sm:$0xf]
  %v1918 = vld [vmem:[%s6 + $0x14] sm:$0xf]
  %v1919 = vld [vmem:[%s6 + $0x18] sm:$0xf]
  %v1920 = vld [vmem:[%s6 + $0x1c] sm:$0xf]
  %v1921 = vld [vmem:[%s6 + $0x20] sm:$0xf]
  %v1922 = vld [vmem:[%s6 + $0x24] sm:$0xf]
  %v1923 = vld [vmem:[%s6 + $0x28] sm:$0xf]
  %v1924 = vld [vmem:[%s6 + $0x2c] sm:$0xf]
  %v1925 = vld [vmem:[%s6 + $0x30] sm:$0xf]
  %v1926 = vld [vmem:[%s6 + $0x34] sm:$0xf]
  %v1927 = vld [vmem:[%s6 + $0x38] sm:$0xf]
  %v1928 = vld [vmem:[%s6 + $0x3c] sm:$0xf]
  %v1945 = vunpack.c.l.b16 %v1913
  %v1946 = vunpack.c.l.b16 %v1914
  %v1947 = vunpack.c.l.b16 %v1915
  %v1948 = vunpack.c.l.b16 %v1916
  %v1949 = vunpack.c.l.b16 %v1917
  %v1950 = vunpack.c.l.b16 %v1918
  %v1951 = vunpack.c.l.b16 %v1919
  %v1952 = vunpack.c.l.b16 %v1920
  %v1953 = vunpack.c.l.b16 %v1921
  %v1954 = vunpack.c.l.b16 %v1922
  %v1955 = vunpack.c.l.b16 %v1923
  %v1956 = vunpack.c.l.b16 %v1924
  %v1957 = vunpack.c.l.b16 %v1925
  %v1958 = vunpack.c.l.b16 %v1926
  %v1959 = vunpack.c.l.b16 %v1927
  %v1960 = vunpack.c.l.b16 %v1928
  %v1961 = vpack.c.b16 %v1946, %v1945
  %v1962 = vpack.c.b16 %v1948, %v1947
  %v1963 = vpack.c.b16 %v1950, %v1949
  %v1964 = vpack.c.b16 %v1952, %v1951
  %v1965 = vpack.c.b16 %v1954, %v1953
  %v1966 = vpack.c.b16 %v1956, %v1955
  %v1967 = vpack.c.b16 %v1958, %v1957
  %v1968 = vpack.c.b16 %v1960, %v1959
  %1977 = vmatprep.subr.bf16.mxu0 0
  %1978 = vmatpush1.bf16.msra.mxu0 %v1968
  %1979 = vmatprep.subr.bf16.mxu0 0
  %1980 = vmatpush1.bf16.msra.mxu0 %v1967
  %1981 = vmatprep.subr.bf16.mxu0 0
  %1982 = vmatpush1.bf16.msra.mxu0 %v1966
  %1983 = vmatprep.subr.bf16.mxu0 0
  %1984 = vmatpush1.bf16.msra.mxu0 %v1965
  %1985 = vmatprep.subr.bf16.mxu0 0
  %1986 = vmatpush1.bf16.msra.mxu0 %v1964
  %1987 = vmatprep.subr.bf16.mxu0 0
  %1988 = vmatpush1.bf16.msra.mxu0 %v1963
  %1989 = vmatprep.subr.bf16.mxu0 0
  %1990 = vmatpush1.bf16.msra.mxu0 %v1962
  %1991 = vmatprep.subr.bf16.mxu0 0
  %1992 = vmatpush1.bf16.msra.mxu0 %v1961
  %1993 = vmatprep.subr.bf16.mxu0 0
  %1994 = vmatpush2.bf16.msra.mxu0 0
  %1995 = vmatprep.subr.bf16.mxu0 0
  %1996 = vmatpush2.bf16.msra.mxu0 0
  %1997 = vmatprep.subr.bf16.mxu0 0
  %1998 = vmatpush2.bf16.msra.mxu0 0
  %1999 = vmatprep.subr.bf16.mxu0 0
  %2000 = vmatpush2.bf16.msra.mxu0 0
  %2001 = vmatprep.subr.bf16.mxu0 0
  %2002 = vmatpush2.bf16.msra.mxu0 0
  %2003 = vmatprep.subr.bf16.mxu0 0
  %2004 = vmatpush2.bf16.msra.mxu0 0
  %2005 = vmatprep.subr.bf16.mxu0 0
  %2006 = vmatpush2.bf16.msra.mxu0 0
  %2007 = vmatprep.subr.bf16.mxu0 0
  %2008 = vmatpush2.bf16.msra.mxu0 0
  %2009 = vmatprep.mubr.bf16.mxu0 0
  %2010 = vmatmul.mubr.bf16.gmra.mxu0 %v1905
  %v2011 = vpop.f32.mrf.mxu0
  %v2012 = vadd.f32 0.0, %v2011
  %v2013 = vpop.f32.mrf.mxu0
  %v2014 = vpop.f32.mrf.mxu0
  %v2015 = vadd.f32 0.0, %v2014
  %v2016 = vpop.f32.mrf.mxu0
  %2017 = vmatprep.mubr.bf16.mxu0 0
  %2018 = vmatmul.mubr.bf16.gmra.mxu0 %v1906
  %v2019 = vpop.f32.mrf.mxu0
  %v2020 = vadd.f32 0.0, %v2019
  %v2021 = vpop.f32.mrf.mxu0
  %v2022 = vpop.f32.mrf.mxu0
  %v2023 = vadd.f32 0.0, %v2022
  %v2024 = vpop.f32.mrf.mxu0
  %2025 = vmatprep.mubr.bf16.mxu0 0
  %2026 = vmatmul.mubr.bf16.gmra.mxu0 %v1907
  %v2027 = vpop.f32.mrf.mxu0
  %v2028 = vadd.f32 0.0, %v2027
  %v2029 = vpop.f32.mrf.mxu0
  %v2030 = vpop.f32.mrf.mxu0
  %v2031 = vadd.f32 0.0, %v2030
  %v2032 = vpop.f32.mrf.mxu0
  %2033 = vmatprep.mubr.bf16.mxu0 0
  %2034 = vmatmul.mubr.bf16.gmra.mxu0 %v1908
  %v2035 = vpop.f32.mrf.mxu0
  %v2036 = vadd.f32 0.0, %v2035
  %v2037 = vpop.f32.mrf.mxu0
  %v2038 = vpop.f32.mrf.mxu0
  %v2039 = vadd.f32 0.0, %v2038
  %v2040 = vpop.f32.mrf.mxu0
  %2041 = vmatprep.mubr.bf16.mxu0 0
  %2042 = vmatmul.mubr.bf16.gmra.mxu0 %v1909
  %v2043 = vpop.f32.mrf.mxu0
  %v2044 = vadd.f32 0.0, %v2043
  %v2045 = vpop.f32.mrf.mxu0
  %v2046 = vpop.f32.mrf.mxu0
  %v2047 = vadd.f32 0.0, %v2046
  %v2048 = vpop.f32.mrf.mxu0
  %2049 = vmatprep.mubr.bf16.mxu0 0
  %2050 = vmatmul.mubr.bf16.gmra.mxu0 %v1910
  %v2051 = vpop.f32.mrf.mxu0
  %v2052 = vadd.f32 0.0, %v2051
  %v2053 = vpop.f32.mrf.mxu0
  %v2054 = vpop.f32.mrf.mxu0
  %v2055 = vadd.f32 0.0, %v2054
  %v2056 = vpop.f32.mrf.mxu0
  %2057 = vmatprep.mubr.bf16.mxu0 0
  %2058 = vmatmul.mubr.bf16.gmra.mxu0 %v1911
  %v2059 = vpop.f32.mrf.mxu0
  %v2060 = vadd.f32 0.0, %v2059
  %v2061 = vpop.f32.mrf.mxu0
  %v2062 = vpop.f32.mrf.mxu0
  %v2063 = vadd.f32 0.0, %v2062
  %v2064 = vpop.f32.mrf.mxu0
  %2065 = vmatprep.mubr.bf16.mxu0 0
  %2066 = vmatmul.mubr.bf16.gmra.mxu0 %v1912
  %v2067 = vpop.f32.mrf.mxu0
  %v2068 = vadd.f32 0.0, %v2067
  %v2069 = vpop.f32.mrf.mxu0
  %v2070 = vpop.f32.mrf.mxu0
  %v2071 = vadd.f32 0.0, %v2070
  %v2072 = vpop.f32.mrf.mxu0
  %2073 = vdwg.mxu0
  %v2074 = vld [vmem:[%s1 + $0xb] sm:$0x1]
  %v2075 = vlaneseq
  %v2076 = vshrl.u32 %v2075, 7
  %v2077 = vsub.s32 0, %v2076
  %v2078 = vrot.slane %v2074, %v2077
  %v2079 = vmul.f32 %v2078, %v2012
  %v2080 = vmul.f32 %v2078, %v2015
  %v2081 = vmul.f32 %v2078, %v2020
  %v2082 = vmul.f32 %v2078, %v2023
  %v2083 = vmul.f32 %v2078, %v2028
  %v2084 = vmul.f32 %v2078, %v2031
  %v2085 = vmul.f32 %v2078, %v2036
  %v2086 = vmul.f32 %v2078, %v2039
  %v2087 = vmul.f32 %v2078, %v2044
  %v2088 = vmul.f32 %v2078, %v2047
  %v2089 = vmul.f32 %v2078, %v2052
  %v2090 = vmul.f32 %v2078, %v2055
  %v2091 = vmul.f32 %v2078, %v2060
  %v2092 = vmul.f32 %v2078, %v2063
  %v2093 = vmul.f32 %v2078, %v2068
  %v2094 = vmul.f32 %v2078, %v2071
  %v2095 = vadd.f32 %v271, %v2079
  %v2096 = vadd.f32 %v272, %v2080
  %v2097 = vadd.f32 %v273, %v2081
  %v2098 = vadd.f32 %v274, %v2082
  %v2099 = vadd.f32 %v275, %v2083
  %v2100 = vadd.f32 %v276, %v2084
  %v2101 = vadd.f32 %v277, %v2085
  %v2102 = vadd.f32 %v278, %v2086
  %v2103 = vadd.f32 %v279, %v2087
  %v2104 = vadd.f32 %v280, %v2088
  %v2105 = vadd.f32 %v281, %v2089
  %v2106 = vadd.f32 %v282, %v2090
  %v2107 = vadd.f32 %v283, %v2091
  %v2108 = vadd.f32 %v284, %v2092
  %v2109 = vadd.f32 %v285, %v2093
  %v2110 = vadd.f32 %v286, %v2094
  %v2111 = vld [vmem:[%s1 + $0x4] sm:$0x1]
  %v2112 = vld [vmem:[%s1 + $0x5] sm:$0x1]
  %2113 = vadd.xlane.f32.xlu0 %v2095
  %v2114 = vpop.xlane.xlu0 %2113
  %2115 = vadd.xlane.f32.xlu0 %v2096
  %v2116 = vpop.xlane.xlu0 %2115
  %2117 = vadd.xlane.f32.xlu0 %v2097
  %v2118 = vpop.xlane.xlu0 %2117
  %2119 = vadd.xlane.f32.xlu0 %v2098
  %v2120 = vpop.xlane.xlu0 %2119
  %2121 = vadd.xlane.f32.xlu0 %v2099
  %v2122 = vpop.xlane.xlu0 %2121
  %2123 = vadd.xlane.f32.xlu0 %v2100
  %v2124 = vpop.xlane.xlu0 %2123
  %2125 = vadd.xlane.f32.xlu0 %v2101
  %v2126 = vpop.xlane.xlu0 %2125
  %2127 = vadd.xlane.f32.xlu0 %v2102
  %v2128 = vpop.xlane.xlu0 %2127
  %2129 = vadd.xlane.f32.xlu0 %v2103
  %v2130 = vpop.xlane.xlu0 %2129
  %2131 = vadd.xlane.f32.xlu0 %v2104
  %v2132 = vpop.xlane.xlu0 %2131
  %2133 = vadd.xlane.f32.xlu0 %v2105
  %v2134 = vpop.xlane.xlu0 %2133
  %2135 = vadd.xlane.f32.xlu0 %v2106
  %v2136 = vpop.xlane.xlu0 %2135
  %2137 = vadd.xlane.f32.xlu0 %v2107
  %v2138 = vpop.xlane.xlu0 %2137
  %2139 = vadd.xlane.f32.xlu0 %v2108
  %v2140 = vpop.xlane.xlu0 %2139
  %2141 = vadd.xlane.f32.xlu0 %v2109
  %v2142 = vpop.xlane.xlu0 %2141
  %2143 = vadd.xlane.f32.xlu0 %v2110
  %v2144 = vpop.xlane.xlu0 %2143
  %v2145 = vmul.f32 %v2114, %v102
  %v2146 = vmul.f32 %v2116, %v102
  %v2147 = vmul.f32 %v2118, %v102
  %v2148 = vmul.f32 %v2120, %v102
  %v2149 = vmul.f32 %v2122, %v102
  %v2150 = vmul.f32 %v2124, %v102
  %v2151 = vmul.f32 %v2126, %v102
  %v2152 = vmul.f32 %v2128, %v102
  %v2153 = vmul.f32 %v2130, %v102
  %v2154 = vmul.f32 %v2132, %v102
  %v2155 = vmul.f32 %v2134, %v102
  %v2156 = vmul.f32 %v2136, %v102
  %v2157 = vmul.f32 %v2138, %v102
  %v2158 = vmul.f32 %v2140, %v102
  %v2159 = vmul.f32 %v2142, %v102
  %v2160 = vmul.f32 %v2144, %v102
  %v2161 = vsub.f32 %v2095, %v2145
  %v2162 = vsub.f32 %v2096, %v2146
  %v2163 = vsub.f32 %v2097, %v2147
  %v2164 = vsub.f32 %v2098, %v2148
  %v2165 = vsub.f32 %v2099, %v2149
  %v2166 = vsub.f32 %v2100, %v2150
  %v2167 = vsub.f32 %v2101, %v2151
  %v2168 = vsub.f32 %v2102, %v2152
  %v2169 = vsub.f32 %v2103, %v2153
  %v2170 = vsub.f32 %v2104, %v2154
  %v2171 = vsub.f32 %v2105, %v2155
  %v2172 = vsub.f32 %v2106, %v2156
  %v2173 = vsub.f32 %v2107, %v2157
  %v2174 = vsub.f32 %v2108, %v2158
  %v2175 = vsub.f32 %v2109, %v2159
  %v2176 = vsub.f32 %v2110, %v2160
  %v2177 = vmul.f32 %v2161, %v2161
  %v2178 = vmul.f32 %v2162, %v2162
  %v2179 = vmul.f32 %v2163, %v2163
  %v2180 = vmul.f32 %v2164, %v2164
  %v2181 = vmul.f32 %v2165, %v2165
  %v2182 = vmul.f32 %v2166, %v2166
  %v2183 = vmul.f32 %v2167, %v2167
  %v2184 = vmul.f32 %v2168, %v2168
  %v2185 = vmul.f32 %v2169, %v2169
  %v2186 = vmul.f32 %v2170, %v2170
  %v2187 = vmul.f32 %v2171, %v2171
  %v2188 = vmul.f32 %v2172, %v2172
  %v2189 = vmul.f32 %v2173, %v2173
  %v2190 = vmul.f32 %v2174, %v2174
  %v2191 = vmul.f32 %v2175, %v2175
  %v2192 = vmul.f32 %v2176, %v2176
  %2193 = vadd.xlane.f32.xlu0 %v2177
  %v2194 = vpop.xlane.xlu0 %2193
  %2195 = vadd.xlane.f32.xlu0 %v2178
  %v2196 = vpop.xlane.xlu0 %2195
  %2197 = vadd.xlane.f32.xlu0 %v2179
  %v2198 = vpop.xlane.xlu0 %2197
  %2199 = vadd.xlane.f32.xlu0 %v2180
  %v2200 = vpop.xlane.xlu0 %2199
  %2201 = vadd.xlane.f32.xlu0 %v2181
  %v2202 = vpop.xlane.xlu0 %2201
  %2203 = vadd.xlane.f32.xlu0 %v2182
  %v2204 = vpop.xlane.xlu0 %2203
  %2205 = vadd.xlane.f32.xlu0 %v2183
  %v2206 = vpop.xlane.xlu0 %2205
  %2207 = vadd.xlane.f32.xlu0 %v2184
  %v2208 = vpop.xlane.xlu0 %2207
  %2209 = vadd.xlane.f32.xlu0 %v2185
  %v2210 = vpop.xlane.xlu0 %2209
  %2211 = vadd.xlane.f32.xlu0 %v2186
  %v2212 = vpop.xlane.xlu0 %2211
  %2213 = vadd.xlane.f32.xlu0 %v2187
  %v2214 = vpop.xlane.xlu0 %2213
  %2215 = vadd.xlane.f32.xlu0 %v2188
  %v2216 = vpop.xlane.xlu0 %2215
  %2217 = vadd.xlane.f32.xlu0 %v2189
  %v2218 = vpop.xlane.xlu0 %2217
  %2219 = vadd.xlane.f32.xlu0 %v2190
  %v2220 = vpop.xlane.xlu0 %2219
  %2221 = vadd.xlane.f32.xlu0 %v2191
  %v2222 = vpop.xlane.xlu0 %2221
  %2223 = vadd.xlane.f32.xlu0 %v2192
  %v2224 = vpop.xlane.xlu0 %2223
  %v2225 = vmul.f32 %v2194, %v102
  %v2226 = vmul.f32 %v2196, %v102
  %v2227 = vmul.f32 %v2198, %v102
  %v2228 = vmul.f32 %v2200, %v102
  %v2229 = vmul.f32 %v2202, %v102
  %v2230 = vmul.f32 %v2204, %v102
  %v2231 = vmul.f32 %v2206, %v102
  %v2232 = vmul.f32 %v2208, %v102
  %v2233 = vmul.f32 %v2210, %v102
  %v2234 = vmul.f32 %v2212, %v102
  %v2235 = vmul.f32 %v2214, %v102
  %v2236 = vmul.f32 %v2216, %v102
  %v2237 = vmul.f32 %v2218, %v102
  %v2238 = vmul.f32 %v2220, %v102
  %v2239 = vmul.f32 %v2222, %v102
  %v2240 = vmul.f32 %v2224, %v102
  %v2241 = vadd.f32 %v2225, 1e-05
  %v2242 = vadd.f32 %v2226, 1e-05
  %v2243 = vadd.f32 %v2227, 1e-05
  %v2244 = vadd.f32 %v2228, 1e-05
  %v2245 = vadd.f32 %v2229, 1e-05
  %v2246 = vadd.f32 %v2230, 1e-05
  %v2247 = vadd.f32 %v2231, 1e-05
  %v2248 = vadd.f32 %v2232, 1e-05
  %v2249 = vadd.f32 %v2233, 1e-05
  %v2250 = vadd.f32 %v2234, 1e-05
  %v2251 = vadd.f32 %v2235, 1e-05
  %v2252 = vadd.f32 %v2236, 1e-05
  %v2253 = vadd.f32 %v2237, 1e-05
  %v2254 = vadd.f32 %v2238, 1e-05
  %v2255 = vadd.f32 %v2239, 1e-05
  %v2256 = vadd.f32 %v2240, 1e-05
  %v2257 = vrsqrt.pop %v2241
  %v2258 = vrsqrt.pop %v2242
  %v2259 = vrsqrt.pop %v2243
  %v2260 = vrsqrt.pop %v2244
  %v2261 = vrsqrt.pop %v2245
  %v2262 = vrsqrt.pop %v2246
  %v2263 = vrsqrt.pop %v2247
  %v2264 = vrsqrt.pop %v2248
  %v2265 = vrsqrt.pop %v2249
  %v2266 = vrsqrt.pop %v2250
  %v2267 = vrsqrt.pop %v2251
  %v2268 = vrsqrt.pop %v2252
  %v2269 = vrsqrt.pop %v2253
  %v2270 = vrsqrt.pop %v2254
  %v2271 = vrsqrt.pop %v2255
  %v2272 = vrsqrt.pop %v2256
  %v2273 = vmul.f32 %v2161, %v2257
  %v2274 = vmul.f32 %v2162, %v2258
  %v2275 = vmul.f32 %v2163, %v2259
  %v2276 = vmul.f32 %v2164, %v2260
  %v2277 = vmul.f32 %v2165, %v2261
  %v2278 = vmul.f32 %v2166, %v2262
  %v2279 = vmul.f32 %v2167, %v2263
  %v2280 = vmul.f32 %v2168, %v2264
  %v2281 = vmul.f32 %v2169, %v2265
  %v2282 = vmul.f32 %v2170, %v2266
  %v2283 = vmul.f32 %v2171, %v2267
  %v2284 = vmul.f32 %v2172, %v2268
  %v2285 = vmul.f32 %v2173, %v2269
  %v2286 = vmul.f32 %v2174, %v2270
  %v2287 = vmul.f32 %v2175, %v2271
  %v2288 = vmul.f32 %v2176, %v2272
  %v2289 = vlaneseq
  %v2290 = vshrl.u32 %v2289, 7
  %v2291 = vsub.s32 0, %v2290
  %v2292 = vrot.slane %v2111, %v2291
  %v2293 = vmul.f32 %v2273, %v2292
  %v2294 = vmul.f32 %v2274, %v2292
  %v2295 = vmul.f32 %v2275, %v2292
  %v2296 = vmul.f32 %v2276, %v2292
  %v2297 = vmul.f32 %v2277, %v2292
  %v2298 = vmul.f32 %v2278, %v2292
  %v2299 = vmul.f32 %v2279, %v2292
  %v2300 = vmul.f32 %v2280, %v2292
  %v2301 = vmul.f32 %v2281, %v2292
  %v2302 = vmul.f32 %v2282, %v2292
  %v2303 = vmul.f32 %v2283, %v2292
  %v2304 = vmul.f32 %v2284, %v2292
  %v2305 = vmul.f32 %v2285, %v2292
  %v2306 = vmul.f32 %v2286, %v2292
  %v2307 = vmul.f32 %v2287, %v2292
  %v2308 = vmul.f32 %v2288, %v2292
  %v2309 = vlaneseq
  %v2310 = vshrl.u32 %v2309, 7
  %v2311 = vsub.s32 0, %v2310
  %v2312 = vrot.slane %v2112, %v2311
  %v2313 = vadd.f32 %v2293, %v2312
  %v2314 = vadd.f32 %v2294, %v2312
  %v2315 = vadd.f32 %v2295, %v2312
  %v2316 = vadd.f32 %v2296, %v2312
  %v2317 = vadd.f32 %v2297, %v2312
  %v2318 = vadd.f32 %v2298, %v2312
  %v2319 = vadd.f32 %v2299, %v2312
  %v2320 = vadd.f32 %v2300, %v2312
  %v2321 = vadd.f32 %v2301, %v2312
  %v2322 = vadd.f32 %v2302, %v2312
  %v2323 = vadd.f32 %v2303, %v2312
  %v2324 = vadd.f32 %v2304, %v2312
  %v2325 = vadd.f32 %v2305, %v2312
  %v2326 = vadd.f32 %v2306, %v2312
  %v2327 = vadd.f32 %v2307, %v2312
  %v2328 = vadd.f32 %v2308, %v2312
  %v2329 = vrot.slane %v2313, 6
  %v2330 = vrot.slane %v2314, 6
  %v2331 = vrot.slane %v2315, 6
  %v2332 = vrot.slane %v2316, 6
  %v2333 = vrot.slane %v2317, 6
  %v2334 = vrot.slane %v2318, 6
  %v2335 = vrot.slane %v2319, 6
  %v2336 = vrot.slane %v2320, 6
  %v2337 = vrot.slane %v2321, 6
  %v2338 = vrot.slane %v2322, 6
  %v2339 = vrot.slane %v2323, 6
  %v2340 = vrot.slane %v2324, 6
  %v2341 = vrot.slane %v2325, 6
  %v2342 = vrot.slane %v2326, 6
  %v2343 = vrot.slane %v2327, 6
  %v2344 = vrot.slane %v2328, 6
  %v2345 = vsel %vm523, %v2343, %v2344
  %v2346 = vsel %vm523, %v2342, %v2343
  %v2347 = vsel %vm523, %v2341, %v2342
  %v2348 = vsel %vm523, %v2340, %v2341
  %v2349 = vsel %vm523, %v2339, %v2340
  %v2350 = vsel %vm523, %v2338, %v2339
  %v2351 = vsel %vm523, %v2337, %v2338
  %v2352 = vsel %vm523, %v2336, %v2337
  %v2353 = vsel %vm523, %v2335, %v2336
  %v2354 = vsel %vm523, %v2334, %v2335
  %v2355 = vsel %vm523, %v2333, %v2334
  %v2356 = vsel %vm523, %v2332, %v2333
  %v2357 = vsel %vm523, %v2331, %v2332
  %v2358 = vsel %vm523, %v2330, %v2331
  %v2359 = vsel %vm523, %v2329, %v2330
  %v2360 = vsel %vm523, %v2344, %v2329
  %v2361 = vrot.slane %v2313, 2
  %v2362 = vrot.slane %v2314, 2
  %v2363 = vrot.slane %v2315, 2
  %v2364 = vrot.slane %v2316, 2
  %v2365 = vrot.slane %v2317, 2
  %v2366 = vrot.slane %v2318, 2
  %v2367 = vrot.slane %v2319, 2
  %v2368 = vrot.slane %v2320, 2
  %v2369 = vrot.slane %v2321, 2
  %v2370 = vrot.slane %v2322, 2
  %v2371 = vrot.slane %v2323, 2
  %v2372 = vrot.slane %v2324, 2
  %v2373 = vrot.slane %v2325, 2
  %v2374 = vrot.slane %v2326, 2
  %v2375 = vrot.slane %v2327, 2
  %v2376 = vrot.slane %v2328, 2
  %v2377 = vsel %vm556, %v2375, %v2376
  %v2378 = vsel %vm556, %v2374, %v2375
  %v2379 = vsel %vm556, %v2373, %v2374
  %v2380 = vsel %vm556, %v2372, %v2373
  %v2381 = vsel %vm556, %v2371, %v2372
  %v2382 = vsel %vm556, %v2370, %v2371
  %v2383 = vsel %vm556, %v2369, %v2370
  %v2384 = vsel %vm556, %v2368, %v2369
  %v2385 = vsel %vm556, %v2367, %v2368
  %v2386 = vsel %vm556, %v2366, %v2367
  %v2387 = vsel %vm556, %v2365, %v2366
  %v2388 = vsel %vm556, %v2364, %v2365
  %v2389 = vsel %vm556, %v2363, %v2364
  %v2390 = vsel %vm556, %v2362, %v2363
  %v2391 = vsel %vm556, %v2361, %v2362
  %v2392 = vsel %vm556, %v2376, %v2361
  %v2393 = vsel %vm637, %v2313, 0.0
  %v2394 = vsel %vm638, %v2314, 0.0
  %v2395 = vsel %vm639, %v2315, 0.0
  %v2396 = vsel %vm640, %v2316, 0.0
  %v2397 = vsel %vm641, %v2317, 0.0
  %v2398 = vsel %vm642, %v2318, 0.0
  %v2399 = vsel %vm643, %v2319, 0.0
  %v2400 = vsel %vm644, %v2320, 0.0
  %v2401 = vsel %vm645, %v2321, 0.0
  %v2402 = vsel %vm646, %v2322, 0.0
  %v2403 = vsel %vm647, %v2323, 0.0
  %v2404 = vsel %vm648, %v2324, 0.0
  %v2405 = vsel %vm649, %v2325, 0.0
  %v2406 = vsel %vm650, %v2326, 0.0
  %v2407 = vsel %vm651, %v2327, 0.0
  %v2408 = vsel %vm652, %v2328, 0.0
  %v2409 = vsel %vm621, %v2315, %v2393
  %v2410 = vsel %vm622, %v2316, %v2394
  %v2411 = vsel %vm623, %v2317, %v2395
  %v2412 = vsel %vm624, %v2318, %v2396
  %v2413 = vsel %vm625, %v2319, %v2397
  %v2414 = vsel %vm626, %v2320, %v2398
  %v2415 = vsel %vm627, %v2321, %v2399
  %v2416 = vsel %vm628, %v2322, %v2400
  %v2417 = vsel %vm629, %v2323, %v2401
  %v2418 = vsel %vm630, %v2324, %v2402
  %v2419 = vsel %vm631, %v2325, %v2403
  %v2420 = vsel %vm632, %v2326, %v2404
  %v2421 = vsel %vm633, %v2327, %v2405
  %v2422 = vsel %vm634, %v2328, %v2406
  %v2423 = vsel %vm635, %v2313, %v2407
  %v2424 = vsel %vm636, %v2314, %v2408
  %v2425 = vsel %vm605, %v2327, %v2409
  %v2426 = vsel %vm606, %v2328, %v2410
  %v2427 = vsel %vm607, %v2313, %v2411
  %v2428 = vsel %vm608, %v2314, %v2412
  %v2429 = vsel %vm609, %v2315, %v2413
  %v2430 = vsel %vm610, %v2316, %v2414
  %v2431 = vsel %vm611, %v2317, %v2415
  %v2432 = vsel %vm612, %v2318, %v2416
  %v2433 = vsel %vm613, %v2319, %v2417
  %v2434 = vsel %vm614, %v2320, %v2418
  %v2435 = vsel %vm615, %v2321, %v2419
  %v2436 = vsel %vm616, %v2322, %v2420
  %v2437 = vsel %vm617, %v2323, %v2421
  %v2438 = vsel %vm618, %v2324, %v2422
  %v2439 = vsel %vm619, %v2325, %v2423
  %v2440 = vsel %vm620, %v2326, %v2424
  %v2441 = vsel %vm589, %v2391, %v2425
  %v2442 = vsel %vm590, %v2390, %v2426
  %v2443 = vsel %vm591, %v2389, %v2427
  %v2444 = vsel %vm592, %v2388, %v2428
  %v2445 = vsel %vm593, %v2387, %v2429
  %v2446 = vsel %vm594, %v2386, %v2430
  %v2447 = vsel %vm595, %v2385, %v2431
  %v2448 = vsel %vm596, %v2384, %v2432
  %v2449 = vsel %vm597, %v2383, %v2433
  %v2450 = vsel %vm598, %v2382, %v2434
  %v2451 = vsel %vm599, %v2381, %v2435
  %v2452 = vsel %vm600, %v2380, %v2436
  %v2453 = vsel %vm601, %v2379, %v2437
  %v2454 = vsel %vm602, %v2378, %v2438
  %v2455 = vsel %vm603, %v2377, %v2439
  %v2456 = vsel %vm604, %v2392, %v2440
  %v2457 = vsel %vm573, %v2360, %v2441
  %v2458 = vsel %vm574, %v2359, %v2442
  %v2459 = vsel %vm575, %v2358, %v2443
  %v2460 = vsel %vm576, %v2357, %v2444
  %v2461 = vsel %vm577, %v2356, %v2445
  %v2462 = vsel %vm578, %v2355, %v2446
  %v2463 = vsel %vm579, %v2354, %v2447
  %v2464 = vsel %vm580, %v2353, %v2448
  %v2465 = vsel %vm581, %v2352, %v2449
  %v2466 = vsel %vm582, %v2351, %v2450
  %v2467 = vsel %vm583, %v2350, %v2451
  %v2468 = vsel %vm584, %v2349, %v2452
  %v2469 = vsel %vm585, %v2348, %v2453
  %v2470 = vsel %vm586, %v2347, %v2454
  %v2471 = vsel %vm587, %v2346, %v2455
  %v2472 = vsel %vm588, %v2345, %v2456
  %v2473 = vld [vmem:[%s1 + $0x9] sm:$0x1]
  %v2474 = vld [vmem:[%s1 + $0xa] sm:$0x1]
  %v2475 = vlaneseq
  %v2476 = vshrl.u32 %v2475, 7
  %v2477 = vsub.s32 0, %v2476
  %v2478 = vrot.slane %v2473, %v2477
  %v2479 = vmul.f32 %v2313, %v2478
  %v2480 = vmul.f32 %v2314, %v2478
  %v2481 = vmul.f32 %v2315, %v2478
  %v2482 = vmul.f32 %v2316, %v2478
  %v2483 = vmul.f32 %v2317, %v2478
  %v2484 = vmul.f32 %v2318, %v2478
  %v2485 = vmul.f32 %v2319, %v2478
  %v2486 = vmul.f32 %v2320, %v2478
  %v2487 = vmul.f32 %v2321, %v2478
  %v2488 = vmul.f32 %v2322, %v2478
  %v2489 = vmul.f32 %v2323, %v2478
  %v2490 = vmul.f32 %v2324, %v2478
  %v2491 = vmul.f32 %v2325, %v2478
  %v2492 = vmul.f32 %v2326, %v2478
  %v2493 = vmul.f32 %v2327, %v2478
  %v2494 = vmul.f32 %v2328, %v2478
  %v2495 = vsub.f32 1.0, %v2473
  %v2496 = vlaneseq
  %v2497 = vshrl.u32 %v2496, 7
  %v2498 = vsub.s32 0, %v2497
  %v2499 = vrot.slane %v2495, %v2498
  %v2500 = vmul.f32 %v2457, %v2499
  %v2501 = vmul.f32 %v2458, %v2499
  %v2502 = vmul.f32 %v2459, %v2499
  %v2503 = vmul.f32 %v2460, %v2499
  %v2504 = vmul.f32 %v2461, %v2499
  %v2505 = vmul.f32 %v2462, %v2499
  %v2506 = vmul.f32 %v2463, %v2499
  %v2507 = vmul.f32 %v2464, %v2499
  %v2508 = vmul.f32 %v2465, %v2499
  %v2509 = vmul.f32 %v2466, %v2499
  %v2510 = vmul.f32 %v2467, %v2499
  %v2511 = vmul.f32 %v2468, %v2499
  %v2512 = vmul.f32 %v2469, %v2499
  %v2513 = vmul.f32 %v2470, %v2499
  %v2514 = vmul.f32 %v2471, %v2499
  %v2515 = vmul.f32 %v2472, %v2499
  %v2516 = vadd.f32 %v2479, %v2500
  %v2517 = vadd.f32 %v2480, %v2501
  %v2518 = vadd.f32 %v2481, %v2502
  %v2519 = vadd.f32 %v2482, %v2503
  %v2520 = vadd.f32 %v2483, %v2504
  %v2521 = vadd.f32 %v2484, %v2505
  %v2522 = vadd.f32 %v2485, %v2506
  %v2523 = vadd.f32 %v2486, %v2507
  %v2524 = vadd.f32 %v2487, %v2508
  %v2525 = vadd.f32 %v2488, %v2509
  %v2526 = vadd.f32 %v2489, %v2510
  %v2527 = vadd.f32 %v2490, %v2511
  %v2528 = vadd.f32 %v2491, %v2512
  %v2529 = vadd.f32 %v2492, %v2513
  %v2530 = vadd.f32 %v2493, %v2514
  %v2531 = vadd.f32 %v2494, %v2515
  %v2532 = vlaneseq
  %v2533 = vshrl.u32 %v2532, 7
  %v2534 = vsub.s32 0, %v2533
  %v2535 = vrot.slane %v2474, %v2534
  %v2536 = vmul.f32 %v2313, %v2535
  %v2537 = vmul.f32 %v2314, %v2535
  %v2538 = vmul.f32 %v2315, %v2535
  %v2539 = vmul.f32 %v2316, %v2535
  %v2540 = vmul.f32 %v2317, %v2535
  %v2541 = vmul.f32 %v2318, %v2535
  %v2542 = vmul.f32 %v2319, %v2535
  %v2543 = vmul.f32 %v2320, %v2535
  %v2544 = vmul.f32 %v2321, %v2535
  %v2545 = vmul.f32 %v2322, %v2535
  %v2546 = vmul.f32 %v2323, %v2535
  %v2547 = vmul.f32 %v2324, %v2535
  %v2548 = vmul.f32 %v2325, %v2535
  %v2549 = vmul.f32 %v2326, %v2535
  %v2550 = vmul.f32 %v2327, %v2535
  %v2551 = vmul.f32 %v2328, %v2535
  %v2552 = vsub.f32 1.0, %v2474
  %v2553 = vlaneseq
  %v2554 = vshrl.u32 %v2553, 7
  %v2555 = vsub.s32 0, %v2554
  %v2556 = vrot.slane %v2552, %v2555
  %v2557 = vmul.f32 %v2457, %v2556
  %v2558 = vmul.f32 %v2458, %v2556
  %v2559 = vmul.f32 %v2459, %v2556
  %v2560 = vmul.f32 %v2460, %v2556
  %v2561 = vmul.f32 %v2461, %v2556
  %v2562 = vmul.f32 %v2462, %v2556
  %v2563 = vmul.f32 %v2463, %v2556
  %v2564 = vmul.f32 %v2464, %v2556
  %v2565 = vmul.f32 %v2465, %v2556
  %v2566 = vmul.f32 %v2466, %v2556
  %v2567 = vmul.f32 %v2467, %v2556
  %v2568 = vmul.f32 %v2468, %v2556
  %v2569 = vmul.f32 %v2469, %v2556
  %v2570 = vmul.f32 %v2470, %v2556
  %v2571 = vmul.f32 %v2471, %v2556
  %v2572 = vmul.f32 %v2472, %v2556
  %v2573 = vadd.f32 %v2536, %v2557
  %v2574 = vadd.f32 %v2537, %v2558
  %v2575 = vadd.f32 %v2538, %v2559
  %v2576 = vadd.f32 %v2539, %v2560
  %v2577 = vadd.f32 %v2540, %v2561
  %v2578 = vadd.f32 %v2541, %v2562
  %v2579 = vadd.f32 %v2542, %v2563
  %v2580 = vadd.f32 %v2543, %v2564
  %v2581 = vadd.f32 %v2544, %v2565
  %v2582 = vadd.f32 %v2545, %v2566
  %v2583 = vadd.f32 %v2546, %v2567
  %v2584 = vadd.f32 %v2547, %v2568
  %v2585 = vadd.f32 %v2548, %v2569
  %v2586 = vadd.f32 %v2549, %v2570
  %v2587 = vadd.f32 %v2550, %v2571
  %v2588 = vadd.f32 %v2551, %v2572
  %v2589 = vpack.c.bf16 %v2517, %v2516
  %v2590 = vpack.c.bf16 %v2519, %v2518
  %v2591 = vpack.c.bf16 %v2521, %v2520
  %v2592 = vpack.c.bf16 %v2523, %v2522
  %v2593 = vpack.c.bf16 %v2525, %v2524
  %v2594 = vpack.c.bf16 %v2527, %v2526
  %v2595 = vpack.c.bf16 %v2529, %v2528
  %v2596 = vpack.c.bf16 %v2531, %v2530
  %v2597 = vld [vmem:[%s7] sm:$0xff]
  %v2598 = vld [vmem:[%s7 + $0x8] sm:$0xff]
  %v2599 = vld [vmem:[%s7 + $0x10] sm:$0xff]
  %v2600 = vld [vmem:[%s7 + $0x18] sm:$0xff]
  %v2601 = vld [vmem:[%s7 + $0x20] sm:$0xff]
  %v2602 = vld [vmem:[%s7 + $0x28] sm:$0xff]
  %v2603 = vld [vmem:[%s7 + $0x30] sm:$0xff]
  %v2604 = vld [vmem:[%s7 + $0x38] sm:$0xff]
  %v2605 = vld [vmem:[%s7 + $0x40] sm:$0xff]
  %v2606 = vld [vmem:[%s7 + $0x48] sm:$0xff]
  %v2607 = vld [vmem:[%s7 + $0x50] sm:$0xff]
  %v2608 = vld [vmem:[%s7 + $0x58] sm:$0xff]
  %v2609 = vld [vmem:[%s7 + $0x60] sm:$0xff]
  %v2610 = vld [vmem:[%s7 + $0x68] sm:$0xff]
  %v2611 = vld [vmem:[%s7 + $0x70] sm:$0xff]
  %v2612 = vld [vmem:[%s7 + $0x78] sm:$0xff]
  %v2613 = vld [vmem:[%s7 + $0x80] sm:$0xff]
  %v2614 = vld [vmem:[%s7 + $0x88] sm:$0xff]
  %v2615 = vld [vmem:[%s7 + $0x90] sm:$0xff]
  %v2616 = vld [vmem:[%s7 + $0x98] sm:$0xff]
  %v2617 = vld [vmem:[%s7 + $0xa0] sm:$0xff]
  %v2618 = vld [vmem:[%s7 + $0xa8] sm:$0xff]
  %v2619 = vld [vmem:[%s7 + $0xb0] sm:$0xff]
  %v2620 = vld [vmem:[%s7 + $0xb8] sm:$0xff]
  %v2621 = vld [vmem:[%s7 + $0xc0] sm:$0xff]
  %v2622 = vld [vmem:[%s7 + $0xc8] sm:$0xff]
  %v2623 = vld [vmem:[%s7 + $0xd0] sm:$0xff]
  %v2624 = vld [vmem:[%s7 + $0xd8] sm:$0xff]
  %v2625 = vld [vmem:[%s7 + $0xe0] sm:$0xff]
  %v2626 = vld [vmem:[%s7 + $0xe8] sm:$0xff]
  %v2627 = vld [vmem:[%s7 + $0xf0] sm:$0xff]
  %v2628 = vld [vmem:[%s7 + $0xf8] sm:$0xff]
  %v2661 = vunpack.c.l.b16 %v2597
  %v2662 = vunpack.c.h.b16 %v2597
  %v2663 = vunpack.c.l.b16 %v2598
  %v2664 = vunpack.c.h.b16 %v2598
  %v2665 = vunpack.c.l.b16 %v2599
  %v2666 = vunpack.c.h.b16 %v2599
  %v2667 = vunpack.c.l.b16 %v2600
  %v2668 = vunpack.c.h.b16 %v2600
  %v2669 = vunpack.c.l.b16 %v2601
  %v2670 = vunpack.c.h.b16 %v2601
  %v2671 = vunpack.c.l.b16 %v2602
  %v2672 = vunpack.c.h.b16 %v2602
  %v2673 = vunpack.c.l.b16 %v2603
  %v2674 = vunpack.c.h.b16 %v2603
  %v2675 = vunpack.c.l.b16 %v2604
  %v2676 = vunpack.c.h.b16 %v2604
  %v2677 = vunpack.c.l.b16 %v2605
  %v2678 = vunpack.c.h.b16 %v2605
  %v2679 = vunpack.c.l.b16 %v2606
  %v2680 = vunpack.c.h.b16 %v2606
  %v2681 = vunpack.c.l.b16 %v2607
  %v2682 = vunpack.c.h.b16 %v2607
  %v2683 = vunpack.c.l.b16 %v2608
  %v2684 = vunpack.c.h.b16 %v2608
  %v2685 = vunpack.c.l.b16 %v2609
  %v2686 = vunpack.c.h.b16 %v2609
  %v2687 = vunpack.c.l.b16 %v2610
  %v2688 = vunpack.c.h.b16 %v2610
  %v2689 = vunpack.c.l.b16 %v2611
  %v2690 = vunpack.c.h.b16 %v2611
  %v2691 = vunpack.c.l.b16 %v2612
  %v2692 = vunpack.c.h.b16 %v2612
  %v2693 = vunpack.c.l.b16 %v2613
  %v2694 = vunpack.c.h.b16 %v2613
  %v2695 = vunpack.c.l.b16 %v2614
  %v2696 = vunpack.c.h.b16 %v2614
  %v2697 = vunpack.c.l.b16 %v2615
  %v2698 = vunpack.c.h.b16 %v2615
  %v2699 = vunpack.c.l.b16 %v2616
  %v2700 = vunpack.c.h.b16 %v2616
  %v2701 = vunpack.c.l.b16 %v2617
  %v2702 = vunpack.c.h.b16 %v2617
  %v2703 = vunpack.c.l.b16 %v2618
  %v2704 = vunpack.c.h.b16 %v2618
  %v2705 = vunpack.c.l.b16 %v2619
  %v2706 = vunpack.c.h.b16 %v2619
  %v2707 = vunpack.c.l.b16 %v2620
  %v2708 = vunpack.c.h.b16 %v2620
  %v2709 = vunpack.c.l.b16 %v2621
  %v2710 = vunpack.c.h.b16 %v2621
  %v2711 = vunpack.c.l.b16 %v2622
  %v2712 = vunpack.c.h.b16 %v2622
  %v2713 = vunpack.c.l.b16 %v2623
  %v2714 = vunpack.c.h.b16 %v2623
  %v2715 = vunpack.c.l.b16 %v2624
  %v2716 = vunpack.c.h.b16 %v2624
  %v2717 = vunpack.c.l.b16 %v2625
  %v2718 = vunpack.c.h.b16 %v2625
  %v2719 = vunpack.c.l.b16 %v2626
  %v2720 = vunpack.c.h.b16 %v2626
  %v2721 = vunpack.c.l.b16 %v2627
  %v2722 = vunpack.c.h.b16 %v2627
  %v2723 = vunpack.c.l.b16 %v2628
  %v2724 = vunpack.c.h.b16 %v2628
  %v2725 = vpack.c.b16 %v2665, %v2661
  %v2726 = vpack.c.b16 %v2666, %v2662
  %v2727 = vpack.c.b16 %v2667, %v2663
  %v2728 = vpack.c.b16 %v2668, %v2664
  %v2729 = vpack.c.b16 %v2673, %v2669
  %v2730 = vpack.c.b16 %v2674, %v2670
  %v2731 = vpack.c.b16 %v2675, %v2671
  %v2732 = vpack.c.b16 %v2676, %v2672
  %v2733 = vpack.c.b16 %v2681, %v2677
  %v2734 = vpack.c.b16 %v2682, %v2678
  %v2735 = vpack.c.b16 %v2683, %v2679
  %v2736 = vpack.c.b16 %v2684, %v2680
  %v2737 = vpack.c.b16 %v2689, %v2685
  %v2738 = vpack.c.b16 %v2690, %v2686
  %v2739 = vpack.c.b16 %v2691, %v2687
  %v2740 = vpack.c.b16 %v2692, %v2688
  %v2741 = vpack.c.b16 %v2697, %v2693
  %v2742 = vpack.c.b16 %v2698, %v2694
  %v2743 = vpack.c.b16 %v2699, %v2695
  %v2744 = vpack.c.b16 %v2700, %v2696
  %v2745 = vpack.c.b16 %v2705, %v2701
  %v2746 = vpack.c.b16 %v2706, %v2702
  %v2747 = vpack.c.b16 %v2707, %v2703
  %v2748 = vpack.c.b16 %v2708, %v2704
  %v2749 = vpack.c.b16 %v2713, %v2709
  %v2750 = vpack.c.b16 %v2714, %v2710
  %v2751 = vpack.c.b16 %v2715, %v2711
  %v2752 = vpack.c.b16 %v2716, %v2712
  %v2753 = vpack.c.b16 %v2721, %v2717
  %v2754 = vpack.c.b16 %v2722, %v2718
  %v2755 = vpack.c.b16 %v2723, %v2719
  %v2756 = vpack.c.b16 %v2724, %v2720
  %2789 = vmatprep.subr.bf16.mxu0 %v2754
  %2790 = vmatpush1.bf16.msra.mxu0 %v2753
  %2791 = vmatprep.subr.bf16.mxu0 %v2750
  %2792 = vmatpush1.bf16.msra.mxu0 %v2749
  %2793 = vmatprep.subr.bf16.mxu0 %v2746
  %2794 = vmatpush1.bf16.msra.mxu0 %v2745
  %2795 = vmatprep.subr.bf16.mxu0 %v2742
  %2796 = vmatpush1.bf16.msra.mxu0 %v2741
  %2797 = vmatprep.subr.bf16.mxu0 %v2738
  %2798 = vmatpush1.bf16.msra.mxu0 %v2737
  %2799 = vmatprep.subr.bf16.mxu0 %v2734
  %2800 = vmatpush1.bf16.msra.mxu0 %v2733
  %2801 = vmatprep.subr.bf16.mxu0 %v2730
  %2802 = vmatpush1.bf16.msra.mxu0 %v2729
  %2803 = vmatprep.subr.bf16.mxu0 %v2726
  %2804 = vmatpush1.bf16.msra.mxu0 %v2725
  %2805 = vmatprep.subr.bf16.mxu0 0
  %2806 = vmatpush2.bf16.msra.mxu0 0
  %2807 = vmatprep.subr.bf16.mxu0 0
  %2808 = vmatpush2.bf16.msra.mxu0 0
  %2809 = vmatprep.subr.bf16.mxu0 0
  %2810 = vmatpush2.bf16.msra.mxu0 0
  %2811 = vmatprep.subr.bf16.mxu0 0
  %2812 = vmatpush2.bf16.msra.mxu0 0
  %2813 = vmatprep.subr.bf16.mxu0 0
  %2814 = vmatpush2.bf16.msra.mxu0 0
  %2815 = vmatprep.subr.bf16.mxu0 0
  %2816 = vmatpush2.bf16.msra.mxu0 0
  %2817 = vmatprep.subr.bf16.mxu0 0
  %2818 = vmatpush2.bf16.msra.mxu0 0
  %2819 = vmatprep.subr.bf16.mxu0 0
  %2820 = vmatpush2.bf16.msra.mxu0 0
  %2821 = vmatprep.mubr.bf16.mxu0 0
  %2822 = vmatmul.mubr.bf16.gmra.mxu0 %v2589
  %v2823 = vpop.f32.mrf.mxu0
  %v2824 = vadd.f32 0.0, %v2823
  %v2825 = vpop.f32.mrf.mxu0
  %v2826 = vadd.f32 0.0, %v2825
  %v2827 = vpop.f32.mrf.mxu0
  %v2828 = vadd.f32 0.0, %v2827
  %v2829 = vpop.f32.mrf.mxu0
  %v2830 = vadd.f32 0.0, %v2829
  %2831 = vmatprep.mubr.bf16.mxu0 0
  %2832 = vmatmul.mubr.bf16.gmra.mxu0 %v2590
  %v2833 = vpop.f32.mrf.mxu0
  %v2834 = vadd.f32 0.0, %v2833
  %v2835 = vpop.f32.mrf.mxu0
  %v2836 = vadd.f32 0.0, %v2835
  %v2837 = vpop.f32.mrf.mxu0
  %v2838 = vadd.f32 0.0, %v2837
  %v2839 = vpop.f32.mrf.mxu0
  %v2840 = vadd.f32 0.0, %v2839
  %2841 = vmatprep.mubr.bf16.mxu0 0
  %2842 = vmatmul.mubr.bf16.gmra.mxu0 %v2591
  %v2843 = vpop.f32.mrf.mxu0
  %v2844 = vadd.f32 0.0, %v2843
  %v2845 = vpop.f32.mrf.mxu0
  %v2846 = vadd.f32 0.0, %v2845
  %v2847 = vpop.f32.mrf.mxu0
  %v2848 = vadd.f32 0.0, %v2847
  %v2849 = vpop.f32.mrf.mxu0
  %v2850 = vadd.f32 0.0, %v2849
  %2851 = vmatprep.mubr.bf16.mxu0 0
  %2852 = vmatmul.mubr.bf16.gmra.mxu0 %v2592
  %v2853 = vpop.f32.mrf.mxu0
  %v2854 = vadd.f32 0.0, %v2853
  %v2855 = vpop.f32.mrf.mxu0
  %v2856 = vadd.f32 0.0, %v2855
  %v2857 = vpop.f32.mrf.mxu0
  %v2858 = vadd.f32 0.0, %v2857
  %v2859 = vpop.f32.mrf.mxu0
  %v2860 = vadd.f32 0.0, %v2859
  %2861 = vmatprep.mubr.bf16.mxu0 0
  %2862 = vmatmul.mubr.bf16.gmra.mxu0 %v2593
  %v2863 = vpop.f32.mrf.mxu0
  %v2864 = vadd.f32 0.0, %v2863
  %v2865 = vpop.f32.mrf.mxu0
  %v2866 = vadd.f32 0.0, %v2865
  %v2867 = vpop.f32.mrf.mxu0
  %v2868 = vadd.f32 0.0, %v2867
  %v2869 = vpop.f32.mrf.mxu0
  %v2870 = vadd.f32 0.0, %v2869
  %2871 = vmatprep.mubr.bf16.mxu0 0
  %2872 = vmatmul.mubr.bf16.gmra.mxu0 %v2594
  %v2873 = vpop.f32.mrf.mxu0
  %v2874 = vadd.f32 0.0, %v2873
  %v2875 = vpop.f32.mrf.mxu0
  %v2876 = vadd.f32 0.0, %v2875
  %v2877 = vpop.f32.mrf.mxu0
  %v2878 = vadd.f32 0.0, %v2877
  %v2879 = vpop.f32.mrf.mxu0
  %v2880 = vadd.f32 0.0, %v2879
  %2881 = vmatprep.mubr.bf16.mxu0 0
  %2882 = vmatmul.mubr.bf16.gmra.mxu0 %v2595
  %v2883 = vpop.f32.mrf.mxu0
  %v2884 = vadd.f32 0.0, %v2883
  %v2885 = vpop.f32.mrf.mxu0
  %v2886 = vadd.f32 0.0, %v2885
  %v2887 = vpop.f32.mrf.mxu0
  %v2888 = vadd.f32 0.0, %v2887
  %v2889 = vpop.f32.mrf.mxu0
  %v2890 = vadd.f32 0.0, %v2889
  %2891 = vmatprep.mubr.bf16.mxu0 0
  %2892 = vmatmul.mubr.bf16.gmra.mxu0 %v2596
  %v2893 = vpop.f32.mrf.mxu0
  %v2894 = vadd.f32 0.0, %v2893
  %v2895 = vpop.f32.mrf.mxu0
  %v2896 = vadd.f32 0.0, %v2895
  %v2897 = vpop.f32.mrf.mxu0
  %v2898 = vadd.f32 0.0, %v2897
  %v2899 = vpop.f32.mrf.mxu0
  %v2900 = vadd.f32 0.0, %v2899
  %2901 = vdwg.mxu0
  %2902 = vmatprep.subr.bf16.mxu0 %v2756
  %2903 = vmatpush1.bf16.msra.mxu0 %v2755
  %2904 = vmatprep.subr.bf16.mxu0 %v2752
  %2905 = vmatpush1.bf16.msra.mxu0 %v2751
  %2906 = vmatprep.subr.bf16.mxu0 %v2748
  %2907 = vmatpush1.bf16.msra.mxu0 %v2747
  %2908 = vmatprep.subr.bf16.mxu0 %v2744
  %2909 = vmatpush1.bf16.msra.mxu0 %v2743
  %2910 = vmatprep.subr.bf16.mxu0 %v2740
  %2911 = vmatpush1.bf16.msra.mxu0 %v2739
  %2912 = vmatprep.subr.bf16.mxu0 %v2736
  %2913 = vmatpush1.bf16.msra.mxu0 %v2735
  %2914 = vmatprep.subr.bf16.mxu0 %v2732
  %2915 = vmatpush1.bf16.msra.mxu0 %v2731
  %2916 = vmatprep.subr.bf16.mxu0 %v2728
  %2917 = vmatpush1.bf16.msra.mxu0 %v2727
  %2918 = vmatprep.subr.bf16.mxu0 0
  %2919 = vmatpush2.bf16.msra.mxu0 0
  %2920 = vmatprep.subr.bf16.mxu0 0
  %2921 = vmatpush2.bf16.msra.mxu0 0
  %2922 = vmatprep.subr.bf16.mxu0 0
  %2923 = vmatpush2.bf16.msra.mxu0 0
  %2924 = vmatprep.subr.bf16.mxu0 0
  %2925 = vmatpush2.bf16.msra.mxu0 0
  %2926 = vmatprep.subr.bf16.mxu0 0
  %2927 = vmatpush2.bf16.msra.mxu0 0
  %2928 = vmatprep.subr.bf16.mxu0 0
  %2929 = vmatpush2.bf16.msra.mxu0 0
  %2930 = vmatprep.subr.bf16.mxu0 0
  %2931 = vmatpush2.bf16.msra.mxu0 0
  %2932 = vmatprep.subr.bf16.mxu0 0
  %2933 = vmatpush2.bf16.msra.mxu0 0
  %2934 = vmatprep.mubr.bf16.mxu0 0
  %2935 = vmatmul.mubr.bf16.gmra.mxu0 %v2589
  %v2936 = vpop.f32.mrf.mxu0
  %v2937 = vadd.f32 0.0, %v2936
  %v2938 = vpop.f32.mrf.mxu0
  %v2939 = vadd.f32 0.0, %v2938
  %v2940 = vpop.f32.mrf.mxu0
  %v2941 = vadd.f32 0.0, %v2940
  %v2942 = vpop.f32.mrf.mxu0
  %v2943 = vadd.f32 0.0, %v2942
  %2944 = vmatprep.mubr.bf16.mxu0 0
  %2945 = vmatmul.mubr.bf16.gmra.mxu0 %v2590
  %v2946 = vpop.f32.mrf.mxu0
  %v2947 = vadd.f32 0.0, %v2946
  %v2948 = vpop.f32.mrf.mxu0
  %v2949 = vadd.f32 0.0, %v2948
  %v2950 = vpop.f32.mrf.mxu0
  %v2951 = vadd.f32 0.0, %v2950
  %v2952 = vpop.f32.mrf.mxu0
  %v2953 = vadd.f32 0.0, %v2952
  %2954 = vmatprep.mubr.bf16.mxu0 0
  %2955 = vmatmul.mubr.bf16.gmra.mxu0 %v2591
  %v2956 = vpop.f32.mrf.mxu0
  %v2957 = vadd.f32 0.0, %v2956
  %v2958 = vpop.f32.mrf.mxu0
  %v2959 = vadd.f32 0.0, %v2958
  %v2960 = vpop.f32.mrf.mxu0
  %v2961 = vadd.f32 0.0, %v2960
  %v2962 = vpop.f32.mrf.mxu0
  %v2963 = vadd.f32 0.0, %v2962
  %2964 = vmatprep.mubr.bf16.mxu0 0
  %2965 = vmatmul.mubr.bf16.gmra.mxu0 %v2592
  %v2966 = vpop.f32.mrf.mxu0
  %v2967 = vadd.f32 0.0, %v2966
  %v2968 = vpop.f32.mrf.mxu0
  %v2969 = vadd.f32 0.0, %v2968
  %v2970 = vpop.f32.mrf.mxu0
  %v2971 = vadd.f32 0.0, %v2970
  %v2972 = vpop.f32.mrf.mxu0
  %v2973 = vadd.f32 0.0, %v2972
  %2974 = vmatprep.mubr.bf16.mxu0 0
  %2975 = vmatmul.mubr.bf16.gmra.mxu0 %v2593
  %v2976 = vpop.f32.mrf.mxu0
  %v2977 = vadd.f32 0.0, %v2976
  %v2978 = vpop.f32.mrf.mxu0
  %v2979 = vadd.f32 0.0, %v2978
  %v2980 = vpop.f32.mrf.mxu0
  %v2981 = vadd.f32 0.0, %v2980
  %v2982 = vpop.f32.mrf.mxu0
  %v2983 = vadd.f32 0.0, %v2982
  %2984 = vmatprep.mubr.bf16.mxu0 0
  %2985 = vmatmul.mubr.bf16.gmra.mxu0 %v2594
  %v2986 = vpop.f32.mrf.mxu0
  %v2987 = vadd.f32 0.0, %v2986
  %v2988 = vpop.f32.mrf.mxu0
  %v2989 = vadd.f32 0.0, %v2988
  %v2990 = vpop.f32.mrf.mxu0
  %v2991 = vadd.f32 0.0, %v2990
  %v2992 = vpop.f32.mrf.mxu0
  %v2993 = vadd.f32 0.0, %v2992
  %2994 = vmatprep.mubr.bf16.mxu0 0
  %2995 = vmatmul.mubr.bf16.gmra.mxu0 %v2595
  %v2996 = vpop.f32.mrf.mxu0
  %v2997 = vadd.f32 0.0, %v2996
  %v2998 = vpop.f32.mrf.mxu0
  %v2999 = vadd.f32 0.0, %v2998
  %v3000 = vpop.f32.mrf.mxu0
  %v3001 = vadd.f32 0.0, %v3000
  %v3002 = vpop.f32.mrf.mxu0
  %v3003 = vadd.f32 0.0, %v3002
  %3004 = vmatprep.mubr.bf16.mxu0 0
  %3005 = vmatmul.mubr.bf16.gmra.mxu0 %v2596
  %v3006 = vpop.f32.mrf.mxu0
  %v3007 = vadd.f32 0.0, %v3006
  %v3008 = vpop.f32.mrf.mxu0
  %v3009 = vadd.f32 0.0, %v3008
  %v3010 = vpop.f32.mrf.mxu0
  %v3011 = vadd.f32 0.0, %v3010
  %v3012 = vpop.f32.mrf.mxu0
  %v3013 = vadd.f32 0.0, %v3012
  %3014 = vdwg.mxu0
  %v3015 = vmax.f32 %v2824, 0.0
  %v3016 = vmax.f32 %v2826, 0.0
  %v3017 = vmax.f32 %v2937, 0.0
  %v3018 = vmax.f32 %v2939, 0.0
  %v3019 = vmax.f32 %v2828, 0.0
  %v3020 = vmax.f32 %v2830, 0.0
  %v3021 = vmax.f32 %v2941, 0.0
  %v3022 = vmax.f32 %v2943, 0.0
  %v3023 = vmax.f32 %v2834, 0.0
  %v3024 = vmax.f32 %v2836, 0.0
  %v3025 = vmax.f32 %v2947, 0.0
  %v3026 = vmax.f32 %v2949, 0.0
  %v3027 = vmax.f32 %v2838, 0.0
  %v3028 = vmax.f32 %v2840, 0.0
  %v3029 = vmax.f32 %v2951, 0.0
  %v3030 = vmax.f32 %v2953, 0.0
  %v3031 = vmax.f32 %v2844, 0.0
  %v3032 = vmax.f32 %v2846, 0.0
  %v3033 = vmax.f32 %v2957, 0.0
  %v3034 = vmax.f32 %v2959, 0.0
  %v3035 = vmax.f32 %v2848, 0.0
  %v3036 = vmax.f32 %v2850, 0.0
  %v3037 = vmax.f32 %v2961, 0.0
  %v3038 = vmax.f32 %v2963, 0.0
  %v3039 = vmax.f32 %v2854, 0.0
  %v3040 = vmax.f32 %v2856, 0.0
  %v3041 = vmax.f32 %v2967, 0.0
  %v3042 = vmax.f32 %v2969, 0.0
  %v3043 = vmax.f32 %v2858, 0.0
  %v3044 = vmax.f32 %v2860, 0.0
  %v3045 = vmax.f32 %v2971, 0.0
  %v3046 = vmax.f32 %v2973, 0.0
  %v3047 = vmax.f32 %v2864, 0.0
  %v3048 = vmax.f32 %v2866, 0.0
  %v3049 = vmax.f32 %v2977, 0.0
  %v3050 = vmax.f32 %v2979, 0.0
  %v3051 = vmax.f32 %v2868, 0.0
  %v3052 = vmax.f32 %v2870, 0.0
  %v3053 = vmax.f32 %v2981, 0.0
  %v3054 = vmax.f32 %v2983, 0.0
  %v3055 = vmax.f32 %v2874, 0.0
  %v3056 = vmax.f32 %v2876, 0.0
  %v3057 = vmax.f32 %v2987, 0.0
  %v3058 = vmax.f32 %v2989, 0.0
  %v3059 = vmax.f32 %v2878, 0.0
  %v3060 = vmax.f32 %v2880, 0.0
  %v3061 = vmax.f32 %v2991, 0.0
  %v3062 = vmax.f32 %v2993, 0.0
  %v3063 = vmax.f32 %v2884, 0.0
  %v3064 = vmax.f32 %v2886, 0.0
  %v3065 = vmax.f32 %v2997, 0.0
  %v3066 = vmax.f32 %v2999, 0.0
  %v3067 = vmax.f32 %v2888, 0.0
  %v3068 = vmax.f32 %v2890, 0.0
  %v3069 = vmax.f32 %v3001, 0.0
  %v3070 = vmax.f32 %v3003, 0.0
  %v3071 = vmax.f32 %v2894, 0.0
  %v3072 = vmax.f32 %v2896, 0.0
  %v3073 = vmax.f32 %v3007, 0.0
  %v3074 = vmax.f32 %v3009, 0.0
  %v3075 = vmax.f32 %v2898, 0.0
  %v3076 = vmax.f32 %v2900, 0.0
  %v3077 = vmax.f32 %v3011, 0.0
  %v3078 = vmax.f32 %v3013, 0.0
  %v3079 = vmul.f32 %v3015, %v3015
  %v3080 = vmul.f32 %v3016, %v3016
  %v3081 = vmul.f32 %v3017, %v3017
  %v3082 = vmul.f32 %v3018, %v3018
  %v3083 = vmul.f32 %v3019, %v3019
  %v3084 = vmul.f32 %v3020, %v3020
  %v3085 = vmul.f32 %v3021, %v3021
  %v3086 = vmul.f32 %v3022, %v3022
  %v3087 = vmul.f32 %v3023, %v3023
  %v3088 = vmul.f32 %v3024, %v3024
  %v3089 = vmul.f32 %v3025, %v3025
  %v3090 = vmul.f32 %v3026, %v3026
  %v3091 = vmul.f32 %v3027, %v3027
  %v3092 = vmul.f32 %v3028, %v3028
  %v3093 = vmul.f32 %v3029, %v3029
  %v3094 = vmul.f32 %v3030, %v3030
  %v3095 = vmul.f32 %v3031, %v3031
  %v3096 = vmul.f32 %v3032, %v3032
  %v3097 = vmul.f32 %v3033, %v3033
  %v3098 = vmul.f32 %v3034, %v3034
  %v3099 = vmul.f32 %v3035, %v3035
  %v3100 = vmul.f32 %v3036, %v3036
  %v3101 = vmul.f32 %v3037, %v3037
  %v3102 = vmul.f32 %v3038, %v3038
  %v3103 = vmul.f32 %v3039, %v3039
  %v3104 = vmul.f32 %v3040, %v3040
  %v3105 = vmul.f32 %v3041, %v3041
  %v3106 = vmul.f32 %v3042, %v3042
  %v3107 = vmul.f32 %v3043, %v3043
  %v3108 = vmul.f32 %v3044, %v3044
  %v3109 = vmul.f32 %v3045, %v3045
  %v3110 = vmul.f32 %v3046, %v3046
  %v3111 = vmul.f32 %v3047, %v3047
  %v3112 = vmul.f32 %v3048, %v3048
  %v3113 = vmul.f32 %v3049, %v3049
  %v3114 = vmul.f32 %v3050, %v3050
  %v3115 = vmul.f32 %v3051, %v3051
  %v3116 = vmul.f32 %v3052, %v3052
  %v3117 = vmul.f32 %v3053, %v3053
  %v3118 = vmul.f32 %v3054, %v3054
  %v3119 = vmul.f32 %v3055, %v3055
  %v3120 = vmul.f32 %v3056, %v3056
  %v3121 = vmul.f32 %v3057, %v3057
  %v3122 = vmul.f32 %v3058, %v3058
  %v3123 = vmul.f32 %v3059, %v3059
  %v3124 = vmul.f32 %v3060, %v3060
  %v3125 = vmul.f32 %v3061, %v3061
  %v3126 = vmul.f32 %v3062, %v3062
  %v3127 = vmul.f32 %v3063, %v3063
  %v3128 = vmul.f32 %v3064, %v3064
  %v3129 = vmul.f32 %v3065, %v3065
  %v3130 = vmul.f32 %v3066, %v3066
  %v3131 = vmul.f32 %v3067, %v3067
  %v3132 = vmul.f32 %v3068, %v3068
  %v3133 = vmul.f32 %v3069, %v3069
  %v3134 = vmul.f32 %v3070, %v3070
  %v3135 = vmul.f32 %v3071, %v3071
  %v3136 = vmul.f32 %v3072, %v3072
  %v3137 = vmul.f32 %v3073, %v3073
  %v3138 = vmul.f32 %v3074, %v3074
  %v3139 = vmul.f32 %v3075, %v3075
  %v3140 = vmul.f32 %v3076, %v3076
  %v3141 = vmul.f32 %v3077, %v3077
  %v3142 = vmul.f32 %v3078, %v3078
  %v3143 = vpack.c.bf16 %v3083, %v3079
  %v3144 = vpack.c.bf16 %v3084, %v3080
  %v3145 = vpack.c.bf16 %v3085, %v3081
  %v3146 = vpack.c.bf16 %v3086, %v3082
  %v3147 = vpack.c.bf16 %v3091, %v3087
  %v3148 = vpack.c.bf16 %v3092, %v3088
  %v3149 = vpack.c.bf16 %v3093, %v3089
  %v3150 = vpack.c.bf16 %v3094, %v3090
  %v3151 = vpack.c.bf16 %v3099, %v3095
  %v3152 = vpack.c.bf16 %v3100, %v3096
  %v3153 = vpack.c.bf16 %v3101, %v3097
  %v3154 = vpack.c.bf16 %v3102, %v3098
  %v3155 = vpack.c.bf16 %v3107, %v3103
  %v3156 = vpack.c.bf16 %v3108, %v3104
  %v3157 = vpack.c.bf16 %v3109, %v3105
  %v3158 = vpack.c.bf16 %v3110, %v3106
  %v3159 = vpack.c.bf16 %v3115, %v3111
  %v3160 = vpack.c.bf16 %v3116, %v3112
  %v3161 = vpack.c.bf16 %v3117, %v3113
  %v3162 = vpack.c.bf16 %v3118, %v3114
  %v3163 = vpack.c.bf16 %v3123, %v3119
  %v3164 = vpack.c.bf16 %v3124, %v3120
  %v3165 = vpack.c.bf16 %v3125, %v3121
  %v3166 = vpack.c.bf16 %v3126, %v3122
  %v3167 = vpack.c.bf16 %v3131, %v3127
  %v3168 = vpack.c.bf16 %v3132, %v3128
  %v3169 = vpack.c.bf16 %v3133, %v3129
  %v3170 = vpack.c.bf16 %v3134, %v3130
  %v3171 = vpack.c.bf16 %v3139, %v3135
  %v3172 = vpack.c.bf16 %v3140, %v3136
  %v3173 = vpack.c.bf16 %v3141, %v3137
  %v3174 = vpack.c.bf16 %v3142, %v3138
  %v3175 = vld [vmem:[%s8] sm:$0xf]
  %v3176 = vld [vmem:[%s8 + $0x4] sm:$0xf]
  %v3177 = vld [vmem:[%s8 + $0x8] sm:$0xf]
  %v3178 = vld [vmem:[%s8 + $0xc] sm:$0xf]
  %v3179 = vld [vmem:[%s8 + $0x10] sm:$0xf]
  %v3180 = vld [vmem:[%s8 + $0x14] sm:$0xf]
  %v3181 = vld [vmem:[%s8 + $0x18] sm:$0xf]
  %v3182 = vld [vmem:[%s8 + $0x1c] sm:$0xf]
  %v3183 = vld [vmem:[%s8 + $0x20] sm:$0xf]
  %v3184 = vld [vmem:[%s8 + $0x24] sm:$0xf]
  %v3185 = vld [vmem:[%s8 + $0x28] sm:$0xf]
  %v3186 = vld [vmem:[%s8 + $0x2c] sm:$0xf]
  %v3187 = vld [vmem:[%s8 + $0x30] sm:$0xf]
  %v3188 = vld [vmem:[%s8 + $0x34] sm:$0xf]
  %v3189 = vld [vmem:[%s8 + $0x38] sm:$0xf]
  %v3190 = vld [vmem:[%s8 + $0x3c] sm:$0xf]
  %v3191 = vld [vmem:[%s8 + $0x40] sm:$0xf]
  %v3192 = vld [vmem:[%s8 + $0x44] sm:$0xf]
  %v3193 = vld [vmem:[%s8 + $0x48] sm:$0xf]
  %v3194 = vld [vmem:[%s8 + $0x4c] sm:$0xf]
  %v3195 = vld [vmem:[%s8 + $0x50] sm:$0xf]
  %v3196 = vld [vmem:[%s8 + $0x54] sm:$0xf]
  %v3197 = vld [vmem:[%s8 + $0x58] sm:$0xf]
  %v3198 = vld [vmem:[%s8 + $0x5c] sm:$0xf]
  %v3199 = vld [vmem:[%s8 + $0x60] sm:$0xf]
  %v3200 = vld [vmem:[%s8 + $0x64] sm:$0xf]
  %v3201 = vld [vmem:[%s8 + $0x68] sm:$0xf]
  %v3202 = vld [vmem:[%s8 + $0x6c] sm:$0xf]
  %v3203 = vld [vmem:[%s8 + $0x70] sm:$0xf]
  %v3204 = vld [vmem:[%s8 + $0x74] sm:$0xf]
  %v3205 = vld [vmem:[%s8 + $0x78] sm:$0xf]
  %v3206 = vld [vmem:[%s8 + $0x7c] sm:$0xf]
  %v3207 = vld [vmem:[%s8 + $0x80] sm:$0xf]
  %v3208 = vld [vmem:[%s8 + $0x84] sm:$0xf]
  %v3209 = vld [vmem:[%s8 + $0x88] sm:$0xf]
  %v3210 = vld [vmem:[%s8 + $0x8c] sm:$0xf]
  %v3211 = vld [vmem:[%s8 + $0x90] sm:$0xf]
  %v3212 = vld [vmem:[%s8 + $0x94] sm:$0xf]
  %v3213 = vld [vmem:[%s8 + $0x98] sm:$0xf]
  %v3214 = vld [vmem:[%s8 + $0x9c] sm:$0xf]
  %v3215 = vld [vmem:[%s8 + $0xa0] sm:$0xf]
  %v3216 = vld [vmem:[%s8 + $0xa4] sm:$0xf]
  %v3217 = vld [vmem:[%s8 + $0xa8] sm:$0xf]
  %v3218 = vld [vmem:[%s8 + $0xac] sm:$0xf]
  %v3219 = vld [vmem:[%s8 + $0xb0] sm:$0xf]
  %v3220 = vld [vmem:[%s8 + $0xb4] sm:$0xf]
  %v3221 = vld [vmem:[%s8 + $0xb8] sm:$0xf]
  %v3222 = vld [vmem:[%s8 + $0xbc] sm:$0xf]
  %v3223 = vld [vmem:[%s8 + $0xc0] sm:$0xf]
  %v3224 = vld [vmem:[%s8 + $0xc4] sm:$0xf]
  %v3225 = vld [vmem:[%s8 + $0xc8] sm:$0xf]
  %v3226 = vld [vmem:[%s8 + $0xcc] sm:$0xf]
  %v3227 = vld [vmem:[%s8 + $0xd0] sm:$0xf]
  %v3228 = vld [vmem:[%s8 + $0xd4] sm:$0xf]
  %v3229 = vld [vmem:[%s8 + $0xd8] sm:$0xf]
  %v3230 = vld [vmem:[%s8 + $0xdc] sm:$0xf]
  %v3231 = vld [vmem:[%s8 + $0xe0] sm:$0xf]
  %v3232 = vld [vmem:[%s8 + $0xe4] sm:$0xf]
  %v3233 = vld [vmem:[%s8 + $0xe8] sm:$0xf]
  %v3234 = vld [vmem:[%s8 + $0xec] sm:$0xf]
  %v3235 = vld [vmem:[%s8 + $0xf0] sm:$0xf]
  %v3236 = vld [vmem:[%s8 + $0xf4] sm:$0xf]
  %v3237 = vld [vmem:[%s8 + $0xf8] sm:$0xf]
  %v3238 = vld [vmem:[%s8 + $0xfc] sm:$0xf]
  %v3303 = vunpack.c.l.b16 %v3175
  %v3304 = vunpack.c.l.b16 %v3176
  %v3305 = vunpack.c.l.b16 %v3177
  %v3306 = vunpack.c.l.b16 %v3178
  %v3307 = vunpack.c.l.b16 %v3179
  %v3308 = vunpack.c.l.b16 %v3180
  %v3309 = vunpack.c.l.b16 %v3181
  %v3310 = vunpack.c.l.b16 %v3182
  %v3311 = vunpack.c.l.b16 %v3183
  %v3312 = vunpack.c.l.b16 %v3184
  %v3313 = vunpack.c.l.b16 %v3185
  %v3314 = vunpack.c.l.b16 %v3186
  %v3315 = vunpack.c.l.b16 %v3187
  %v3316 = vunpack.c.l.b16 %v3188
  %v3317 = vunpack.c.l.b16 %v3189
  %v3318 = vunpack.c.l.b16 %v3190
  %v3319 = vunpack.c.l.b16 %v3191
  %v3320 = vunpack.c.l.b16 %v3192
  %v3321 = vunpack.c.l.b16 %v3193
  %v3322 = vunpack.c.l.b16 %v3194
  %v3323 = vunpack.c.l.b16 %v3195
  %v3324 = vunpack.c.l.b16 %v3196
  %v3325 = vunpack.c.l.b16 %v3197
  %v3326 = vunpack.c.l.b16 %v3198
  %v3327 = vunpack.c.l.b16 %v3199
  %v3328 = vunpack.c.l.b16 %v3200
  %v3329 = vunpack.c.l.b16 %v3201
  %v3330 = vunpack.c.l.b16 %v3202
  %v3331 = vunpack.c.l.b16 %v3203
  %v3332 = vunpack.c.l.b16 %v3204
  %v3333 = vunpack.c.l.b16 %v3205
  %v3334 = vunpack.c.l.b16 %v3206
  %v3335 = vunpack.c.l.b16 %v3207
  %v3336 = vunpack.c.l.b16 %v3208
  %v3337 = vunpack.c.l.b16 %v3209
  %v3338 = vunpack.c.l.b16 %v3210
  %v3339 = vunpack.c.l.b16 %v3211
  %v3340 = vunpack.c.l.b16 %v3212
  %v3341 = vunpack.c.l.b16 %v3213
  %v3342 = vunpack.c.l.b16 %v3214
  %v3343 = vunpack.c.l.b16 %v3215
  %v3344 = vunpack.c.l.b16 %v3216
  %v3345 = vunpack.c.l.b16 %v3217
  %v3346 = vunpack.c.l.b16 %v3218
  %v3347 = vunpack.c.l.b16 %v3219
  %v3348 = vunpack.c.l.b16 %v3220
  %v3349 = vunpack.c.l.b16 %v3221
  %v3350 = vunpack.c.l.b16 %v3222
  %v3351 = vunpack.c.l.b16 %v3223
  %v3352 = vunpack.c.l.b16 %v3224
  %v3353 = vunpack.c.l.b16 %v3225
  %v3354 = vunpack.c.l.b16 %v3226
  %v3355 = vunpack.c.l.b16 %v3227
  %v3356 = vunpack.c.l.b16 %v3228
  %v3357 = vunpack.c.l.b16 %v3229
  %v3358 = vunpack.c.l.b16 %v3230
  %v3359 = vunpack.c.l.b16 %v3231
  %v3360 = vunpack.c.l.b16 %v3232
  %v3361 = vunpack.c.l.b16 %v3233
  %v3362 = vunpack.c.l.b16 %v3234
  %v3363 = vunpack.c.l.b16 %v3235
  %v3364 = vunpack.c.l.b16 %v3236
  %v3365 = vunpack.c.l.b16 %v3237
  %v3366 = vunpack.c.l.b16 %v3238
  %v3367 = vpack.c.b16 %v3304, %v3303
  %v3368 = vpack.c.b16 %v3306, %v3305
  %v3369 = vpack.c.b16 %v3308, %v3307
  %v3370 = vpack.c.b16 %v3310, %v3309
  %v3371 = vpack.c.b16 %v3312, %v3311
  %v3372 = vpack.c.b16 %v3314, %v3313
  %v3373 = vpack.c.b16 %v3316, %v3315
  %v3374 = vpack.c.b16 %v3318, %v3317
  %v3375 = vpack.c.b16 %v3320, %v3319
  %v3376 = vpack.c.b16 %v3322, %v3321
  %v3377 = vpack.c.b16 %v3324, %v3323
  %v3378 = vpack.c.b16 %v3326, %v3325
  %v3379 = vpack.c.b16 %v3328, %v3327
  %v3380 = vpack.c.b16 %v3330, %v3329
  %v3381 = vpack.c.b16 %v3332, %v3331
  %v3382 = vpack.c.b16 %v3334, %v3333
  %v3383 = vpack.c.b16 %v3336, %v3335
  %v3384 = vpack.c.b16 %v3338, %v3337
  %v3385 = vpack.c.b16 %v3340, %v3339
  %v3386 = vpack.c.b16 %v3342, %v3341
  %v3387 = vpack.c.b16 %v3344, %v3343
  %v3388 = vpack.c.b16 %v3346, %v3345
  %v3389 = vpack.c.b16 %v3348, %v3347
  %v3390 = vpack.c.b16 %v3350, %v3349
  %v3391 = vpack.c.b16 %v3352, %v3351
  %v3392 = vpack.c.b16 %v3354, %v3353
  %v3393 = vpack.c.b16 %v3356, %v3355
  %v3394 = vpack.c.b16 %v3358, %v3357
  %v3395 = vpack.c.b16 %v3360, %v3359
  %v3396 = vpack.c.b16 %v3362, %v3361
  %v3397 = vpack.c.b16 %v3364, %v3363
  %v3398 = vpack.c.b16 %v3366, %v3365
  %3431 = vmatprep.subr.bf16.mxu0 0
  %3432 = vmatpush1.bf16.msra.mxu0 %v3374
  %3433 = vmatprep.subr.bf16.mxu0 0
  %3434 = vmatpush1.bf16.msra.mxu0 %v3373
  %3435 = vmatprep.subr.bf16.mxu0 0
  %3436 = vmatpush1.bf16.msra.mxu0 %v3372
  %3437 = vmatprep.subr.bf16.mxu0 0
  %3438 = vmatpush1.bf16.msra.mxu0 %v3371
  %3439 = vmatprep.subr.bf16.mxu0 0
  %3440 = vmatpush1.bf16.msra.mxu0 %v3370
  %3441 = vmatprep.subr.bf16.mxu0 0
  %3442 = vmatpush1.bf16.msra.mxu0 %v3369
  %3443 = vmatprep.subr.bf16.mxu0 0
  %3444 = vmatpush1.bf16.msra.mxu0 %v3368
  %3445 = vmatprep.subr.bf16.mxu0 0
  %3446 = vmatpush1.bf16.msra.mxu0 %v3367
  %3447 = vmatprep.subr.bf16.mxu0 0
  %3448 = vmatpush2.bf16.msra.mxu0 %v3382
  %3449 = vmatprep.subr.bf16.mxu0 0
  %3450 = vmatpush2.bf16.msra.mxu0 %v3381
  %3451 = vmatprep.subr.bf16.mxu0 0
  %3452 = vmatpush2.bf16.msra.mxu0 %v3380
  %3453 = vmatprep.subr.bf16.mxu0 0
  %3454 = vmatpush2.bf16.msra.mxu0 %v3379
  %3455 = vmatprep.subr.bf16.mxu0 0
  %3456 = vmatpush2.bf16.msra.mxu0 %v3378
  %3457 = vmatprep.subr.bf16.mxu0 0
  %3458 = vmatpush2.bf16.msra.mxu0 %v3377
  %3459 = vmatprep.subr.bf16.mxu0 0
  %3460 = vmatpush2.bf16.msra.mxu0 %v3376
  %3461 = vmatprep.subr.bf16.mxu0 0
  %3462 = vmatpush2.bf16.msra.mxu0 %v3375
  %3463 = vmatprep.mubr.bf16.mxu0 %v3144
  %3464 = vmatmul.mubr.bf16.gmra.mxu0 %v3143
  %v3465 = vpop.f32.mrf.mxu0
  %v3466 = vadd.f32 0.0, %v3465
  %v3467 = vpop.f32.mrf.mxu0
  %v3468 = vpop.f32.mrf.mxu0
  %v3469 = vadd.f32 0.0, %v3468
  %v3470 = vpop.f32.mrf.mxu0
  %3471 = vmatprep.mubr.bf16.mxu0 %v3148
  %3472 = vmatmul.mubr.bf16.gmra.mxu0 %v3147
  %v3473 = vpop.f32.mrf.mxu0
  %v3474 = vadd.f32 0.0, %v3473
  %v3475 = vpop.f32.mrf.mxu0
  %v3476 = vpop.f32.mrf.mxu0
  %v3477 = vadd.f32 0.0, %v3476
  %v3478 = vpop.f32.mrf.mxu0
  %3479 = vmatprep.mubr.bf16.mxu0 %v3152
  %3480 = vmatmul.mubr.bf16.gmra.mxu0 %v3151
  %v3481 = vpop.f32.mrf.mxu0
  %v3482 = vadd.f32 0.0, %v3481
  %v3483 = vpop.f32.mrf.mxu0
  %v3484 = vpop.f32.mrf.mxu0
  %v3485 = vadd.f32 0.0, %v3484
  %v3486 = vpop.f32.mrf.mxu0
  %3487 = vmatprep.mubr.bf16.mxu0 %v3156
  %3488 = vmatmul.mubr.bf16.gmra.mxu0 %v3155
  %v3489 = vpop.f32.mrf.mxu0
  %v3490 = vadd.f32 0.0, %v3489
  %v3491 = vpop.f32.mrf.mxu0
  %v3492 = vpop.f32.mrf.mxu0
  %v3493 = vadd.f32 0.0, %v3492
  %v3494 = vpop.f32.mrf.mxu0
  %3495 = vmatprep.mubr.bf16.mxu0 %v3160
  %3496 = vmatmul.mubr.bf16.gmra.mxu0 %v3159
  %v3497 = vpop.f32.mrf.mxu0
  %v3498 = vadd.f32 0.0, %v3497
  %v3499 = vpop.f32.mrf.mxu0
  %v3500 = vpop.f32.mrf.mxu0
  %v3501 = vadd.f32 0.0, %v3500
  %v3502 = vpop.f32.mrf.mxu0
  %3503 = vmatprep.mubr.bf16.mxu0 %v3164
  %3504 = vmatmul.mubr.bf16.gmra.mxu0 %v3163
  %v3505 = vpop.f32.mrf.mxu0
  %v3506 = vadd.f32 0.0, %v3505
  %v3507 = vpop.f32.mrf.mxu0
  %v3508 = vpop.f32.mrf.mxu0
  %v3509 = vadd.f32 0.0, %v3508
  %v3510 = vpop.f32.mrf.mxu0
  %3511 = vmatprep.mubr.bf16.mxu0 %v3168
  %3512 = vmatmul.mubr.bf16.gmra.mxu0 %v3167
  %v3513 = vpop.f32.mrf.mxu0
  %v3514 = vadd.f32 0.0, %v3513
  %v3515 = vpop.f32.mrf.mxu0
  %v3516 = vpop.f32.mrf.mxu0
  %v3517 = vadd.f32 0.0, %v3516
  %v3518 = vpop.f32.mrf.mxu0
  %3519 = vmatprep.mubr.bf16.mxu0 %v3172
  %3520 = vmatmul.mubr.bf16.gmra.mxu0 %v3171
  %v3521 = vpop.f32.mrf.mxu0
  %v3522 = vadd.f32 0.0, %v3521
  %v3523 = vpop.f32.mrf.mxu0
  %v3524 = vpop.f32.mrf.mxu0
  %v3525 = vadd.f32 0.0, %v3524
  %v3526 = vpop.f32.mrf.mxu0
  %3527 = vdwg.mxu0
  %3528 = vmatprep.subr.bf16.mxu0 0
  %3529 = vmatpush1.bf16.msra.mxu0 %v3390
  %3530 = vmatprep.subr.bf16.mxu0 0
  %3531 = vmatpush1.bf16.msra.mxu0 %v3389
  %3532 = vmatprep.subr.bf16.mxu0 0
  %3533 = vmatpush1.bf16.msra.mxu0 %v3388
  %3534 = vmatprep.subr.bf16.mxu0 0
  %3535 = vmatpush1.bf16.msra.mxu0 %v3387
  %3536 = vmatprep.subr.bf16.mxu0 0
  %3537 = vmatpush1.bf16.msra.mxu0 %v3386
  %3538 = vmatprep.subr.bf16.mxu0 0
  %3539 = vmatpush1.bf16.msra.mxu0 %v3385
  %3540 = vmatprep.subr.bf16.mxu0 0
  %3541 = vmatpush1.bf16.msra.mxu0 %v3384
  %3542 = vmatprep.subr.bf16.mxu0 0
  %3543 = vmatpush1.bf16.msra.mxu0 %v3383
  %3544 = vmatprep.subr.bf16.mxu0 0
  %3545 = vmatpush2.bf16.msra.mxu0 %v3398
  %3546 = vmatprep.subr.bf16.mxu0 0
  %3547 = vmatpush2.bf16.msra.mxu0 %v3397
  %3548 = vmatprep.subr.bf16.mxu0 0
  %3549 = vmatpush2.bf16.msra.mxu0 %v3396
  %3550 = vmatprep.subr.bf16.mxu0 0
  %3551 = vmatpush2.bf16.msra.mxu0 %v3395
  %3552 = vmatprep.subr.bf16.mxu0 0
  %3553 = vmatpush2.bf16.msra.mxu0 %v3394
  %3554 = vmatprep.subr.bf16.mxu0 0
  %3555 = vmatpush2.bf16.msra.mxu0 %v3393
  %3556 = vmatprep.subr.bf16.mxu0 0
  %3557 = vmatpush2.bf16.msra.mxu0 %v3392
  %3558 = vmatprep.subr.bf16.mxu0 0
  %3559 = vmatpush2.bf16.msra.mxu0 %v3391
  %3560 = vmatprep.mubr.bf16.mxu0 %v3146
  %3561 = vmatmul.mubr.bf16.gmra.mxu0 %v3145
  %v3562 = vpop.f32.mrf.mxu0
  %v3563 = vadd.f32 %v3466, %v3562
  %v3564 = vpop.f32.mrf.mxu0
  %v3565 = vpop.f32.mrf.mxu0
  %v3566 = vadd.f32 %v3469, %v3565
  %v3567 = vpop.f32.mrf.mxu0
  %3568 = vmatprep.mubr.bf16.mxu0 %v3150
  %3569 = vmatmul.mubr.bf16.gmra.mxu0 %v3149
  %v3570 = vpop.f32.mrf.mxu0
  %v3571 = vadd.f32 %v3474, %v3570
  %v3572 = vpop.f32.mrf.mxu0
  %v3573 = vpop.f32.mrf.mxu0
  %v3574 = vadd.f32 %v3477, %v3573
  %v3575 = vpop.f32.mrf.mxu0
  %3576 = vmatprep.mubr.bf16.mxu0 %v3154
  %3577 = vmatmul.mubr.bf16.gmra.mxu0 %v3153
  %v3578 = vpop.f32.mrf.mxu0
  %v3579 = vadd.f32 %v3482, %v3578
  %v3580 = vpop.f32.mrf.mxu0
  %v3581 = vpop.f32.mrf.mxu0
  %v3582 = vadd.f32 %v3485, %v3581
  %v3583 = vpop.f32.mrf.mxu0
  %3584 = vmatprep.mubr.bf16.mxu0 %v3158
  %3585 = vmatmul.mubr.bf16.gmra.mxu0 %v3157
  %v3586 = vpop.f32.mrf.mxu0
  %v3587 = vadd.f32 %v3490, %v3586
  %v3588 = vpop.f32.mrf.mxu0
  %v3589 = vpop.f32.mrf.mxu0
  %v3590 = vadd.f32 %v3493, %v3589
  %v3591 = vpop.f32.mrf.mxu0
  %3592 = vmatprep.mubr.bf16.mxu0 %v3162
  %3593 = vmatmul.mubr.bf16.gmra.mxu0 %v3161
  %v3594 = vpop.f32.mrf.mxu0
  %v3595 = vadd.f32 %v3498, %v3594
  %v3596 = vpop.f32.mrf.mxu0
  %v3597 = vpop.f32.mrf.mxu0
  %v3598 = vadd.f32 %v3501, %v3597
  %v3599 = vpop.f32.mrf.mxu0
  %3600 = vmatprep.mubr.bf16.mxu0 %v3166
  %3601 = vmatmul.mubr.bf16.gmra.mxu0 %v3165
  %v3602 = vpop.f32.mrf.mxu0
  %v3603 = vadd.f32 %v3506, %v3602
  %v3604 = vpop.f32.mrf.mxu0
  %v3605 = vpop.f32.mrf.mxu0
  %v3606 = vadd.f32 %v3509, %v3605
  %v3607 = vpop.f32.mrf.mxu0
  %3608 = vmatprep.mubr.bf16.mxu0 %v3170
  %3609 = vmatmul.mubr.bf16.gmra.mxu0 %v3169
  %v3610 = vpop.f32.mrf.mxu0
  %v3611 = vadd.f32 %v3514, %v3610
  %v3612 = vpop.f32.mrf.mxu0
  %v3613 = vpop.f32.mrf.mxu0
  %v3614 = vadd.f32 %v3517, %v3613
  %v3615 = vpop.f32.mrf.mxu0
  %3616 = vmatprep.mubr.bf16.mxu0 %v3174
  %3617 = vmatmul.mubr.bf16.gmra.mxu0 %v3173
  %v3618 = vpop.f32.mrf.mxu0
  %v3619 = vadd.f32 %v3522, %v3618
  %v3620 = vpop.f32.mrf.mxu0
  %v3621 = vpop.f32.mrf.mxu0
  %v3622 = vadd.f32 %v3525, %v3621
  %v3623 = vpop.f32.mrf.mxu0
  %3624 = vdwg.mxu0
  %v3625 = vpack.c.bf16 %v2574, %v2573
  %v3626 = vpack.c.bf16 %v2576, %v2575
  %v3627 = vpack.c.bf16 %v2578, %v2577
  %v3628 = vpack.c.bf16 %v2580, %v2579
  %v3629 = vpack.c.bf16 %v2582, %v2581
  %v3630 = vpack.c.bf16 %v2584, %v2583
  %v3631 = vpack.c.bf16 %v2586, %v2585
  %v3632 = vpack.c.bf16 %v2588, %v2587
  %v3633 = vld [vmem:[%s9] sm:$0xf]
  %v3634 = vld [vmem:[%s9 + $0x4] sm:$0xf]
  %v3635 = vld [vmem:[%s9 + $0x8] sm:$0xf]
  %v3636 = vld [vmem:[%s9 + $0xc] sm:$0xf]
  %v3637 = vld [vmem:[%s9 + $0x10] sm:$0xf]
  %v3638 = vld [vmem:[%s9 + $0x14] sm:$0xf]
  %v3639 = vld [vmem:[%s9 + $0x18] sm:$0xf]
  %v3640 = vld [vmem:[%s9 + $0x1c] sm:$0xf]
  %v3641 = vld [vmem:[%s9 + $0x20] sm:$0xf]
  %v3642 = vld [vmem:[%s9 + $0x24] sm:$0xf]
  %v3643 = vld [vmem:[%s9 + $0x28] sm:$0xf]
  %v3644 = vld [vmem:[%s9 + $0x2c] sm:$0xf]
  %v3645 = vld [vmem:[%s9 + $0x30] sm:$0xf]
  %v3646 = vld [vmem:[%s9 + $0x34] sm:$0xf]
  %v3647 = vld [vmem:[%s9 + $0x38] sm:$0xf]
  %v3648 = vld [vmem:[%s9 + $0x3c] sm:$0xf]
  %v3665 = vunpack.c.l.b16 %v3633
  %v3666 = vunpack.c.l.b16 %v3634
  %v3667 = vunpack.c.l.b16 %v3635
  %v3668 = vunpack.c.l.b16 %v3636
  %v3669 = vunpack.c.l.b16 %v3637
  %v3670 = vunpack.c.l.b16 %v3638
  %v3671 = vunpack.c.l.b16 %v3639
  %v3672 = vunpack.c.l.b16 %v3640
  %v3673 = vunpack.c.l.b16 %v3641
  %v3674 = vunpack.c.l.b16 %v3642
  %v3675 = vunpack.c.l.b16 %v3643
  %v3676 = vunpack.c.l.b16 %v3644
  %v3677 = vunpack.c.l.b16 %v3645
  %v3678 = vunpack.c.l.b16 %v3646
  %v3679 = vunpack.c.l.b16 %v3647
  %v3680 = vunpack.c.l.b16 %v3648
  %v3681 = vpack.c.b16 %v3666, %v3665
  %v3682 = vpack.c.b16 %v3668, %v3667
  %v3683 = vpack.c.b16 %v3670, %v3669
  %v3684 = vpack.c.b16 %v3672, %v3671
  %v3685 = vpack.c.b16 %v3674, %v3673
  %v3686 = vpack.c.b16 %v3676, %v3675
  %v3687 = vpack.c.b16 %v3678, %v3677
  %v3688 = vpack.c.b16 %v3680, %v3679
  %3697 = vmatprep.subr.bf16.mxu0 0
  %3698 = vmatpush1.bf16.msra.mxu0 %v3688
  %3699 = vmatprep.subr.bf16.mxu0 0
  %3700 = vmatpush1.bf16.msra.mxu0 %v3687
  %3701 = vmatprep.subr.bf16.mxu0 0
  %3702 = vmatpush1.bf16.msra.mxu0 %v3686
  %3703 = vmatprep.subr.bf16.mxu0 0
  %3704 = vmatpush1.bf16.msra.mxu0 %v3685
  %3705 = vmatprep.subr.bf16.mxu0 0
  %3706 = vmatpush1.bf16.msra.mxu0 %v3684
  %3707 = vmatprep.subr.bf16.mxu0 0
  %3708 = vmatpush1.bf16.msra.mxu0 %v3683
  %3709 = vmatprep.subr.bf16.mxu0 0
  %3710 = vmatpush1.bf16.msra.mxu0 %v3682
  %3711 = vmatprep.subr.bf16.mxu0 0
  %3712 = vmatpush1.bf16.msra.mxu0 %v3681
  %3713 = vmatprep.subr.bf16.mxu0 0
  %3714 = vmatpush2.bf16.msra.mxu0 0
  %3715 = vmatprep.subr.bf16.mxu0 0
  %3716 = vmatpush2.bf16.msra.mxu0 0
  %3717 = vmatprep.subr.bf16.mxu0 0
  %3718 = vmatpush2.bf16.msra.mxu0 0
  %3719 = vmatprep.subr.bf16.mxu0 0
  %3720 = vmatpush2.bf16.msra.mxu0 0
  %3721 = vmatprep.subr.bf16.mxu0 0
  %3722 = vmatpush2.bf16.msra.mxu0 0
  %3723 = vmatprep.subr.bf16.mxu0 0
  %3724 = vmatpush2.bf16.msra.mxu0 0
  %3725 = vmatprep.subr.bf16.mxu0 0
  %3726 = vmatpush2.bf16.msra.mxu0 0
  %3727 = vmatprep.subr.bf16.mxu0 0
  %3728 = vmatpush2.bf16.msra.mxu0 0
  %3729 = vmatprep.mubr.bf16.mxu0 0
  %3730 = vmatmul.mubr.bf16.gmra.mxu0 %v3625
  %v3731 = vpop.f32.mrf.mxu0
  %v3732 = vadd.f32 0.0, %v3731
  %v3733 = vpop.f32.mrf.mxu0
  %v3734 = vpop.f32.mrf.mxu0
  %v3735 = vadd.f32 0.0, %v3734
  %v3736 = vpop.f32.mrf.mxu0
  %3737 = vmatprep.mubr.bf16.mxu0 0
  %3738 = vmatmul.mubr.bf16.gmra.mxu0 %v3626
  %v3739 = vpop.f32.mrf.mxu0
  %v3740 = vadd.f32 0.0, %v3739
  %v3741 = vpop.f32.mrf.mxu0
  %v3742 = vpop.f32.mrf.mxu0
  %v3743 = vadd.f32 0.0, %v3742
  %v3744 = vpop.f32.mrf.mxu0
  %3745 = vmatprep.mubr.bf16.mxu0 0
  %3746 = vmatmul.mubr.bf16.gmra.mxu0 %v3627
  %v3747 = vpop.f32.mrf.mxu0
  %v3748 = vadd.f32 0.0, %v3747
  %v3749 = vpop.f32.mrf.mxu0
  %v3750 = vpop.f32.mrf.mxu0
  %v3751 = vadd.f32 0.0, %v3750
  %v3752 = vpop.f32.mrf.mxu0
  %3753 = vmatprep.mubr.bf16.mxu0 0
  %3754 = vmatmul.mubr.bf16.gmra.mxu0 %v3628
  %v3755 = vpop.f32.mrf.mxu0
  %v3756 = vadd.f32 0.0, %v3755
  %v3757 = vpop.f32.mrf.mxu0
  %v3758 = vpop.f32.mrf.mxu0
  %v3759 = vadd.f32 0.0, %v3758
  %v3760 = vpop.f32.mrf.mxu0
  %3761 = vmatprep.mubr.bf16.mxu0 0
  %3762 = vmatmul.mubr.bf16.gmra.mxu0 %v3629
  %v3763 = vpop.f32.mrf.mxu0
  %v3764 = vadd.f32 0.0, %v3763
  %v3765 = vpop.f32.mrf.mxu0
  %v3766 = vpop.f32.mrf.mxu0
  %v3767 = vadd.f32 0.0, %v3766
  %v3768 = vpop.f32.mrf.mxu0
  %3769 = vmatprep.mubr.bf16.mxu0 0
  %3770 = vmatmul.mubr.bf16.gmra.mxu0 %v3630
  %v3771 = vpop.f32.mrf.mxu0
  %v3772 = vadd.f32 0.0, %v3771
  %v3773 = vpop.f32.mrf.mxu0
  %v3774 = vpop.f32.mrf.mxu0
  %v3775 = vadd.f32 0.0, %v3774
  %v3776 = vpop.f32.mrf.mxu0
  %3777 = vmatprep.mubr.bf16.mxu0 0
  %3778 = vmatmul.mubr.bf16.gmra.mxu0 %v3631
  %v3779 = vpop.f32.mrf.mxu0
  %v3780 = vadd.f32 0.0, %v3779
  %v3781 = vpop.f32.mrf.mxu0
  %v3782 = vpop.f32.mrf.mxu0
  %v3783 = vadd.f32 0.0, %v3782
  %v3784 = vpop.f32.mrf.mxu0
  %3785 = vmatprep.mubr.bf16.mxu0 0
  %3786 = vmatmul.mubr.bf16.gmra.mxu0 %v3632
  %v3787 = vpop.f32.mrf.mxu0
  %v3788 = vadd.f32 0.0, %v3787
  %v3789 = vpop.f32.mrf.mxu0
  %v3790 = vpop.f32.mrf.mxu0
  %v3791 = vadd.f32 0.0, %v3790
  %v3792 = vpop.f32.mrf.mxu0
  %3793 = vdwg.mxu0
  %v3794 = vxor.u32 %v3732, 2147483648
  %v3795 = vxor.u32 %v3735, 2147483648
  %v3796 = vxor.u32 %v3740, 2147483648
  %v3797 = vxor.u32 %v3743, 2147483648
  %v3798 = vxor.u32 %v3748, 2147483648
  %v3799 = vxor.u32 %v3751, 2147483648
  %v3800 = vxor.u32 %v3756, 2147483648
  %v3801 = vxor.u32 %v3759, 2147483648
  %v3802 = vxor.u32 %v3764, 2147483648
  %v3803 = vxor.u32 %v3767, 2147483648
  %v3804 = vxor.u32 %v3772, 2147483648
  %v3805 = vxor.u32 %v3775, 2147483648
  %v3806 = vxor.u32 %v3780, 2147483648
  %v3807 = vxor.u32 %v3783, 2147483648
  %v3808 = vxor.u32 %v3788, 2147483648
  %v3809 = vxor.u32 %v3791, 2147483648
  %v3810 = vmul.f32 %v3794, 1.442695
  %v3811 = vpow.pop %v3810
  %v3812 = vmul.f32 %v3795, 1.442695
  %v3813 = vpow.pop %v3812
  %v3814 = vmul.f32 %v3796, 1.442695
  %v3815 = vpow.pop %v3814
  %v3816 = vmul.f32 %v3797, 1.442695
  %v3817 = vpow.pop %v3816
  %v3818 = vmul.f32 %v3798, 1.442695
  %v3819 = vpow.pop %v3818
  %v3820 = vmul.f32 %v3799, 1.442695
  %v3821 = vpow.pop %v3820
  %v3822 = vmul.f32 %v3800, 1.442695
  %v3823 = vpow.pop %v3822
  %v3824 = vmul.f32 %v3801, 1.442695
  %v3825 = vpow.pop %v3824
  %v3826 = vmul.f32 %v3802, 1.442695
  %v3827 = vpow.pop %v3826
  %v3828 = vmul.f32 %v3803, 1.442695
  %v3829 = vpow.pop %v3828
  %v3830 = vmul.f32 %v3804, 1.442695
  %v3831 = vpow.pop %v3830
  %v3832 = vmul.f32 %v3805, 1.442695
  %v3833 = vpow.pop %v3832
  %v3834 = vmul.f32 %v3806, 1.442695
  %v3835 = vpow.pop %v3834
  %v3836 = vmul.f32 %v3807, 1.442695
  %v3837 = vpow.pop %v3836
  %v3838 = vmul.f32 %v3808, 1.442695
  %v3839 = vpow.pop %v3838
  %v3840 = vmul.f32 %v3809, 1.442695
  %v3841 = vpow.pop %v3840
  %v3842 = vadd.f32 %v3811, 1.0
  %v3843 = vadd.f32 %v3813, 1.0
  %v3844 = vadd.f32 %v3815, 1.0
  %v3845 = vadd.f32 %v3817, 1.0
  %v3846 = vadd.f32 %v3819, 1.0
  %v3847 = vadd.f32 %v3821, 1.0
  %v3848 = vadd.f32 %v3823, 1.0
  %v3849 = vadd.f32 %v3825, 1.0
  %v3850 = vadd.f32 %v3827, 1.0
  %v3851 = vadd.f32 %v3829, 1.0
  %v3852 = vadd.f32 %v3831, 1.0
  %v3853 = vadd.f32 %v3833, 1.0
  %v3854 = vadd.f32 %v3835, 1.0
  %v3855 = vadd.f32 %v3837, 1.0
  %v3856 = vadd.f32 %v3839, 1.0
  %v3857 = vadd.f32 %v3841, 1.0
  %v3858 = vrcp.pop %v3842
  %v3859 = vmul.f32 1.0, %v3858
  %v3860 = vrcp.pop %v3843
  %v3861 = vmul.f32 1.0, %v3860
  %v3862 = vrcp.pop %v3844
  %v3863 = vmul.f32 1.0, %v3862
  %v3864 = vrcp.pop %v3845
  %v3865 = vmul.f32 1.0, %v3864
  %v3866 = vrcp.pop %v3846
  %v3867 = vmul.f32 1.0, %v3866
  %v3868 = vrcp.pop %v3847
  %v3869 = vmul.f32 1.0, %v3868
  %v3870 = vrcp.pop %v3848
  %v3871 = vmul.f32 1.0, %v3870
  %v3872 = vrcp.pop %v3849
  %v3873 = vmul.f32 1.0, %v3872
  %v3874 = vrcp.pop %v3850
  %v3875 = vmul.f32 1.0, %v3874
  %v3876 = vrcp.pop %v3851
  %v3877 = vmul.f32 1.0, %v3876
  %v3878 = vrcp.pop %v3852
  %v3879 = vmul.f32 1.0, %v3878
  %v3880 = vrcp.pop %v3853
  %v3881 = vmul.f32 1.0, %v3880
  %v3882 = vrcp.pop %v3854
  %v3883 = vmul.f32 1.0, %v3882
  %v3884 = vrcp.pop %v3855
  %v3885 = vmul.f32 1.0, %v3884
  %v3886 = vrcp.pop %v3856
  %v3887 = vmul.f32 1.0, %v3886
  %v3888 = vrcp.pop %v3857
  %v3889 = vmul.f32 1.0, %v3888
  %v3890 = vld [vmem:[%s1 + $0xc] sm:$0x1]
  %v3891 = vmul.f32 %v3859, %v3563
  %v3892 = vmul.f32 %v3861, %v3566
  %v3893 = vmul.f32 %v3863, %v3571
  %v3894 = vmul.f32 %v3865, %v3574
  %v3895 = vmul.f32 %v3867, %v3579
  %v3896 = vmul.f32 %v3869, %v3582
  %v3897 = vmul.f32 %v3871, %v3587
  %v3898 = vmul.f32 %v3873, %v3590
  %v3899 = vmul.f32 %v3875, %v3595
  %v3900 = vmul.f32 %v3877, %v3598
  %v3901 = vmul.f32 %v3879, %v3603
  %v3902 = vmul.f32 %v3881, %v3606
  %v3903 = vmul.f32 %v3883, %v3611
  %v3904 = vmul.f32 %v3885, %v3614
  %v3905 = vmul.f32 %v3887, %v3619
  %v3906 = vmul.f32 %v3889, %v3622
  %v3907 = vlaneseq
  %v3908 = vshrl.u32 %v3907, 7
  %v3909 = vsub.s32 0, %v3908
  %v3910 = vrot.slane %v3890, %v3909
  %v3911 = vmul.f32 %v3910, %v3891
  %v3912 = vmul.f32 %v3910, %v3892
  %v3913 = vmul.f32 %v3910, %v3893
  %v3914 = vmul.f32 %v3910, %v3894
  %v3915 = vmul.f32 %v3910, %v3895
  %v3916 = vmul.f32 %v3910, %v3896
  %v3917 = vmul.f32 %v3910, %v3897
  %v3918 = vmul.f32 %v3910, %v3898
  %v3919 = vmul.f32 %v3910, %v3899
  %v3920 = vmul.f32 %v3910, %v3900
  %v3921 = vmul.f32 %v3910, %v3901
  %v3922 = vmul.f32 %v3910, %v3902
  %v3923 = vmul.f32 %v3910, %v3903
  %v3924 = vmul.f32 %v3910, %v3904
  %v3925 = vmul.f32 %v3910, %v3905
  %v3926 = vmul.f32 %v3910, %v3906
  %v3927 = vadd.f32 %v2095, %v3911
  %v3928 = vadd.f32 %v2096, %v3912
  %v3929 = vadd.f32 %v2097, %v3913
  %v3930 = vadd.f32 %v2098, %v3914
  %v3931 = vadd.f32 %v2099, %v3915
  %v3932 = vadd.f32 %v2100, %v3916
  %v3933 = vadd.f32 %v2101, %v3917
  %v3934 = vadd.f32 %v2102, %v3918
  %v3935 = vadd.f32 %v2103, %v3919
  %v3936 = vadd.f32 %v2104, %v3920
  %v3937 = vadd.f32 %v2105, %v3921
  %v3938 = vadd.f32 %v2106, %v3922
  %v3939 = vadd.f32 %v2107, %v3923
  %v3940 = vadd.f32 %v2108, %v3924
  %v3941 = vadd.f32 %v2109, %v3925
  %v3942 = vadd.f32 %v2110, %v3926
  %3943 = vst [vmem:[%s10] sm:$0xff] %v3927
  %3944 = vst [vmem:[%s10 + $0x8] sm:$0xff] %v3928
  %3945 = vst [vmem:[%s10 + $0x10] sm:$0xff] %v3929
  %3946 = vst [vmem:[%s10 + $0x18] sm:$0xff] %v3930
  %3947 = vst [vmem:[%s10 + $0x20] sm:$0xff] %v3931
  %3948 = vst [vmem:[%s10 + $0x28] sm:$0xff] %v3932
  %3949 = vst [vmem:[%s10 + $0x30] sm:$0xff] %v3933
  %3950 = vst [vmem:[%s10 + $0x38] sm:$0xff] %v3934
  %3951 = vst [vmem:[%s10 + $0x40] sm:$0xff] %v3935
  %3952 = vst [vmem:[%s10 + $0x48] sm:$0xff] %v3936
  %3953 = vst [vmem:[%s10 + $0x50] sm:$0xff] %v3937
  %3954 = vst [vmem:[%s10 + $0x58] sm:$0xff] %v3938
  %3955 = vst [vmem:[%s10 + $0x60] sm:$0xff] %v3939
  %3956 = vst [vmem:[%s10 + $0x68] sm:$0xff] %v3940
  %3957 = vst [vmem:[%s10 + $0x70] sm:$0xff] %v3941
  %3958 = vst [vmem:[%s10 + $0x78] sm:$0xff] %v3942
  // Predicated region
  $region49: #{_lambda_.5} parent=0 // pred_check
    _
  $region50: #{_lambda_.5} parent=0 // pred_check_branch
    %3960 = sbr.rel (0) target = $region52
  $region51: #{_lambda_.5} parent=0 // pred_region
    _
  $region52: #{_lambda_.5} parent=0 // pred_fallthru
    _
  // Predicated region
  $region53: #{_lambda_.5} parent=0 // pred_check
    _
  $region54: #{_lambda_.5} parent=0 // pred_check_branch
    %3962 = sbr.rel (0) target = $region56
  $region55: #{_lambda_.5} parent=0 // pred_region
    _
  $region56: #{_lambda_.5} parent=0 // pred_fallthru
    _

// kernel: _lambda_.6
$region0: #{_lambda_.6}
  #allocation0 [shape = 'u32[]', space=smem, size = 0x4, offset = 0x4, fixed_abs, tag = 'smem constant byte address 0x4 - core index']
  #allocation1 [shape = 'u32[144,128]{1,0:T(1,128)}', space=vmem, size = 0x12000, scoped, tag = 'internal scratch']
  #allocation2 [shape = 'f32[128,128]{1,0:T(8,128)}', space=vmem, size = 0x10000, scoped, tag = 'scratch operand']
  #allocation3 [shape = 'f32[128,128]{1,0:T(8,128)}', space=vmem, size = 0x10000, scoped, tag = 'scratch operand']
  #allocation4 [shape = 'f32[128,128]{1,0:T(8,128)}', space=vmem, size = 0x10000, scoped, tag = 'scratch operand']
  %s0 = inlined_call_operand.vmem [shape: f32[128,128], index: 0, kind: input, shape index: {}]
  %s1 = inlined_call_operand.vmem [shape: f32[16,128], index: 1, kind: input, shape index: {}]
  %s2 = inlined_call_operand.vmem [shape: s32[128,128], index: 2, kind: input, shape index: {}]
  %s3 = inlined_call_operand.vmem [shape: bf16[128,128], index: 3, kind: input, shape index: {}]
  %s4 = inlined_call_operand.vmem [shape: bf16[128,128], index: 4, kind: input, shape index: {}]
  %s5 = inlined_call_operand.vmem [shape: bf16[128,128], index: 5, kind: input, shape index: {}]
  %s6 = inlined_call_operand.vmem [shape: bf16[128,128], index: 6, kind: input, shape index: {}]
  %s7 = inlined_call_operand.vmem [shape: bf16[128,512], index: 7, kind: input, shape index: {}]
  %s8 = inlined_call_operand.vmem [shape: bf16[512,128], index: 8, kind: input, shape index: {}]
  %s9 = inlined_call_operand.vmem [shape: bf16[128,128], index: 9, kind: input, shape index: {}]
  %s10 = inlined_call_operand.vmem [shape: f32[128,128], index: 10, kind: output, shape index: {}]
  %s11 = sld [smem:[#allocation0]]
  $region57: #{_lambda_.6} parent=0
    _
  %s13 = ssub.s32 1, %s11
  %s14 = scalar_select 0, %s13, %s11
  // Predicated region
  $region2: #{_lambda_.6} parent=0 // pred_check
    _
  $region3: #{_lambda_.6} parent=0 // pred_check_branch
    %16 = sbr.rel (0) target = $region5
  $region4: #{_lambda_.6} parent=0 // pred_region
    _
  $region5: #{_lambda_.6} parent=0 // pred_fallthru
    _
  // Predicated region
  $region6: #{_lambda_.6} parent=0 // pred_check
    _
  $region7: #{_lambda_.6} parent=0 // pred_check_branch
    %18 = sbr.rel (0) target = $region9
  $region8: #{_lambda_.6} parent=0 // pred_region
    _
  $region9: #{_lambda_.6} parent=0 // pred_fallthru
    _
  // Predicated region
  $region10: #{_lambda_.6} parent=0 // pred_check
    _
  $region11: #{_lambda_.6} parent=0 // pred_check_branch
    %20 = sbr.rel (0) target = $region13
  $region12: #{_lambda_.6} parent=0 // pred_region
    _
  $region13: #{_lambda_.6} parent=0 // pred_fallthru
    _
  // Predicated region
  $region14: #{_lambda_.6} parent=0 // pred_check
    _
  $region15: #{_lambda_.6} parent=0 // pred_check_branch
    %22 = sbr.rel (0) target = $region17
  $region16: #{_lambda_.6} parent=0 // pred_region
    _
  $region17: #{_lambda_.6} parent=0 // pred_fallthru
    _
  // Predicated region
  $region18: #{_lambda_.6} parent=0 // pred_check
    _
  $region19: #{_lambda_.6} parent=0 // pred_check_branch
    %24 = sbr.rel (0) target = $region21
  $region20: #{_lambda_.6} parent=0 // pred_region
    _
  $region21: #{_lambda_.6} parent=0 // pred_fallthru
    _
  // Predicated region
  $region22: #{_lambda_.6} parent=0 // pred_check
    _
  $region23: #{_lambda_.6} parent=0 // pred_check_branch
    %26 = sbr.rel (0) target = $region25
  $region24: #{_lambda_.6} parent=0 // pred_region
    _
  $region25: #{_lambda_.6} parent=0 // pred_fallthru
    _
  // Predicated region
  $region26: #{_lambda_.6} parent=0 // pred_check
    _
  $region27: #{_lambda_.6} parent=0 // pred_check_branch
    %28 = sbr.rel (0) target = $region29
  $region28: #{_lambda_.6} parent=0 // pred_region
    _
  $region29: #{_lambda_.6} parent=0 // pred_fallthru
    _
  // Predicated region
  $region30: #{_lambda_.6} parent=0 // pred_check
    _
  $region31: #{_lambda_.6} parent=0 // pred_check_branch
    %30 = sbr.rel (0) target = $region33
  $region32: #{_lambda_.6} parent=0 // pred_region
    _
  $region33: #{_lambda_.6} parent=0 // pred_fallthru
    _
  // Predicated region
  $region34: #{_lambda_.6} parent=0 // pred_check
    _
  $region35: #{_lambda_.6} parent=0 // pred_check_branch
    %32 = sbr.rel (0) target = $region37
  $region36: #{_lambda_.6} parent=0 // pred_region
    _
  $region37: #{_lambda_.6} parent=0 // pred_fallthru
    _
  // Predicated region
  $region38: #{_lambda_.6} parent=0 // pred_check
    _
  $region39: #{_lambda_.6} parent=0 // pred_check_branch
    %34 = sbr.rel (0) target = $region41
  $region40: #{_lambda_.6} parent=0 // pred_region
    _
  $region41: #{_lambda_.6} parent=0 // pred_fallthru
    _
  %v36 = vld [vmem:[%s2] sm:$0xff]
  %v37 = vld [vmem:[%s2 + $0x8] sm:$0xff]
  %v38 = vld [vmem:[%s2 + $0x10] sm:$0xff]
  %v39 = vld [vmem:[%s2 + $0x18] sm:$0xff]
  %v40 = vld [vmem:[%s2 + $0x20] sm:$0xff]
  %v41 = vld [vmem:[%s2 + $0x28] sm:$0xff]
  %v42 = vld [vmem:[%s2 + $0x30] sm:$0xff]
  %v43 = vld [vmem:[%s2 + $0x38] sm:$0xff]
  %v44 = vld [vmem:[%s2 + $0x40] sm:$0xff]
  %v45 = vld [vmem:[%s2 + $0x48] sm:$0xff]
  %v46 = vld [vmem:[%s2 + $0x50] sm:$0xff]
  %v47 = vld [vmem:[%s2 + $0x58] sm:$0xff]
  %v48 = vld [vmem:[%s2 + $0x60] sm:$0xff]
  %v49 = vld [vmem:[%s2 + $0x68] sm:$0xff]
  %v50 = vld [vmem:[%s2 + $0x70] sm:$0xff]
  %v51 = vld [vmem:[%s2 + $0x78] sm:$0xff]
  %v52 = vld [vmem:[%s0] sm:$0xff]
  %v53 = vld [vmem:[%s0 + $0x8] sm:$0xff]
  %v54 = vld [vmem:[%s0 + $0x10] sm:$0xff]
  %v55 = vld [vmem:[%s0 + $0x18] sm:$0xff]
  %v56 = vld [vmem:[%s0 + $0x20] sm:$0xff]
  %v57 = vld [vmem:[%s0 + $0x28] sm:$0xff]
  %v58 = vld [vmem:[%s0 + $0x30] sm:$0xff]
  %v59 = vld [vmem:[%s0 + $0x38] sm:$0xff]
  %v60 = vld [vmem:[%s0 + $0x40] sm:$0xff]
  %v61 = vld [vmem:[%s0 + $0x48] sm:$0xff]
  %v62 = vld [vmem:[%s0 + $0x50] sm:$0xff]
  %v63 = vld [vmem:[%s0 + $0x58] sm:$0xff]
  %v64 = vld [vmem:[%s0 + $0x60] sm:$0xff]
  %v65 = vld [vmem:[%s0 + $0x68] sm:$0xff]
  %v66 = vld [vmem:[%s0 + $0x70] sm:$0xff]
  %v67 = vld [vmem:[%s0 + $0x78] sm:$0xff]
  %v68 = vld [vmem:[%s1 + $0x2] sm:$0x1]
  %v69 = vld [vmem:[%s1 + $0x3] sm:$0x1]
  %70 = vadd.xlane.f32.xlu0 %v52
  %v71 = vpop.xlane.xlu0 %70
  %72 = vadd.xlane.f32.xlu0 %v53
  %v73 = vpop.xlane.xlu0 %72
  %74 = vadd.xlane.f32.xlu0 %v54
  %v75 = vpop.xlane.xlu0 %74
  %76 = vadd.xlane.f32.xlu0 %v55
  %v77 = vpop.xlane.xlu0 %76
  %78 = vadd.xlane.f32.xlu0 %v56
  %v79 = vpop.xlane.xlu0 %78
  %80 = vadd.xlane.f32.xlu0 %v57
  %v81 = vpop.xlane.xlu0 %80
  %82 = vadd.xlane.f32.xlu0 %v58
  %v83 = vpop.xlane.xlu0 %82
  %84 = vadd.xlane.f32.xlu0 %v59
  %v85 = vpop.xlane.xlu0 %84
  %86 = vadd.xlane.f32.xlu0 %v60
  %v87 = vpop.xlane.xlu0 %86
  %88 = vadd.xlane.f32.xlu0 %v61
  %v89 = vpop.xlane.xlu0 %88
  %90 = vadd.xlane.f32.xlu0 %v62
  %v91 = vpop.xlane.xlu0 %90
  %92 = vadd.xlane.f32.xlu0 %v63
  %v93 = vpop.xlane.xlu0 %92
  %94 = vadd.xlane.f32.xlu0 %v64
  %v95 = vpop.xlane.xlu0 %94
  %96 = vadd.xlane.f32.xlu0 %v65
  %v97 = vpop.xlane.xlu0 %96
  %98 = vadd.xlane.f32.xlu0 %v66
  %v99 = vpop.xlane.xlu0 %98
  %100 = vadd.xlane.f32.xlu0 %v67
  %v101 = vpop.xlane.xlu0 %100
  %v102 = vrcp.pop 128.0
  %v103 = vmul.f32 %v71, %v102
  %v104 = vmul.f32 %v73, %v102
  %v105 = vmul.f32 %v75, %v102
  %v106 = vmul.f32 %v77, %v102
  %v107 = vmul.f32 %v79, %v102
  %v108 = vmul.f32 %v81, %v102
  %v109 = vmul.f32 %v83, %v102
  %v110 = vmul.f32 %v85, %v102
  %v111 = vmul.f32 %v87, %v102
  %v112 = vmul.f32 %v89, %v102
  %v113 = vmul.f32 %v91, %v102
  %v114 = vmul.f32 %v93, %v102
  %v115 = vmul.f32 %v95, %v102
  %v116 = vmul.f32 %v97, %v102
  %v117 = vmul.f32 %v99, %v102
  %v118 = vmul.f32 %v101, %v102
  %v119 = vsub.f32 %v52, %v103
  %v120 = vsub.f32 %v53, %v104
  %v121 = vsub.f32 %v54, %v105
  %v122 = vsub.f32 %v55, %v106
  %v123 = vsub.f32 %v56, %v107
  %v124 = vsub.f32 %v57, %v108
  %v125 = vsub.f32 %v58, %v109
  %v126 = vsub.f32 %v59, %v110
  %v127 = vsub.f32 %v60, %v111
  %v128 = vsub.f32 %v61, %v112
  %v129 = vsub.f32 %v62, %v113
  %v130 = vsub.f32 %v63, %v114
  %v131 = vsub.f32 %v64, %v115
  %v132 = vsub.f32 %v65, %v116
  %v133 = vsub.f32 %v66, %v117
  %v134 = vsub.f32 %v67, %v118
  %v135 = vmul.f32 %v119, %v119
  %v136 = vmul.f32 %v120, %v120
  %v137 = vmul.f32 %v121, %v121
  %v138 = vmul.f32 %v122, %v122
  %v139 = vmul.f32 %v123, %v123
  %v140 = vmul.f32 %v124, %v124
  %v141 = vmul.f32 %v125, %v125
  %v142 = vmul.f32 %v126, %v126
  %v143 = vmul.f32 %v127, %v127
  %v144 = vmul.f32 %v128, %v128
  %v145 = vmul.f32 %v129, %v129
  %v146 = vmul.f32 %v130, %v130
  %v147 = vmul.f32 %v131, %v131
  %v148 = vmul.f32 %v132, %v132
  %v149 = vmul.f32 %v133, %v133
  %v150 = vmul.f32 %v134, %v134
  %151 = vadd.xlane.f32.xlu0 %v135
  %v152 = vpop.xlane.xlu0 %151
  %153 = vadd.xlane.f32.xlu0 %v136
  %v154 = vpop.xlane.xlu0 %153
  %155 = vadd.xlane.f32.xlu0 %v137
  %v156 = vpop.xlane.xlu0 %155
  %157 = vadd.xlane.f32.xlu0 %v138
  %v158 = vpop.xlane.xlu0 %157
  %159 = vadd.xlane.f32.xlu0 %v139
  %v160 = vpop.xlane.xlu0 %159
  %161 = vadd.xlane.f32.xlu0 %v140
  %v162 = vpop.xlane.xlu0 %161
  %163 = vadd.xlane.f32.xlu0 %v141
  %v164 = vpop.xlane.xlu0 %163
  %165 = vadd.xlane.f32.xlu0 %v142
  %v166 = vpop.xlane.xlu0 %165
  %167 = vadd.xlane.f32.xlu0 %v143
  %v168 = vpop.xlane.xlu0 %167
  %169 = vadd.xlane.f32.xlu0 %v144
  %v170 = vpop.xlane.xlu0 %169
  %171 = vadd.xlane.f32.xlu0 %v145
  %v172 = vpop.xlane.xlu0 %171
  %173 = vadd.xlane.f32.xlu0 %v146
  %v174 = vpop.xlane.xlu0 %173
  %175 = vadd.xlane.f32.xlu0 %v147
  %v176 = vpop.xlane.xlu0 %175
  %177 = vadd.xlane.f32.xlu0 %v148
  %v178 = vpop.xlane.xlu0 %177
  %179 = vadd.xlane.f32.xlu0 %v149
  %v180 = vpop.xlane.xlu0 %179
  %181 = vadd.xlane.f32.xlu0 %v150
  %v182 = vpop.xlane.xlu0 %181
  %v183 = vmul.f32 %v152, %v102
  %v184 = vmul.f32 %v154, %v102
  %v185 = vmul.f32 %v156, %v102
  %v186 = vmul.f32 %v158, %v102
  %v187 = vmul.f32 %v160, %v102
  %v188 = vmul.f32 %v162, %v102
  %v189 = vmul.f32 %v164, %v102
  %v190 = vmul.f32 %v166, %v102
  %v191 = vmul.f32 %v168, %v102
  %v192 = vmul.f32 %v170, %v102
  %v193 = vmul.f32 %v172, %v102
  %v194 = vmul.f32 %v174, %v102
  %v195 = vmul.f32 %v176, %v102
  %v196 = vmul.f32 %v178, %v102
  %v197 = vmul.f32 %v180, %v102
  %v198 = vmul.f32 %v182, %v102
  %v199 = vadd.f32 %v183, 1e-05
  %v200 = vadd.f32 %v184, 1e-05
  %v201 = vadd.f32 %v185, 1e-05
  %v202 = vadd.f32 %v186, 1e-05
  %v203 = vadd.f32 %v187, 1e-05
  %v204 = vadd.f32 %v188, 1e-05
  %v205 = vadd.f32 %v189, 1e-05
  %v206 = vadd.f32 %v190, 1e-05
  %v207 = vadd.f32 %v191, 1e-05
  %v208 = vadd.f32 %v192, 1e-05
  %v209 = vadd.f32 %v193, 1e-05
  %v210 = vadd.f32 %v194, 1e-05
  %v211 = vadd.f32 %v195, 1e-05
  %v212 = vadd.f32 %v196, 1e-05
  %v213 = vadd.f32 %v197, 1e-05
  %v214 = vadd.f32 %v198, 1e-05
  %v215 = vrsqrt.pop %v199
  %v216 = vrsqrt.pop %v200
  %v217 = vrsqrt.pop %v201
  %v218 = vrsqrt.pop %v202
  %v219 = vrsqrt.pop %v203
  %v220 = vrsqrt.pop %v204
  %v221 = vrsqrt.pop %v205
  %v222 = vrsqrt.pop %v206
  %v223 = vrsqrt.pop %v207
  %v224 = vrsqrt.pop %v208
  %v225 = vrsqrt.pop %v209
  %v226 = vrsqrt.pop %v210
  %v227 = vrsqrt.pop %v211
  %v228 = vrsqrt.pop %v212
  %v229 = vrsqrt.pop %v213
  %v230 = vrsqrt.pop %v214
  %v231 = vmul.f32 %v119, %v215
  %v232 = vmul.f32 %v120, %v216
  %v233 = vmul.f32 %v121, %v217
  %v234 = vmul.f32 %v122, %v218
  %v235 = vmul.f32 %v123, %v219
  %v236 = vmul.f32 %v124, %v220
  %v237 = vmul.f32 %v125, %v221
  %v238 = vmul.f32 %v126, %v222
  %v239 = vmul.f32 %v127, %v223
  %v240 = vmul.f32 %v128, %v224
  %v241 = vmul.f32 %v129, %v225
  %v242 = vmul.f32 %v130, %v226
  %v243 = vmul.f32 %v131, %v227
  %v244 = vmul.f32 %v132, %v228
  %v245 = vmul.f32 %v133, %v229
  %v246 = vmul.f32 %v134, %v230
  %v247 = vlaneseq
  %v248 = vshrl.u32 %v247, 7
  %v249 = vsub.s32 0, %v248
  %v250 = vrot.slane %v68, %v249
  %v251 = vmul.f32 %v231, %v250
  %v252 = vmul.f32 %v232, %v250
  %v253 = vmul.f32 %v233, %v250
  %v254 = vmul.f32 %v234, %v250
  %v255 = vmul.f32 %v235, %v250
  %v256 = vmul.f32 %v236, %v250
  %v257 = vmul.f32 %v237, %v250
  %v258 = vmul.f32 %v238, %v250
  %v259 = vmul.f32 %v239, %v250
  %v260 = vmul.f32 %v240, %v250
  %v261 = vmul.f32 %v241, %v250
  %v262 = vmul.f32 %v242, %v250
  %v263 = vmul.f32 %v243, %v250
  %v264 = vmul.f32 %v244, %v250
  %v265 = vmul.f32 %v245, %v250
  %v266 = vmul.f32 %v246, %v250
  %v267 = vlaneseq
  %v268 = vshrl.u32 %v267, 7
  %v269 = vsub.s32 0, %v268
  %v270 = vrot.slane %v69, %v269
  %v271 = vadd.f32 %v251, %v270
  %v272 = vadd.f32 %v252, %v270
  %v273 = vadd.f32 %v253, %v270
  %v274 = vadd.f32 %v254, %v270
  %v275 = vadd.f32 %v255, %v270
  %v276 = vadd.f32 %v256, %v270
  %v277 = vadd.f32 %v257, %v270
  %v278 = vadd.f32 %v258, %v270
  %v279 = vadd.f32 %v259, %v270
  %v280 = vadd.f32 %v260, %v270
  %v281 = vadd.f32 %v261, %v270
  %v282 = vadd.f32 %v262, %v270
  %v283 = vadd.f32 %v263, %v270
  %v284 = vadd.f32 %v264, %v270
  %v285 = vadd.f32 %v265, %v270
  %v286 = vadd.f32 %v266, %v270
  %v287 = vrot.slane %v271, 6
  %v288 = vrot.slane %v272, 6
  %v289 = vrot.slane %v273, 6
  %v290 = vrot.slane %v274, 6
  %v291 = vrot.slane %v275, 6
  %v292 = vrot.slane %v276, 6
  %v293 = vrot.slane %v277, 6
  %v294 = vrot.slane %v278, 6
  %v295 = vrot.slane %v279, 6
  %v296 = vrot.slane %v280, 6
  %v297 = vrot.slane %v281, 6
  %v298 = vrot.slane %v282, 6
  %v299 = vrot.slane %v283, 6
  %v300 = vrot.slane %v284, 6
  %v301 = vrot.slane %v285, 6
  %v302 = vrot.slane %v286, 6
  %v303 = vlaneseq
  %v304 = vshrl.u32 %v303, 7
  %vm305 = vcmp.lt.s32.totalorder %v304, 2
  %v306 = vsel %vm305, %v301, %v302
  %v307 = vsel %vm305, %v300, %v301
  %v308 = vsel %vm305, %v299, %v300
  %v309 = vsel %vm305, %v298, %v299
  %v310 = vsel %vm305, %v297, %v298
  %v311 = vsel %vm305, %v296, %v297
  %v312 = vsel %vm305, %v295, %v296
  %v313 = vsel %vm305, %v294, %v295
  %v314 = vsel %vm305, %v293, %v294
  %v315 = vsel %vm305, %v292, %v293
  %v316 = vsel %vm305, %v291, %v292
  %v317 = vsel %vm305, %v290, %v291
  %v318 = vsel %vm305, %v289, %v290
  %v319 = vsel %vm305, %v288, %v289
  %v320 = vsel %vm305, %v287, %v288
  %v321 = vsel %vm305, %v302, %v287
  %v322 = vrot.slane %v271, 2
  %v323 = vrot.slane %v272, 2
  %v324 = vrot.slane %v273, 2
  %v325 = vrot.slane %v274, 2
  %v326 = vrot.slane %v275, 2
  %v327 = vrot.slane %v276, 2
  %v328 = vrot.slane %v277, 2
  %v329 = vrot.slane %v278, 2
  %v330 = vrot.slane %v279, 2
  %v331 = vrot.slane %v280, 2
  %v332 = vrot.slane %v281, 2
  %v333 = vrot.slane %v282, 2
  %v334 = vrot.slane %v283, 2
  %v335 = vrot.slane %v284, 2
  %v336 = vrot.slane %v285, 2
  %v337 = vrot.slane %v286, 2
  %vm338 = vcmp.lt.s32.totalorder %v304, 6
  %v339 = vsel %vm338, %v336, %v337
  %v340 = vsel %vm338, %v335, %v336
  %v341 = vsel %vm338, %v334, %v335
  %v342 = vsel %vm338, %v333, %v334
  %v343 = vsel %vm338, %v332, %v333
  %v344 = vsel %vm338, %v331, %v332
  %v345 = vsel %vm338, %v330, %v331
  %v346 = vsel %vm338, %v329, %v330
  %v347 = vsel %vm338, %v328, %v329
  %v348 = vsel %vm338, %v327, %v328
  %v349 = vsel %vm338, %v326, %v327
  %v350 = vsel %vm338, %v325, %v326
  %v351 = vsel %vm338, %v324, %v325
  %v352 = vsel %vm338, %v323, %v324
  %v353 = vsel %vm338, %v322, %v323
  %v354 = vsel %vm338, %v337, %v322
  %vm355 = vcmp.eq.s32.totalorder %v36, 0
  %vm356 = vcmp.eq.s32.totalorder %v37, 0
  %vm357 = vcmp.eq.s32.totalorder %v38, 0
  %vm358 = vcmp.eq.s32.totalorder %v39, 0
  %vm359 = vcmp.eq.s32.totalorder %v40, 0
  %vm360 = vcmp.eq.s32.totalorder %v41, 0
  %vm361 = vcmp.eq.s32.totalorder %v42, 0
  %vm362 = vcmp.eq.s32.totalorder %v43, 0
  %vm363 = vcmp.eq.s32.totalorder %v44, 0
  %vm364 = vcmp.eq.s32.totalorder %v45, 0
  %vm365 = vcmp.eq.s32.totalorder %v46, 0
  %vm366 = vcmp.eq.s32.totalorder %v47, 0
  %vm367 = vcmp.eq.s32.totalorder %v48, 0
  %vm368 = vcmp.eq.s32.totalorder %v49, 0
  %vm369 = vcmp.eq.s32.totalorder %v50, 0
  %vm370 = vcmp.eq.s32.totalorder %v51, 0
  %vm371 = vcmp.eq.s32.totalorder %v36, 1
  %vm372 = vcmp.eq.s32.totalorder %v37, 1
  %vm373 = vcmp.eq.s32.totalorder %v38, 1
  %vm374 = vcmp.eq.s32.totalorder %v39, 1
  %vm375 = vcmp.eq.s32.totalorder %v40, 1
  %vm376 = vcmp.eq.s32.totalorder %v41, 1
  %vm377 = vcmp.eq.s32.totalorder %v42, 1
  %vm378 = vcmp.eq.s32.totalorder %v43, 1
  %vm379 = vcmp.eq.s32.totalorder %v44, 1
  %vm380 = vcmp.eq.s32.totalorder %v45, 1
  %vm381 = vcmp.eq.s32.totalorder %v46, 1
  %vm382 = vcmp.eq.s32.totalorder %v47, 1
  %vm383 = vcmp.eq.s32.totalorder %v48, 1
  %vm384 = vcmp.eq.s32.totalorder %v49, 1
  %vm385 = vcmp.eq.s32.totalorder %v50, 1
  %vm386 = vcmp.eq.s32.totalorder %v51, 1
  %vm387 = vcmp.eq.s32.totalorder %v36, 2
  %vm388 = vcmp.eq.s32.totalorder %v37, 2
  %vm389 = vcmp.eq.s32.totalorder %v38, 2
  %vm390 = vcmp.eq.s32.totalorder %v39, 2
  %vm391 = vcmp.eq.s32.totalorder %v40, 2
  %vm392 = vcmp.eq.s32.totalorder %v41, 2
  %vm393 = vcmp.eq.s32.totalorder %v42, 2
  %vm394 = vcmp.eq.s32.totalorder %v43, 2
  %vm395 = vcmp.eq.s32.totalorder %v44, 2
  %vm396 = vcmp.eq.s32.totalorder %v45, 2
  %vm397 = vcmp.eq.s32.totalorder %v46, 2
  %vm398 = vcmp.eq.s32.totalorder %v47, 2
  %vm399 = vcmp.eq.s32.totalorder %v48, 2
  %vm400 = vcmp.eq.s32.totalorder %v49, 2
  %vm401 = vcmp.eq.s32.totalorder %v50, 2
  %vm402 = vcmp.eq.s32.totalorder %v51, 2
  %vm403 = vcmp.eq.s32.totalorder %v36, 3
  %vm404 = vcmp.eq.s32.totalorder %v37, 3
  %vm405 = vcmp.eq.s32.totalorder %v38, 3
  %vm406 = vcmp.eq.s32.totalorder %v39, 3
  %vm407 = vcmp.eq.s32.totalorder %v40, 3
  %vm408 = vcmp.eq.s32.totalorder %v41, 3
  %vm409 = vcmp.eq.s32.totalorder %v42, 3
  %vm410 = vcmp.eq.s32.totalorder %v43, 3
  %vm411 = vcmp.eq.s32.totalorder %v44, 3
  %vm412 = vcmp.eq.s32.totalorder %v45, 3
  %vm413 = vcmp.eq.s32.totalorder %v46, 3
  %vm414 = vcmp.eq.s32.totalorder %v47, 3
  %vm415 = vcmp.eq.s32.totalorder %v48, 3
  %vm416 = vcmp.eq.s32.totalorder %v49, 3
  %vm417 = vcmp.eq.s32.totalorder %v50, 3
  %vm418 = vcmp.eq.s32.totalorder %v51, 3
  %vm419 = vcmp.eq.s32.totalorder %v36, 4
  %vm420 = vcmp.eq.s32.totalorder %v37, 4
  %vm421 = vcmp.eq.s32.totalorder %v38, 4
  %vm422 = vcmp.eq.s32.totalorder %v39, 4
  %vm423 = vcmp.eq.s32.totalorder %v40, 4
  %vm424 = vcmp.eq.s32.totalorder %v41, 4
  %vm425 = vcmp.eq.s32.totalorder %v42, 4
  %vm426 = vcmp.eq.s32.totalorder %v43, 4
  %vm427 = vcmp.eq.s32.totalorder %v44, 4
  %vm428 = vcmp.eq.s32.totalorder %v45, 4
  %vm429 = vcmp.eq.s32.totalorder %v46, 4
  %vm430 = vcmp.eq.s32.totalorder %v47, 4
  %vm431 = vcmp.eq.s32.totalorder %v48, 4
  %vm432 = vcmp.eq.s32.totalorder %v49, 4
  %vm433 = vcmp.eq.s32.totalorder %v50, 4
  %vm434 = vcmp.eq.s32.totalorder %v51, 4
  %v435 = vsel %vm419, %v271, 0.0
  %v436 = vsel %vm420, %v272, 0.0
  %v437 = vsel %vm421, %v273, 0.0
  %v438 = vsel %vm422, %v274, 0.0
  %v439 = vsel %vm423, %v275, 0.0
  %v440 = vsel %vm424, %v276, 0.0
  %v441 = vsel %vm425, %v277, 0.0
  %v442 = vsel %vm426, %v278, 0.0
  %v443 = vsel %vm427, %v279, 0.0
  %v444 = vsel %vm428, %v280, 0.0
  %v445 = vsel %vm429, %v281, 0.0
  %v446 = vsel %vm430, %v282, 0.0
  %v447 = vsel %vm431, %v283, 0.0
  %v448 = vsel %vm432, %v284, 0.0
  %v449 = vsel %vm433, %v285, 0.0
  %v450 = vsel %vm434, %v286, 0.0
  %v451 = vsel %vm403, %v273, %v435
  %v452 = vsel %vm404, %v274, %v436
  %v453 = vsel %vm405, %v275, %v437
  %v454 = vsel %vm406, %v276, %v438
  %v455 = vsel %vm407, %v277, %v439
  %v456 = vsel %vm408, %v278, %v440
  %v457 = vsel %vm409, %v279, %v441
  %v458 = vsel %vm410, %v280, %v442
  %v459 = vsel %vm411, %v281, %v443
  %v460 = vsel %vm412, %v282, %v444
  %v461 = vsel %vm413, %v283, %v445
  %v462 = vsel %vm414, %v284, %v446
  %v463 = vsel %vm415, %v285, %v447
  %v464 = vsel %vm416, %v286, %v448
  %v465 = vsel %vm417, %v271, %v449
  %v466 = vsel %vm418, %v272, %v450
  %v467 = vsel %vm387, %v285, %v451
  %v468 = vsel %vm388, %v286, %v452
  %v469 = vsel %vm389, %v271, %v453
  %v470 = vsel %vm390, %v272, %v454
  %v471 = vsel %vm391, %v273, %v455
  %v472 = vsel %vm392, %v274, %v456
  %v473 = vsel %vm393, %v275, %v457
  %v474 = vsel %vm394, %v276, %v458
  %v475 = vsel %vm395, %v277, %v459
  %v476 = vsel %vm396, %v278, %v460
  %v477 = vsel %vm397, %v279, %v461
  %v478 = vsel %vm398, %v280, %v462
  %v479 = vsel %vm399, %v281, %v463
  %v480 = vsel %vm400, %v282, %v464
  %v481 = vsel %vm401, %v283, %v465
  %v482 = vsel %vm402, %v284, %v466
  %v483 = vsel %vm371, %v353, %v467
  %v484 = vsel %vm372, %v352, %v468
  %v485 = vsel %vm373, %v351, %v469
  %v486 = vsel %vm374, %v350, %v470
  %v487 = vsel %vm375, %v349, %v471
  %v488 = vsel %vm376, %v348, %v472
  %v489 = vsel %vm377, %v347, %v473
  %v490 = vsel %vm378, %v346, %v474
  %v491 = vsel %vm379, %v345, %v475
  %v492 = vsel %vm380, %v344, %v476
  %v493 = vsel %vm381, %v343, %v477
  %v494 = vsel %vm382, %v342, %v478
  %v495 = vsel %vm383, %v341, %v479
  %v496 = vsel %vm384, %v340, %v480
  %v497 = vsel %vm385, %v339, %v481
  %v498 = vsel %vm386, %v354, %v482
  %v499 = vsel %vm355, %v321, %v483
  %v500 = vsel %vm356, %v320, %v484
  %v501 = vsel %vm357, %v319, %v485
  %v502 = vsel %vm358, %v318, %v486
  %v503 = vsel %vm359, %v317, %v487
  %v504 = vsel %vm360, %v316, %v488
  %v505 = vsel %vm361, %v315, %v489
  %v506 = vsel %vm362, %v314, %v490
  %v507 = vsel %vm363, %v313, %v491
  %v508 = vsel %vm364, %v312, %v492
  %v509 = vsel %vm365, %v311, %v493
  %v510 = vsel %vm366, %v310, %v494
  %v511 = vsel %vm367, %v309, %v495
  %v512 = vsel %vm368, %v308, %v496
  %v513 = vsel %vm369, %v307, %v497
  %v514 = vsel %vm370, %v306, %v498
  %v515 = vld [vmem:[%s1 + $0x6] sm:$0x1]
  %v516 = vld [vmem:[%s1 + $0x7] sm:$0x1]
  %v517 = vld [vmem:[%s1 + $0x8] sm:$0x1]
  %v518 = vlaneseq
  %v519 = vshrl.u32 %v518, 7
  %v520 = vsub.s32 0, %v519
  %v521 = vrot.slane %v515, %v520
  %v522 = vmul.f32 %v271, %v521
  %v523 = vmul.f32 %v272, %v521
  %v524 = vmul.f32 %v273, %v521
  %v525 = vmul.f32 %v274, %v521
  %v526 = vmul.f32 %v275, %v521
  %v527 = vmul.f32 %v276, %v521
  %v528 = vmul.f32 %v277, %v521
  %v529 = vmul.f32 %v278, %v521
  %v530 = vmul.f32 %v279, %v521
  %v531 = vmul.f32 %v280, %v521
  %v532 = vmul.f32 %v281, %v521
  %v533 = vmul.f32 %v282, %v521
  %v534 = vmul.f32 %v283, %v521
  %v535 = vmul.f32 %v284, %v521
  %v536 = vmul.f32 %v285, %v521
  %v537 = vmul.f32 %v286, %v521
  %v538 = vsub.f32 1.0, %v515
  %v539 = vlaneseq
  %v540 = vshrl.u32 %v539, 7
  %v541 = vsub.s32 0, %v540
  %v542 = vrot.slane %v538, %v541
  %v543 = vmul.f32 %v499, %v542
  %v544 = vmul.f32 %v500, %v542
  %v545 = vmul.f32 %v501, %v542
  %v546 = vmul.f32 %v502, %v542
  %v547 = vmul.f32 %v503, %v542
  %v548 = vmul.f32 %v504, %v542
  %v549 = vmul.f32 %v505, %v542
  %v550 = vmul.f32 %v506, %v542
  %v551 = vmul.f32 %v507, %v542
  %v552 = vmul.f32 %v508, %v542
  %v553 = vmul.f32 %v509, %v542
  %v554 = vmul.f32 %v510, %v542
  %v555 = vmul.f32 %v511, %v542
  %v556 = vmul.f32 %v512, %v542
  %v557 = vmul.f32 %v513, %v542
  %v558 = vmul.f32 %v514, %v542
  %v559 = vadd.f32 %v522, %v543
  %v560 = vadd.f32 %v523, %v544
  %v561 = vadd.f32 %v524, %v545
  %v562 = vadd.f32 %v525, %v546
  %v563 = vadd.f32 %v526, %v547
  %v564 = vadd.f32 %v527, %v548
  %v565 = vadd.f32 %v528, %v549
  %v566 = vadd.f32 %v529, %v550
  %v567 = vadd.f32 %v530, %v551
  %v568 = vadd.f32 %v531, %v552
  %v569 = vadd.f32 %v532, %v553
  %v570 = vadd.f32 %v533, %v554
  %v571 = vadd.f32 %v534, %v555
  %v572 = vadd.f32 %v535, %v556
  %v573 = vadd.f32 %v536, %v557
  %v574 = vadd.f32 %v537, %v558
  %v575 = vlaneseq
  %v576 = vshrl.u32 %v575, 7
  %v577 = vsub.s32 0, %v576
  %v578 = vrot.slane %v516, %v577
  %v579 = vmul.f32 %v271, %v578
  %v580 = vmul.f32 %v272, %v578
  %v581 = vmul.f32 %v273, %v578
  %v582 = vmul.f32 %v274, %v578
  %v583 = vmul.f32 %v275, %v578
  %v584 = vmul.f32 %v276, %v578
  %v585 = vmul.f32 %v277, %v578
  %v586 = vmul.f32 %v278, %v578
  %v587 = vmul.f32 %v279, %v578
  %v588 = vmul.f32 %v280, %v578
  %v589 = vmul.f32 %v281, %v578
  %v590 = vmul.f32 %v282, %v578
  %v591 = vmul.f32 %v283, %v578
  %v592 = vmul.f32 %v284, %v578
  %v593 = vmul.f32 %v285, %v578
  %v594 = vmul.f32 %v286, %v578
  %v595 = vsub.f32 1.0, %v516
  %v596 = vlaneseq
  %v597 = vshrl.u32 %v596, 7
  %v598 = vsub.s32 0, %v597
  %v599 = vrot.slane %v595, %v598
  %v600 = vmul.f32 %v499, %v599
  %v601 = vmul.f32 %v500, %v599
  %v602 = vmul.f32 %v501, %v599
  %v603 = vmul.f32 %v502, %v599
  %v604 = vmul.f32 %v503, %v599
  %v605 = vmul.f32 %v504, %v599
  %v606 = vmul.f32 %v505, %v599
  %v607 = vmul.f32 %v506, %v599
  %v608 = vmul.f32 %v507, %v599
  %v609 = vmul.f32 %v508, %v599
  %v610 = vmul.f32 %v509, %v599
  %v611 = vmul.f32 %v510, %v599
  %v612 = vmul.f32 %v511, %v599
  %v613 = vmul.f32 %v512, %v599
  %v614 = vmul.f32 %v513, %v599
  %v615 = vmul.f32 %v514, %v599
  %v616 = vadd.f32 %v579, %v600
  %v617 = vadd.f32 %v580, %v601
  %v618 = vadd.f32 %v581, %v602
  %v619 = vadd.f32 %v582, %v603
  %v620 = vadd.f32 %v583, %v604
  %v621 = vadd.f32 %v584, %v605
  %v622 = vadd.f32 %v585, %v606
  %v623 = vadd.f32 %v586, %v607
  %v624 = vadd.f32 %v587, %v608
  %v625 = vadd.f32 %v588, %v609
  %v626 = vadd.f32 %v589, %v610
  %v627 = vadd.f32 %v590, %v611
  %v628 = vadd.f32 %v591, %v612
  %v629 = vadd.f32 %v592, %v613
  %v630 = vadd.f32 %v593, %v614
  %v631 = vadd.f32 %v594, %v615
  %v632 = vlaneseq
  %v633 = vshrl.u32 %v632, 7
  %v634 = vsub.s32 0, %v633
  %v635 = vrot.slane %v517, %v634
  %v636 = vmul.f32 %v271, %v635
  %v637 = vmul.f32 %v272, %v635
  %v638 = vmul.f32 %v273, %v635
  %v639 = vmul.f32 %v274, %v635
  %v640 = vmul.f32 %v275, %v635
  %v641 = vmul.f32 %v276, %v635
  %v642 = vmul.f32 %v277, %v635
  %v643 = vmul.f32 %v278, %v635
  %v644 = vmul.f32 %v279, %v635
  %v645 = vmul.f32 %v280, %v635
  %v646 = vmul.f32 %v281, %v635
  %v647 = vmul.f32 %v282, %v635
  %v648 = vmul.f32 %v283, %v635
  %v649 = vmul.f32 %v284, %v635
  %v650 = vmul.f32 %v285, %v635
  %v651 = vmul.f32 %v286, %v635
  %v652 = vsub.f32 1.0, %v517
  %v653 = vlaneseq
  %v654 = vshrl.u32 %v653, 7
  %v655 = vsub.s32 0, %v654
  %v656 = vrot.slane %v652, %v655
  %v657 = vmul.f32 %v499, %v656
  %v658 = vmul.f32 %v500, %v656
  %v659 = vmul.f32 %v501, %v656
  %v660 = vmul.f32 %v502, %v656
  %v661 = vmul.f32 %v503, %v656
  %v662 = vmul.f32 %v504, %v656
  %v663 = vmul.f32 %v505, %v656
  %v664 = vmul.f32 %v506, %v656
  %v665 = vmul.f32 %v507, %v656
  %v666 = vmul.f32 %v508, %v656
  %v667 = vmul.f32 %v509, %v656
  %v668 = vmul.f32 %v510, %v656
  %v669 = vmul.f32 %v511, %v656
  %v670 = vmul.f32 %v512, %v656
  %v671 = vmul.f32 %v513, %v656
  %v672 = vmul.f32 %v514, %v656
  %v673 = vadd.f32 %v636, %v657
  %v674 = vadd.f32 %v637, %v658
  %v675 = vadd.f32 %v638, %v659
  %v676 = vadd.f32 %v639, %v660
  %v677 = vadd.f32 %v640, %v661
  %v678 = vadd.f32 %v641, %v662
  %v679 = vadd.f32 %v642, %v663
  %v680 = vadd.f32 %v643, %v664
  %v681 = vadd.f32 %v644, %v665
  %v682 = vadd.f32 %v645, %v666
  %v683 = vadd.f32 %v646, %v667
  %v684 = vadd.f32 %v647, %v668
  %v685 = vadd.f32 %v648, %v669
  %v686 = vadd.f32 %v649, %v670
  %v687 = vadd.f32 %v650, %v671
  %v688 = vadd.f32 %v651, %v672
  %v689 = vpack.c.bf16 %v560, %v559
  %v690 = vpack.c.bf16 %v562, %v561
  %v691 = vpack.c.bf16 %v564, %v563
  %v692 = vpack.c.bf16 %v566, %v565
  %v693 = vpack.c.bf16 %v568, %v567
  %v694 = vpack.c.bf16 %v570, %v569
  %v695 = vpack.c.bf16 %v572, %v571
  %v696 = vpack.c.bf16 %v574, %v573
  %v697 = vld [vmem:[%s3] sm:$0xf]
  %v698 = vld [vmem:[%s3 + $0x4] sm:$0xf]
  %v699 = vld [vmem:[%s3 + $0x8] sm:$0xf]
  %v700 = vld [vmem:[%s3 + $0xc] sm:$0xf]
  %v701 = vld [vmem:[%s3 + $0x10] sm:$0xf]
  %v702 = vld [vmem:[%s3 + $0x14] sm:$0xf]
  %v703 = vld [vmem:[%s3 + $0x18] sm:$0xf]
  %v704 = vld [vmem:[%s3 + $0x1c] sm:$0xf]
  %v705 = vld [vmem:[%s3 + $0x20] sm:$0xf]
  %v706 = vld [vmem:[%s3 + $0x24] sm:$0xf]
  %v707 = vld [vmem:[%s3 + $0x28] sm:$0xf]
  %v708 = vld [vmem:[%s3 + $0x2c] sm:$0xf]
  %v709 = vld [vmem:[%s3 + $0x30] sm:$0xf]
  %v710 = vld [vmem:[%s3 + $0x34] sm:$0xf]
  %v711 = vld [vmem:[%s3 + $0x38] sm:$0xf]
  %v712 = vld [vmem:[%s3 + $0x3c] sm:$0xf]
  %v729 = vunpack.c.l.b16 %v697
  %v730 = vunpack.c.l.b16 %v698
  %v731 = vunpack.c.l.b16 %v699
  %v732 = vunpack.c.l.b16 %v700
  %v733 = vunpack.c.l.b16 %v701
  %v734 = vunpack.c.l.b16 %v702
  %v735 = vunpack.c.l.b16 %v703
  %v736 = vunpack.c.l.b16 %v704
  %v737 = vunpack.c.l.b16 %v705
  %v738 = vunpack.c.l.b16 %v706
  %v739 = vunpack.c.l.b16 %v707
  %v740 = vunpack.c.l.b16 %v708
  %v741 = vunpack.c.l.b16 %v709
  %v742 = vunpack.c.l.b16 %v710
  %v743 = vunpack.c.l.b16 %v711
  %v744 = vunpack.c.l.b16 %v712
  %v745 = vpack.c.b16 %v730, %v729
  %v746 = vpack.c.b16 %v732, %v731
  %v747 = vpack.c.b16 %v734, %v733
  %v748 = vpack.c.b16 %v736, %v735
  %v749 = vpack.c.b16 %v738, %v737
  %v750 = vpack.c.b16 %v740, %v739
  %v751 = vpack.c.b16 %v742, %v741
  %v752 = vpack.c.b16 %v744, %v743
  %761 = vmatprep.subr.bf16.mxu0 0
  %762 = vmatpush1.bf16.msra.mxu0 %v752
  %763 = vmatprep.subr.bf16.mxu0 0
  %764 = vmatpush1.bf16.msra.mxu0 %v751
  %765 = vmatprep.subr.bf16.mxu0 0
  %766 = vmatpush1.bf16.msra.mxu0 %v750
  %767 = vmatprep.subr.bf16.mxu0 0
  %768 = vmatpush1.bf16.msra.mxu0 %v749
  %769 = vmatprep.subr.bf16.mxu0 0
  %770 = vmatpush1.bf16.msra.mxu0 %v748
  %771 = vmatprep.subr.bf16.mxu0 0
  %772 = vmatpush1.bf16.msra.mxu0 %v747
  %773 = vmatprep.subr.bf16.mxu0 0
  %774 = vmatpush1.bf16.msra.mxu0 %v746
  %775 = vmatprep.subr.bf16.mxu0 0
  %776 = vmatpush1.bf16.msra.mxu0 %v745
  %777 = vmatprep.subr.bf16.mxu0 0
  %778 = vmatpush2.bf16.msra.mxu0 0
  %779 = vmatprep.subr.bf16.mxu0 0
  %780 = vmatpush2.bf16.msra.mxu0 0
  %781 = vmatprep.subr.bf16.mxu0 0
  %782 = vmatpush2.bf16.msra.mxu0 0
  %783 = vmatprep.subr.bf16.mxu0 0
  %784 = vmatpush2.bf16.msra.mxu0 0
  %785 = vmatprep.subr.bf16.mxu0 0
  %786 = vmatpush2.bf16.msra.mxu0 0
  %787 = vmatprep.subr.bf16.mxu0 0
  %788 = vmatpush2.bf16.msra.mxu0 0
  %789 = vmatprep.subr.bf16.mxu0 0
  %790 = vmatpush2.bf16.msra.mxu0 0
  %791 = vmatprep.subr.bf16.mxu0 0
  %792 = vmatpush2.bf16.msra.mxu0 0
  %793 = vmatprep.mubr.bf16.mxu0 0
  %794 = vmatmul.mubr.bf16.gmra.mxu0 %v689
  %v795 = vpop.f32.mrf.mxu0
  %v796 = vadd.f32 0.0, %v795
  %v797 = vpop.f32.mrf.mxu0
  %v798 = vpop.f32.mrf.mxu0
  %v799 = vadd.f32 0.0, %v798
  %v800 = vpop.f32.mrf.mxu0
  %801 = vmatprep.mubr.bf16.mxu0 0
  %802 = vmatmul.mubr.bf16.gmra.mxu0 %v690
  %v803 = vpop.f32.mrf.mxu0
  %v804 = vadd.f32 0.0, %v803
  %v805 = vpop.f32.mrf.mxu0
  %v806 = vpop.f32.mrf.mxu0
  %v807 = vadd.f32 0.0, %v806
  %v808 = vpop.f32.mrf.mxu0
  %809 = vmatprep.mubr.bf16.mxu0 0
  %810 = vmatmul.mubr.bf16.gmra.mxu0 %v691
  %v811 = vpop.f32.mrf.mxu0
  %v812 = vadd.f32 0.0, %v811
  %v813 = vpop.f32.mrf.mxu0
  %v814 = vpop.f32.mrf.mxu0
  %v815 = vadd.f32 0.0, %v814
  %v816 = vpop.f32.mrf.mxu0
  %817 = vmatprep.mubr.bf16.mxu0 0
  %818 = vmatmul.mubr.bf16.gmra.mxu0 %v692
  %v819 = vpop.f32.mrf.mxu0
  %v820 = vadd.f32 0.0, %v819
  %v821 = vpop.f32.mrf.mxu0
  %v822 = vpop.f32.mrf.mxu0
  %v823 = vadd.f32 0.0, %v822
  %v824 = vpop.f32.mrf.mxu0
  %825 = vmatprep.mubr.bf16.mxu0 0
  %826 = vmatmul.mubr.bf16.gmra.mxu0 %v693
  %v827 = vpop.f32.mrf.mxu0
  %v828 = vadd.f32 0.0, %v827
  %v829 = vpop.f32.mrf.mxu0
  %v830 = vpop.f32.mrf.mxu0
  %v831 = vadd.f32 0.0, %v830
  %v832 = vpop.f32.mrf.mxu0
  %833 = vmatprep.mubr.bf16.mxu0 0
  %834 = vmatmul.mubr.bf16.gmra.mxu0 %v694
  %v835 = vpop.f32.mrf.mxu0
  %v836 = vadd.f32 0.0, %v835
  %v837 = vpop.f32.mrf.mxu0
  %v838 = vpop.f32.mrf.mxu0
  %v839 = vadd.f32 0.0, %v838
  %v840 = vpop.f32.mrf.mxu0
  %841 = vmatprep.mubr.bf16.mxu0 0
  %842 = vmatmul.mubr.bf16.gmra.mxu0 %v695
  %v843 = vpop.f32.mrf.mxu0
  %v844 = vadd.f32 0.0, %v843
  %v845 = vpop.f32.mrf.mxu0
  %v846 = vpop.f32.mrf.mxu0
  %v847 = vadd.f32 0.0, %v846
  %v848 = vpop.f32.mrf.mxu0
  %849 = vmatprep.mubr.bf16.mxu0 0
  %850 = vmatmul.mubr.bf16.gmra.mxu0 %v696
  %v851 = vpop.f32.mrf.mxu0
  %v852 = vadd.f32 0.0, %v851
  %v853 = vpop.f32.mrf.mxu0
  %v854 = vpop.f32.mrf.mxu0
  %v855 = vadd.f32 0.0, %v854
  %v856 = vpop.f32.mrf.mxu0
  %857 = vdwg.mxu0
  %858 = vst [vmem:[#allocation2] sm:$0xff] %v796
  %859 = vst [vmem:[#allocation2 + $0x8] sm:$0xff] %v799
  %860 = vst [vmem:[#allocation2 + $0x10] sm:$0xff] %v804
  %861 = vst [vmem:[#allocation2 + $0x18] sm:$0xff] %v807
  %862 = vst [vmem:[#allocation2 + $0x20] sm:$0xff] %v812
  %863 = vst [vmem:[#allocation2 + $0x28] sm:$0xff] %v815
  %864 = vst [vmem:[#allocation2 + $0x30] sm:$0xff] %v820
  %865 = vst [vmem:[#allocation2 + $0x38] sm:$0xff] %v823
  %866 = vst [vmem:[#allocation2 + $0x40] sm:$0xff] %v828
  %867 = vst [vmem:[#allocation2 + $0x48] sm:$0xff] %v831
  %868 = vst [vmem:[#allocation2 + $0x50] sm:$0xff] %v836
  %869 = vst [vmem:[#allocation2 + $0x58] sm:$0xff] %v839
  %870 = vst [vmem:[#allocation2 + $0x60] sm:$0xff] %v844
  %871 = vst [vmem:[#allocation2 + $0x68] sm:$0xff] %v847
  %872 = vst [vmem:[#allocation2 + $0x70] sm:$0xff] %v852
  %873 = vst [vmem:[#allocation2 + $0x78] sm:$0xff] %v855
  %v874 = vpack.c.bf16 %v617, %v616
  %v875 = vpack.c.bf16 %v619, %v618
  %v876 = vpack.c.bf16 %v621, %v620
  %v877 = vpack.c.bf16 %v623, %v622
  %v878 = vpack.c.bf16 %v625, %v624
  %v879 = vpack.c.bf16 %v627, %v626
  %v880 = vpack.c.bf16 %v629, %v628
  %v881 = vpack.c.bf16 %v631, %v630
  %v882 = vld [vmem:[%s4] sm:$0xf]
  %v883 = vld [vmem:[%s4 + $0x4] sm:$0xf]
  %v884 = vld [vmem:[%s4 + $0x8] sm:$0xf]
  %v885 = vld [vmem:[%s4 + $0xc] sm:$0xf]
  %v886 = vld [vmem:[%s4 + $0x10] sm:$0xf]
  %v887 = vld [vmem:[%s4 + $0x14] sm:$0xf]
  %v888 = vld [vmem:[%s4 + $0x18] sm:$0xf]
  %v889 = vld [vmem:[%s4 + $0x1c] sm:$0xf]
  %v890 = vld [vmem:[%s4 + $0x20] sm:$0xf]
  %v891 = vld [vmem:[%s4 + $0x24] sm:$0xf]
  %v892 = vld [vmem:[%s4 + $0x28] sm:$0xf]
  %v893 = vld [vmem:[%s4 + $0x2c] sm:$0xf]
  %v894 = vld [vmem:[%s4 + $0x30] sm:$0xf]
  %v895 = vld [vmem:[%s4 + $0x34] sm:$0xf]
  %v896 = vld [vmem:[%s4 + $0x38] sm:$0xf]
  %v897 = vld [vmem:[%s4 + $0x3c] sm:$0xf]
  %v914 = vunpack.c.l.b16 %v882
  %v915 = vunpack.c.l.b16 %v883
  %v916 = vunpack.c.l.b16 %v884
  %v917 = vunpack.c.l.b16 %v885
  %v918 = vunpack.c.l.b16 %v886
  %v919 = vunpack.c.l.b16 %v887
  %v920 = vunpack.c.l.b16 %v888
  %v921 = vunpack.c.l.b16 %v889
  %v922 = vunpack.c.l.b16 %v890
  %v923 = vunpack.c.l.b16 %v891
  %v924 = vunpack.c.l.b16 %v892
  %v925 = vunpack.c.l.b16 %v893
  %v926 = vunpack.c.l.b16 %v894
  %v927 = vunpack.c.l.b16 %v895
  %v928 = vunpack.c.l.b16 %v896
  %v929 = vunpack.c.l.b16 %v897
  %v930 = vpack.c.b16 %v915, %v914
  %v931 = vpack.c.b16 %v917, %v916
  %v932 = vpack.c.b16 %v919, %v918
  %v933 = vpack.c.b16 %v921, %v920
  %v934 = vpack.c.b16 %v923, %v922
  %v935 = vpack.c.b16 %v925, %v924
  %v936 = vpack.c.b16 %v927, %v926
  %v937 = vpack.c.b16 %v929, %v928
  %946 = vmatprep.subr.bf16.mxu0 0
  %947 = vmatpush1.bf16.msra.mxu0 %v937
  %948 = vmatprep.subr.bf16.mxu0 0
  %949 = vmatpush1.bf16.msra.mxu0 %v936
  %950 = vmatprep.subr.bf16.mxu0 0
  %951 = vmatpush1.bf16.msra.mxu0 %v935
  %952 = vmatprep.subr.bf16.mxu0 0
  %953 = vmatpush1.bf16.msra.mxu0 %v934
  %954 = vmatprep.subr.bf16.mxu0 0
  %955 = vmatpush1.bf16.msra.mxu0 %v933
  %956 = vmatprep.subr.bf16.mxu0 0
  %957 = vmatpush1.bf16.msra.mxu0 %v932
  %958 = vmatprep.subr.bf16.mxu0 0
  %959 = vmatpush1.bf16.msra.mxu0 %v931
  %960 = vmatprep.subr.bf16.mxu0 0
  %961 = vmatpush1.bf16.msra.mxu0 %v930
  %962 = vmatprep.subr.bf16.mxu0 0
  %963 = vmatpush2.bf16.msra.mxu0 0
  %964 = vmatprep.subr.bf16.mxu0 0
  %965 = vmatpush2.bf16.msra.mxu0 0
  %966 = vmatprep.subr.bf16.mxu0 0
  %967 = vmatpush2.bf16.msra.mxu0 0
  %968 = vmatprep.subr.bf16.mxu0 0
  %969 = vmatpush2.bf16.msra.mxu0 0
  %970 = vmatprep.subr.bf16.mxu0 0
  %971 = vmatpush2.bf16.msra.mxu0 0
  %972 = vmatprep.subr.bf16.mxu0 0
  %973 = vmatpush2.bf16.msra.mxu0 0
  %974 = vmatprep.subr.bf16.mxu0 0
  %975 = vmatpush2.bf16.msra.mxu0 0
  %976 = vmatprep.subr.bf16.mxu0 0
  %977 = vmatpush2.bf16.msra.mxu0 0
  %978 = vmatprep.mubr.bf16.mxu0 0
  %979 = vmatmul.mubr.bf16.gmra.mxu0 %v874
  %v980 = vpop.f32.mrf.mxu0
  %v981 = vadd.f32 0.0, %v980
  %v982 = vpop.f32.mrf.mxu0
  %v983 = vpop.f32.mrf.mxu0
  %v984 = vadd.f32 0.0, %v983
  %v985 = vpop.f32.mrf.mxu0
  %986 = vmatprep.mubr.bf16.mxu0 0
  %987 = vmatmul.mubr.bf16.gmra.mxu0 %v875
  %v988 = vpop.f32.mrf.mxu0
  %v989 = vadd.f32 0.0, %v988
  %v990 = vpop.f32.mrf.mxu0
  %v991 = vpop.f32.mrf.mxu0
  %v992 = vadd.f32 0.0, %v991
  %v993 = vpop.f32.mrf.mxu0
  %994 = vmatprep.mubr.bf16.mxu0 0
  %995 = vmatmul.mubr.bf16.gmra.mxu0 %v876
  %v996 = vpop.f32.mrf.mxu0
  %v997 = vadd.f32 0.0, %v996
  %v998 = vpop.f32.mrf.mxu0
  %v999 = vpop.f32.mrf.mxu0
  %v1000 = vadd.f32 0.0, %v999
  %v1001 = vpop.f32.mrf.mxu0
  %1002 = vmatprep.mubr.bf16.mxu0 0
  %1003 = vmatmul.mubr.bf16.gmra.mxu0 %v877
  %v1004 = vpop.f32.mrf.mxu0
  %v1005 = vadd.f32 0.0, %v1004
  %v1006 = vpop.f32.mrf.mxu0
  %v1007 = vpop.f32.mrf.mxu0
  %v1008 = vadd.f32 0.0, %v1007
  %v1009 = vpop.f32.mrf.mxu0
  %1010 = vmatprep.mubr.bf16.mxu0 0
  %1011 = vmatmul.mubr.bf16.gmra.mxu0 %v878
  %v1012 = vpop.f32.mrf.mxu0
  %v1013 = vadd.f32 0.0, %v1012
  %v1014 = vpop.f32.mrf.mxu0
  %v1015 = vpop.f32.mrf.mxu0
  %v1016 = vadd.f32 0.0, %v1015
  %v1017 = vpop.f32.mrf.mxu0
  %1018 = vmatprep.mubr.bf16.mxu0 0
  %1019 = vmatmul.mubr.bf16.gmra.mxu0 %v879
  %v1020 = vpop.f32.mrf.mxu0
  %v1021 = vadd.f32 0.0, %v1020
  %v1022 = vpop.f32.mrf.mxu0
  %v1023 = vpop.f32.mrf.mxu0
  %v1024 = vadd.f32 0.0, %v1023
  %v1025 = vpop.f32.mrf.mxu0
  %1026 = vmatprep.mubr.bf16.mxu0 0
  %1027 = vmatmul.mubr.bf16.gmra.mxu0 %v880
  %v1028 = vpop.f32.mrf.mxu0
  %v1029 = vadd.f32 0.0, %v1028
  %v1030 = vpop.f32.mrf.mxu0
  %v1031 = vpop.f32.mrf.mxu0
  %v1032 = vadd.f32 0.0, %v1031
  %v1033 = vpop.f32.mrf.mxu0
  %1034 = vmatprep.mubr.bf16.mxu0 0
  %1035 = vmatmul.mubr.bf16.gmra.mxu0 %v881
  %v1036 = vpop.f32.mrf.mxu0
  %v1037 = vadd.f32 0.0, %v1036
  %v1038 = vpop.f32.mrf.mxu0
  %v1039 = vpop.f32.mrf.mxu0
  %v1040 = vadd.f32 0.0, %v1039
  %v1041 = vpop.f32.mrf.mxu0
  %1042 = vdwg.mxu0
  %1043 = vst [vmem:[#allocation3] sm:$0xff] %v981
  %1044 = vst [vmem:[#allocation3 + $0x8] sm:$0xff] %v984
  %1045 = vst [vmem:[#allocation3 + $0x10] sm:$0xff] %v989
  %1046 = vst [vmem:[#allocation3 + $0x18] sm:$0xff] %v992
  %1047 = vst [vmem:[#allocation3 + $0x20] sm:$0xff] %v997
  %1048 = vst [vmem:[#allocation3 + $0x28] sm:$0xff] %v1000
  %1049 = vst [vmem:[#allocation3 + $0x30] sm:$0xff] %v1005
  %1050 = vst [vmem:[#allocation3 + $0x38] sm:$0xff] %v1008
  %1051 = vst [vmem:[#allocation3 + $0x40] sm:$0xff] %v1013
  %1052 = vst [vmem:[#allocation3 + $0x48] sm:$0xff] %v1016
  %1053 = vst [vmem:[#allocation3 + $0x50] sm:$0xff] %v1021
  %1054 = vst [vmem:[#allocation3 + $0x58] sm:$0xff] %v1024
  %1055 = vst [vmem:[#allocation3 + $0x60] sm:$0xff] %v1029
  %1056 = vst [vmem:[#allocation3 + $0x68] sm:$0xff] %v1032
  %1057 = vst [vmem:[#allocation3 + $0x70] sm:$0xff] %v1037
  %1058 = vst [vmem:[#allocation3 + $0x78] sm:$0xff] %v1040
  %v1059 = vpack.c.bf16 %v674, %v673
  %v1060 = vpack.c.bf16 %v676, %v675
  %v1061 = vpack.c.bf16 %v678, %v677
  %v1062 = vpack.c.bf16 %v680, %v679
  %v1063 = vpack.c.bf16 %v682, %v681
  %v1064 = vpack.c.bf16 %v684, %v683
  %v1065 = vpack.c.bf16 %v686, %v685
  %v1066 = vpack.c.bf16 %v688, %v687
  %v1067 = vld [vmem:[%s5] sm:$0xf]
  %v1068 = vld [vmem:[%s5 + $0x4] sm:$0xf]
  %v1069 = vld [vmem:[%s5 + $0x8] sm:$0xf]
  %v1070 = vld [vmem:[%s5 + $0xc] sm:$0xf]
  %v1071 = vld [vmem:[%s5 + $0x10] sm:$0xf]
  %v1072 = vld [vmem:[%s5 + $0x14] sm:$0xf]
  %v1073 = vld [vmem:[%s5 + $0x18] sm:$0xf]
  %v1074 = vld [vmem:[%s5 + $0x1c] sm:$0xf]
  %v1075 = vld [vmem:[%s5 + $0x20] sm:$0xf]
  %v1076 = vld [vmem:[%s5 + $0x24] sm:$0xf]
  %v1077 = vld [vmem:[%s5 + $0x28] sm:$0xf]
  %v1078 = vld [vmem:[%s5 + $0x2c] sm:$0xf]
  %v1079 = vld [vmem:[%s5 + $0x30] sm:$0xf]
  %v1080 = vld [vmem:[%s5 + $0x34] sm:$0xf]
  %v1081 = vld [vmem:[%s5 + $0x38] sm:$0xf]
  %v1082 = vld [vmem:[%s5 + $0x3c] sm:$0xf]
  %v1099 = vunpack.c.l.b16 %v1067
  %v1100 = vunpack.c.l.b16 %v1068
  %v1101 = vunpack.c.l.b16 %v1069
  %v1102 = vunpack.c.l.b16 %v1070
  %v1103 = vunpack.c.l.b16 %v1071
  %v1104 = vunpack.c.l.b16 %v1072
  %v1105 = vunpack.c.l.b16 %v1073
  %v1106 = vunpack.c.l.b16 %v1074
  %v1107 = vunpack.c.l.b16 %v1075
  %v1108 = vunpack.c.l.b16 %v1076
  %v1109 = vunpack.c.l.b16 %v1077
  %v1110 = vunpack.c.l.b16 %v1078
  %v1111 = vunpack.c.l.b16 %v1079
  %v1112 = vunpack.c.l.b16 %v1080
  %v1113 = vunpack.c.l.b16 %v1081
  %v1114 = vunpack.c.l.b16 %v1082
  %v1115 = vpack.c.b16 %v1100, %v1099
  %v1116 = vpack.c.b16 %v1102, %v1101
  %v1117 = vpack.c.b16 %v1104, %v1103
  %v1118 = vpack.c.b16 %v1106, %v1105
  %v1119 = vpack.c.b16 %v1108, %v1107
  %v1120 = vpack.c.b16 %v1110, %v1109
  %v1121 = vpack.c.b16 %v1112, %v1111
  %v1122 = vpack.c.b16 %v1114, %v1113
  %1131 = vmatprep.subr.bf16.mxu0 0
  %1132 = vmatpush1.bf16.msra.mxu0 %v1122
  %1133 = vmatprep.subr.bf16.mxu0 0
  %1134 = vmatpush1.bf16.msra.mxu0 %v1121
  %1135 = vmatprep.subr.bf16.mxu0 0
  %1136 = vmatpush1.bf16.msra.mxu0 %v1120
  %1137 = vmatprep.subr.bf16.mxu0 0
  %1138 = vmatpush1.bf16.msra.mxu0 %v1119
  %1139 = vmatprep.subr.bf16.mxu0 0
  %1140 = vmatpush1.bf16.msra.mxu0 %v1118
  %1141 = vmatprep.subr.bf16.mxu0 0
  %1142 = vmatpush1.bf16.msra.mxu0 %v1117
  %1143 = vmatprep.subr.bf16.mxu0 0
  %1144 = vmatpush1.bf16.msra.mxu0 %v1116
  %1145 = vmatprep.subr.bf16.mxu0 0
  %1146 = vmatpush1.bf16.msra.mxu0 %v1115
  %1147 = vmatprep.subr.bf16.mxu0 0
  %1148 = vmatpush2.bf16.msra.mxu0 0
  %1149 = vmatprep.subr.bf16.mxu0 0
  %1150 = vmatpush2.bf16.msra.mxu0 0
  %1151 = vmatprep.subr.bf16.mxu0 0
  %1152 = vmatpush2.bf16.msra.mxu0 0
  %1153 = vmatprep.subr.bf16.mxu0 0
  %1154 = vmatpush2.bf16.msra.mxu0 0
  %1155 = vmatprep.subr.bf16.mxu0 0
  %1156 = vmatpush2.bf16.msra.mxu0 0
  %1157 = vmatprep.subr.bf16.mxu0 0
  %1158 = vmatpush2.bf16.msra.mxu0 0
  %1159 = vmatprep.subr.bf16.mxu0 0
  %1160 = vmatpush2.bf16.msra.mxu0 0
  %1161 = vmatprep.subr.bf16.mxu0 0
  %1162 = vmatpush2.bf16.msra.mxu0 0
  %1163 = vmatprep.mubr.bf16.mxu0 0
  %1164 = vmatmul.mubr.bf16.gmra.mxu0 %v1059
  %v1165 = vpop.f32.mrf.mxu0
  %v1166 = vadd.f32 0.0, %v1165
  %v1167 = vpop.f32.mrf.mxu0
  %v1168 = vpop.f32.mrf.mxu0
  %v1169 = vadd.f32 0.0, %v1168
  %v1170 = vpop.f32.mrf.mxu0
  %1171 = vmatprep.mubr.bf16.mxu0 0
  %1172 = vmatmul.mubr.bf16.gmra.mxu0 %v1060
  %v1173 = vpop.f32.mrf.mxu0
  %v1174 = vadd.f32 0.0, %v1173
  %v1175 = vpop.f32.mrf.mxu0
  %v1176 = vpop.f32.mrf.mxu0
  %v1177 = vadd.f32 0.0, %v1176
  %v1178 = vpop.f32.mrf.mxu0
  %1179 = vmatprep.mubr.bf16.mxu0 0
  %1180 = vmatmul.mubr.bf16.gmra.mxu0 %v1061
  %v1181 = vpop.f32.mrf.mxu0
  %v1182 = vadd.f32 0.0, %v1181
  %v1183 = vpop.f32.mrf.mxu0
  %v1184 = vpop.f32.mrf.mxu0
  %v1185 = vadd.f32 0.0, %v1184
  %v1186 = vpop.f32.mrf.mxu0
  %1187 = vmatprep.mubr.bf16.mxu0 0
  %1188 = vmatmul.mubr.bf16.gmra.mxu0 %v1062
  %v1189 = vpop.f32.mrf.mxu0
  %v1190 = vadd.f32 0.0, %v1189
  %v1191 = vpop.f32.mrf.mxu0
  %v1192 = vpop.f32.mrf.mxu0
  %v1193 = vadd.f32 0.0, %v1192
  %v1194 = vpop.f32.mrf.mxu0
  %1195 = vmatprep.mubr.bf16.mxu0 0
  %1196 = vmatmul.mubr.bf16.gmra.mxu0 %v1063
  %v1197 = vpop.f32.mrf.mxu0
  %v1198 = vadd.f32 0.0, %v1197
  %v1199 = vpop.f32.mrf.mxu0
  %v1200 = vpop.f32.mrf.mxu0
  %v1201 = vadd.f32 0.0, %v1200
  %v1202 = vpop.f32.mrf.mxu0
  %1203 = vmatprep.mubr.bf16.mxu0 0
  %1204 = vmatmul.mubr.bf16.gmra.mxu0 %v1064
  %v1205 = vpop.f32.mrf.mxu0
  %v1206 = vadd.f32 0.0, %v1205
  %v1207 = vpop.f32.mrf.mxu0
  %v1208 = vpop.f32.mrf.mxu0
  %v1209 = vadd.f32 0.0, %v1208
  %v1210 = vpop.f32.mrf.mxu0
  %1211 = vmatprep.mubr.bf16.mxu0 0
  %1212 = vmatmul.mubr.bf16.gmra.mxu0 %v1065
  %v1213 = vpop.f32.mrf.mxu0
  %v1214 = vadd.f32 0.0, %v1213
  %v1215 = vpop.f32.mrf.mxu0
  %v1216 = vpop.f32.mrf.mxu0
  %v1217 = vadd.f32 0.0, %v1216
  %v1218 = vpop.f32.mrf.mxu0
  %1219 = vmatprep.mubr.bf16.mxu0 0
  %1220 = vmatmul.mubr.bf16.gmra.mxu0 %v1066
  %v1221 = vpop.f32.mrf.mxu0
  %v1222 = vadd.f32 0.0, %v1221
  %v1223 = vpop.f32.mrf.mxu0
  %v1224 = vpop.f32.mrf.mxu0
  %v1225 = vadd.f32 0.0, %v1224
  %v1226 = vpop.f32.mrf.mxu0
  %1227 = vdwg.mxu0
  %v1228 = vxor.u32 %v1166, 2147483648
  %v1229 = vxor.u32 %v1169, 2147483648
  %v1230 = vxor.u32 %v1174, 2147483648
  %v1231 = vxor.u32 %v1177, 2147483648
  %v1232 = vxor.u32 %v1182, 2147483648
  %v1233 = vxor.u32 %v1185, 2147483648
  %v1234 = vxor.u32 %v1190, 2147483648
  %v1235 = vxor.u32 %v1193, 2147483648
  %v1236 = vxor.u32 %v1198, 2147483648
  %v1237 = vxor.u32 %v1201, 2147483648
  %v1238 = vxor.u32 %v1206, 2147483648
  %v1239 = vxor.u32 %v1209, 2147483648
  %v1240 = vxor.u32 %v1214, 2147483648
  %v1241 = vxor.u32 %v1217, 2147483648
  %v1242 = vxor.u32 %v1222, 2147483648
  %v1243 = vxor.u32 %v1225, 2147483648
  %v1244 = vmul.f32 %v1228, 1.442695
  %v1245 = vpow.pop %v1244
  %v1246 = vmul.f32 %v1229, 1.442695
  %v1247 = vpow.pop %v1246
  %v1248 = vmul.f32 %v1230, 1.442695
  %v1249 = vpow.pop %v1248
  %v1250 = vmul.f32 %v1231, 1.442695
  %v1251 = vpow.pop %v1250
  %v1252 = vmul.f32 %v1232, 1.442695
  %v1253 = vpow.pop %v1252
  %v1254 = vmul.f32 %v1233, 1.442695
  %v1255 = vpow.pop %v1254
  %v1256 = vmul.f32 %v1234, 1.442695
  %v1257 = vpow.pop %v1256
  %v1258 = vmul.f32 %v1235, 1.442695
  %v1259 = vpow.pop %v1258
  %v1260 = vmul.f32 %v1236, 1.442695
  %v1261 = vpow.pop %v1260
  %v1262 = vmul.f32 %v1237, 1.442695
  %v1263 = vpow.pop %v1262
  %v1264 = vmul.f32 %v1238, 1.442695
  %v1265 = vpow.pop %v1264
  %v1266 = vmul.f32 %v1239, 1.442695
  %v1267 = vpow.pop %v1266
  %v1268 = vmul.f32 %v1240, 1.442695
  %v1269 = vpow.pop %v1268
  %v1270 = vmul.f32 %v1241, 1.442695
  %v1271 = vpow.pop %v1270
  %v1272 = vmul.f32 %v1242, 1.442695
  %v1273 = vpow.pop %v1272
  %v1274 = vmul.f32 %v1243, 1.442695
  %v1275 = vpow.pop %v1274
  %v1276 = vadd.f32 %v1245, 1.0
  %v1277 = vadd.f32 %v1247, 1.0
  %v1278 = vadd.f32 %v1249, 1.0
  %v1279 = vadd.f32 %v1251, 1.0
  %v1280 = vadd.f32 %v1253, 1.0
  %v1281 = vadd.f32 %v1255, 1.0
  %v1282 = vadd.f32 %v1257, 1.0
  %v1283 = vadd.f32 %v1259, 1.0
  %v1284 = vadd.f32 %v1261, 1.0
  %v1285 = vadd.f32 %v1263, 1.0
  %v1286 = vadd.f32 %v1265, 1.0
  %v1287 = vadd.f32 %v1267, 1.0
  %v1288 = vadd.f32 %v1269, 1.0
  %v1289 = vadd.f32 %v1271, 1.0
  %v1290 = vadd.f32 %v1273, 1.0
  %v1291 = vadd.f32 %v1275, 1.0
  %v1292 = vrcp.pop %v1276
  %v1293 = vmul.f32 1.0, %v1292
  %v1294 = vrcp.pop %v1277
  %v1295 = vmul.f32 1.0, %v1294
  %v1296 = vrcp.pop %v1278
  %v1297 = vmul.f32 1.0, %v1296
  %v1298 = vrcp.pop %v1279
  %v1299 = vmul.f32 1.0, %v1298
  %v1300 = vrcp.pop %v1280
  %v1301 = vmul.f32 1.0, %v1300
  %v1302 = vrcp.pop %v1281
  %v1303 = vmul.f32 1.0, %v1302
  %v1304 = vrcp.pop %v1282
  %v1305 = vmul.f32 1.0, %v1304
  %v1306 = vrcp.pop %v1283
  %v1307 = vmul.f32 1.0, %v1306
  %v1308 = vrcp.pop %v1284
  %v1309 = vmul.f32 1.0, %v1308
  %v1310 = vrcp.pop %v1285
  %v1311 = vmul.f32 1.0, %v1310
  %v1312 = vrcp.pop %v1286
  %v1313 = vmul.f32 1.0, %v1312
  %v1314 = vrcp.pop %v1287
  %v1315 = vmul.f32 1.0, %v1314
  %v1316 = vrcp.pop %v1288
  %v1317 = vmul.f32 1.0, %v1316
  %v1318 = vrcp.pop %v1289
  %v1319 = vmul.f32 1.0, %v1318
  %v1320 = vrcp.pop %v1290
  %v1321 = vmul.f32 1.0, %v1320
  %v1322 = vrcp.pop %v1291
  %v1323 = vmul.f32 1.0, %v1322
  %v1324 = vld [vmem:[%s1 + $0xd] sm:$0x1]
  %v1325 = vlaneseq
  %v1326 = vshrl.u32 %v1325, 7
  %v1327 = vsub.s32 0, %v1326
  %v1328 = vrot.slane %v1324, %v1327
  %v1329 = vld [vmem:[%s1 + $0xe] sm:$0x1]
  %v1330 = vlaneseq
  %v1331 = vshrl.u32 %v1330, 7
  %v1332 = vsub.s32 0, %v1331
  %v1333 = vrot.slane %v1329, %v1332
  loop: start=0, step=1, limit=8
  $region42: #{_lambda_.6} parent=0 // loop_pre_header
    _
  $region43: #{_lambda_.6} parent=0 // loop_header
    %s1335 = sphi 0, %s1339
    %p1336 = scmp.ge.s32.totalorder %s1335, 8
    %v1340 = vphi 0.0, %v1651
    %v1341 = vphi 0.0, %v1653
    %v1342 = vphi -1e+38, %v1654
  $region44: #{_lambda_.6} parent=0 // loop_header_branch
    %1338 = sbr.rel (%p1336) target = $region48
  $region45: #{_lambda_.6} parent=0 // loop_body
    %s1343 = smul.u32 %s1335, 16
    %s1344 = scalar_lea.vmem [#allocation2], %s1343
    %v1345 = vld [vmem:[%s1344] sm:$0x3]
    %s1346 = scalar_lea.vmem [#allocation3], %s1343
    %v1347 = vld [vmem:[%s1346] sm:$0x3]
    %v1348 = vadd.f32 %v1333, %v1345
    %v1349 = vsub.f32 %v1342, %v1348
    %v1350 = vand.u32 2147483647, %v1349
    %v1351 = vsub.f32 0.0, %v1350
    %v1352 = vmul.f32 %v1351, 1.442695
    %v1353 = vpow.pop %v1352
    %vm1354 = vcmp.ge.f32.partialorder %v1349, 0.0
    %v1355 = vsel %vm1354, 1.0, %v1353
    %v1356 = vsel %vm1354, %v1353, 1.0
    %v1357 = vmul.f32 %v1355, %v1340
    %v1358 = vmul.f32 %v1356, %v1347
    %v1359 = vadd.f32 %v1357, %v1358
    %v1360 = vmul.f32 %v1355, %v1341
    %v1361 = vadd.f32 %v1360, %v1356
    %v1362 = vrcp.pop %v1361
    %v1363 = vmul.f32 %v1359, %v1362
    %s1364 = scalar_lea.vmem [#allocation4], %s1343
    %1365 = vst [vmem:[%s1364] sm:$0x3] %v1363
    %v1366 = vadd.f32 %v1328, %v1342
    %v1367 = vsub.f32 %v1366, %v1345
    %v1368 = vand.u32 2147483647, %v1367
    %v1369 = vsub.f32 0.0, %v1368
    %v1370 = vmul.f32 %v1369, 1.442695
    %v1371 = vpow.pop %v1370
    %vm1372 = vcmp.ge.f32.partialorder %v1367, 0.0
    %v1373 = vsel %vm1372, 1.0, %v1371
    %v1374 = vsel %vm1372, %v1371, 1.0
    %v1375 = vmul.f32 %v1373, %v1340
    %v1376 = vmul.f32 %v1374, %v1347
    %v1377 = vadd.f32 %v1375, %v1376
    %v1378 = vmul.f32 %v1373, %v1341
    %v1379 = vadd.f32 %v1378, %v1374
    %v1380 = vmax.f32 %v1366, %v1345
    %s1381 = smul.u32 %s1335, 8
    %s1382 = sadd.s32 %s1381, 1
    %s1383 = smul.u32 %s1382, 2
    %s1384 = scalar_lea.vmem [#allocation2], %s1383
    %v1385 = vld [vmem:[%s1384] sm:$0x3]
    %s1386 = scalar_lea.vmem [#allocation3], %s1383
    %v1387 = vld [vmem:[%s1386] sm:$0x3]
    %v1388 = vadd.f32 %v1333, %v1385
    %v1389 = vsub.f32 %v1380, %v1388
    %v1390 = vand.u32 2147483647, %v1389
    %v1391 = vsub.f32 0.0, %v1390
    %v1392 = vmul.f32 %v1391, 1.442695
    %v1393 = vpow.pop %v1392
    %vm1394 = vcmp.ge.f32.partialorder %v1389, 0.0
    %v1395 = vsel %vm1394, 1.0, %v1393
    %v1396 = vsel %vm1394, %v1393, 1.0
    %v1397 = vmul.f32 %v1395, %v1377
    %v1398 = vmul.f32 %v1396, %v1387
    %v1399 = vadd.f32 %v1397, %v1398
    %v1400 = vmul.f32 %v1395, %v1379
    %v1401 = vadd.f32 %v1400, %v1396
    %v1402 = vrcp.pop %v1401
    %v1403 = vmul.f32 %v1399, %v1402
    %s1404 = scalar_lea.vmem [#allocation4], %s1383
    %1405 = vst [vmem:[%s1404] sm:$0x3] %v1403
    %v1406 = vadd.f32 %v1328, %v1380
    %v1407 = vsub.f32 %v1406, %v1385
    %v1408 = vand.u32 2147483647, %v1407
    %v1409 = vsub.f32 0.0, %v1408
    %v1410 = vmul.f32 %v1409, 1.442695
    %v1411 = vpow.pop %v1410
    %vm1412 = vcmp.ge.f32.partialorder %v1407, 0.0
    %v1413 = vsel %vm1412, 1.0, %v1411
    %v1414 = vsel %vm1412, %v1411, 1.0
    %v1415 = vmul.f32 %v1413, %v1377
    %v1416 = vmul.f32 %v1414, %v1387
    %v1417 = vadd.f32 %v1415, %v1416
    %v1418 = vmul.f32 %v1413, %v1379
    %v1419 = vadd.f32 %v1418, %v1414
    %v1420 = vmax.f32 %v1406, %v1385
    %s1421 = sadd.s32 %s1381, 2
    %s1422 = smul.u32 %s1421, 2
    %s1423 = scalar_lea.vmem [#allocation2], %s1422
    %v1424 = vld [vmem:[%s1423] sm:$0x3]
    %s1425 = scalar_lea.vmem [#allocation3], %s1422
    %v1426 = vld [vmem:[%s1425] sm:$0x3]
    %v1427 = vadd.f32 %v1333, %v1424
    %v1428 = vsub.f32 %v1420, %v1427
    %v1429 = vand.u32 2147483647, %v1428
    %v1430 = vsub.f32 0.0, %v1429
    %v1431 = vmul.f32 %v1430, 1.442695
    %v1432 = vpow.pop %v1431
    %vm1433 = vcmp.ge.f32.partialorder %v1428, 0.0
    %v1434 = vsel %vm1433, 1.0, %v1432
    %v1435 = vsel %vm1433, %v1432, 1.0
    %v1436 = vmul.f32 %v1434, %v1417
    %v1437 = vmul.f32 %v1435, %v1426
    %v1438 = vadd.f32 %v1436, %v1437
    %v1439 = vmul.f32 %v1434, %v1419
    %v1440 = vadd.f32 %v1439, %v1435
    %v1441 = vrcp.pop %v1440
    %v1442 = vmul.f32 %v1438, %v1441
    %s1443 = scalar_lea.vmem [#allocation4], %s1422
    %1444 = vst [vmem:[%s1443] sm:$0x3] %v1442
    %v1445 = vadd.f32 %v1328, %v1420
    %v1446 = vsub.f32 %v1445, %v1424
    %v1447 = vand.u32 2147483647, %v1446
    %v1448 = vsub.f32 0.0, %v1447
    %v1449 = vmul.f32 %v1448, 1.442695
    %v1450 = vpow.pop %v1449
    %vm1451 = vcmp.ge.f32.partialorder %v1446, 0.0
    %v1452 = vsel %vm1451, 1.0, %v1450
    %v1453 = vsel %vm1451, %v1450, 1.0
    %v1454 = vmul.f32 %v1452, %v1417
    %v1455 = vmul.f32 %v1453, %v1426
    %v1456 = vadd.f32 %v1454, %v1455
    %v1457 = vmul.f32 %v1452, %v1419
    %v1458 = vadd.f32 %v1457, %v1453
    %v1459 = vmax.f32 %v1445, %v1424
    %s1460 = sadd.s32 %s1381, 3
    %s1461 = smul.u32 %s1460, 2
    %s1462 = scalar_lea.vmem [#allocation2], %s1461
    %v1463 = vld [vmem:[%s1462] sm:$0x3]
    %s1464 = scalar_lea.vmem [#allocation3], %s1461
    %v1465 = vld [vmem:[%s1464] sm:$0x3]
    %v1466 = vadd.f32 %v1333, %v1463
    %v1467 = vsub.f32 %v1459, %v1466
    %v1468 = vand.u32 2147483647, %v1467
    %v1469 = vsub.f32 0.0, %v1468
    %v1470 = vmul.f32 %v1469, 1.442695
    %v1471 = vpow.pop %v1470
    %vm1472 = vcmp.ge.f32.partialorder %v1467, 0.0
    %v1473 = vsel %vm1472, 1.0, %v1471
    %v1474 = vsel %vm1472, %v1471, 1.0
    %v1475 = vmul.f32 %v1473, %v1456
    %v1476 = vmul.f32 %v1474, %v1465
    %v1477 = vadd.f32 %v1475, %v1476
    %v1478 = vmul.f32 %v1473, %v1458
    %v1479 = vadd.f32 %v1478, %v1474
    %v1480 = vrcp.pop %v1479
    %v1481 = vmul.f32 %v1477, %v1480
    %s1482 = scalar_lea.vmem [#allocation4], %s1461
    %1483 = vst [vmem:[%s1482] sm:$0x3] %v1481
    %v1484 = vadd.f32 %v1328, %v1459
    %v1485 = vsub.f32 %v1484, %v1463
    %v1486 = vand.u32 2147483647, %v1485
    %v1487 = vsub.f32 0.0, %v1486
    %v1488 = vmul.f32 %v1487, 1.442695
    %v1489 = vpow.pop %v1488
    %vm1490 = vcmp.ge.f32.partialorder %v1485, 0.0
    %v1491 = vsel %vm1490, 1.0, %v1489
    %v1492 = vsel %vm1490, %v1489, 1.0
    %v1493 = vmul.f32 %v1491, %v1456
    %v1494 = vmul.f32 %v1492, %v1465
    %v1495 = vadd.f32 %v1493, %v1494
    %v1496 = vmul.f32 %v1491, %v1458
    %v1497 = vadd.f32 %v1496, %v1492
    %v1498 = vmax.f32 %v1484, %v1463
    %s1499 = sadd.s32 %s1381, 4
    %s1500 = smul.u32 %s1499, 2
    %s1501 = scalar_lea.vmem [#allocation2], %s1500
    %v1502 = vld [vmem:[%s1501] sm:$0x3]
    %s1503 = scalar_lea.vmem [#allocation3], %s1500
    %v1504 = vld [vmem:[%s1503] sm:$0x3]
    %v1505 = vadd.f32 %v1333, %v1502
    %v1506 = vsub.f32 %v1498, %v1505
    %v1507 = vand.u32 2147483647, %v1506
    %v1508 = vsub.f32 0.0, %v1507
    %v1509 = vmul.f32 %v1508, 1.442695
    %v1510 = vpow.pop %v1509
    %vm1511 = vcmp.ge.f32.partialorder %v1506, 0.0
    %v1512 = vsel %vm1511, 1.0, %v1510
    %v1513 = vsel %vm1511, %v1510, 1.0
    %v1514 = vmul.f32 %v1512, %v1495
    %v1515 = vmul.f32 %v1513, %v1504
    %v1516 = vadd.f32 %v1514, %v1515
    %v1517 = vmul.f32 %v1512, %v1497
    %v1518 = vadd.f32 %v1517, %v1513
    %v1519 = vrcp.pop %v1518
    %v1520 = vmul.f32 %v1516, %v1519
    %s1521 = scalar_lea.vmem [#allocation4], %s1500
    %1522 = vst [vmem:[%s1521] sm:$0x3] %v1520
    %v1523 = vadd.f32 %v1328, %v1498
    %v1524 = vsub.f32 %v1523, %v1502
    %v1525 = vand.u32 2147483647, %v1524
    %v1526 = vsub.f32 0.0, %v1525
    %v1527 = vmul.f32 %v1526, 1.442695
    %v1528 = vpow.pop %v1527
    %vm1529 = vcmp.ge.f32.partialorder %v1524, 0.0
    %v1530 = vsel %vm1529, 1.0, %v1528
    %v1531 = vsel %vm1529, %v1528, 1.0
    %v1532 = vmul.f32 %v1530, %v1495
    %v1533 = vmul.f32 %v1531, %v1504
    %v1534 = vadd.f32 %v1532, %v1533
    %v1535 = vmul.f32 %v1530, %v1497
    %v1536 = vadd.f32 %v1535, %v1531
    %v1537 = vmax.f32 %v1523, %v1502
    %s1538 = sadd.s32 %s1381, 5
    %s1539 = smul.u32 %s1538, 2
    %s1540 = scalar_lea.vmem [#allocation2], %s1539
    %v1541 = vld [vmem:[%s1540] sm:$0x3]
    %s1542 = scalar_lea.vmem [#allocation3], %s1539
    %v1543 = vld [vmem:[%s1542] sm:$0x3]
    %v1544 = vadd.f32 %v1333, %v1541
    %v1545 = vsub.f32 %v1537, %v1544
    %v1546 = vand.u32 2147483647, %v1545
    %v1547 = vsub.f32 0.0, %v1546
    %v1548 = vmul.f32 %v1547, 1.442695
    %v1549 = vpow.pop %v1548
    %vm1550 = vcmp.ge.f32.partialorder %v1545, 0.0
    %v1551 = vsel %vm1550, 1.0, %v1549
    %v1552 = vsel %vm1550, %v1549, 1.0
    %v1553 = vmul.f32 %v1551, %v1534
    %v1554 = vmul.f32 %v1552, %v1543
    %v1555 = vadd.f32 %v1553, %v1554
    %v1556 = vmul.f32 %v1551, %v1536
    %v1557 = vadd.f32 %v1556, %v1552
    %v1558 = vrcp.pop %v1557
    %v1559 = vmul.f32 %v1555, %v1558
    %s1560 = scalar_lea.vmem [#allocation4], %s1539
    %1561 = vst [vmem:[%s1560] sm:$0x3] %v1559
    %v1562 = vadd.f32 %v1328, %v1537
    %v1563 = vsub.f32 %v1562, %v1541
    %v1564 = vand.u32 2147483647, %v1563
    %v1565 = vsub.f32 0.0, %v1564
    %v1566 = vmul.f32 %v1565, 1.442695
    %v1567 = vpow.pop %v1566
    %vm1568 = vcmp.ge.f32.partialorder %v1563, 0.0
    %v1569 = vsel %vm1568, 1.0, %v1567
    %v1570 = vsel %vm1568, %v1567, 1.0
    %v1571 = vmul.f32 %v1569, %v1534
    %v1572 = vmul.f32 %v1570, %v1543
    %v1573 = vadd.f32 %v1571, %v1572
    %v1574 = vmul.f32 %v1569, %v1536
    %v1575 = vadd.f32 %v1574, %v1570
    %v1576 = vmax.f32 %v1562, %v1541
    %s1577 = sadd.s32 %s1381, 6
    %s1578 = smul.u32 %s1577, 2
    %s1579 = scalar_lea.vmem [#allocation2], %s1578
    %v1580 = vld [vmem:[%s1579] sm:$0x3]
    %s1581 = scalar_lea.vmem [#allocation3], %s1578
    %v1582 = vld [vmem:[%s1581] sm:$0x3]
    %v1583 = vadd.f32 %v1333, %v1580
    %v1584 = vsub.f32 %v1576, %v1583
    %v1585 = vand.u32 2147483647, %v1584
    %v1586 = vsub.f32 0.0, %v1585
    %v1587 = vmul.f32 %v1586, 1.442695
    %v1588 = vpow.pop %v1587
    %vm1589 = vcmp.ge.f32.partialorder %v1584, 0.0
    %v1590 = vsel %vm1589, 1.0, %v1588
    %v1591 = vsel %vm1589, %v1588, 1.0
    %v1592 = vmul.f32 %v1590, %v1573
    %v1593 = vmul.f32 %v1591, %v1582
    %v1594 = vadd.f32 %v1592, %v1593
    %v1595 = vmul.f32 %v1590, %v1575
    %v1596 = vadd.f32 %v1595, %v1591
    %v1597 = vrcp.pop %v1596
    %v1598 = vmul.f32 %v1594, %v1597
    %s1599 = scalar_lea.vmem [#allocation4], %s1578
    %1600 = vst [vmem:[%s1599] sm:$0x3] %v1598
    %v1601 = vadd.f32 %v1328, %v1576
    %v1602 = vsub.f32 %v1601, %v1580
    %v1603 = vand.u32 2147483647, %v1602
    %v1604 = vsub.f32 0.0, %v1603
    %v1605 = vmul.f32 %v1604, 1.442695
    %v1606 = vpow.pop %v1605
    %vm1607 = vcmp.ge.f32.partialorder %v1602, 0.0
    %v1608 = vsel %vm1607, 1.0, %v1606
    %v1609 = vsel %vm1607, %v1606, 1.0
    %v1610 = vmul.f32 %v1608, %v1573
    %v1611 = vmul.f32 %v1609, %v1582
    %v1612 = vadd.f32 %v1610, %v1611
    %v1613 = vmul.f32 %v1608, %v1575
    %v1614 = vadd.f32 %v1613, %v1609
    %v1615 = vmax.f32 %v1601, %v1580
    %s1616 = sadd.s32 %s1381, 7
    %s1617 = smul.u32 %s1616, 2
    %s1618 = scalar_lea.vmem [#allocation2], %s1617
    %v1619 = vld [vmem:[%s1618] sm:$0x3]
    %s1620 = scalar_lea.vmem [#allocation3], %s1617
    %v1621 = vld [vmem:[%s1620] sm:$0x3]
    %v1622 = vadd.f32 %v1333, %v1619
    %v1623 = vsub.f32 %v1615, %v1622
    %v1624 = vand.u32 2147483647, %v1623
    %v1625 = vsub.f32 0.0, %v1624
    %v1626 = vmul.f32 %v1625, 1.442695
    %v1627 = vpow.pop %v1626
    %vm1628 = vcmp.ge.f32.partialorder %v1623, 0.0
    %v1629 = vsel %vm1628, 1.0, %v1627
    %v1630 = vsel %vm1628, %v1627, 1.0
    %v1631 = vmul.f32 %v1629, %v1612
    %v1632 = vmul.f32 %v1630, %v1621
    %v1633 = vadd.f32 %v1631, %v1632
    %v1634 = vmul.f32 %v1629, %v1614
    %v1635 = vadd.f32 %v1634, %v1630
    %v1636 = vrcp.pop %v1635
    %v1637 = vmul.f32 %v1633, %v1636
    %s1638 = scalar_lea.vmem [#allocation4], %s1617
    %1639 = vst [vmem:[%s1638] sm:$0x3] %v1637
    %v1640 = vadd.f32 %v1328, %v1615
    %v1641 = vsub.f32 %v1640, %v1619
    %v1642 = vand.u32 2147483647, %v1641
    %v1643 = vsub.f32 0.0, %v1642
    %v1644 = vmul.f32 %v1643, 1.442695
    %v1645 = vpow.pop %v1644
    %vm1646 = vcmp.ge.f32.partialorder %v1641, 0.0
    %v1647 = vsel %vm1646, 1.0, %v1645
    %v1648 = vsel %vm1646, %v1645, 1.0
    %v1649 = vmul.f32 %v1647, %v1612
    %v1650 = vmul.f32 %v1648, %v1621
    %v1651 = vadd.f32 %v1649, %v1650
    %v1652 = vmul.f32 %v1647, %v1614
    %v1653 = vadd.f32 %v1652, %v1648
    %v1654 = vmax.f32 %v1640, %v1619
  $region46: #{_lambda_.6} parent=0 // loop_footer
    %s1339 = sadd.s32 1, %s1335
  $region47: #{_lambda_.6} parent=0 // loop_footer_branch
    %1334 = sbr.rel target = $region43
  $region48: #{_lambda_.6} parent=0 // loop_exit
    _
  %v1655 = vld [vmem:[#allocation4] sm:$0xff]
  %v1656 = vld [vmem:[#allocation4 + $0x8] sm:$0xff]
  %v1657 = vld [vmem:[#allocation4 + $0x10] sm:$0xff]
  %v1658 = vld [vmem:[#allocation4 + $0x18] sm:$0xff]
  %v1659 = vld [vmem:[#allocation4 + $0x20] sm:$0xff]
  %v1660 = vld [vmem:[#allocation4 + $0x28] sm:$0xff]
  %v1661 = vld [vmem:[#allocation4 + $0x30] sm:$0xff]
  %v1662 = vld [vmem:[#allocation4 + $0x38] sm:$0xff]
  %v1663 = vld [vmem:[#allocation4 + $0x40] sm:$0xff]
  %v1664 = vld [vmem:[#allocation4 + $0x48] sm:$0xff]
  %v1665 = vld [vmem:[#allocation4 + $0x50] sm:$0xff]
  %v1666 = vld [vmem:[#allocation4 + $0x58] sm:$0xff]
  %v1667 = vld [vmem:[#allocation4 + $0x60] sm:$0xff]
  %v1668 = vld [vmem:[#allocation4 + $0x68] sm:$0xff]
  %v1669 = vld [vmem:[#allocation4 + $0x70] sm:$0xff]
  %v1670 = vld [vmem:[#allocation4 + $0x78] sm:$0xff]
  %v1671 = vmul.f32 %v1293, %v1655
  %v1672 = vmul.f32 %v1295, %v1656
  %v1673 = vmul.f32 %v1297, %v1657
  %v1674 = vmul.f32 %v1299, %v1658
  %v1675 = vmul.f32 %v1301, %v1659
  %v1676 = vmul.f32 %v1303, %v1660
  %v1677 = vmul.f32 %v1305, %v1661
  %v1678 = vmul.f32 %v1307, %v1662
  %v1679 = vmul.f32 %v1309, %v1663
  %v1680 = vmul.f32 %v1311, %v1664
  %v1681 = vmul.f32 %v1313, %v1665
  %v1682 = vmul.f32 %v1315, %v1666
  %v1683 = vmul.f32 %v1317, %v1667
  %v1684 = vmul.f32 %v1319, %v1668
  %v1685 = vmul.f32 %v1321, %v1669
  %v1686 = vmul.f32 %v1323, %v1670
  %v1687 = vpack.c.bf16 %v1672, %v1671
  %v1688 = vpack.c.bf16 %v1674, %v1673
  %v1689 = vpack.c.bf16 %v1676, %v1675
  %v1690 = vpack.c.bf16 %v1678, %v1677
  %v1691 = vpack.c.bf16 %v1680, %v1679
  %v1692 = vpack.c.bf16 %v1682, %v1681
  %v1693 = vpack.c.bf16 %v1684, %v1683
  %v1694 = vpack.c.bf16 %v1686, %v1685
  %v1695 = vld [vmem:[%s6] sm:$0xf]
  %v1696 = vld [vmem:[%s6 + $0x4] sm:$0xf]
  %v1697 = vld [vmem:[%s6 + $0x8] sm:$0xf]
  %v1698 = vld [vmem:[%s6 + $0xc] sm:$0xf]
  %v1699 = vld [vmem:[%s6 + $0x10] sm:$0xf]
  %v1700 = vld [vmem:[%s6 + $0x14] sm:$0xf]
  %v1701 = vld [vmem:[%s6 + $0x18] sm:$0xf]
  %v1702 = vld [vmem:[%s6 + $0x1c] sm:$0xf]
  %v1703 = vld [vmem:[%s6 + $0x20] sm:$0xf]
  %v1704 = vld [vmem:[%s6 + $0x24] sm:$0xf]
  %v1705 = vld [vmem:[%s6 + $0x28] sm:$0xf]
  %v1706 = vld [vmem:[%s6 + $0x2c] sm:$0xf]
  %v1707 = vld [vmem:[%s6 + $0x30] sm:$0xf]
  %v1708 = vld [vmem:[%s6 + $0x34] sm:$0xf]
  %v1709 = vld [vmem:[%s6 + $0x38] sm:$0xf]
  %v1710 = vld [vmem:[%s6 + $0x3c] sm:$0xf]
  %v1727 = vunpack.c.l.b16 %v1695
  %v1728 = vunpack.c.l.b16 %v1696
  %v1729 = vunpack.c.l.b16 %v1697
  %v1730 = vunpack.c.l.b16 %v1698
  %v1731 = vunpack.c.l.b16 %v1699
  %v1732 = vunpack.c.l.b16 %v1700
  %v1733 = vunpack.c.l.b16 %v1701
  %v1734 = vunpack.c.l.b16 %v1702
  %v1735 = vunpack.c.l.b16 %v1703
  %v1736 = vunpack.c.l.b16 %v1704
  %v1737 = vunpack.c.l.b16 %v1705
  %v1738 = vunpack.c.l.b16 %v1706
  %v1739 = vunpack.c.l.b16 %v1707
  %v1740 = vunpack.c.l.b16 %v1708
  %v1741 = vunpack.c.l.b16 %v1709
  %v1742 = vunpack.c.l.b16 %v1710
  %v1743 = vpack.c.b16 %v1728, %v1727
  %v1744 = vpack.c.b16 %v1730, %v1729
  %v1745 = vpack.c.b16 %v1732, %v1731
  %v1746 = vpack.c.b16 %v1734, %v1733
  %v1747 = vpack.c.b16 %v1736, %v1735
  %v1748 = vpack.c.b16 %v1738, %v1737
  %v1749 = vpack.c.b16 %v1740, %v1739
  %v1750 = vpack.c.b16 %v1742, %v1741
  %1759 = vmatprep.subr.bf16.mxu0 0
  %1760 = vmatpush1.bf16.msra.mxu0 %v1750
  %1761 = vmatprep.subr.bf16.mxu0 0
  %1762 = vmatpush1.bf16.msra.mxu0 %v1749
  %1763 = vmatprep.subr.bf16.mxu0 0
  %1764 = vmatpush1.bf16.msra.mxu0 %v1748
  %1765 = vmatprep.subr.bf16.mxu0 0
  %1766 = vmatpush1.bf16.msra.mxu0 %v1747
  %1767 = vmatprep.subr.bf16.mxu0 0
  %1768 = vmatpush1.bf16.msra.mxu0 %v1746
  %1769 = vmatprep.subr.bf16.mxu0 0
  %1770 = vmatpush1.bf16.msra.mxu0 %v1745
  %1771 = vmatprep.subr.bf16.mxu0 0
  %1772 = vmatpush1.bf16.msra.mxu0 %v1744
  %1773 = vmatprep.subr.bf16.mxu0 0
  %1774 = vmatpush1.bf16.msra.mxu0 %v1743
  %1775 = vmatprep.subr.bf16.mxu0 0
  %1776 = vmatpush2.bf16.msra.mxu0 0
  %1777 = vmatprep.subr.bf16.mxu0 0
  %1778 = vmatpush2.bf16.msra.mxu0 0
  %1779 = vmatprep.subr.bf16.mxu0 0
  %1780 = vmatpush2.bf16.msra.mxu0 0
  %1781 = vmatprep.subr.bf16.mxu0 0
  %1782 = vmatpush2.bf16.msra.mxu0 0
  %1783 = vmatprep.subr.bf16.mxu0 0
  %1784 = vmatpush2.bf16.msra.mxu0 0
  %1785 = vmatprep.subr.bf16.mxu0 0
  %1786 = vmatpush2.bf16.msra.mxu0 0
  %1787 = vmatprep.subr.bf16.mxu0 0
  %1788 = vmatpush2.bf16.msra.mxu0 0
  %1789 = vmatprep.subr.bf16.mxu0 0
  %1790 = vmatpush2.bf16.msra.mxu0 0
  %1791 = vmatprep.mubr.bf16.mxu0 0
  %1792 = vmatmul.mubr.bf16.gmra.mxu0 %v1687
  %v1793 = vpop.f32.mrf.mxu0
  %v1794 = vadd.f32 0.0, %v1793
  %v1795 = vpop.f32.mrf.mxu0
  %v1796 = vpop.f32.mrf.mxu0
  %v1797 = vadd.f32 0.0, %v1796
  %v1798 = vpop.f32.mrf.mxu0
  %1799 = vmatprep.mubr.bf16.mxu0 0
  %1800 = vmatmul.mubr.bf16.gmra.mxu0 %v1688
  %v1801 = vpop.f32.mrf.mxu0
  %v1802 = vadd.f32 0.0, %v1801
  %v1803 = vpop.f32.mrf.mxu0
  %v1804 = vpop.f32.mrf.mxu0
  %v1805 = vadd.f32 0.0, %v1804
  %v1806 = vpop.f32.mrf.mxu0
  %1807 = vmatprep.mubr.bf16.mxu0 0
  %1808 = vmatmul.mubr.bf16.gmra.mxu0 %v1689
  %v1809 = vpop.f32.mrf.mxu0
  %v1810 = vadd.f32 0.0, %v1809
  %v1811 = vpop.f32.mrf.mxu0
  %v1812 = vpop.f32.mrf.mxu0
  %v1813 = vadd.f32 0.0, %v1812
  %v1814 = vpop.f32.mrf.mxu0
  %1815 = vmatprep.mubr.bf16.mxu0 0
  %1816 = vmatmul.mubr.bf16.gmra.mxu0 %v1690
  %v1817 = vpop.f32.mrf.mxu0
  %v1818 = vadd.f32 0.0, %v1817
  %v1819 = vpop.f32.mrf.mxu0
  %v1820 = vpop.f32.mrf.mxu0
  %v1821 = vadd.f32 0.0, %v1820
  %v1822 = vpop.f32.mrf.mxu0
  %1823 = vmatprep.mubr.bf16.mxu0 0
  %1824 = vmatmul.mubr.bf16.gmra.mxu0 %v1691
  %v1825 = vpop.f32.mrf.mxu0
  %v1826 = vadd.f32 0.0, %v1825
  %v1827 = vpop.f32.mrf.mxu0
  %v1828 = vpop.f32.mrf.mxu0
  %v1829 = vadd.f32 0.0, %v1828
  %v1830 = vpop.f32.mrf.mxu0
  %1831 = vmatprep.mubr.bf16.mxu0 0
  %1832 = vmatmul.mubr.bf16.gmra.mxu0 %v1692
  %v1833 = vpop.f32.mrf.mxu0
  %v1834 = vadd.f32 0.0, %v1833
  %v1835 = vpop.f32.mrf.mxu0
  %v1836 = vpop.f32.mrf.mxu0
  %v1837 = vadd.f32 0.0, %v1836
  %v1838 = vpop.f32.mrf.mxu0
  %1839 = vmatprep.mubr.bf16.mxu0 0
  %1840 = vmatmul.mubr.bf16.gmra.mxu0 %v1693
  %v1841 = vpop.f32.mrf.mxu0
  %v1842 = vadd.f32 0.0, %v1841
  %v1843 = vpop.f32.mrf.mxu0
  %v1844 = vpop.f32.mrf.mxu0
  %v1845 = vadd.f32 0.0, %v1844
  %v1846 = vpop.f32.mrf.mxu0
  %1847 = vmatprep.mubr.bf16.mxu0 0
  %1848 = vmatmul.mubr.bf16.gmra.mxu0 %v1694
  %v1849 = vpop.f32.mrf.mxu0
  %v1850 = vadd.f32 0.0, %v1849
  %v1851 = vpop.f32.mrf.mxu0
  %v1852 = vpop.f32.mrf.mxu0
  %v1853 = vadd.f32 0.0, %v1852
  %v1854 = vpop.f32.mrf.mxu0
  %1855 = vdwg.mxu0
  %v1856 = vld [vmem:[%s1 + $0xb] sm:$0x1]
  %v1857 = vlaneseq
  %v1858 = vshrl.u32 %v1857, 7
  %v1859 = vsub.s32 0, %v1858
  %v1860 = vrot.slane %v1856, %v1859
  %v1861 = vmul.f32 %v1860, %v1794
  %v1862 = vmul.f32 %v1860, %v1797
  %v1863 = vmul.f32 %v1860, %v1802
  %v1864 = vmul.f32 %v1860, %v1805
  %v1865 = vmul.f32 %v1860, %v1810
  %v1866 = vmul.f32 %v1860, %v1813
  %v1867 = vmul.f32 %v1860, %v1818
  %v1868 = vmul.f32 %v1860, %v1821
  %v1869 = vmul.f32 %v1860, %v1826
  %v1870 = vmul.f32 %v1860, %v1829
  %v1871 = vmul.f32 %v1860, %v1834
  %v1872 = vmul.f32 %v1860, %v1837
  %v1873 = vmul.f32 %v1860, %v1842
  %v1874 = vmul.f32 %v1860, %v1845
  %v1875 = vmul.f32 %v1860, %v1850
  %v1876 = vmul.f32 %v1860, %v1853
  %v1877 = vadd.f32 %v52, %v1861
  %v1878 = vadd.f32 %v53, %v1862
  %v1879 = vadd.f32 %v54, %v1863
  %v1880 = vadd.f32 %v55, %v1864
  %v1881 = vadd.f32 %v56, %v1865
  %v1882 = vadd.f32 %v57, %v1866
  %v1883 = vadd.f32 %v58, %v1867
  %v1884 = vadd.f32 %v59, %v1868
  %v1885 = vadd.f32 %v60, %v1869
  %v1886 = vadd.f32 %v61, %v1870
  %v1887 = vadd.f32 %v62, %v1871
  %v1888 = vadd.f32 %v63, %v1872
  %v1889 = vadd.f32 %v64, %v1873
  %v1890 = vadd.f32 %v65, %v1874
  %v1891 = vadd.f32 %v66, %v1875
  %v1892 = vadd.f32 %v67, %v1876
  %v1893 = vld [vmem:[%s1 + $0x4] sm:$0x1]
  %v1894 = vld [vmem:[%s1 + $0x5] sm:$0x1]
  %1895 = vadd.xlane.f32.xlu0 %v1877
  %v1896 = vpop.xlane.xlu0 %1895
  %1897 = vadd.xlane.f32.xlu0 %v1878
  %v1898 = vpop.xlane.xlu0 %1897
  %1899 = vadd.xlane.f32.xlu0 %v1879
  %v1900 = vpop.xlane.xlu0 %1899
  %1901 = vadd.xlane.f32.xlu0 %v1880
  %v1902 = vpop.xlane.xlu0 %1901
  %1903 = vadd.xlane.f32.xlu0 %v1881
  %v1904 = vpop.xlane.xlu0 %1903
  %1905 = vadd.xlane.f32.xlu0 %v1882
  %v1906 = vpop.xlane.xlu0 %1905
  %1907 = vadd.xlane.f32.xlu0 %v1883
  %v1908 = vpop.xlane.xlu0 %1907
  %1909 = vadd.xlane.f32.xlu0 %v1884
  %v1910 = vpop.xlane.xlu0 %1909
  %1911 = vadd.xlane.f32.xlu0 %v1885
  %v1912 = vpop.xlane.xlu0 %1911
  %1913 = vadd.xlane.f32.xlu0 %v1886
  %v1914 = vpop.xlane.xlu0 %1913
  %1915 = vadd.xlane.f32.xlu0 %v1887
  %v1916 = vpop.xlane.xlu0 %1915
  %1917 = vadd.xlane.f32.xlu0 %v1888
  %v1918 = vpop.xlane.xlu0 %1917
  %1919 = vadd.xlane.f32.xlu0 %v1889
  %v1920 = vpop.xlane.xlu0 %1919
  %1921 = vadd.xlane.f32.xlu0 %v1890
  %v1922 = vpop.xlane.xlu0 %1921
  %1923 = vadd.xlane.f32.xlu0 %v1891
  %v1924 = vpop.xlane.xlu0 %1923
  %1925 = vadd.xlane.f32.xlu0 %v1892
  %v1926 = vpop.xlane.xlu0 %1925
  %v1927 = vmul.f32 %v1896, %v102
  %v1928 = vmul.f32 %v1898, %v102
  %v1929 = vmul.f32 %v1900, %v102
  %v1930 = vmul.f32 %v1902, %v102
  %v1931 = vmul.f32 %v1904, %v102
  %v1932 = vmul.f32 %v1906, %v102
  %v1933 = vmul.f32 %v1908, %v102
  %v1934 = vmul.f32 %v1910, %v102
  %v1935 = vmul.f32 %v1912, %v102
  %v1936 = vmul.f32 %v1914, %v102
  %v1937 = vmul.f32 %v1916, %v102
  %v1938 = vmul.f32 %v1918, %v102
  %v1939 = vmul.f32 %v1920, %v102
  %v1940 = vmul.f32 %v1922, %v102
  %v1941 = vmul.f32 %v1924, %v102
  %v1942 = vmul.f32 %v1926, %v102
  %v1943 = vsub.f32 %v1877, %v1927
  %v1944 = vsub.f32 %v1878, %v1928
  %v1945 = vsub.f32 %v1879, %v1929
  %v1946 = vsub.f32 %v1880, %v1930
  %v1947 = vsub.f32 %v1881, %v1931
  %v1948 = vsub.f32 %v1882, %v1932
  %v1949 = vsub.f32 %v1883, %v1933
  %v1950 = vsub.f32 %v1884, %v1934
  %v1951 = vsub.f32 %v1885, %v1935
  %v1952 = vsub.f32 %v1886, %v1936
  %v1953 = vsub.f32 %v1887, %v1937
  %v1954 = vsub.f32 %v1888, %v1938
  %v1955 = vsub.f32 %v1889, %v1939
  %v1956 = vsub.f32 %v1890, %v1940
  %v1957 = vsub.f32 %v1891, %v1941
  %v1958 = vsub.f32 %v1892, %v1942
  %v1959 = vmul.f32 %v1943, %v1943
  %v1960 = vmul.f32 %v1944, %v1944
  %v1961 = vmul.f32 %v1945, %v1945
  %v1962 = vmul.f32 %v1946, %v1946
  %v1963 = vmul.f32 %v1947, %v1947
  %v1964 = vmul.f32 %v1948, %v1948
  %v1965 = vmul.f32 %v1949, %v1949
  %v1966 = vmul.f32 %v1950, %v1950
  %v1967 = vmul.f32 %v1951, %v1951
  %v1968 = vmul.f32 %v1952, %v1952
  %v1969 = vmul.f32 %v1953, %v1953
  %v1970 = vmul.f32 %v1954, %v1954
  %v1971 = vmul.f32 %v1955, %v1955
  %v1972 = vmul.f32 %v1956, %v1956
  %v1973 = vmul.f32 %v1957, %v1957
  %v1974 = vmul.f32 %v1958, %v1958
  %1975 = vadd.xlane.f32.xlu0 %v1959
  %v1976 = vpop.xlane.xlu0 %1975
  %1977 = vadd.xlane.f32.xlu0 %v1960
  %v1978 = vpop.xlane.xlu0 %1977
  %1979 = vadd.xlane.f32.xlu0 %v1961
  %v1980 = vpop.xlane.xlu0 %1979
  %1981 = vadd.xlane.f32.xlu0 %v1962
  %v1982 = vpop.xlane.xlu0 %1981
  %1983 = vadd.xlane.f32.xlu0 %v1963
  %v1984 = vpop.xlane.xlu0 %1983
  %1985 = vadd.xlane.f32.xlu0 %v1964
  %v1986 = vpop.xlane.xlu0 %1985
  %1987 = vadd.xlane.f32.xlu0 %v1965
  %v1988 = vpop.xlane.xlu0 %1987
  %1989 = vadd.xlane.f32.xlu0 %v1966
  %v1990 = vpop.xlane.xlu0 %1989
  %1991 = vadd.xlane.f32.xlu0 %v1967
  %v1992 = vpop.xlane.xlu0 %1991
  %1993 = vadd.xlane.f32.xlu0 %v1968
  %v1994 = vpop.xlane.xlu0 %1993
  %1995 = vadd.xlane.f32.xlu0 %v1969
  %v1996 = vpop.xlane.xlu0 %1995
  %1997 = vadd.xlane.f32.xlu0 %v1970
  %v1998 = vpop.xlane.xlu0 %1997
  %1999 = vadd.xlane.f32.xlu0 %v1971
  %v2000 = vpop.xlane.xlu0 %1999
  %2001 = vadd.xlane.f32.xlu0 %v1972
  %v2002 = vpop.xlane.xlu0 %2001
  %2003 = vadd.xlane.f32.xlu0 %v1973
  %v2004 = vpop.xlane.xlu0 %2003
  %2005 = vadd.xlane.f32.xlu0 %v1974
  %v2006 = vpop.xlane.xlu0 %2005
  %v2007 = vmul.f32 %v1976, %v102
  %v2008 = vmul.f32 %v1978, %v102
  %v2009 = vmul.f32 %v1980, %v102
  %v2010 = vmul.f32 %v1982, %v102
  %v2011 = vmul.f32 %v1984, %v102
  %v2012 = vmul.f32 %v1986, %v102
  %v2013 = vmul.f32 %v1988, %v102
  %v2014 = vmul.f32 %v1990, %v102
  %v2015 = vmul.f32 %v1992, %v102
  %v2016 = vmul.f32 %v1994, %v102
  %v2017 = vmul.f32 %v1996, %v102
  %v2018 = vmul.f32 %v1998, %v102
  %v2019 = vmul.f32 %v2000, %v102
  %v2020 = vmul.f32 %v2002, %v102
  %v2021 = vmul.f32 %v2004, %v102
  %v2022 = vmul.f32 %v2006, %v102
  %v2023 = vadd.f32 %v2007, 1e-05
  %v2024 = vadd.f32 %v2008, 1e-05
  %v2025 = vadd.f32 %v2009, 1e-05
  %v2026 = vadd.f32 %v2010, 1e-05
  %v2027 = vadd.f32 %v2011, 1e-05
  %v2028 = vadd.f32 %v2012, 1e-05
  %v2029 = vadd.f32 %v2013, 1e-05
  %v2030 = vadd.f32 %v2014, 1e-05
  %v2031 = vadd.f32 %v2015, 1e-05
  %v2032 = vadd.f32 %v2016, 1e-05
  %v2033 = vadd.f32 %v2017, 1e-05
  %v2034 = vadd.f32 %v2018, 1e-05
  %v2035 = vadd.f32 %v2019, 1e-05
  %v2036 = vadd.f32 %v2020, 1e-05
  %v2037 = vadd.f32 %v2021, 1e-05
  %v2038 = vadd.f32 %v2022, 1e-05
  %v2039 = vrsqrt.pop %v2023
  %v2040 = vrsqrt.pop %v2024
  %v2041 = vrsqrt.pop %v2025
  %v2042 = vrsqrt.pop %v2026
  %v2043 = vrsqrt.pop %v2027
  %v2044 = vrsqrt.pop %v2028
  %v2045 = vrsqrt.pop %v2029
  %v2046 = vrsqrt.pop %v2030
  %v2047 = vrsqrt.pop %v2031
  %v2048 = vrsqrt.pop %v2032
  %v2049 = vrsqrt.pop %v2033
  %v2050 = vrsqrt.pop %v2034
  %v2051 = vrsqrt.pop %v2035
  %v2052 = vrsqrt.pop %v2036
  %v2053 = vrsqrt.pop %v2037
  %v2054 = vrsqrt.pop %v2038
  %v2055 = vmul.f32 %v1943, %v2039
  %v2056 = vmul.f32 %v1944, %v2040
  %v2057 = vmul.f32 %v1945, %v2041
  %v2058 = vmul.f32 %v1946, %v2042
  %v2059 = vmul.f32 %v1947, %v2043
  %v2060 = vmul.f32 %v1948, %v2044
  %v2061 = vmul.f32 %v1949, %v2045
  %v2062 = vmul.f32 %v1950, %v2046
  %v2063 = vmul.f32 %v1951, %v2047
  %v2064 = vmul.f32 %v1952, %v2048
  %v2065 = vmul.f32 %v1953, %v2049
  %v2066 = vmul.f32 %v1954, %v2050
  %v2067 = vmul.f32 %v1955, %v2051
  %v2068 = vmul.f32 %v1956, %v2052
  %v2069 = vmul.f32 %v1957, %v2053
  %v2070 = vmul.f32 %v1958, %v2054
  %v2071 = vlaneseq
  %v2072 = vshrl.u32 %v2071, 7
  %v2073 = vsub.s32 0, %v2072
  %v2074 = vrot.slane %v1893, %v2073
  %v2075 = vmul.f32 %v2055, %v2074
  %v2076 = vmul.f32 %v2056, %v2074
  %v2077 = vmul.f32 %v2057, %v2074
  %v2078 = vmul.f32 %v2058, %v2074
  %v2079 = vmul.f32 %v2059, %v2074
  %v2080 = vmul.f32 %v2060, %v2074
  %v2081 = vmul.f32 %v2061, %v2074
  %v2082 = vmul.f32 %v2062, %v2074
  %v2083 = vmul.f32 %v2063, %v2074
  %v2084 = vmul.f32 %v2064, %v2074
  %v2085 = vmul.f32 %v2065, %v2074
  %v2086 = vmul.f32 %v2066, %v2074
  %v2087 = vmul.f32 %v2067, %v2074
  %v2088 = vmul.f32 %v2068, %v2074
  %v2089 = vmul.f32 %v2069, %v2074
  %v2090 = vmul.f32 %v2070, %v2074
  %v2091 = vlaneseq
  %v2092 = vshrl.u32 %v2091, 7
  %v2093 = vsub.s32 0, %v2092
  %v2094 = vrot.slane %v1894, %v2093
  %v2095 = vadd.f32 %v2075, %v2094
  %v2096 = vadd.f32 %v2076, %v2094
  %v2097 = vadd.f32 %v2077, %v2094
  %v2098 = vadd.f32 %v2078, %v2094
  %v2099 = vadd.f32 %v2079, %v2094
  %v2100 = vadd.f32 %v2080, %v2094
  %v2101 = vadd.f32 %v2081, %v2094
  %v2102 = vadd.f32 %v2082, %v2094
  %v2103 = vadd.f32 %v2083, %v2094
  %v2104 = vadd.f32 %v2084, %v2094
  %v2105 = vadd.f32 %v2085, %v2094
  %v2106 = vadd.f32 %v2086, %v2094
  %v2107 = vadd.f32 %v2087, %v2094
  %v2108 = vadd.f32 %v2088, %v2094
  %v2109 = vadd.f32 %v2089, %v2094
  %v2110 = vadd.f32 %v2090, %v2094
  %v2111 = vrot.slane %v2095, 6
  %v2112 = vrot.slane %v2096, 6
  %v2113 = vrot.slane %v2097, 6
  %v2114 = vrot.slane %v2098, 6
  %v2115 = vrot.slane %v2099, 6
  %v2116 = vrot.slane %v2100, 6
  %v2117 = vrot.slane %v2101, 6
  %v2118 = vrot.slane %v2102, 6
  %v2119 = vrot.slane %v2103, 6
  %v2120 = vrot.slane %v2104, 6
  %v2121 = vrot.slane %v2105, 6
  %v2122 = vrot.slane %v2106, 6
  %v2123 = vrot.slane %v2107, 6
  %v2124 = vrot.slane %v2108, 6
  %v2125 = vrot.slane %v2109, 6
  %v2126 = vrot.slane %v2110, 6
  %v2127 = vsel %vm305, %v2125, %v2126
  %v2128 = vsel %vm305, %v2124, %v2125
  %v2129 = vsel %vm305, %v2123, %v2124
  %v2130 = vsel %vm305, %v2122, %v2123
  %v2131 = vsel %vm305, %v2121, %v2122
  %v2132 = vsel %vm305, %v2120, %v2121
  %v2133 = vsel %vm305, %v2119, %v2120
  %v2134 = vsel %vm305, %v2118, %v2119
  %v2135 = vsel %vm305, %v2117, %v2118
  %v2136 = vsel %vm305, %v2116, %v2117
  %v2137 = vsel %vm305, %v2115, %v2116
  %v2138 = vsel %vm305, %v2114, %v2115
  %v2139 = vsel %vm305, %v2113, %v2114
  %v2140 = vsel %vm305, %v2112, %v2113
  %v2141 = vsel %vm305, %v2111, %v2112
  %v2142 = vsel %vm305, %v2126, %v2111
  %v2143 = vrot.slane %v2095, 2
  %v2144 = vrot.slane %v2096, 2
  %v2145 = vrot.slane %v2097, 2
  %v2146 = vrot.slane %v2098, 2
  %v2147 = vrot.slane %v2099, 2
  %v2148 = vrot.slane %v2100, 2
  %v2149 = vrot.slane %v2101, 2
  %v2150 = vrot.slane %v2102, 2
  %v2151 = vrot.slane %v2103, 2
  %v2152 = vrot.slane %v2104, 2
  %v2153 = vrot.slane %v2105, 2
  %v2154 = vrot.slane %v2106, 2
  %v2155 = vrot.slane %v2107, 2
  %v2156 = vrot.slane %v2108, 2
  %v2157 = vrot.slane %v2109, 2
  %v2158 = vrot.slane %v2110, 2
  %v2159 = vsel %vm338, %v2157, %v2158
  %v2160 = vsel %vm338, %v2156, %v2157
  %v2161 = vsel %vm338, %v2155, %v2156
  %v2162 = vsel %vm338, %v2154, %v2155
  %v2163 = vsel %vm338, %v2153, %v2154
  %v2164 = vsel %vm338, %v2152, %v2153
  %v2165 = vsel %vm338, %v2151, %v2152
  %v2166 = vsel %vm338, %v2150, %v2151
  %v2167 = vsel %vm338, %v2149, %v2150
  %v2168 = vsel %vm338, %v2148, %v2149
  %v2169 = vsel %vm338, %v2147, %v2148
  %v2170 = vsel %vm338, %v2146, %v2147
  %v2171 = vsel %vm338, %v2145, %v2146
  %v2172 = vsel %vm338, %v2144, %v2145
  %v2173 = vsel %vm338, %v2143, %v2144
  %v2174 = vsel %vm338, %v2158, %v2143
  %v2175 = vsel %vm419, %v2095, 0.0
  %v2176 = vsel %vm420, %v2096, 0.0
  %v2177 = vsel %vm421, %v2097, 0.0
  %v2178 = vsel %vm422, %v2098, 0.0
  %v2179 = vsel %vm423, %v2099, 0.0
  %v2180 = vsel %vm424, %v2100, 0.0
  %v2181 = vsel %vm425, %v2101, 0.0
  %v2182 = vsel %vm426, %v2102, 0.0
  %v2183 = vsel %vm427, %v2103, 0.0
  %v2184 = vsel %vm428, %v2104, 0.0
  %v2185 = vsel %vm429, %v2105, 0.0
  %v2186 = vsel %vm430, %v2106, 0.0
  %v2187 = vsel %vm431, %v2107, 0.0
  %v2188 = vsel %vm432, %v2108, 0.0
  %v2189 = vsel %vm433, %v2109, 0.0
  %v2190 = vsel %vm434, %v2110, 0.0
  %v2191 = vsel %vm403, %v2097, %v2175
  %v2192 = vsel %vm404, %v2098, %v2176
  %v2193 = vsel %vm405, %v2099, %v2177
  %v2194 = vsel %vm406, %v2100, %v2178
  %v2195 = vsel %vm407, %v2101, %v2179
  %v2196 = vsel %vm408, %v2102, %v2180
  %v2197 = vsel %vm409, %v2103, %v2181
  %v2198 = vsel %vm410, %v2104, %v2182
  %v2199 = vsel %vm411, %v2105, %v2183
  %v2200 = vsel %vm412, %v2106, %v2184
  %v2201 = vsel %vm413, %v2107, %v2185
  %v2202 = vsel %vm414, %v2108, %v2186
  %v2203 = vsel %vm415, %v2109, %v2187
  %v2204 = vsel %vm416, %v2110, %v2188
  %v2205 = vsel %vm417, %v2095, %v2189
  %v2206 = vsel %vm418, %v2096, %v2190
  %v2207 = vsel %vm387, %v2109, %v2191
  %v2208 = vsel %vm388, %v2110, %v2192
  %v2209 = vsel %vm389, %v2095, %v2193
  %v2210 = vsel %vm390, %v2096, %v2194
  %v2211 = vsel %vm391, %v2097, %v2195
  %v2212 = vsel %vm392, %v2098, %v2196
  %v2213 = vsel %vm393, %v2099, %v2197
  %v2214 = vsel %vm394, %v2100, %v2198
  %v2215 = vsel %vm395, %v2101, %v2199
  %v2216 = vsel %vm396, %v2102, %v2200
  %v2217 = vsel %vm397, %v2103, %v2201
  %v2218 = vsel %vm398, %v2104, %v2202
  %v2219 = vsel %vm399, %v2105, %v2203
  %v2220 = vsel %vm400, %v2106, %v2204
  %v2221 = vsel %vm401, %v2107, %v2205
  %v2222 = vsel %vm402, %v2108, %v2206
  %v2223 = vsel %vm371, %v2173, %v2207
  %v2224 = vsel %vm372, %v2172, %v2208
  %v2225 = vsel %vm373, %v2171, %v2209
  %v2226 = vsel %vm374, %v2170, %v2210
  %v2227 = vsel %vm375, %v2169, %v2211
  %v2228 = vsel %vm376, %v2168, %v2212
  %v2229 = vsel %vm377, %v2167, %v2213
  %v2230 = vsel %vm378, %v2166, %v2214
  %v2231 = vsel %vm379, %v2165, %v2215
  %v2232 = vsel %vm380, %v2164, %v2216
  %v2233 = vsel %vm381, %v2163, %v2217
  %v2234 = vsel %vm382, %v2162, %v2218
  %v2235 = vsel %vm383, %v2161, %v2219
  %v2236 = vsel %vm384, %v2160, %v2220
  %v2237 = vsel %vm385, %v2159, %v2221
  %v2238 = vsel %vm386, %v2174, %v2222
  %v2239 = vsel %vm355, %v2142, %v2223
  %v2240 = vsel %vm356, %v2141, %v2224
  %v2241 = vsel %vm357, %v2140, %v2225
  %v2242 = vsel %vm358, %v2139, %v2226
  %v2243 = vsel %vm359, %v2138, %v2227
  %v2244 = vsel %vm360, %v2137, %v2228
  %v2245 = vsel %vm361, %v2136, %v2229
  %v2246 = vsel %vm362, %v2135, %v2230
  %v2247 = vsel %vm363, %v2134, %v2231
  %v2248 = vsel %vm364, %v2133, %v2232
  %v2249 = vsel %vm365, %v2132, %v2233
  %v2250 = vsel %vm366, %v2131, %v2234
  %v2251 = vsel %vm367, %v2130, %v2235
  %v2252 = vsel %vm368, %v2129, %v2236
  %v2253 = vsel %vm369, %v2128, %v2237
  %v2254 = vsel %vm370, %v2127, %v2238
  %v2255 = vld [vmem:[%s1 + $0x9] sm:$0x1]
  %v2256 = vld [vmem:[%s1 + $0xa] sm:$0x1]
  %v2257 = vlaneseq
  %v2258 = vshrl.u32 %v2257, 7
  %v2259 = vsub.s32 0, %v2258
  %v2260 = vrot.slane %v2255, %v2259
  %v2261 = vmul.f32 %v2095, %v2260
  %v2262 = vmul.f32 %v2096, %v2260
  %v2263 = vmul.f32 %v2097, %v2260
  %v2264 = vmul.f32 %v2098, %v2260
  %v2265 = vmul.f32 %v2099, %v2260
  %v2266 = vmul.f32 %v2100, %v2260
  %v2267 = vmul.f32 %v2101, %v2260
  %v2268 = vmul.f32 %v2102, %v2260
  %v2269 = vmul.f32 %v2103, %v2260
  %v2270 = vmul.f32 %v2104, %v2260
  %v2271 = vmul.f32 %v2105, %v2260
  %v2272 = vmul.f32 %v2106, %v2260
  %v2273 = vmul.f32 %v2107, %v2260
  %v2274 = vmul.f32 %v2108, %v2260
  %v2275 = vmul.f32 %v2109, %v2260
  %v2276 = vmul.f32 %v2110, %v2260
  %v2277 = vsub.f32 1.0, %v2255
  %v2278 = vlaneseq
  %v2279 = vshrl.u32 %v2278, 7
  %v2280 = vsub.s32 0, %v2279
  %v2281 = vrot.slane %v2277, %v2280
  %v2282 = vmul.f32 %v2239, %v2281
  %v2283 = vmul.f32 %v2240, %v2281
  %v2284 = vmul.f32 %v2241, %v2281
  %v2285 = vmul.f32 %v2242, %v2281
  %v2286 = vmul.f32 %v2243, %v2281
  %v2287 = vmul.f32 %v2244, %v2281
  %v2288 = vmul.f32 %v2245, %v2281
  %v2289 = vmul.f32 %v2246, %v2281
  %v2290 = vmul.f32 %v2247, %v2281
  %v2291 = vmul.f32 %v2248, %v2281
  %v2292 = vmul.f32 %v2249, %v2281
  %v2293 = vmul.f32 %v2250, %v2281
  %v2294 = vmul.f32 %v2251, %v2281
  %v2295 = vmul.f32 %v2252, %v2281
  %v2296 = vmul.f32 %v2253, %v2281
  %v2297 = vmul.f32 %v2254, %v2281
  %v2298 = vadd.f32 %v2261, %v2282
  %v2299 = vadd.f32 %v2262, %v2283
  %v2300 = vadd.f32 %v2263, %v2284
  %v2301 = vadd.f32 %v2264, %v2285
  %v2302 = vadd.f32 %v2265, %v2286
  %v2303 = vadd.f32 %v2266, %v2287
  %v2304 = vadd.f32 %v2267, %v2288
  %v2305 = vadd.f32 %v2268, %v2289
  %v2306 = vadd.f32 %v2269, %v2290
  %v2307 = vadd.f32 %v2270, %v2291
  %v2308 = vadd.f32 %v2271, %v2292
  %v2309 = vadd.f32 %v2272, %v2293
  %v2310 = vadd.f32 %v2273, %v2294
  %v2311 = vadd.f32 %v2274, %v2295
  %v2312 = vadd.f32 %v2275, %v2296
  %v2313 = vadd.f32 %v2276, %v2297
  %v2314 = vlaneseq
  %v2315 = vshrl.u32 %v2314, 7
  %v2316 = vsub.s32 0, %v2315
  %v2317 = vrot.slane %v2256, %v2316
  %v2318 = vmul.f32 %v2095, %v2317
  %v2319 = vmul.f32 %v2096, %v2317
  %v2320 = vmul.f32 %v2097, %v2317
  %v2321 = vmul.f32 %v2098, %v2317
  %v2322 = vmul.f32 %v2099, %v2317
  %v2323 = vmul.f32 %v2100, %v2317
  %v2324 = vmul.f32 %v2101, %v2317
  %v2325 = vmul.f32 %v2102, %v2317
  %v2326 = vmul.f32 %v2103, %v2317
  %v2327 = vmul.f32 %v2104, %v2317
  %v2328 = vmul.f32 %v2105, %v2317
  %v2329 = vmul.f32 %v2106, %v2317
  %v2330 = vmul.f32 %v2107, %v2317
  %v2331 = vmul.f32 %v2108, %v2317
  %v2332 = vmul.f32 %v2109, %v2317
  %v2333 = vmul.f32 %v2110, %v2317
  %v2334 = vsub.f32 1.0, %v2256
  %v2335 = vlaneseq
  %v2336 = vshrl.u32 %v2335, 7
  %v2337 = vsub.s32 0, %v2336
  %v2338 = vrot.slane %v2334, %v2337
  %v2339 = vmul.f32 %v2239, %v2338
  %v2340 = vmul.f32 %v2240, %v2338
  %v2341 = vmul.f32 %v2241, %v2338
  %v2342 = vmul.f32 %v2242, %v2338
  %v2343 = vmul.f32 %v2243, %v2338
  %v2344 = vmul.f32 %v2244, %v2338
  %v2345 = vmul.f32 %v2245, %v2338
  %v2346 = vmul.f32 %v2246, %v2338
  %v2347 = vmul.f32 %v2247, %v2338
  %v2348 = vmul.f32 %v2248, %v2338
  %v2349 = vmul.f32 %v2249, %v2338
  %v2350 = vmul.f32 %v2250, %v2338
  %v2351 = vmul.f32 %v2251, %v2338
  %v2352 = vmul.f32 %v2252, %v2338
  %v2353 = vmul.f32 %v2253, %v2338
  %v2354 = vmul.f32 %v2254, %v2338
  %v2355 = vadd.f32 %v2318, %v2339
  %v2356 = vadd.f32 %v2319, %v2340
  %v2357 = vadd.f32 %v2320, %v2341
  %v2358 = vadd.f32 %v2321, %v2342
  %v2359 = vadd.f32 %v2322, %v2343
  %v2360 = vadd.f32 %v2323, %v2344
  %v2361 = vadd.f32 %v2324, %v2345
  %v2362 = vadd.f32 %v2325, %v2346
  %v2363 = vadd.f32 %v2326, %v2347
  %v2364 = vadd.f32 %v2327, %v2348
  %v2365 = vadd.f32 %v2328, %v2349
  %v2366 = vadd.f32 %v2329, %v2350
  %v2367 = vadd.f32 %v2330, %v2351
  %v2368 = vadd.f32 %v2331, %v2352
  %v2369 = vadd.f32 %v2332, %v2353
  %v2370 = vadd.f32 %v2333, %v2354
  %v2371 = vpack.c.bf16 %v2299, %v2298
  %v2372 = vpack.c.bf16 %v2301, %v2300
  %v2373 = vpack.c.bf16 %v2303, %v2302
  %v2374 = vpack.c.bf16 %v2305, %v2304
  %v2375 = vpack.c.bf16 %v2307, %v2306
  %v2376 = vpack.c.bf16 %v2309, %v2308
  %v2377 = vpack.c.bf16 %v2311, %v2310
  %v2378 = vpack.c.bf16 %v2313, %v2312
  %v2379 = vld [vmem:[%s7] sm:$0xff]
  %v2380 = vld [vmem:[%s7 + $0x8] sm:$0xff]
  %v2381 = vld [vmem:[%s7 + $0x10] sm:$0xff]
  %v2382 = vld [vmem:[%s7 + $0x18] sm:$0xff]
  %v2383 = vld [vmem:[%s7 + $0x20] sm:$0xff]
  %v2384 = vld [vmem:[%s7 + $0x28] sm:$0xff]
  %v2385 = vld [vmem:[%s7 + $0x30] sm:$0xff]
  %v2386 = vld [vmem:[%s7 + $0x38] sm:$0xff]
  %v2387 = vld [vmem:[%s7 + $0x40] sm:$0xff]
  %v2388 = vld [vmem:[%s7 + $0x48] sm:$0xff]
  %v2389 = vld [vmem:[%s7 + $0x50] sm:$0xff]
  %v2390 = vld [vmem:[%s7 + $0x58] sm:$0xff]
  %v2391 = vld [vmem:[%s7 + $0x60] sm:$0xff]
  %v2392 = vld [vmem:[%s7 + $0x68] sm:$0xff]
  %v2393 = vld [vmem:[%s7 + $0x70] sm:$0xff]
  %v2394 = vld [vmem:[%s7 + $0x78] sm:$0xff]
  %v2395 = vld [vmem:[%s7 + $0x80] sm:$0xff]
  %v2396 = vld [vmem:[%s7 + $0x88] sm:$0xff]
  %v2397 = vld [vmem:[%s7 + $0x90] sm:$0xff]
  %v2398 = vld [vmem:[%s7 + $0x98] sm:$0xff]
  %v2399 = vld [vmem:[%s7 + $0xa0] sm:$0xff]
  %v2400 = vld [vmem:[%s7 + $0xa8] sm:$0xff]
  %v2401 = vld [vmem:[%s7 + $0xb0] sm:$0xff]
  %v2402 = vld [vmem:[%s7 + $0xb8] sm:$0xff]
  %v2403 = vld [vmem:[%s7 + $0xc0] sm:$0xff]
  %v2404 = vld [vmem:[%s7 + $0xc8] sm:$0xff]
  %v2405 = vld [vmem:[%s7 + $0xd0] sm:$0xff]
  %v2406 = vld [vmem:[%s7 + $0xd8] sm:$0xff]
  %v2407 = vld [vmem:[%s7 + $0xe0] sm:$0xff]
  %v2408 = vld [vmem:[%s7 + $0xe8] sm:$0xff]
  %v2409 = vld [vmem:[%s7 + $0xf0] sm:$0xff]
  %v2410 = vld [vmem:[%s7 + $0xf8] sm:$0xff]
  %v2443 = vunpack.c.l.b16 %v2379
  %v2444 = vunpack.c.h.b16 %v2379
  %v2445 = vunpack.c.l.b16 %v2380
  %v2446 = vunpack.c.h.b16 %v2380
  %v2447 = vunpack.c.l.b16 %v2381
  %v2448 = vunpack.c.h.b16 %v2381
  %v2449 = vunpack.c.l.b16 %v2382
  %v2450 = vunpack.c.h.b16 %v2382
  %v2451 = vunpack.c.l.b16 %v2383
  %v2452 = vunpack.c.h.b16 %v2383
  %v2453 = vunpack.c.l.b16 %v2384
  %v2454 = vunpack.c.h.b16 %v2384
  %v2455 = vunpack.c.l.b16 %v2385
  %v2456 = vunpack.c.h.b16 %v2385
  %v2457 = vunpack.c.l.b16 %v2386
  %v2458 = vunpack.c.h.b16 %v2386
  %v2459 = vunpack.c.l.b16 %v2387
  %v2460 = vunpack.c.h.b16 %v2387
  %v2461 = vunpack.c.l.b16 %v2388
  %v2462 = vunpack.c.h.b16 %v2388
  %v2463 = vunpack.c.l.b16 %v2389
  %v2464 = vunpack.c.h.b16 %v2389
  %v2465 = vunpack.c.l.b16 %v2390
  %v2466 = vunpack.c.h.b16 %v2390
  %v2467 = vunpack.c.l.b16 %v2391
  %v2468 = vunpack.c.h.b16 %v2391
  %v2469 = vunpack.c.l.b16 %v2392
  %v2470 = vunpack.c.h.b16 %v2392
  %v2471 = vunpack.c.l.b16 %v2393
  %v2472 = vunpack.c.h.b16 %v2393
  %v2473 = vunpack.c.l.b16 %v2394
  %v2474 = vunpack.c.h.b16 %v2394
  %v2475 = vunpack.c.l.b16 %v2395
  %v2476 = vunpack.c.h.b16 %v2395
  %v2477 = vunpack.c.l.b16 %v2396
  %v2478 = vunpack.c.h.b16 %v2396
  %v2479 = vunpack.c.l.b16 %v2397
  %v2480 = vunpack.c.h.b16 %v2397
  %v2481 = vunpack.c.l.b16 %v2398
  %v2482 = vunpack.c.h.b16 %v2398
  %v2483 = vunpack.c.l.b16 %v2399
  %v2484 = vunpack.c.h.b16 %v2399
  %v2485 = vunpack.c.l.b16 %v2400
  %v2486 = vunpack.c.h.b16 %v2400
  %v2487 = vunpack.c.l.b16 %v2401
  %v2488 = vunpack.c.h.b16 %v2401
  %v2489 = vunpack.c.l.b16 %v2402
  %v2490 = vunpack.c.h.b16 %v2402
  %v2491 = vunpack.c.l.b16 %v2403
  %v2492 = vunpack.c.h.b16 %v2403
  %v2493 = vunpack.c.l.b16 %v2404
  %v2494 = vunpack.c.h.b16 %v2404
  %v2495 = vunpack.c.l.b16 %v2405
  %v2496 = vunpack.c.h.b16 %v2405
  %v2497 = vunpack.c.l.b16 %v2406
  %v2498 = vunpack.c.h.b16 %v2406
  %v2499 = vunpack.c.l.b16 %v2407
  %v2500 = vunpack.c.h.b16 %v2407
  %v2501 = vunpack.c.l.b16 %v2408
  %v2502 = vunpack.c.h.b16 %v2408
  %v2503 = vunpack.c.l.b16 %v2409
  %v2504 = vunpack.c.h.b16 %v2409
  %v2505 = vunpack.c.l.b16 %v2410
  %v2506 = vunpack.c.h.b16 %v2410
  %v2507 = vpack.c.b16 %v2447, %v2443
  %v2508 = vpack.c.b16 %v2448, %v2444
  %v2509 = vpack.c.b16 %v2449, %v2445
  %v2510 = vpack.c.b16 %v2450, %v2446
  %v2511 = vpack.c.b16 %v2455, %v2451
  %v2512 = vpack.c.b16 %v2456, %v2452
  %v2513 = vpack.c.b16 %v2457, %v2453
  %v2514 = vpack.c.b16 %v2458, %v2454
  %v2515 = vpack.c.b16 %v2463, %v2459
  %v2516 = vpack.c.b16 %v2464, %v2460
  %v2517 = vpack.c.b16 %v2465, %v2461
  %v2518 = vpack.c.b16 %v2466, %v2462
  %v2519 = vpack.c.b16 %v2471, %v2467
  %v2520 = vpack.c.b16 %v2472, %v2468
  %v2521 = vpack.c.b16 %v2473, %v2469
  %v2522 = vpack.c.b16 %v2474, %v2470
  %v2523 = vpack.c.b16 %v2479, %v2475
  %v2524 = vpack.c.b16 %v2480, %v2476
  %v2525 = vpack.c.b16 %v2481, %v2477
  %v2526 = vpack.c.b16 %v2482, %v2478
  %v2527 = vpack.c.b16 %v2487, %v2483
  %v2528 = vpack.c.b16 %v2488, %v2484
  %v2529 = vpack.c.b16 %v2489, %v2485
  %v2530 = vpack.c.b16 %v2490, %v2486
  %v2531 = vpack.c.b16 %v2495, %v2491
  %v2532 = vpack.c.b16 %v2496, %v2492
  %v2533 = vpack.c.b16 %v2497, %v2493
  %v2534 = vpack.c.b16 %v2498, %v2494
  %v2535 = vpack.c.b16 %v2503, %v2499
  %v2536 = vpack.c.b16 %v2504, %v2500
  %v2537 = vpack.c.b16 %v2505, %v2501
  %v2538 = vpack.c.b16 %v2506, %v2502
  %2571 = vmatprep.subr.bf16.mxu0 %v2536
  %2572 = vmatpush1.bf16.msra.mxu0 %v2535
  %2573 = vmatprep.subr.bf16.mxu0 %v2532
  %2574 = vmatpush1.bf16.msra.mxu0 %v2531
  %2575 = vmatprep.subr.bf16.mxu0 %v2528
  %2576 = vmatpush1.bf16.msra.mxu0 %v2527
  %2577 = vmatprep.subr.bf16.mxu0 %v2524
  %2578 = vmatpush1.bf16.msra.mxu0 %v2523
  %2579 = vmatprep.subr.bf16.mxu0 %v2520
  %2580 = vmatpush1.bf16.msra.mxu0 %v2519
  %2581 = vmatprep.subr.bf16.mxu0 %v2516
  %2582 = vmatpush1.bf16.msra.mxu0 %v2515
  %2583 = vmatprep.subr.bf16.mxu0 %v2512
  %2584 = vmatpush1.bf16.msra.mxu0 %v2511
  %2585 = vmatprep.subr.bf16.mxu0 %v2508
  %2586 = vmatpush1.bf16.msra.mxu0 %v2507
  %2587 = vmatprep.subr.bf16.mxu0 0
  %2588 = vmatpush2.bf16.msra.mxu0 0
  %2589 = vmatprep.subr.bf16.mxu0 0
  %2590 = vmatpush2.bf16.msra.mxu0 0
  %2591 = vmatprep.subr.bf16.mxu0 0
  %2592 = vmatpush2.bf16.msra.mxu0 0
  %2593 = vmatprep.subr.bf16.mxu0 0
  %2594 = vmatpush2.bf16.msra.mxu0 0
  %2595 = vmatprep.subr.bf16.mxu0 0
  %2596 = vmatpush2.bf16.msra.mxu0 0
  %2597 = vmatprep.subr.bf16.mxu0 0
  %2598 = vmatpush2.bf16.msra.mxu0 0
  %2599 = vmatprep.subr.bf16.mxu0 0
  %2600 = vmatpush2.bf16.msra.mxu0 0
  %2601 = vmatprep.subr.bf16.mxu0 0
  %2602 = vmatpush2.bf16.msra.mxu0 0
  %2603 = vmatprep.mubr.bf16.mxu0 0
  %2604 = vmatmul.mubr.bf16.gmra.mxu0 %v2371
  %v2605 = vpop.f32.mrf.mxu0
  %v2606 = vadd.f32 0.0, %v2605
  %v2607 = vpop.f32.mrf.mxu0
  %v2608 = vadd.f32 0.0, %v2607
  %v2609 = vpop.f32.mrf.mxu0
  %v2610 = vadd.f32 0.0, %v2609
  %v2611 = vpop.f32.mrf.mxu0
  %v2612 = vadd.f32 0.0, %v2611
  %2613 = vmatprep.mubr.bf16.mxu0 0
  %2614 = vmatmul.mubr.bf16.gmra.mxu0 %v2372
  %v2615 = vpop.f32.mrf.mxu0
  %v2616 = vadd.f32 0.0, %v2615
  %v2617 = vpop.f32.mrf.mxu0
  %v2618 = vadd.f32 0.0, %v2617
  %v2619 = vpop.f32.mrf.mxu0
  %v2620 = vadd.f32 0.0, %v2619
  %v2621 = vpop.f32.mrf.mxu0
  %v2622 = vadd.f32 0.0, %v2621
  %2623 = vmatprep.mubr.bf16.mxu0 0
  %2624 = vmatmul.mubr.bf16.gmra.mxu0 %v2373
  %v2625 = vpop.f32.mrf.mxu0
  %v2626 = vadd.f32 0.0, %v2625
  %v2627 = vpop.f32.mrf.mxu0
  %v2628 = vadd.f32 0.0, %v2627
  %v2629 = vpop.f32.mrf.mxu0
  %v2630 = vadd.f32 0.0, %v2629
  %v2631 = vpop.f32.mrf.mxu0
  %v2632 = vadd.f32 0.0, %v2631
  %2633 = vmatprep.mubr.bf16.mxu0 0
  %2634 = vmatmul.mubr.bf16.gmra.mxu0 %v2374
  %v2635 = vpop.f32.mrf.mxu0
  %v2636 = vadd.f32 0.0, %v2635
  %v2637 = vpop.f32.mrf.mxu0
  %v2638 = vadd.f32 0.0, %v2637
  %v2639 = vpop.f32.mrf.mxu0
  %v2640 = vadd.f32 0.0, %v2639
  %v2641 = vpop.f32.mrf.mxu0
  %v2642 = vadd.f32 0.0, %v2641
  %2643 = vmatprep.mubr.bf16.mxu0 0
  %2644 = vmatmul.mubr.bf16.gmra.mxu0 %v2375
  %v2645 = vpop.f32.mrf.mxu0
  %v2646 = vadd.f32 0.0, %v2645
  %v2647 = vpop.f32.mrf.mxu0
  %v2648 = vadd.f32 0.0, %v2647
  %v2649 = vpop.f32.mrf.mxu0
  %v2650 = vadd.f32 0.0, %v2649
  %v2651 = vpop.f32.mrf.mxu0
  %v2652 = vadd.f32 0.0, %v2651
  %2653 = vmatprep.mubr.bf16.mxu0 0
  %2654 = vmatmul.mubr.bf16.gmra.mxu0 %v2376
  %v2655 = vpop.f32.mrf.mxu0
  %v2656 = vadd.f32 0.0, %v2655
  %v2657 = vpop.f32.mrf.mxu0
  %v2658 = vadd.f32 0.0, %v2657
  %v2659 = vpop.f32.mrf.mxu0
  %v2660 = vadd.f32 0.0, %v2659
  %v2661 = vpop.f32.mrf.mxu0
  %v2662 = vadd.f32 0.0, %v2661
  %2663 = vmatprep.mubr.bf16.mxu0 0
  %2664 = vmatmul.mubr.bf16.gmra.mxu0 %v2377
  %v2665 = vpop.f32.mrf.mxu0
  %v2666 = vadd.f32 0.0, %v2665
  %v2667 = vpop.f32.mrf.mxu0
  %v2668 = vadd.f32 0.0, %v2667
  %v2669 = vpop.f32.mrf.mxu0
  %v2670 = vadd.f32 0.0, %v2669
  %v2671 = vpop.f32.mrf.mxu0
  %v2672 = vadd.f32 0.0, %v2671
  %2673 = vmatprep.mubr.bf16.mxu0 0
  %2674 = vmatmul.mubr.bf16.gmra.mxu0 %v2378
  %v2675 = vpop.f32.mrf.mxu0
  %v2676 = vadd.f32 0.0, %v2675
  %v2677 = vpop.f32.mrf.mxu0
  %v2678 = vadd.f32 0.0, %v2677
  %v2679 = vpop.f32.mrf.mxu0
  %v2680 = vadd.f32 0.0, %v2679
  %v2681 = vpop.f32.mrf.mxu0
  %v2682 = vadd.f32 0.0, %v2681
  %2683 = vdwg.mxu0
  %2684 = vmatprep.subr.bf16.mxu0 %v2538
  %2685 = vmatpush1.bf16.msra.mxu0 %v2537
  %2686 = vmatprep.subr.bf16.mxu0 %v2534
  %2687 = vmatpush1.bf16.msra.mxu0 %v2533
  %2688 = vmatprep.subr.bf16.mxu0 %v2530
  %2689 = vmatpush1.bf16.msra.mxu0 %v2529
  %2690 = vmatprep.subr.bf16.mxu0 %v2526
  %2691 = vmatpush1.bf16.msra.mxu0 %v2525
  %2692 = vmatprep.subr.bf16.mxu0 %v2522
  %2693 = vmatpush1.bf16.msra.mxu0 %v2521
  %2694 = vmatprep.subr.bf16.mxu0 %v2518
  %2695 = vmatpush1.bf16.msra.mxu0 %v2517
  %2696 = vmatprep.subr.bf16.mxu0 %v2514
  %2697 = vmatpush1.bf16.msra.mxu0 %v2513
  %2698 = vmatprep.subr.bf16.mxu0 %v2510
  %2699 = vmatpush1.bf16.msra.mxu0 %v2509
  %2700 = vmatprep.subr.bf16.mxu0 0
  %2701 = vmatpush2.bf16.msra.mxu0 0
  %2702 = vmatprep.subr.bf16.mxu0 0
  %2703 = vmatpush2.bf16.msra.mxu0 0
  %2704 = vmatprep.subr.bf16.mxu0 0
  %2705 = vmatpush2.bf16.msra.mxu0 0
  %2706 = vmatprep.subr.bf16.mxu0 0
  %2707 = vmatpush2.bf16.msra.mxu0 0
  %2708 = vmatprep.subr.bf16.mxu0 0
  %2709 = vmatpush2.bf16.msra.mxu0 0
  %2710 = vmatprep.subr.bf16.mxu0 0
  %2711 = vmatpush2.bf16.msra.mxu0 0
  %2712 = vmatprep.subr.bf16.mxu0 0
  %2713 = vmatpush2.bf16.msra.mxu0 0
  %2714 = vmatprep.subr.bf16.mxu0 0
  %2715 = vmatpush2.bf16.msra.mxu0 0
  %2716 = vmatprep.mubr.bf16.mxu0 0
  %2717 = vmatmul.mubr.bf16.gmra.mxu0 %v2371
  %v2718 = vpop.f32.mrf.mxu0
  %v2719 = vadd.f32 0.0, %v2718
  %v2720 = vpop.f32.mrf.mxu0
  %v2721 = vadd.f32 0.0, %v2720
  %v2722 = vpop.f32.mrf.mxu0
  %v2723 = vadd.f32 0.0, %v2722
  %v2724 = vpop.f32.mrf.mxu0
  %v2725 = vadd.f32 0.0, %v2724
  %2726 = vmatprep.mubr.bf16.mxu0 0
  %2727 = vmatmul.mubr.bf16.gmra.mxu0 %v2372
  %v2728 = vpop.f32.mrf.mxu0
  %v2729 = vadd.f32 0.0, %v2728
  %v2730 = vpop.f32.mrf.mxu0
  %v2731 = vadd.f32 0.0, %v2730
  %v2732 = vpop.f32.mrf.mxu0
  %v2733 = vadd.f32 0.0, %v2732
  %v2734 = vpop.f32.mrf.mxu0
  %v2735 = vadd.f32 0.0, %v2734
  %2736 = vmatprep.mubr.bf16.mxu0 0
  %2737 = vmatmul.mubr.bf16.gmra.mxu0 %v2373
  %v2738 = vpop.f32.mrf.mxu0
  %v2739 = vadd.f32 0.0, %v2738
  %v2740 = vpop.f32.mrf.mxu0
  %v2741 = vadd.f32 0.0, %v2740
  %v2742 = vpop.f32.mrf.mxu0
  %v2743 = vadd.f32 0.0, %v2742
  %v2744 = vpop.f32.mrf.mxu0
  %v2745 = vadd.f32 0.0, %v2744
  %2746 = vmatprep.mubr.bf16.mxu0 0
  %2747 = vmatmul.mubr.bf16.gmra.mxu0 %v2374
  %v2748 = vpop.f32.mrf.mxu0
  %v2749 = vadd.f32 0.0, %v2748
  %v2750 = vpop.f32.mrf.mxu0
  %v2751 = vadd.f32 0.0, %v2750
  %v2752 = vpop.f32.mrf.mxu0
  %v2753 = vadd.f32 0.0, %v2752
  %v2754 = vpop.f32.mrf.mxu0
  %v2755 = vadd.f32 0.0, %v2754
  %2756 = vmatprep.mubr.bf16.mxu0 0
  %2757 = vmatmul.mubr.bf16.gmra.mxu0 %v2375
  %v2758 = vpop.f32.mrf.mxu0
  %v2759 = vadd.f32 0.0, %v2758
  %v2760 = vpop.f32.mrf.mxu0
  %v2761 = vadd.f32 0.0, %v2760
  %v2762 = vpop.f32.mrf.mxu0
  %v2763 = vadd.f32 0.0, %v2762
  %v2764 = vpop.f32.mrf.mxu0
  %v2765 = vadd.f32 0.0, %v2764
  %2766 = vmatprep.mubr.bf16.mxu0 0
  %2767 = vmatmul.mubr.bf16.gmra.mxu0 %v2376
  %v2768 = vpop.f32.mrf.mxu0
  %v2769 = vadd.f32 0.0, %v2768
  %v2770 = vpop.f32.mrf.mxu0
  %v2771 = vadd.f32 0.0, %v2770
  %v2772 = vpop.f32.mrf.mxu0
  %v2773 = vadd.f32 0.0, %v2772
  %v2774 = vpop.f32.mrf.mxu0
  %v2775 = vadd.f32 0.0, %v2774
  %2776 = vmatprep.mubr.bf16.mxu0 0
  %2777 = vmatmul.mubr.bf16.gmra.mxu0 %v2377
  %v2778 = vpop.f32.mrf.mxu0
  %v2779 = vadd.f32 0.0, %v2778
  %v2780 = vpop.f32.mrf.mxu0
  %v2781 = vadd.f32 0.0, %v2780
  %v2782 = vpop.f32.mrf.mxu0
  %v2783 = vadd.f32 0.0, %v2782
  %v2784 = vpop.f32.mrf.mxu0
  %v2785 = vadd.f32 0.0, %v2784
  %2786 = vmatprep.mubr.bf16.mxu0 0
  %2787 = vmatmul.mubr.bf16.gmra.mxu0 %v2378
  %v2788 = vpop.f32.mrf.mxu0
  %v2789 = vadd.f32 0.0, %v2788
  %v2790 = vpop.f32.mrf.mxu0
  %v2791 = vadd.f32 0.0, %v2790
  %v2792 = vpop.f32.mrf.mxu0
  %v2793 = vadd.f32 0.0, %v2792
  %v2794 = vpop.f32.mrf.mxu0
  %v2795 = vadd.f32 0.0, %v2794
  %2796 = vdwg.mxu0
  %v2797 = vmax.f32 %v2606, 0.0
  %v2798 = vmax.f32 %v2608, 0.0
  %v2799 = vmax.f32 %v2719, 0.0
  %v2800 = vmax.f32 %v2721, 0.0
  %v2801 = vmax.f32 %v2610, 0.0
  %v2802 = vmax.f32 %v2612, 0.0
  %v2803 = vmax.f32 %v2723, 0.0
  %v2804 = vmax.f32 %v2725, 0.0
  %v2805 = vmax.f32 %v2616, 0.0
  %v2806 = vmax.f32 %v2618, 0.0
  %v2807 = vmax.f32 %v2729, 0.0
  %v2808 = vmax.f32 %v2731, 0.0
  %v2809 = vmax.f32 %v2620, 0.0
  %v2810 = vmax.f32 %v2622, 0.0
  %v2811 = vmax.f32 %v2733, 0.0
  %v2812 = vmax.f32 %v2735, 0.0
  %v2813 = vmax.f32 %v2626, 0.0
  %v2814 = vmax.f32 %v2628, 0.0
  %v2815 = vmax.f32 %v2739, 0.0
  %v2816 = vmax.f32 %v2741, 0.0
  %v2817 = vmax.f32 %v2630, 0.0
  %v2818 = vmax.f32 %v2632, 0.0
  %v2819 = vmax.f32 %v2743, 0.0
  %v2820 = vmax.f32 %v2745, 0.0
  %v2821 = vmax.f32 %v2636, 0.0
  %v2822 = vmax.f32 %v2638, 0.0
  %v2823 = vmax.f32 %v2749, 0.0
  %v2824 = vmax.f32 %v2751, 0.0
  %v2825 = vmax.f32 %v2640, 0.0
  %v2826 = vmax.f32 %v2642, 0.0
  %v2827 = vmax.f32 %v2753, 0.0
  %v2828 = vmax.f32 %v2755, 0.0
  %v2829 = vmax.f32 %v2646, 0.0
  %v2830 = vmax.f32 %v2648, 0.0
  %v2831 = vmax.f32 %v2759, 0.0
  %v2832 = vmax.f32 %v2761, 0.0
  %v2833 = vmax.f32 %v2650, 0.0
  %v2834 = vmax.f32 %v2652, 0.0
  %v2835 = vmax.f32 %v2763, 0.0
  %v2836 = vmax.f32 %v2765, 0.0
  %v2837 = vmax.f32 %v2656, 0.0
  %v2838 = vmax.f32 %v2658, 0.0
  %v2839 = vmax.f32 %v2769, 0.0
  %v2840 = vmax.f32 %v2771, 0.0
  %v2841 = vmax.f32 %v2660, 0.0
  %v2842 = vmax.f32 %v2662, 0.0
  %v2843 = vmax.f32 %v2773, 0.0
  %v2844 = vmax.f32 %v2775, 0.0
  %v2845 = vmax.f32 %v2666, 0.0
  %v2846 = vmax.f32 %v2668, 0.0
  %v2847 = vmax.f32 %v2779, 0.0
  %v2848 = vmax.f32 %v2781, 0.0
  %v2849 = vmax.f32 %v2670, 0.0
  %v2850 = vmax.f32 %v2672, 0.0
  %v2851 = vmax.f32 %v2783, 0.0
  %v2852 = vmax.f32 %v2785, 0.0
  %v2853 = vmax.f32 %v2676, 0.0
  %v2854 = vmax.f32 %v2678, 0.0
  %v2855 = vmax.f32 %v2789, 0.0
  %v2856 = vmax.f32 %v2791, 0.0
  %v2857 = vmax.f32 %v2680, 0.0
  %v2858 = vmax.f32 %v2682, 0.0
  %v2859 = vmax.f32 %v2793, 0.0
  %v2860 = vmax.f32 %v2795, 0.0
  %v2861 = vmul.f32 %v2797, %v2797
  %v2862 = vmul.f32 %v2798, %v2798
  %v2863 = vmul.f32 %v2799, %v2799
  %v2864 = vmul.f32 %v2800, %v2800
  %v2865 = vmul.f32 %v2801, %v2801
  %v2866 = vmul.f32 %v2802, %v2802
  %v2867 = vmul.f32 %v2803, %v2803
  %v2868 = vmul.f32 %v2804, %v2804
  %v2869 = vmul.f32 %v2805, %v2805
  %v2870 = vmul.f32 %v2806, %v2806
  %v2871 = vmul.f32 %v2807, %v2807
  %v2872 = vmul.f32 %v2808, %v2808
  %v2873 = vmul.f32 %v2809, %v2809
  %v2874 = vmul.f32 %v2810, %v2810
  %v2875 = vmul.f32 %v2811, %v2811
  %v2876 = vmul.f32 %v2812, %v2812
  %v2877 = vmul.f32 %v2813, %v2813
  %v2878 = vmul.f32 %v2814, %v2814
  %v2879 = vmul.f32 %v2815, %v2815
  %v2880 = vmul.f32 %v2816, %v2816
  %v2881 = vmul.f32 %v2817, %v2817
  %v2882 = vmul.f32 %v2818, %v2818
  %v2883 = vmul.f32 %v2819, %v2819
  %v2884 = vmul.f32 %v2820, %v2820
  %v2885 = vmul.f32 %v2821, %v2821
  %v2886 = vmul.f32 %v2822, %v2822
  %v2887 = vmul.f32 %v2823, %v2823
  %v2888 = vmul.f32 %v2824, %v2824
  %v2889 = vmul.f32 %v2825, %v2825
  %v2890 = vmul.f32 %v2826, %v2826
  %v2891 = vmul.f32 %v2827, %v2827
  %v2892 = vmul.f32 %v2828, %v2828
  %v2893 = vmul.f32 %v2829, %v2829
  %v2894 = vmul.f32 %v2830, %v2830
  %v2895 = vmul.f32 %v2831, %v2831
  %v2896 = vmul.f32 %v2832, %v2832
  %v2897 = vmul.f32 %v2833, %v2833
  %v2898 = vmul.f32 %v2834, %v2834
  %v2899 = vmul.f32 %v2835, %v2835
  %v2900 = vmul.f32 %v2836, %v2836
  %v2901 = vmul.f32 %v2837, %v2837
  %v2902 = vmul.f32 %v2838, %v2838
  %v2903 = vmul.f32 %v2839, %v2839
  %v2904 = vmul.f32 %v2840, %v2840
  %v2905 = vmul.f32 %v2841, %v2841
  %v2906 = vmul.f32 %v2842, %v2842
  %v2907 = vmul.f32 %v2843, %v2843
  %v2908 = vmul.f32 %v2844, %v2844
  %v2909 = vmul.f32 %v2845, %v2845
  %v2910 = vmul.f32 %v2846, %v2846
  %v2911 = vmul.f32 %v2847, %v2847
  %v2912 = vmul.f32 %v2848, %v2848
  %v2913 = vmul.f32 %v2849, %v2849
  %v2914 = vmul.f32 %v2850, %v2850
  %v2915 = vmul.f32 %v2851, %v2851
  %v2916 = vmul.f32 %v2852, %v2852
  %v2917 = vmul.f32 %v2853, %v2853
  %v2918 = vmul.f32 %v2854, %v2854
  %v2919 = vmul.f32 %v2855, %v2855
  %v2920 = vmul.f32 %v2856, %v2856
  %v2921 = vmul.f32 %v2857, %v2857
  %v2922 = vmul.f32 %v2858, %v2858
  %v2923 = vmul.f32 %v2859, %v2859
  %v2924 = vmul.f32 %v2860, %v2860
  %v2925 = vpack.c.bf16 %v2865, %v2861
  %v2926 = vpack.c.bf16 %v2866, %v2862
  %v2927 = vpack.c.bf16 %v2867, %v2863
  %v2928 = vpack.c.bf16 %v2868, %v2864
  %v2929 = vpack.c.bf16 %v2873, %v2869
  %v2930 = vpack.c.bf16 %v2874, %v2870
  %v2931 = vpack.c.bf16 %v2875, %v2871
  %v2932 = vpack.c.bf16 %v2876, %v2872
  %v2933 = vpack.c.bf16 %v2881, %v2877
  %v2934 = vpack.c.bf16 %v2882, %v2878
  %v2935 = vpack.c.bf16 %v2883, %v2879
  %v2936 = vpack.c.bf16 %v2884, %v2880
  %v2937 = vpack.c.bf16 %v2889, %v2885
  %v2938 = vpack.c.bf16 %v2890, %v2886
  %v2939 = vpack.c.bf16 %v2891, %v2887
  %v2940 = vpack.c.bf16 %v2892, %v2888
  %v2941 = vpack.c.bf16 %v2897, %v2893
  %v2942 = vpack.c.bf16 %v2898, %v2894
  %v2943 = vpack.c.bf16 %v2899, %v2895
  %v2944 = vpack.c.bf16 %v2900, %v2896
  %v2945 = vpack.c.bf16 %v2905, %v2901
  %v2946 = vpack.c.bf16 %v2906, %v2902
  %v2947 = vpack.c.bf16 %v2907, %v2903
  %v2948 = vpack.c.bf16 %v2908, %v2904
  %v2949 = vpack.c.bf16 %v2913, %v2909
  %v2950 = vpack.c.bf16 %v2914, %v2910
  %v2951 = vpack.c.bf16 %v2915, %v2911
  %v2952 = vpack.c.bf16 %v2916, %v2912
  %v2953 = vpack.c.bf16 %v2921, %v2917
  %v2954 = vpack.c.bf16 %v2922, %v2918
  %v2955 = vpack.c.bf16 %v2923, %v2919
  %v2956 = vpack.c.bf16 %v2924, %v2920
  %v2957 = vld [vmem:[%s8] sm:$0xf]
  %v2958 = vld [vmem:[%s8 + $0x4] sm:$0xf]
  %v2959 = vld [vmem:[%s8 + $0x8] sm:$0xf]
  %v2960 = vld [vmem:[%s8 + $0xc] sm:$0xf]
  %v2961 = vld [vmem:[%s8 + $0x10] sm:$0xf]
  %v2962 = vld [vmem:[%s8 + $0x14] sm:$0xf]
  %v2963 = vld [vmem:[%s8 + $0x18] sm:$0xf]
  %v2964 = vld [vmem:[%s8 + $0x1c] sm:$0xf]
  %v2965 = vld [vmem:[%s8 + $0x20] sm:$0xf]
  %v2966 = vld [vmem:[%s8 + $0x24] sm:$0xf]
  %v2967 = vld [vmem:[%s8 + $0x28] sm:$0xf]
  %v2968 = vld [vmem:[%s8 + $0x2c] sm:$0xf]
  %v2969 = vld [vmem:[%s8 + $0x30] sm:$0xf]
  %v2970 = vld [vmem:[%s8 + $0x34] sm:$0xf]
  %v2971 = vld [vmem:[%s8 + $0x38] sm:$0xf]
  %v2972 = vld [vmem:[%s8 + $0x3c] sm:$0xf]
  %v2973 = vld [vmem:[%s8 + $0x40] sm:$0xf]
  %v2974 = vld [vmem:[%s8 + $0x44] sm:$0xf]
  %v2975 = vld [vmem:[%s8 + $0x48] sm:$0xf]
  %v2976 = vld [vmem:[%s8 + $0x4c] sm:$0xf]
  %v2977 = vld [vmem:[%s8 + $0x50] sm:$0xf]
  %v2978 = vld [vmem:[%s8 + $0x54] sm:$0xf]
  %v2979 = vld [vmem:[%s8 + $0x58] sm:$0xf]
  %v2980 = vld [vmem:[%s8 + $0x5c] sm:$0xf]
  %v2981 = vld [vmem:[%s8 + $0x60] sm:$0xf]
  %v2982 = vld [vmem:[%s8 + $0x64] sm:$0xf]
  %v2983 = vld [vmem:[%s8 + $0x68] sm:$0xf]
  %v2984 = vld [vmem:[%s8 + $0x6c] sm:$0xf]
  %v2985 = vld [vmem:[%s8 + $0x70] sm:$0xf]
  %v2986 = vld [vmem:[%s8 + $0x74] sm:$0xf]
  %v2987 = vld [vmem:[%s8 + $0x78] sm:$0xf]
  %v2988 = vld [vmem:[%s8 + $0x7c] sm:$0xf]
  %v2989 = vld [vmem:[%s8 + $0x80] sm:$0xf]
  %v2990 = vld [vmem:[%s8 + $0x84] sm:$0xf]
  %v2991 = vld [vmem:[%s8 + $0x88] sm:$0xf]
  %v2992 = vld [vmem:[%s8 + $0x8c] sm:$0xf]
  %v2993 = vld [vmem:[%s8 + $0x90] sm:$0xf]
  %v2994 = vld [vmem:[%s8 + $0x94] sm:$0xf]
  %v2995 = vld [vmem:[%s8 + $0x98] sm:$0xf]
  %v2996 = vld [vmem:[%s8 + $0x9c] sm:$0xf]
  %v2997 = vld [vmem:[%s8 + $0xa0] sm:$0xf]
  %v2998 = vld [vmem:[%s8 + $0xa4] sm:$0xf]
  %v2999 = vld [vmem:[%s8 + $0xa8] sm:$0xf]
  %v3000 = vld [vmem:[%s8 + $0xac] sm:$0xf]
  %v3001 = vld [vmem:[%s8 + $0xb0] sm:$0xf]
  %v3002 = vld [vmem:[%s8 + $0xb4] sm:$0xf]
  %v3003 = vld [vmem:[%s8 + $0xb8] sm:$0xf]
  %v3004 = vld [vmem:[%s8 + $0xbc] sm:$0xf]
  %v3005 = vld [vmem:[%s8 + $0xc0] sm:$0xf]
  %v3006 = vld [vmem:[%s8 + $0xc4] sm:$0xf]
  %v3007 = vld [vmem:[%s8 + $0xc8] sm:$0xf]
  %v3008 = vld [vmem:[%s8 + $0xcc] sm:$0xf]
  %v3009 = vld [vmem:[%s8 + $0xd0] sm:$0xf]
  %v3010 = vld [vmem:[%s8 + $0xd4] sm:$0xf]
  %v3011 = vld [vmem:[%s8 + $0xd8] sm:$0xf]
  %v3012 = vld [vmem:[%s8 + $0xdc] sm:$0xf]
  %v3013 = vld [vmem:[%s8 + $0xe0] sm:$0xf]
  %v3014 = vld [vmem:[%s8 + $0xe4] sm:$0xf]
  %v3015 = vld [vmem:[%s8 + $0xe8] sm:$0xf]
  %v3016 = vld [vmem:[%s8 + $0xec] sm:$0xf]
  %v3017 = vld [vmem:[%s8 + $0xf0] sm:$0xf]
  %v3018 = vld [vmem:[%s8 + $0xf4] sm:$0xf]
  %v3019 = vld [vmem:[%s8 + $0xf8] sm:$0xf]
  %v3020 = vld [vmem:[%s8 + $0xfc] sm:$0xf]
  %v3085 = vunpack.c.l.b16 %v2957
  %v3086 = vunpack.c.l.b16 %v2958
  %v3087 = vunpack.c.l.b16 %v2959
  %v3088 = vunpack.c.l.b16 %v2960
  %v3089 = vunpack.c.l.b16 %v2961
  %v3090 = vunpack.c.l.b16 %v2962
  %v3091 = vunpack.c.l.b16 %v2963
  %v3092 = vunpack.c.l.b16 %v2964
  %v3093 = vunpack.c.l.b16 %v2965
  %v3094 = vunpack.c.l.b16 %v2966
  %v3095 = vunpack.c.l.b16 %v2967
  %v3096 = vunpack.c.l.b16 %v2968
  %v3097 = vunpack.c.l.b16 %v2969
  %v3098 = vunpack.c.l.b16 %v2970
  %v3099 = vunpack.c.l.b16 %v2971
  %v3100 = vunpack.c.l.b16 %v2972
  %v3101 = vunpack.c.l.b16 %v2973
  %v3102 = vunpack.c.l.b16 %v2974
  %v3103 = vunpack.c.l.b16 %v2975
  %v3104 = vunpack.c.l.b16 %v2976
  %v3105 = vunpack.c.l.b16 %v2977
  %v3106 = vunpack.c.l.b16 %v2978
  %v3107 = vunpack.c.l.b16 %v2979
  %v3108 = vunpack.c.l.b16 %v2980
  %v3109 = vunpack.c.l.b16 %v2981
  %v3110 = vunpack.c.l.b16 %v2982
  %v3111 = vunpack.c.l.b16 %v2983
  %v3112 = vunpack.c.l.b16 %v2984
  %v3113 = vunpack.c.l.b16 %v2985
  %v3114 = vunpack.c.l.b16 %v2986
  %v3115 = vunpack.c.l.b16 %v2987
  %v3116 = vunpack.c.l.b16 %v2988
  %v3117 = vunpack.c.l.b16 %v2989
  %v3118 = vunpack.c.l.b16 %v2990
  %v3119 = vunpack.c.l.b16 %v2991
  %v3120 = vunpack.c.l.b16 %v2992
  %v3121 = vunpack.c.l.b16 %v2993
  %v3122 = vunpack.c.l.b16 %v2994
  %v3123 = vunpack.c.l.b16 %v2995
  %v3124 = vunpack.c.l.b16 %v2996
  %v3125 = vunpack.c.l.b16 %v2997
  %v3126 = vunpack.c.l.b16 %v2998
  %v3127 = vunpack.c.l.b16 %v2999
  %v3128 = vunpack.c.l.b16 %v3000
  %v3129 = vunpack.c.l.b16 %v3001
  %v3130 = vunpack.c.l.b16 %v3002
  %v3131 = vunpack.c.l.b16 %v3003
  %v3132 = vunpack.c.l.b16 %v3004
  %v3133 = vunpack.c.l.b16 %v3005
  %v3134 = vunpack.c.l.b16 %v3006
  %v3135 = vunpack.c.l.b16 %v3007
  %v3136 = vunpack.c.l.b16 %v3008
  %v3137 = vunpack.c.l.b16 %v3009
  %v3138 = vunpack.c.l.b16 %v3010
  %v3139 = vunpack.c.l.b16 %v3011
  %v3140 = vunpack.c.l.b16 %v3012
  %v3141 = vunpack.c.l.b16 %v3013
  %v3142 = vunpack.c.l.b16 %v3014
  %v3143 = vunpack.c.l.b16 %v3015
  %v3144 = vunpack.c.l.b16 %v3016
  %v3145 = vunpack.c.l.b16 %v3017
  %v3146 = vunpack.c.l.b16 %v3018
  %v3147 = vunpack.c.l.b16 %v3019
  %v3148 = vunpack.c.l.b16 %v3020
  %v3149 = vpack.c.b16 %v3086, %v3085
  %v3150 = vpack.c.b16 %v3088, %v3087
  %v3151 = vpack.c.b16 %v3090, %v3089
  %v3152 = vpack.c.b16 %v3092, %v3091
  %v3153 = vpack.c.b16 %v3094, %v3093
  %v3154 = vpack.c.b16 %v3096, %v3095
  %v3155 = vpack.c.b16 %v3098, %v3097
  %v3156 = vpack.c.b16 %v3100, %v3099
  %v3157 = vpack.c.b16 %v3102, %v3101
  %v3158 = vpack.c.b16 %v3104, %v3103
  %v3159 = vpack.c.b16 %v3106, %v3105
  %v3160 = vpack.c.b16 %v3108, %v3107
  %v3161 = vpack.c.b16 %v3110, %v3109
  %v3162 = vpack.c.b16 %v3112, %v3111
  %v3163 = vpack.c.b16 %v3114, %v3113
  %v3164 = vpack.c.b16 %v3116, %v3115
  %v3165 = vpack.c.b16 %v3118, %v3117
  %v3166 = vpack.c.b16 %v3120, %v3119
  %v3167 = vpack.c.b16 %v3122, %v3121
  %v3168 = vpack.c.b16 %v3124, %v3123
  %v3169 = vpack.c.b16 %v3126, %v3125
  %v3170 = vpack.c.b16 %v3128, %v3127
  %v3171 = vpack.c.b16 %v3130, %v3129
  %v3172 = vpack.c.b16 %v3132, %v3131
  %v3173 = vpack.c.b16 %v3134, %v3133
  %v3174 = vpack.c.b16 %v3136, %v3135
  %v3175 = vpack.c.b16 %v3138, %v3137
  %v3176 = vpack.c.b16 %v3140, %v3139
  %v3177 = vpack.c.b16 %v3142, %v3141
  %v3178 = vpack.c.b16 %v3144, %v3143
  %v3179 = vpack.c.b16 %v3146, %v3145
  %v3180 = vpack.c.b16 %v3148, %v3147
  %3213 = vmatprep.subr.bf16.mxu0 0
  %3214 = vmatpush1.bf16.msra.mxu0 %v3156
  %3215 = vmatprep.subr.bf16.mxu0 0
  %3216 = vmatpush1.bf16.msra.mxu0 %v3155
  %3217 = vmatprep.subr.bf16.mxu0 0
  %3218 = vmatpush1.bf16.msra.mxu0 %v3154
  %3219 = vmatprep.subr.bf16.mxu0 0
  %3220 = vmatpush1.bf16.msra.mxu0 %v3153
  %3221 = vmatprep.subr.bf16.mxu0 0
  %3222 = vmatpush1.bf16.msra.mxu0 %v3152
  %3223 = vmatprep.subr.bf16.mxu0 0
  %3224 = vmatpush1.bf16.msra.mxu0 %v3151
  %3225 = vmatprep.subr.bf16.mxu0 0
  %3226 = vmatpush1.bf16.msra.mxu0 %v3150
  %3227 = vmatprep.subr.bf16.mxu0 0
  %3228 = vmatpush1.bf16.msra.mxu0 %v3149
  %3229 = vmatprep.subr.bf16.mxu0 0
  %3230 = vmatpush2.bf16.msra.mxu0 %v3164
  %3231 = vmatprep.subr.bf16.mxu0 0
  %3232 = vmatpush2.bf16.msra.mxu0 %v3163
  %3233 = vmatprep.subr.bf16.mxu0 0
  %3234 = vmatpush2.bf16.msra.mxu0 %v3162
  %3235 = vmatprep.subr.bf16.mxu0 0
  %3236 = vmatpush2.bf16.msra.mxu0 %v3161
  %3237 = vmatprep.subr.bf16.mxu0 0
  %3238 = vmatpush2.bf16.msra.mxu0 %v3160
  %3239 = vmatprep.subr.bf16.mxu0 0
  %3240 = vmatpush2.bf16.msra.mxu0 %v3159
  %3241 = vmatprep.subr.bf16.mxu0 0
  %3242 = vmatpush2.bf16.msra.mxu0 %v3158
  %3243 = vmatprep.subr.bf16.mxu0 0
  %3244 = vmatpush2.bf16.msra.mxu0 %v3157
  %3245 = vmatprep.mubr.bf16.mxu0 %v2926
  %3246 = vmatmul.mubr.bf16.gmra.mxu0 %v2925
  %v3247 = vpop.f32.mrf.mxu0
  %v3248 = vadd.f32 0.0, %v3247
  %v3249 = vpop.f32.mrf.mxu0
  %v3250 = vpop.f32.mrf.mxu0
  %v3251 = vadd.f32 0.0, %v3250
  %v3252 = vpop.f32.mrf.mxu0
  %3253 = vmatprep.mubr.bf16.mxu0 %v2930
  %3254 = vmatmul.mubr.bf16.gmra.mxu0 %v2929
  %v3255 = vpop.f32.mrf.mxu0
  %v3256 = vadd.f32 0.0, %v3255
  %v3257 = vpop.f32.mrf.mxu0
  %v3258 = vpop.f32.mrf.mxu0
  %v3259 = vadd.f32 0.0, %v3258
  %v3260 = vpop.f32.mrf.mxu0
  %3261 = vmatprep.mubr.bf16.mxu0 %v2934
  %3262 = vmatmul.mubr.bf16.gmra.mxu0 %v2933
  %v3263 = vpop.f32.mrf.mxu0
  %v3264 = vadd.f32 0.0, %v3263
  %v3265 = vpop.f32.mrf.mxu0
  %v3266 = vpop.f32.mrf.mxu0
  %v3267 = vadd.f32 0.0, %v3266
  %v3268 = vpop.f32.mrf.mxu0
  %3269 = vmatprep.mubr.bf16.mxu0 %v2938
  %3270 = vmatmul.mubr.bf16.gmra.mxu0 %v2937
  %v3271 = vpop.f32.mrf.mxu0
  %v3272 = vadd.f32 0.0, %v3271
  %v3273 = vpop.f32.mrf.mxu0
  %v3274 = vpop.f32.mrf.mxu0
  %v3275 = vadd.f32 0.0, %v3274
  %v3276 = vpop.f32.mrf.mxu0
  %3277 = vmatprep.mubr.bf16.mxu0 %v2942
  %3278 = vmatmul.mubr.bf16.gmra.mxu0 %v2941
  %v3279 = vpop.f32.mrf.mxu0
  %v3280 = vadd.f32 0.0, %v3279
  %v3281 = vpop.f32.mrf.mxu0
  %v3282 = vpop.f32.mrf.mxu0
  %v3283 = vadd.f32 0.0, %v3282
  %v3284 = vpop.f32.mrf.mxu0
  %3285 = vmatprep.mubr.bf16.mxu0 %v2946
  %3286 = vmatmul.mubr.bf16.gmra.mxu0 %v2945
  %v3287 = vpop.f32.mrf.mxu0
  %v3288 = vadd.f32 0.0, %v3287
  %v3289 = vpop.f32.mrf.mxu0
  %v3290 = vpop.f32.mrf.mxu0
  %v3291 = vadd.f32 0.0, %v3290
  %v3292 = vpop.f32.mrf.mxu0
  %3293 = vmatprep.mubr.bf16.mxu0 %v2950
  %3294 = vmatmul.mubr.bf16.gmra.mxu0 %v2949
  %v3295 = vpop.f32.mrf.mxu0
  %v3296 = vadd.f32 0.0, %v3295
  %v3297 = vpop.f32.mrf.mxu0
  %v3298 = vpop.f32.mrf.mxu0
  %v3299 = vadd.f32 0.0, %v3298
  %v3300 = vpop.f32.mrf.mxu0
  %3301 = vmatprep.mubr.bf16.mxu0 %v2954
  %3302 = vmatmul.mubr.bf16.gmra.mxu0 %v2953
  %v3303 = vpop.f32.mrf.mxu0
  %v3304 = vadd.f32 0.0, %v3303
  %v3305 = vpop.f32.mrf.mxu0
  %v3306 = vpop.f32.mrf.mxu0
  %v3307 = vadd.f32 0.0, %v3306
  %v3308 = vpop.f32.mrf.mxu0
  %3309 = vdwg.mxu0
  %3310 = vmatprep.subr.bf16.mxu0 0
  %3311 = vmatpush1.bf16.msra.mxu0 %v3172
  %3312 = vmatprep.subr.bf16.mxu0 0
  %3313 = vmatpush1.bf16.msra.mxu0 %v3171
  %3314 = vmatprep.subr.bf16.mxu0 0
  %3315 = vmatpush1.bf16.msra.mxu0 %v3170
  %3316 = vmatprep.subr.bf16.mxu0 0
  %3317 = vmatpush1.bf16.msra.mxu0 %v3169
  %3318 = vmatprep.subr.bf16.mxu0 0
  %3319 = vmatpush1.bf16.msra.mxu0 %v3168
  %3320 = vmatprep.subr.bf16.mxu0 0
  %3321 = vmatpush1.bf16.msra.mxu0 %v3167
  %3322 = vmatprep.subr.bf16.mxu0 0
  %3323 = vmatpush1.bf16.msra.mxu0 %v3166
  %3324 = vmatprep.subr.bf16.mxu0 0
  %3325 = vmatpush1.bf16.msra.mxu0 %v3165
  %3326 = vmatprep.subr.bf16.mxu0 0
  %3327 = vmatpush2.bf16.msra.mxu0 %v3180
  %3328 = vmatprep.subr.bf16.mxu0 0
  %3329 = vmatpush2.bf16.msra.mxu0 %v3179
  %3330 = vmatprep.subr.bf16.mxu0 0
  %3331 = vmatpush2.bf16.msra.mxu0 %v3178
  %3332 = vmatprep.subr.bf16.mxu0 0
  %3333 = vmatpush2.bf16.msra.mxu0 %v3177
  %3334 = vmatprep.subr.bf16.mxu0 0
  %3335 = vmatpush2.bf16.msra.mxu0 %v3176
  %3336 = vmatprep.subr.bf16.mxu0 0
  %3337 = vmatpush2.bf16.msra.mxu0 %v3175
  %3338 = vmatprep.subr.bf16.mxu0 0
  %3339 = vmatpush2.bf16.msra.mxu0 %v3174
  %3340 = vmatprep.subr.bf16.mxu0 0
  %3341 = vmatpush2.bf16.msra.mxu0 %v3173
  %3342 = vmatprep.mubr.bf16.mxu0 %v2928
  %3343 = vmatmul.mubr.bf16.gmra.mxu0 %v2927
  %v3344 = vpop.f32.mrf.mxu0
  %v3345 = vadd.f32 %v3248, %v3344
  %v3346 = vpop.f32.mrf.mxu0
  %v3347 = vpop.f32.mrf.mxu0
  %v3348 = vadd.f32 %v3251, %v3347
  %v3349 = vpop.f32.mrf.mxu0
  %3350 = vmatprep.mubr.bf16.mxu0 %v2932
  %3351 = vmatmul.mubr.bf16.gmra.mxu0 %v2931
  %v3352 = vpop.f32.mrf.mxu0
  %v3353 = vadd.f32 %v3256, %v3352
  %v3354 = vpop.f32.mrf.mxu0
  %v3355 = vpop.f32.mrf.mxu0
  %v3356 = vadd.f32 %v3259, %v3355
  %v3357 = vpop.f32.mrf.mxu0
  %3358 = vmatprep.mubr.bf16.mxu0 %v2936
  %3359 = vmatmul.mubr.bf16.gmra.mxu0 %v2935
  %v3360 = vpop.f32.mrf.mxu0
  %v3361 = vadd.f32 %v3264, %v3360
  %v3362 = vpop.f32.mrf.mxu0
  %v3363 = vpop.f32.mrf.mxu0
  %v3364 = vadd.f32 %v3267, %v3363
  %v3365 = vpop.f32.mrf.mxu0
  %3366 = vmatprep.mubr.bf16.mxu0 %v2940
  %3367 = vmatmul.mubr.bf16.gmra.mxu0 %v2939
  %v3368 = vpop.f32.mrf.mxu0
  %v3369 = vadd.f32 %v3272, %v3368
  %v3370 = vpop.f32.mrf.mxu0
  %v3371 = vpop.f32.mrf.mxu0
  %v3372 = vadd.f32 %v3275, %v3371
  %v3373 = vpop.f32.mrf.mxu0
  %3374 = vmatprep.mubr.bf16.mxu0 %v2944
  %3375 = vmatmul.mubr.bf16.gmra.mxu0 %v2943
  %v3376 = vpop.f32.mrf.mxu0
  %v3377 = vadd.f32 %v3280, %v3376
  %v3378 = vpop.f32.mrf.mxu0
  %v3379 = vpop.f32.mrf.mxu0
  %v3380 = vadd.f32 %v3283, %v3379
  %v3381 = vpop.f32.mrf.mxu0
  %3382 = vmatprep.mubr.bf16.mxu0 %v2948
  %3383 = vmatmul.mubr.bf16.gmra.mxu0 %v2947
  %v3384 = vpop.f32.mrf.mxu0
  %v3385 = vadd.f32 %v3288, %v3384
  %v3386 = vpop.f32.mrf.mxu0
  %v3387 = vpop.f32.mrf.mxu0
  %v3388 = vadd.f32 %v3291, %v3387
  %v3389 = vpop.f32.mrf.mxu0
  %3390 = vmatprep.mubr.bf16.mxu0 %v2952
  %3391 = vmatmul.mubr.bf16.gmra.mxu0 %v2951
  %v3392 = vpop.f32.mrf.mxu0
  %v3393 = vadd.f32 %v3296, %v3392
  %v3394 = vpop.f32.mrf.mxu0
  %v3395 = vpop.f32.mrf.mxu0
  %v3396 = vadd.f32 %v3299, %v3395
  %v3397 = vpop.f32.mrf.mxu0
  %3398 = vmatprep.mubr.bf16.mxu0 %v2956
  %3399 = vmatmul.mubr.bf16.gmra.mxu0 %v2955
  %v3400 = vpop.f32.mrf.mxu0
  %v3401 = vadd.f32 %v3304, %v3400
  %v3402 = vpop.f32.mrf.mxu0
  %v3403 = vpop.f32.mrf.mxu0
  %v3404 = vadd.f32 %v3307, %v3403
  %v3405 = vpop.f32.mrf.mxu0
  %3406 = vdwg.mxu0
  %v3407 = vpack.c.bf16 %v2356, %v2355
  %v3408 = vpack.c.bf16 %v2358, %v2357
  %v3409 = vpack.c.bf16 %v2360, %v2359
  %v3410 = vpack.c.bf16 %v2362, %v2361
  %v3411 = vpack.c.bf16 %v2364, %v2363
  %v3412 = vpack.c.bf16 %v2366, %v2365
  %v3413 = vpack.c.bf16 %v2368, %v2367
  %v3414 = vpack.c.bf16 %v2370, %v2369
  %v3415 = vld [vmem:[%s9] sm:$0xf]
  %v3416 = vld [vmem:[%s9 + $0x4] sm:$0xf]
  %v3417 = vld [vmem:[%s9 + $0x8] sm:$0xf]
  %v3418 = vld [vmem:[%s9 + $0xc] sm:$0xf]
  %v3419 = vld [vmem:[%s9 + $0x10] sm:$0xf]
  %v3420 = vld [vmem:[%s9 + $0x14] sm:$0xf]
  %v3421 = vld [vmem:[%s9 + $0x18] sm:$0xf]
  %v3422 = vld [vmem:[%s9 + $0x1c] sm:$0xf]
  %v3423 = vld [vmem:[%s9 + $0x20] sm:$0xf]
  %v3424 = vld [vmem:[%s9 + $0x24] sm:$0xf]
  %v3425 = vld [vmem:[%s9 + $0x28] sm:$0xf]
  %v3426 = vld [vmem:[%s9 + $0x2c] sm:$0xf]
  %v3427 = vld [vmem:[%s9 + $0x30] sm:$0xf]
  %v3428 = vld [vmem:[%s9 + $0x34] sm:$0xf]
  %v3429 = vld [vmem:[%s9 + $0x38] sm:$0xf]
  %v3430 = vld [vmem:[%s9 + $0x3c] sm:$0xf]
  %v3447 = vunpack.c.l.b16 %v3415
  %v3448 = vunpack.c.l.b16 %v3416
  %v3449 = vunpack.c.l.b16 %v3417
  %v3450 = vunpack.c.l.b16 %v3418
  %v3451 = vunpack.c.l.b16 %v3419
  %v3452 = vunpack.c.l.b16 %v3420
  %v3453 = vunpack.c.l.b16 %v3421
  %v3454 = vunpack.c.l.b16 %v3422
  %v3455 = vunpack.c.l.b16 %v3423
  %v3456 = vunpack.c.l.b16 %v3424
  %v3457 = vunpack.c.l.b16 %v3425
  %v3458 = vunpack.c.l.b16 %v3426
  %v3459 = vunpack.c.l.b16 %v3427
  %v3460 = vunpack.c.l.b16 %v3428
  %v3461 = vunpack.c.l.b16 %v3429
  %v3462 = vunpack.c.l.b16 %v3430
  %v3463 = vpack.c.b16 %v3448, %v3447
  %v3464 = vpack.c.b16 %v3450, %v3449
  %v3465 = vpack.c.b16 %v3452, %v3451
  %v3466 = vpack.c.b16 %v3454, %v3453
  %v3467 = vpack.c.b16 %v3456, %v3455
  %v3468 = vpack.c.b16 %v3458, %v3457
  %v3469 = vpack.c.b16 %v3460, %v3459
  %v3470 = vpack.c.b16 %v3462, %v3461
  %3479 = vmatprep.subr.bf16.mxu0 0
  %3480 = vmatpush1.bf16.msra.mxu0 %v3470
  %3481 = vmatprep.subr.bf16.mxu0 0
  %3482 = vmatpush1.bf16.msra.mxu0 %v3469
  %3483 = vmatprep.subr.bf16.mxu0 0
  %3484 = vmatpush1.bf16.msra.mxu0 %v3468
  %3485 = vmatprep.subr.bf16.mxu0 0
  %3486 = vmatpush1.bf16.msra.mxu0 %v3467
  %3487 = vmatprep.subr.bf16.mxu0 0
  %3488 = vmatpush1.bf16.msra.mxu0 %v3466
  %3489 = vmatprep.subr.bf16.mxu0 0
  %3490 = vmatpush1.bf16.msra.mxu0 %v3465
  %3491 = vmatprep.subr.bf16.mxu0 0
  %3492 = vmatpush1.bf16.msra.mxu0 %v3464
  %3493 = vmatprep.subr.bf16.mxu0 0
  %3494 = vmatpush1.bf16.msra.mxu0 %v3463
  %3495 = vmatprep.subr.bf16.mxu0 0
  %3496 = vmatpush2.bf16.msra.mxu0 0
  %3497 = vmatprep.subr.bf16.mxu0 0
  %3498 = vmatpush2.bf16.msra.mxu0 0
  %3499 = vmatprep.subr.bf16.mxu0 0
  %3500 = vmatpush2.bf16.msra.mxu0 0
  %3501 = vmatprep.subr.bf16.mxu0 0
  %3502 = vmatpush2.bf16.msra.mxu0 0
  %3503 = vmatprep.subr.bf16.mxu0 0
  %3504 = vmatpush2.bf16.msra.mxu0 0
  %3505 = vmatprep.subr.bf16.mxu0 0
  %3506 = vmatpush2.bf16.msra.mxu0 0
  %3507 = vmatprep.subr.bf16.mxu0 0
  %3508 = vmatpush2.bf16.msra.mxu0 0
  %3509 = vmatprep.subr.bf16.mxu0 0
  %3510 = vmatpush2.bf16.msra.mxu0 0
  %3511 = vmatprep.mubr.bf16.mxu0 0
  %3512 = vmatmul.mubr.bf16.gmra.mxu0 %v3407
  %v3513 = vpop.f32.mrf.mxu0
  %v3514 = vadd.f32 0.0, %v3513
  %v3515 = vpop.f32.mrf.mxu0
  %v3516 = vpop.f32.mrf.mxu0
  %v3517 = vadd.f32 0.0, %v3516
  %v3518 = vpop.f32.mrf.mxu0
  %3519 = vmatprep.mubr.bf16.mxu0 0
  %3520 = vmatmul.mubr.bf16.gmra.mxu0 %v3408
  %v3521 = vpop.f32.mrf.mxu0
  %v3522 = vadd.f32 0.0, %v3521
  %v3523 = vpop.f32.mrf.mxu0
  %v3524 = vpop.f32.mrf.mxu0
  %v3525 = vadd.f32 0.0, %v3524
  %v3526 = vpop.f32.mrf.mxu0
  %3527 = vmatprep.mubr.bf16.mxu0 0
  %3528 = vmatmul.mubr.bf16.gmra.mxu0 %v3409
  %v3529 = vpop.f32.mrf.mxu0
  %v3530 = vadd.f32 0.0, %v3529
  %v3531 = vpop.f32.mrf.mxu0
  %v3532 = vpop.f32.mrf.mxu0
  %v3533 = vadd.f32 0.0, %v3532
  %v3534 = vpop.f32.mrf.mxu0
  %3535 = vmatprep.mubr.bf16.mxu0 0
  %3536 = vmatmul.mubr.bf16.gmra.mxu0 %v3410
  %v3537 = vpop.f32.mrf.mxu0
  %v3538 = vadd.f32 0.0, %v3537
  %v3539 = vpop.f32.mrf.mxu0
  %v3540 = vpop.f32.mrf.mxu0
  %v3541 = vadd.f32 0.0, %v3540
  %v3542 = vpop.f32.mrf.mxu0
  %3543 = vmatprep.mubr.bf16.mxu0 0
  %3544 = vmatmul.mubr.bf16.gmra.mxu0 %v3411
  %v3545 = vpop.f32.mrf.mxu0
  %v3546 = vadd.f32 0.0, %v3545
  %v3547 = vpop.f32.mrf.mxu0
  %v3548 = vpop.f32.mrf.mxu0
  %v3549 = vadd.f32 0.0, %v3548
  %v3550 = vpop.f32.mrf.mxu0
  %3551 = vmatprep.mubr.bf16.mxu0 0
  %3552 = vmatmul.mubr.bf16.gmra.mxu0 %v3412
  %v3553 = vpop.f32.mrf.mxu0
  %v3554 = vadd.f32 0.0, %v3553
  %v3555 = vpop.f32.mrf.mxu0
  %v3556 = vpop.f32.mrf.mxu0
  %v3557 = vadd.f32 0.0, %v3556
  %v3558 = vpop.f32.mrf.mxu0
  %3559 = vmatprep.mubr.bf16.mxu0 0
  %3560 = vmatmul.mubr.bf16.gmra.mxu0 %v3413
  %v3561 = vpop.f32.mrf.mxu0
  %v3562 = vadd.f32 0.0, %v3561
  %v3563 = vpop.f32.mrf.mxu0
  %v3564 = vpop.f32.mrf.mxu0
  %v3565 = vadd.f32 0.0, %v3564
  %v3566 = vpop.f32.mrf.mxu0
  %3567 = vmatprep.mubr.bf16.mxu0 0
  %3568 = vmatmul.mubr.bf16.gmra.mxu0 %v3414
  %v3569 = vpop.f32.mrf.mxu0
  %v3570 = vadd.f32 0.0, %v3569
  %v3571 = vpop.f32.mrf.mxu0
  %v3572 = vpop.f32.mrf.mxu0
  %v3573 = vadd.f32 0.0, %v3572
  %v3574 = vpop.f32.mrf.mxu0
  %3575 = vdwg.mxu0
  %v3576 = vxor.u32 %v3514, 2147483648
  %v3577 = vxor.u32 %v3517, 2147483648
  %v3578 = vxor.u32 %v3522, 2147483648
  %v3579 = vxor.u32 %v3525, 2147483648
  %v3580 = vxor.u32 %v3530, 2147483648
  %v3581 = vxor.u32 %v3533, 2147483648
  %v3582 = vxor.u32 %v3538, 2147483648
  %v3583 = vxor.u32 %v3541, 2147483648
  %v3584 = vxor.u32 %v3546, 2147483648
  %v3585 = vxor.u32 %v3549, 2147483648
  %v3586 = vxor.u32 %v3554, 2147483648
  %v3587 = vxor.u32 %v3557, 2147483648
  %v3588 = vxor.u32 %v3562, 2147483648
  %v3589 = vxor.u32 %v3565, 2147483648
  %v3590 = vxor.u32 %v3570, 2147483648
  %v3591 = vxor.u32 %v3573, 2147483648
  %v3592 = vmul.f32 %v3576, 1.442695
  %v3593 = vpow.pop %v3592
  %v3594 = vmul.f32 %v3577, 1.442695
  %v3595 = vpow.pop %v3594
  %v3596 = vmul.f32 %v3578, 1.442695
  %v3597 = vpow.pop %v3596
  %v3598 = vmul.f32 %v3579, 1.442695
  %v3599 = vpow.pop %v3598
  %v3600 = vmul.f32 %v3580, 1.442695
  %v3601 = vpow.pop %v3600
  %v3602 = vmul.f32 %v3581, 1.442695
  %v3603 = vpow.pop %v3602
  %v3604 = vmul.f32 %v3582, 1.442695
  %v3605 = vpow.pop %v3604
  %v3606 = vmul.f32 %v3583, 1.442695
  %v3607 = vpow.pop %v3606
  %v3608 = vmul.f32 %v3584, 1.442695
  %v3609 = vpow.pop %v3608
  %v3610 = vmul.f32 %v3585, 1.442695
  %v3611 = vpow.pop %v3610
  %v3612 = vmul.f32 %v3586, 1.442695
  %v3613 = vpow.pop %v3612
  %v3614 = vmul.f32 %v3587, 1.442695
  %v3615 = vpow.pop %v3614
  %v3616 = vmul.f32 %v3588, 1.442695
  %v3617 = vpow.pop %v3616
  %v3618 = vmul.f32 %v3589, 1.442695
  %v3619 = vpow.pop %v3618
  %v3620 = vmul.f32 %v3590, 1.442695
  %v3621 = vpow.pop %v3620
  %v3622 = vmul.f32 %v3591, 1.442695
  %v3623 = vpow.pop %v3622
  %v3624 = vadd.f32 %v3593, 1.0
  %v3625 = vadd.f32 %v3595, 1.0
  %v3626 = vadd.f32 %v3597, 1.0
  %v3627 = vadd.f32 %v3599, 1.0
  %v3628 = vadd.f32 %v3601, 1.0
  %v3629 = vadd.f32 %v3603, 1.0
  %v3630 = vadd.f32 %v3605, 1.0
  %v3631 = vadd.f32 %v3607, 1.0
  %v3632 = vadd.f32 %v3609, 1.0
  %v3633 = vadd.f32 %v3611, 1.0
  %v3634 = vadd.f32 %v3613, 1.0
  %v3635 = vadd.f32 %v3615, 1.0
  %v3636 = vadd.f32 %v3617, 1.0
  %v3637 = vadd.f32 %v3619, 1.0
  %v3638 = vadd.f32 %v3621, 1.0
  %v3639 = vadd.f32 %v3623, 1.0
  %v3640 = vrcp.pop %v3624
  %v3641 = vmul.f32 1.0, %v3640
  %v3642 = vrcp.pop %v3625
  %v3643 = vmul.f32 1.0, %v3642
  %v3644 = vrcp.pop %v3626
  %v3645 = vmul.f32 1.0, %v3644
  %v3646 = vrcp.pop %v3627
  %v3647 = vmul.f32 1.0, %v3646
  %v3648 = vrcp.pop %v3628
  %v3649 = vmul.f32 1.0, %v3648
  %v3650 = vrcp.pop %v3629
  %v3651 = vmul.f32 1.0, %v3650
  %v3652 = vrcp.pop %v3630
  %v3653 = vmul.f32 1.0, %v3652
  %v3654 = vrcp.pop %v3631
  %v3655 = vmul.f32 1.0, %v3654
  %v3656 = vrcp.pop %v3632
  %v3657 = vmul.f32 1.0, %v3656
  %v3658 = vrcp.pop %v3633
  %v3659 = vmul.f32 1.0, %v3658
  %v3660 = vrcp.pop %v3634
  %v3661 = vmul.f32 1.0, %v3660
  %v3662 = vrcp.pop %v3635
  %v3663 = vmul.f32 1.0, %v3662
  %v3664 = vrcp.pop %v3636
  %v3665 = vmul.f32 1.0, %v3664
  %v3666 = vrcp.pop %v3637
  %v3667 = vmul.f32 1.0, %v3666
  %v3668 = vrcp.pop %v3638
  %v3669 = vmul.f32 1.0, %v3668
  %v3670 = vrcp.pop %v3639
  %v3671 = vmul.f32 1.0, %v3670
  %v3672 = vld [vmem:[%s1 + $0xc] sm:$0x1]
  %v3673 = vmul.f32 %v3641, %v3345
  %v3674 = vmul.f32 %v3643, %v3348
  %v3675 = vmul.f32 %v3645, %v3353
  %v3676 = vmul.f32 %v3647, %v3356
  %v3677 = vmul.f32 %v3649, %v3361
  %v3678 = vmul.f32 %v3651, %v3364
  %v3679 = vmul.f32 %v3653, %v3369
  %v3680 = vmul.f32 %v3655, %v3372
  %v3681 = vmul.f32 %v3657, %v3377
  %v3682 = vmul.f32 %v3659, %v3380
  %v3683 = vmul.f32 %v3661, %v3385
  %v3684 = vmul.f32 %v3663, %v3388
  %v3685 = vmul.f32 %v3665, %v3393
  %v3686 = vmul.f32 %v3667, %v3396
  %v3687 = vmul.f32 %v3669, %v3401
  %v3688 = vmul.f32 %v3671, %v3404
  %v3689 = vlaneseq
  %v3690 = vshrl.u32 %v3689, 7
  %v3691 = vsub.s32 0, %v3690
  %v3692 = vrot.slane %v3672, %v3691
  %v3693 = vmul.f32 %v3692, %v3673
  %v3694 = vmul.f32 %v3692, %v3674
  %v3695 = vmul.f32 %v3692, %v3675
  %v3696 = vmul.f32 %v3692, %v3676
  %v3697 = vmul.f32 %v3692, %v3677
  %v3698 = vmul.f32 %v3692, %v3678
  %v3699 = vmul.f32 %v3692, %v3679
  %v3700 = vmul.f32 %v3692, %v3680
  %v3701 = vmul.f32 %v3692, %v3681
  %v3702 = vmul.f32 %v3692, %v3682
  %v3703 = vmul.f32 %v3692, %v3683
  %v3704 = vmul.f32 %v3692, %v3684
  %v3705 = vmul.f32 %v3692, %v3685
  %v3706 = vmul.f32 %v3692, %v3686
  %v3707 = vmul.f32 %v3692, %v3687
  %v3708 = vmul.f32 %v3692, %v3688
  %v3709 = vadd.f32 %v1877, %v3693
  %v3710 = vadd.f32 %v1878, %v3694
  %v3711 = vadd.f32 %v1879, %v3695
  %v3712 = vadd.f32 %v1880, %v3696
  %v3713 = vadd.f32 %v1881, %v3697
  %v3714 = vadd.f32 %v1882, %v3698
  %v3715 = vadd.f32 %v1883, %v3699
  %v3716 = vadd.f32 %v1884, %v3700
  %v3717 = vadd.f32 %v1885, %v3701
  %v3718 = vadd.f32 %v1886, %v3702
  %v3719 = vadd.f32 %v1887, %v3703
  %v3720 = vadd.f32 %v1888, %v3704
  %v3721 = vadd.f32 %v1889, %v3705
  %v3722 = vadd.f32 %v1890, %v3706
  %v3723 = vadd.f32 %v1891, %v3707
  %v3724 = vadd.f32 %v1892, %v3708
  %3725 = vst [vmem:[%s10] sm:$0xff] %v3709
  %3726 = vst [vmem:[%s10 + $0x8] sm:$0xff] %v3710
  %3727 = vst [vmem:[%s10 + $0x10] sm:$0xff] %v3711
  %3728 = vst [vmem:[%s10 + $0x18] sm:$0xff] %v3712
  %3729 = vst [vmem:[%s10 + $0x20] sm:$0xff] %v3713
  %3730 = vst [vmem:[%s10 + $0x28] sm:$0xff] %v3714
  %3731 = vst [vmem:[%s10 + $0x30] sm:$0xff] %v3715
  %3732 = vst [vmem:[%s10 + $0x38] sm:$0xff] %v3716
  %3733 = vst [vmem:[%s10 + $0x40] sm:$0xff] %v3717
  %3734 = vst [vmem:[%s10 + $0x48] sm:$0xff] %v3718
  %3735 = vst [vmem:[%s10 + $0x50] sm:$0xff] %v3719
  %3736 = vst [vmem:[%s10 + $0x58] sm:$0xff] %v3720
  %3737 = vst [vmem:[%s10 + $0x60] sm:$0xff] %v3721
  %3738 = vst [vmem:[%s10 + $0x68] sm:$0xff] %v3722
  %3739 = vst [vmem:[%s10 + $0x70] sm:$0xff] %v3723
  %3740 = vst [vmem:[%s10 + $0x78] sm:$0xff] %v3724
  // Predicated region
  $region49: #{_lambda_.6} parent=0 // pred_check
    _
  $region50: #{_lambda_.6} parent=0 // pred_check_branch
    %3742 = sbr.rel (0) target = $region52
  $region51: #{_lambda_.6} parent=0 // pred_region
    _
  $region52: #{_lambda_.6} parent=0 // pred_fallthru
    _
  // Predicated region
  $region53: #{_lambda_.6} parent=0 // pred_check
    _
  $region54: #{_lambda_.6} parent=0 // pred_check_branch
    %3744 = sbr.rel (0) target = $region56
  $region55: #{_lambda_.6} parent=0 // pred_region
    _
  $region56: #{_lambda_.6} parent=0 // pred_fallthru
    _

</llo_original>
